<compile_context>
chip_gen: v5e
topology: v5e:2x2
jax: 0.10.0
libtpu: 0.0.40
codegen_flags: <defaults>
</compile_context>

<pallas_src>
import jax
import jax.numpy as jnp
import numpy as np
from jax import lax
from jax.experimental import pallas as pl
from jax.experimental.pallas import tpu as pltpu

C_OUT, KH, KW = 20, 5, 5
K_TAPS = KH * KW                      # 25
HIDDEN = 500
HPAD = 512                            # fc1/bn1 width padded to an MXU-friendly multiple
NUM_CLASSES = 10
NCPAD = 128                           # fc2 output padded to a full lane tile
POOL_H = POOL_W = 13
SPATIAL = POOL_H * POOL_W             # 169
FLAT = C_OUT * SPATIAL                # 20 * 13 * 13 = 3380
BN_EPS = 1e-5


# ------------------------------ fused kernel ------------------------------- #

def net_fused_kernel(p_ref, wc_ref, shift_ref, w1_ref, s1_ref, b1_ref,
                     w2_ref, b2_ref, o_ref):
    """conv1+bn2d+maxpool2+relu+flatten+fc1+bn1+relu+(dropout=id)+fc2 for one batch block.

    p_ref    : (1, 25, 4*bt*169) bf16  im2col patches; col = cand*(bt*169) + b*169 + s
    wc_ref   : (20, 25)   bf16         conv weights with BN2d scale folded in (sign-exact)
    shift_ref: (20, 1)    f32          BN2d shift (conv bias folded), added after the max
    w1_ref   : (3380, 512) bf16        fc1 weight, hidden padded 500 -> 512
    s1_ref   : (1, 512)   f32          BN1d scale
    b1_ref   : (1, 512)   f32          BN1d shift (fc1 bias folded)
    w2_ref   : (512, 128) bf16         fc2 weight, classes padded 10 -> 128
    b2_ref   : (1, 128)   f32          fc2 bias (padded)
    o_ref    : (bt, 128)  f32          logits (wrapper slices back to 10)
    """
    bt = o_ref.shape[0]
    pw = bt * SPATIAL

    # conv2d(1->20, k=5, p=1) at all 4 max-pool candidate offsets as ONE MXU matmul.
    r = jnp.dot(wc_ref[...], p_ref[0], preferred_element_type=jnp.float32)  # (20, 4*pw)

    # MaxPool2d(2): max over the 4 candidates. The BN scale already lives in the conv
    # weights (so signs are correct before the max); the additive shift commutes with max.
    pooled = jnp.maximum(jnp.maximum(r[:, 0 * pw:1 * pw], r[:, 1 * pw:2 * pw]),
                         jnp.maximum(r[:, 2 * pw:3 * pw], r[:, 3 * pw:4 * pw]))
    pooled = jnp.maximum(pooled + shift_ref[...], 0.0)       # BN2d shift + ReLU, (20, pw)

    # Relayout channel-major (20, bt*169) -> batch-major flat (bt, 3380), matching torch's
    # flatten order (c*169 + s).  Done once per block, in VMEM, consumed by fc1 directly.
    imgs = [pooled[:, b * SPATIAL:(b + 1) * SPATIAL] for b in range(bt)]    # bt x (20, 169)
    a = jnp.stack(imgs, axis=0).reshape(bt, FLAT).astype(jnp.bfloat16)      # (bt, 3380)

    # fc1 + BN1d(eval) + ReLU.
    # TODO(synk): nn.Dropout(0.5) is stochastic in train mode; eval-mode identity here.
    h = jnp.dot(a, w1_ref[...], preferred_element_type=jnp.float32)         # (bt, 512)
    h = jnp.maximum(h * s1_ref[...] + b1_ref[...], 0.0)

    # fc2 (lane-dense 128-wide output; wrapper slices the first 10 classes)
    o_ref[...] = (jnp.dot(h.astype(jnp.bfloat16), w2_ref[...],
                          preferred_element_type=jnp.float32) + b2_ref[...])


# ------------------------------- wrapper ----------------------------------- #

def _choose_tile(batch):
    """Batch tile: multiple of 8, <= 64 (VMEM), and >= 2 grid steps (v7x megacore)."""
    bt = min(64, max(8, (batch // 2) // 8 * 8))
    bp = pl.cdiv(max(batch, 2 * bt), bt) * bt
    return bt, bp


def _im2col_pool_patches(xpad, nblocks, bt):
    """(n, 30, 30) padded images -> (nblocks, 25, 4*bt*169) bf16 stride-2 conv-site patches.

    Column order inside a block: cand*(bt*169) + b_local*169 + site, where
    patch[tap, col] == xpad[b, 2*i + dy + ky, 2*j + dx + kx], site = i*13 + j, tap = ky*5+kx.
    """
    n = nblocks * bt
    cands = []
    for dy in range(2):
        for dx in range(2):
            taps = []
            for ky in range(KH):
                for kx in range(KW):
                    r0, c0 = dy + ky, dx + kx
                    sl = xpad[:, r0:r0 + 2 * POOL_H:2, c0:c0 + 2 * POOL_W:2]   # (n,13,13)
                    taps.append(sl.reshape(n, SPATIAL))
            cands.append(jnp.stack(taps, axis=0))             # (25, n, 169)
    p = jnp.stack(cands, axis=1)                              # (25, 4, n, 169)
    p = p.reshape(K_TAPS, 4, nblocks, bt, SPATIAL)
    p = p.transpose(2, 0, 1, 3, 4).reshape(nblocks, K_TAPS, 4 * bt * SPATIAL)
    return p.astype(jnp.bfloat16)


@jax.jit
def net_forward(x, params):
    B = x.shape[0]
    bt, bp = _choose_tile(B)
    nblocks = bp // bt
    if bp != B:
        x = jnp.pad(x, ((0, bp - B), (0, 0), (0, 0), (0, 0)))

    # XLA glue: pad (padding=1) + im2col over the 2x2 pool candidates (bf16 patches).
    xpad = jnp.pad(x[:, 0], ((0, 0), (1, 1), (1, 1)))                     # (bp, 30, 30)
    patches = _im2col_pool_patches(xpad, nblocks, bt)                     # (nb, 25, 4*bt*169)

    # Fold BatchNorm2d (eval running stats): scale into the conv weights (exact), and a
    # per-channel shift (conv bias folded) applied after the max-pool inside the kernel.
    s2d = params["bn2d_gamma"] * lax.rsqrt(params["bn2d_var"] + BN_EPS)
    wc = (params["conv_w"].reshape(C_OUT, K_TAPS) * s2d[:, None]).astype(jnp.bfloat16)
    shift = (s2d * (params["conv_b"] - params["bn2d_mean"])
             + params["bn2d_beta"]).reshape(C_OUT, 1)

    # Fold BatchNorm1d (eval) + fc1 bias; pad hidden 500 -> 512 and classes 10 -> 128.
    s1 = params["bn1_gamma"] * lax.rsqrt(params["bn1_var"] + BN_EPS)
    b1_eff = s1 * (params["fc1_b"] - params["bn1_mean"]) + params["bn1_beta"]
    w1 = jnp.pad(params["fc1_w"].T, ((0, 0), (0, HPAD - HIDDEN))).astype(jnp.bfloat16)
    s1p = jnp.pad(s1, (0, HPAD - HIDDEN)).reshape(1, HPAD)
    b1p = jnp.pad(b1_eff, (0, HPAD - HIDDEN)).reshape(1, HPAD)
    w2 = jnp.pad(params["fc2_w"].T,
                 ((0, HPAD - HIDDEN), (0, NCPAD - NUM_CLASSES))).astype(jnp.bfloat16)
    b2 = jnp.pad(params["fc2_b"], (0, NCPAD - NUM_CLASSES)).reshape(1, NCPAD)

    cw = 4 * bt * SPATIAL
    out = pl.pallas_call(
        net_fused_kernel,
        out_shape=jax.ShapeDtypeStruct((bp, NCPAD), jnp.float32),
        grid=(nblocks,),
        in_specs=[
            pl.BlockSpec((1, K_TAPS, cw), lambda i: (i, 0, 0)),     # patches (per block)
            pl.BlockSpec((C_OUT, K_TAPS), lambda i: (0, 0)),        # conv weights (resident)
            pl.BlockSpec((C_OUT, 1), lambda i: (0, 0)),
            pl.BlockSpec((FLAT, HPAD), lambda i: (0, 0)),           # fc1 weight (resident)
            pl.BlockSpec((1, HPAD), lambda i: (0, 0)),
            pl.BlockSpec((1, HPAD), lambda i: (0, 0)),
            pl.BlockSpec((HPAD, NCPAD), lambda i: (0, 0)),          # fc2 weight (resident)
            pl.BlockSpec((1, NCPAD), lambda i: (0, 0)),
        ],
        out_specs=pl.BlockSpec((bt, NCPAD), lambda i: (i, 0)),
        compiler_params=pltpu.CompilerParams(
            dimension_semantics=("parallel",),
            vmem_limit_bytes=32 * 1024 * 1024),    # within v7x's 64 MiB physical VMEM
    )(patches, wc, shift, w1, s1p, b1p, w2, b2)
    return out[:B, :NUM_CLASSES]


# --------------------------- pure-JAX reference ----------------------------- #

def reference_forward(x, p):
    conv = lax.conv_general_dilated(
        x, p["conv_w"], window_strides=(1, 1), padding=((1, 1), (1, 1)),
        dimension_numbers=("NCHW", "OIHW", "NCHW")) + p["conv_b"][None, :, None, None]
    bn = (p["bn2d_gamma"][None, :, None, None]
          * (conv - p["bn2d_mean"][None, :, None, None])
          / jnp.sqrt(p["bn2d_var"][None, :, None, None] + BN_EPS)
          + p["bn2d_beta"][None, :, None, None])
    pooled = lax.reduce_window(bn, -jnp.inf, lax.max,
                               (1, 1, 2, 2), (1, 1, 2, 2), "VALID")
    r = jnp.maximum(pooled, 0.0)
    flat = r.reshape(x.shape[0], -1)
    h = flat @ p["fc1_w"].T + p["fc1_b"]
    h = (p["bn1_gamma"] * (h - p["bn1_mean"]) / jnp.sqrt(p["bn1_var"] + BN_EPS)
         + p["bn1_beta"])
    h = jnp.maximum(h, 0.0)
    return h @ p["fc2_w"].T + p["fc2_b"]


# --------------------------------- main ------------------------------------- #

if __name__ == "__main__":
    key = jax.random.PRNGKey(0)
    ks = jax.random.split(key, 16)
    B = 2
    x = jax.random.normal(ks[0], (B, 1, 28, 28), dtype=jnp.float32)

    params = {
        # conv1: Conv2d(1, 20, kernel_size=5, stride=1, padding=1)
        "conv_w": 0.05 * jax.random.normal(ks[1], (C_OUT, 1, KH, KW), jnp.float32),
        "conv_b": 0.05 * jax.random.normal(ks[2], (C_OUT,), jnp.float32),
        # bn2d: BatchNorm2d(20) — eval-mode running stats
        "bn2d_gamma": 1.0 + 0.1 * jax.random.normal(ks[3], (C_OUT,), jnp.float32),
        "bn2d_beta": 0.1 * jax.random.normal(ks[4], (C_OUT,), jnp.float32),
        "bn2d_mean": 0.1 * jax.random.normal(ks[5], (C_OUT,), jnp.float32),
        "bn2d_var": 1.0 + 0.5 * jax.random.uniform(ks[6], (C_OUT,), jnp.float32),
        # fc1: Linear(3380, 500)
        "fc1_w": 0.02 * jax.random.normal(ks[7], (HIDDEN, FLAT), jnp.float32),
        "fc1_b": 0.02 * jax.random.normal(ks[8], (HIDDEN,), jnp.float32),
        # bn1: BatchNorm1d(500) — eval-mode running stats
        "bn1_gamma": 1.0 + 0.1 * jax.random.normal(ks[9], (HIDDEN,), jnp.float32),
        "bn1_beta": 0.1 * jax.random.normal(ks[10], (HIDDEN,), jnp.float32),
        "bn1_mean": 0.1 * jax.random.normal(ks[11], (HIDDEN,), jnp.float32),
        "bn1_var": 1.0 + 0.5 * jax.random.uniform(ks[12], (HIDDEN,), jnp.float32),
        # fc2: Linear(500, 10)
        "fc2_w": 0.05 * jax.random.normal(ks[13], (NUM_CLASSES, HIDDEN), jnp.float32),
        "fc2_b": 0.05 * jax.random.normal(ks[14], (NUM_CLASSES,), jnp.float32),
    }

    out = jax.block_until_ready(net_forward(x, params))
    ref = jax.block_until_ready(reference_forward(x, params))

    assert out.shape == (B, NUM_CLASSES)
    # Conv patches/weights, fc1 and fc2 weights run in bf16 (f32 accumulation) -> allow
    # a few e-2 of slack against the pure-f32 reference.
    if np.allclose(np.asarray(out), np.asarray(ref), atol=3e-2, rtol=3e-2):
        print("KERNEL_OK")
    else:
        print("MISMATCH max_abs_err =",
              float(np.max(np.abs(np.asarray(out) - np.asarray(ref)))))
</pallas_src>

<mosaic_0001>
module attributes {stable_mosaic.version = 11 : i64} {
  func.func @net_fused_kernel(%arg0: i32, %arg1: memref<1x25x5408xbf16, #tpu.memory_space<vmem>>, %arg2: memref<20x25xbf16, #tpu.memory_space<vmem>>, %arg3: memref<20x1xf32, #tpu.memory_space<vmem>>, %arg4: memref<3380x512xbf16, #tpu.memory_space<vmem>>, %arg5: memref<1x512xf32, #tpu.memory_space<vmem>>, %arg6: memref<1x512xf32, #tpu.memory_space<vmem>>, %arg7: memref<512x128xbf16, #tpu.memory_space<vmem>>, %arg8: memref<1x128xf32, #tpu.memory_space<vmem>>, %arg9: memref<8x128xf32, #tpu.memory_space<vmem>>) attributes {dimension_semantics = [#tpu.dimension_semantics<parallel>], iteration_bounds = array<i64: 2>, scalar_prefetch = 0 : i64, scratch_operands = 0 : i64, tpu.core_type = #tpu.core_type<tc>, window_params = [{transform_indices = @transform_0, window_bounds = array<i64: 1, 25, 5408>}, {pipeline_mode = #tpu.pipeline_mode<synchronous>, transform_indices = @transform_1, window_bounds = array<i64: 20, 25>}, {pipeline_mode = #tpu.pipeline_mode<synchronous>, transform_indices = @transform_2, window_bounds = array<i64: 20, 1>}, {pipeline_mode = #tpu.pipeline_mode<synchronous>, transform_indices = @transform_3, window_bounds = array<i64: 3380, 512>}, {pipeline_mode = #tpu.pipeline_mode<synchronous>, transform_indices = @transform_4, window_bounds = array<i64: 1, 512>}, {pipeline_mode = #tpu.pipeline_mode<synchronous>, transform_indices = @transform_5, window_bounds = array<i64: 1, 512>}, {pipeline_mode = #tpu.pipeline_mode<synchronous>, transform_indices = @transform_6, window_bounds = array<i64: 512, 128>}, {pipeline_mode = #tpu.pipeline_mode<synchronous>, transform_indices = @transform_7, window_bounds = array<i64: 1, 128>}, {transform_indices = @transform_8, window_bounds = array<i64: 8, 128>}]} {
    %c0 = arith.constant 0 : index
    %c0_0 = arith.constant 0 : index
    %0 = vector.load %arg2[%c0, %c0_0] : memref<20x25xbf16, #tpu.memory_space<vmem>>, vector<20x25xbf16>
    %c0_1 = arith.constant 0 : index
    %c0_2 = arith.constant 0 : index
    %c0_3 = arith.constant 0 : index
    %1 = vector.load %arg1[%c0_1, %c0_2, %c0_3] : memref<1x25x5408xbf16, #tpu.memory_space<vmem>>, vector<1x25x5408xbf16>
    %2 = vector.shape_cast %1 : vector<1x25x5408xbf16> to vector<25x5408xbf16>
    %cst = arith.constant dense<0.000000e+00> : vector<20x5408xf32>
    %3 = tpu.matmul %0, %2, %cst {dimension_numbers = #tpu.dot_dimension_numbers<[1], [0], [0], [1], [0, 0, 1, 1], [], []>} : vector<20x25xbf16>, vector<25x5408xbf16>, vector<20x5408xf32> -> vector<20x5408xf32>
    %4 = vector.extract_strided_slice %3 {offsets = [0, 0], sizes = [20, 1352], strides = [1, 1]} : vector<20x5408xf32> to vector<20x1352xf32>
    %5 = vector.extract_strided_slice %3 {offsets = [0, 1352], sizes = [20, 1352], strides = [1, 1]} : vector<20x5408xf32> to vector<20x1352xf32>
    %6 = arith.maximumf %4, %5 : vector<20x1352xf32>
    %7 = vector.extract_strided_slice %3 {offsets = [0, 2704], sizes = [20, 1352], strides = [1, 1]} : vector<20x5408xf32> to vector<20x1352xf32>
    %8 = vector.extract_strided_slice %3 {offsets = [0, 4056], sizes = [20, 1352], strides = [1, 1]} : vector<20x5408xf32> to vector<20x1352xf32>
    %9 = arith.maximumf %7, %8 : vector<20x1352xf32>
    %10 = arith.maximumf %6, %9 : vector<20x1352xf32>
    %c0_4 = arith.constant 0 : index
    %c0_5 = arith.constant 0 : index
    %11 = vector.load %arg3[%c0_4, %c0_5] : memref<20x1xf32, #tpu.memory_space<vmem>>, vector<20x1xf32>
    %12 = vector.broadcast %11 : vector<20x1xf32> to vector<20x1352xf32>
    %13 = arith.addf %10, %12 : vector<20x1352xf32>
    %cst_6 = arith.constant 0.000000e+00 : f32
    %14 = vector.broadcast %cst_6 : f32 to vector<20x1352xf32>
    %15 = arith.maximumf %13, %14 : vector<20x1352xf32>
    %16 = vector.extract_strided_slice %15 {offsets = [0, 0], sizes = [20, 169], strides = [1, 1]} : vector<20x1352xf32> to vector<20x169xf32>
    %17 = vector.extract_strided_slice %15 {offsets = [0, 169], sizes = [20, 169], strides = [1, 1]} : vector<20x1352xf32> to vector<20x169xf32>
    %18 = vector.extract_strided_slice %15 {offsets = [0, 338], sizes = [20, 169], strides = [1, 1]} : vector<20x1352xf32> to vector<20x169xf32>
    %19 = vector.extract_strided_slice %15 {offsets = [0, 507], sizes = [20, 169], strides = [1, 1]} : vector<20x1352xf32> to vector<20x169xf32>
    %20 = vector.extract_strided_slice %15 {offsets = [0, 676], sizes = [20, 169], strides = [1, 1]} : vector<20x1352xf32> to vector<20x169xf32>
    %21 = vector.extract_strided_slice %15 {offsets = [0, 845], sizes = [20, 169], strides = [1, 1]} : vector<20x1352xf32> to vector<20x169xf32>
    %22 = vector.extract_strided_slice %15 {offsets = [0, 1014], sizes = [20, 169], strides = [1, 1]} : vector<20x1352xf32> to vector<20x169xf32>
    %23 = vector.extract_strided_slice %15 {offsets = [0, 1183], sizes = [20, 169], strides = [1, 1]} : vector<20x1352xf32> to vector<20x169xf32>
    %24 = vector.shape_cast %16 : vector<20x169xf32> to vector<1x20x169xf32>
    %25 = vector.shape_cast %17 : vector<20x169xf32> to vector<1x20x169xf32>
    %26 = vector.shape_cast %18 : vector<20x169xf32> to vector<1x20x169xf32>
    %27 = vector.shape_cast %19 : vector<20x169xf32> to vector<1x20x169xf32>
    %28 = vector.shape_cast %20 : vector<20x169xf32> to vector<1x20x169xf32>
    %29 = vector.shape_cast %21 : vector<20x169xf32> to vector<1x20x169xf32>
    %30 = vector.shape_cast %22 : vector<20x169xf32> to vector<1x20x169xf32>
    %31 = vector.shape_cast %23 : vector<20x169xf32> to vector<1x20x169xf32>
    %32 = tpu.concatenate %24, %25, %26, %27, %28, %29, %30, %31 in 0 : vector<1x20x169xf32>, vector<1x20x169xf32>, vector<1x20x169xf32>, vector<1x20x169xf32>, vector<1x20x169xf32>, vector<1x20x169xf32>, vector<1x20x169xf32>, vector<1x20x169xf32> -> vector<8x20x169xf32>
    %33 = vector.shape_cast %32 : vector<8x20x169xf32> to vector<8x3380xf32>
    %34 = arith.truncf %33 : vector<8x3380xf32> to vector<8x3380xbf16>
    %c0_7 = arith.constant 0 : index
    %c0_8 = arith.constant 0 : index
    %35 = vector.load %arg4[%c0_7, %c0_8] : memref<3380x512xbf16, #tpu.memory_space<vmem>>, vector<3380x512xbf16>
    %cst_9 = arith.constant dense<0.000000e+00> : vector<8x512xf32>
    %36 = tpu.matmul %34, %35, %cst_9 {dimension_numbers = #tpu.dot_dimension_numbers<[1], [0], [0], [1], [0, 0, 1, 1], [], []>} : vector<8x3380xbf16>, vector<3380x512xbf16>, vector<8x512xf32> -> vector<8x512xf32>
    %c0_10 = arith.constant 0 : index
    %c0_11 = arith.constant 0 : index
    %37 = vector.load %arg5[%c0_10, %c0_11] : memref<1x512xf32, #tpu.memory_space<vmem>>, vector<1x512xf32>
    %38 = vector.broadcast %37 : vector<1x512xf32> to vector<8x512xf32>
    %39 = arith.mulf %36, %38 : vector<8x512xf32>
    %c0_12 = arith.constant 0 : index
    %c0_13 = arith.constant 0 : index
    %40 = vector.load %arg6[%c0_12, %c0_13] : memref<1x512xf32, #tpu.memory_space<vmem>>, vector<1x512xf32>
    %41 = vector.broadcast %40 : vector<1x512xf32> to vector<8x512xf32>
    %42 = arith.addf %39, %41 : vector<8x512xf32>
    %cst_14 = arith.constant 0.000000e+00 : f32
    %43 = vector.broadcast %cst_14 : f32 to vector<8x512xf32>
    %44 = arith.maximumf %42, %43 : vector<8x512xf32>
    %45 = arith.truncf %44 : vector<8x512xf32> to vector<8x512xbf16>
    %c0_15 = arith.constant 0 : index
    %c0_16 = arith.constant 0 : index
    %46 = vector.load %arg7[%c0_15, %c0_16] : memref<512x128xbf16, #tpu.memory_space<vmem>>, vector<512x128xbf16>
    %cst_17 = arith.constant dense<0.000000e+00> : vector<8x128xf32>
    %47 = tpu.matmul %45, %46, %cst_17 {dimension_numbers = #tpu.dot_dimension_numbers<[1], [0], [0], [1], [0, 0, 1, 1], [], []>} : vector<8x512xbf16>, vector<512x128xbf16>, vector<8x128xf32> -> vector<8x128xf32>
    %c0_18 = arith.constant 0 : index
    %c0_19 = arith.constant 0 : index
    %48 = vector.load %arg8[%c0_18, %c0_19] : memref<1x128xf32, #tpu.memory_space<vmem>>, vector<1x128xf32>
    %49 = vector.broadcast %48 : vector<1x128xf32> to vector<8x128xf32>
    %50 = arith.addf %47, %49 : vector<8x128xf32>
    %c0_20 = arith.constant 0 : index
    %c0_21 = arith.constant 0 : index
    %51 = vector.load %arg9[%c0_20, %c0_21] : memref<8x128xf32, #tpu.memory_space<vmem>>, vector<8x128xf32>
    tpu.vector_store %arg9[%c0_20, %c0_21], %50 {strides = array<i32>} : memref<8x128xf32, #tpu.memory_space<vmem>>, vector<8x128xf32>,
    return
  }
  func.func @transform_0(%arg0: i32) -> (i32, i32, i32) {
    %c0_i32 = arith.constant 0 : i32
    %c0_i32_0 = arith.constant 0 : i32
    %c0_i32_1 = arith.constant 0 : i32
    return %arg0, %c0_i32, %c0_i32_0 : i32, i32, i32
  }
  func.func @transform_1(%arg0: i32) -> (i32, i32) {
    %c0_i32 = arith.constant 0 : i32
    %c0_i32_0 = arith.constant 0 : i32
    %c0_i32_1 = arith.constant 0 : i32
    return %c0_i32, %c0_i32_0 : i32, i32
  }
  func.func @transform_2(%arg0: i32) -> (i32, i32) {
    %c0_i32 = arith.constant 0 : i32
    %c0_i32_0 = arith.constant 0 : i32
    %c0_i32_1 = arith.constant 0 : i32
    return %c0_i32, %c0_i32_0 : i32, i32
  }
  func.func @transform_3(%arg0: i32) -> (i32, i32) {
    %c0_i32 = arith.constant 0 : i32
    %c0_i32_0 = arith.constant 0 : i32
    %c0_i32_1 = arith.constant 0 : i32
    return %c0_i32, %c0_i32_0 : i32, i32
  }
  func.func @transform_4(%arg0: i32) -> (i32, i32) {
    %c0_i32 = arith.constant 0 : i32
    %c0_i32_0 = arith.constant 0 : i32
    %c0_i32_1 = arith.constant 0 : i32
    return %c0_i32, %c0_i32_0 : i32, i32
  }
  func.func @transform_5(%arg0: i32) -> (i32, i32) {
    %c0_i32 = arith.constant 0 : i32
    %c0_i32_0 = arith.constant 0 : i32
    %c0_i32_1 = arith.constant 0 : i32
    return %c0_i32, %c0_i32_0 : i32, i32
  }
  func.func @transform_6(%arg0: i32) -> (i32, i32) {
    %c0_i32 = arith.constant 0 : i32
    %c0_i32_0 = arith.constant 0 : i32
    %c0_i32_1 = arith.constant 0 : i32
    return %c0_i32, %c0_i32_0 : i32, i32
  }
  func.func @transform_7(%arg0: i32) -> (i32, i32) {
    %c0_i32 = arith.constant 0 : i32
    %c0_i32_0 = arith.constant 0 : i32
    %c0_i32_1 = arith.constant 0 : i32
    return %c0_i32, %c0_i32_0 : i32, i32
  }
  func.func @transform_8(%arg0: i32) -> (i32, i32) {
    %c0_i32 = arith.constant 0 : i32
    %c0_i32_0 = arith.constant 0 : i32
    return %arg0, %c0_i32 : i32, i32
  }
}

</mosaic_0001>

<llo_original>
// kernel: net_forward.1
$region0: #{net_forward.1}
  #allocation0 [shape = 'u32[]', space=smem, size = 0x4, offset = 0x4, fixed_abs, tag = 'smem constant byte address 0x4 - core index']
  #allocation1 [shape = 'u32[72,128]{1,0:T(1,128)}', space=vmem, size = 0x9000, scoped, tag = 'internal scratch']
  %s0 = inlined_call_operand.vmem [shape: bf16[2,25,5408], index: 0, kind: input, shape index: {}]
  %s1 = inlined_call_operand.vmem [shape: bf16[20,25], index: 1, kind: input, shape index: {}]
  %s2 = inlined_call_operand.vmem [shape: f32[20,1], index: 2, kind: input, shape index: {}]
  %s3 = inlined_call_operand.vmem [shape: bf16[3380,512], index: 3, kind: input, shape index: {}]
  %s4 = inlined_call_operand.vmem [shape: f32[1,512], index: 4, kind: input, shape index: {}]
  %s5 = inlined_call_operand.vmem [shape: f32[1,512], index: 5, kind: input, shape index: {}]
  %s6 = inlined_call_operand.vmem [shape: bf16[512,128], index: 6, kind: input, shape index: {}]
  %s7 = inlined_call_operand.vmem [shape: f32[1,128], index: 7, kind: input, shape index: {}]
  %s8 = inlined_call_operand.vmem [shape: f32[16,128], index: 8, kind: output, shape index: {}]
  %s9 = sld [smem:[#allocation0]]
  $region65: #{net_forward.1} parent=0
    _
  %s11 = ssub.s32 1, %s9
  %s12 = scalar_select 0, %s11, %s9
  loop: start=0, step=1, limit=4
  $region2: #{net_forward.1} parent=0 // loop_pre_header
    _
  $region3: #{net_forward.1} parent=0 // loop_header
    %s14 = sphi 0, %s18
    %p15 = scmp.ge.s32.totalorder %s14, 4
    %s24 = sphi 0, %s26
    %s27 = sphi 0, %s24
    %s28 = sphi 0, %s27
    %s44 = sphi 0, %s28
    %s48 = sphi 0, %s48
    %s50 = sphi 0, %s48
    %s51 = sphi 0, %s50
    %s65 = sphi 0, %s51
    %s69 = sphi 0, %s69
    %s71 = sphi 0, %s69
    %s72 = sphi 0, %s71
    %s86 = sphi 0, %s72
    %s90 = sphi 0, %s90
    %s92 = sphi 0, %s90
    %s93 = sphi 0, %s92
    %s107 = sphi 0, %s93
    %s111 = sphi 0, %s111
    %s113 = sphi 0, %s111
    %s114 = sphi 0, %s113
    %s128 = sphi 0, %s114
    %s132 = sphi 0, %s132
    %s134 = sphi 0, %s132
    %s135 = sphi 0, %s134
    %s149 = sphi 0, %s135
    %s153 = sphi 0, %s153
    %s155 = sphi 0, %s153
    %s156 = sphi 0, %s155
    %s170 = sphi 0, %s156
    %s174 = sphi 0, %s174
    %s176 = sphi 0, %s174
    %s177 = sphi 0, %s176
    %s191 = sphi 0, %s177
    %s197 = sphi 0, %s199
    %s200 = sphi 0, %s197
    %s201 = sphi 0, %s200
    %s217 = sphi 0, %s201
  $region4: #{net_forward.1} parent=0 // loop_header_branch
    %17 = sbr.rel (%p15) target = $region8
  $region5: #{net_forward.1} parent=0 // loop_body
    %s19 = ssub.s32 %s14, 1
    %s20 = ssub.s32 %s14, 2
    %s21 = sadd.s32 %s14, 1
    %s22 = ssub.s32 %s14, %s21
    %p23 = scmp.eq.s32.totalorder %s22, 0
    %s25 = sadd.s32 %s24, 1
    %s26 = scalar_select %p23, %s24, %s25
    %p29 = pneg %p23
    %p30 = scmp.eq.s32.totalorder %s14, 1
    %p31 = por %p29, %p30
    %p32 = scmp.ne.s32.totalorder %s24, %s27
    %p33 = scmp.eq.s32.totalorder %s14, 0
    %p34 = por %p32, %p33
    %p35 = scmp.ne.s32.totalorder %s24, %s27
    %p36 = scmp.eq.s32.totalorder %s19, 1
    %p37 = por %p35, %p36
    %p38 = scmp.ne.s32.totalorder %s27, %s28
    %p39 = scmp.eq.s32.totalorder %s19, 0
    %p40 = por %p38, %p39
    %p41 = scmp.ne.s32.totalorder %s27, %s28
    %p42 = scmp.eq.s32.totalorder %s20, 1
    %p43 = por %p41, %p42
    %p45 = scmp.ne.s32.totalorder %s28, %s44
    %p46 = scmp.eq.s32.totalorder %s20, 0
    %p47 = por %p45, %p46
    %s49 = sadd.s32 %s48, 1
    %p52 = scmp.eq.s32.totalorder %s14, 1
    %p53 = scmp.ne.s32.totalorder %s48, %s50
    %p54 = scmp.eq.s32.totalorder %s14, 0
    %p55 = por %p53, %p54
    %p56 = scmp.ne.s32.totalorder %s48, %s50
    %p57 = scmp.eq.s32.totalorder %s19, 1
    %p58 = por %p56, %p57
    %p59 = scmp.ne.s32.totalorder %s50, %s51
    %p60 = scmp.eq.s32.totalorder %s19, 0
    %p61 = por %p59, %p60
    %p62 = scmp.ne.s32.totalorder %s50, %s51
    %p63 = scmp.eq.s32.totalorder %s20, 1
    %p64 = por %p62, %p63
    %p66 = scmp.ne.s32.totalorder %s51, %s65
    %p67 = scmp.eq.s32.totalorder %s20, 0
    %p68 = por %p66, %p67
    %s70 = sadd.s32 %s69, 1
    %p73 = scmp.eq.s32.totalorder %s14, 1
    %p74 = scmp.ne.s32.totalorder %s69, %s71
    %p75 = scmp.eq.s32.totalorder %s14, 0
    %p76 = por %p74, %p75
    %p77 = scmp.ne.s32.totalorder %s69, %s71
    %p78 = scmp.eq.s32.totalorder %s19, 1
    %p79 = por %p77, %p78
    %p80 = scmp.ne.s32.totalorder %s71, %s72
    %p81 = scmp.eq.s32.totalorder %s19, 0
    %p82 = por %p80, %p81
    %p83 = scmp.ne.s32.totalorder %s71, %s72
    %p84 = scmp.eq.s32.totalorder %s20, 1
    %p85 = por %p83, %p84
    %p87 = scmp.ne.s32.totalorder %s72, %s86
    %p88 = scmp.eq.s32.totalorder %s20, 0
    %p89 = por %p87, %p88
    %s91 = sadd.s32 %s90, 1
    %p94 = scmp.eq.s32.totalorder %s14, 1
    %p95 = scmp.ne.s32.totalorder %s90, %s92
    %p96 = scmp.eq.s32.totalorder %s14, 0
    %p97 = por %p95, %p96
    %p98 = scmp.ne.s32.totalorder %s90, %s92
    %p99 = scmp.eq.s32.totalorder %s19, 1
    %p100 = por %p98, %p99
    %p101 = scmp.ne.s32.totalorder %s92, %s93
    %p102 = scmp.eq.s32.totalorder %s19, 0
    %p103 = por %p101, %p102
    %p104 = scmp.ne.s32.totalorder %s92, %s93
    %p105 = scmp.eq.s32.totalorder %s20, 1
    %p106 = por %p104, %p105
    %p108 = scmp.ne.s32.totalorder %s93, %s107
    %p109 = scmp.eq.s32.totalorder %s20, 0
    %p110 = por %p108, %p109
    %s112 = sadd.s32 %s111, 1
    %p115 = scmp.eq.s32.totalorder %s14, 1
    %p116 = scmp.ne.s32.totalorder %s111, %s113
    %p117 = scmp.eq.s32.totalorder %s14, 0
    %p118 = por %p116, %p117
    %p119 = scmp.ne.s32.totalorder %s111, %s113
    %p120 = scmp.eq.s32.totalorder %s19, 1
    %p121 = por %p119, %p120
    %p122 = scmp.ne.s32.totalorder %s113, %s114
    %p123 = scmp.eq.s32.totalorder %s19, 0
    %p124 = por %p122, %p123
    %p125 = scmp.ne.s32.totalorder %s113, %s114
    %p126 = scmp.eq.s32.totalorder %s20, 1
    %p127 = por %p125, %p126
    %p129 = scmp.ne.s32.totalorder %s114, %s128
    %p130 = scmp.eq.s32.totalorder %s20, 0
    %p131 = por %p129, %p130
    %s133 = sadd.s32 %s132, 1
    %p136 = scmp.eq.s32.totalorder %s14, 1
    %p137 = scmp.ne.s32.totalorder %s132, %s134
    %p138 = scmp.eq.s32.totalorder %s14, 0
    %p139 = por %p137, %p138
    %p140 = scmp.ne.s32.totalorder %s132, %s134
    %p141 = scmp.eq.s32.totalorder %s19, 1
    %p142 = por %p140, %p141
    %p143 = scmp.ne.s32.totalorder %s134, %s135
    %p144 = scmp.eq.s32.totalorder %s19, 0
    %p145 = por %p143, %p144
    %p146 = scmp.ne.s32.totalorder %s134, %s135
    %p147 = scmp.eq.s32.totalorder %s20, 1
    %p148 = por %p146, %p147
    %p150 = scmp.ne.s32.totalorder %s135, %s149
    %p151 = scmp.eq.s32.totalorder %s20, 0
    %p152 = por %p150, %p151
    %s154 = sadd.s32 %s153, 1
    %p157 = scmp.eq.s32.totalorder %s14, 1
    %p158 = scmp.ne.s32.totalorder %s153, %s155
    %p159 = scmp.eq.s32.totalorder %s14, 0
    %p160 = por %p158, %p159
    %p161 = scmp.ne.s32.totalorder %s153, %s155
    %p162 = scmp.eq.s32.totalorder %s19, 1
    %p163 = por %p161, %p162
    %p164 = scmp.ne.s32.totalorder %s155, %s156
    %p165 = scmp.eq.s32.totalorder %s19, 0
    %p166 = por %p164, %p165
    %p167 = scmp.ne.s32.totalorder %s155, %s156
    %p168 = scmp.eq.s32.totalorder %s20, 1
    %p169 = por %p167, %p168
    %p171 = scmp.ne.s32.totalorder %s156, %s170
    %p172 = scmp.eq.s32.totalorder %s20, 0
    %p173 = por %p171, %p172
    %s175 = sadd.s32 %s174, 1
    %p178 = scmp.eq.s32.totalorder %s14, 1
    %p179 = scmp.ne.s32.totalorder %s174, %s176
    %p180 = scmp.eq.s32.totalorder %s14, 0
    %p181 = por %p179, %p180
    %p182 = scmp.ne.s32.totalorder %s174, %s176
    %p183 = scmp.eq.s32.totalorder %s19, 1
    %p184 = por %p182, %p183
    %p185 = scmp.ne.s32.totalorder %s176, %s177
    %p186 = scmp.eq.s32.totalorder %s19, 0
    %p187 = por %p185, %p186
    %p188 = scmp.ne.s32.totalorder %s176, %s177
    %p189 = scmp.eq.s32.totalorder %s20, 1
    %p190 = por %p188, %p189
    %p192 = scmp.ne.s32.totalorder %s177, %s191
    %p193 = scmp.eq.s32.totalorder %s20, 0
    %p194 = por %p192, %p193
    %s195 = ssub.s32 %s14, %s21
    %p196 = scmp.eq.s32.totalorder %s195, 0
    %s198 = sadd.s32 %s197, 1
    %s199 = scalar_select %p196, %s197, %s198
    %p202 = pneg %p196
    %p203 = scmp.eq.s32.totalorder %s14, 1
    %p204 = por %p202, %p203
    %p205 = scmp.ne.s32.totalorder %s197, %s200
    %p206 = scmp.eq.s32.totalorder %s14, 0
    %p207 = por %p205, %p206
    %p208 = scmp.ne.s32.totalorder %s197, %s200
    %p209 = scmp.eq.s32.totalorder %s19, 1
    %p210 = por %p208, %p209
    %p211 = scmp.ne.s32.totalorder %s200, %s201
    %p212 = scmp.eq.s32.totalorder %s19, 0
    %p213 = por %p211, %p212
    %p214 = scmp.ne.s32.totalorder %s200, %s201
    %p215 = scmp.eq.s32.totalorder %s20, 1
    %p216 = por %p214, %p215
    %p218 = scmp.ne.s32.totalorder %s201, %s217
    %p219 = scmp.eq.s32.totalorder %s20, 0
    %p220 = por %p218, %p219
    %p221 = scmp.le.s32.totalorder 1, %s14
    %p222 = scmp.lt.s32.totalorder %s14, 3
    %p223 = pnand %p221, %p222
    %p224 = pneg %p223
    // Predicated region
    $region9: #{net_forward.1} parent=5 // pred_check
      _
    $region10: #{net_forward.1} parent=5 // pred_check_branch
      %226 = sbr.rel (%p223) target = $region12
    $region11: #{net_forward.1} parent=5 // pred_region
      %s227 = ssub.s32 %s14, 1
      // Predicated region
      $region13: #{net_forward.1} parent=11 // pred_check
        %p228 = pneg %p61
      $region14: #{net_forward.1} parent=11 // pred_check_branch
        %230 = sbr.rel (%p228) target = $region16
      $region15: #{net_forward.1} parent=11 // pred_region
        _
      $region16: #{net_forward.1} parent=11 // pred_fallthru
        _
      // Predicated region
      $region17: #{net_forward.1} parent=11 // pred_check
        %p231 = pneg %p82
      $region18: #{net_forward.1} parent=11 // pred_check_branch
        %233 = sbr.rel (%p231) target = $region20
      $region19: #{net_forward.1} parent=11 // pred_region
        _
      $region20: #{net_forward.1} parent=11 // pred_fallthru
        _
      // Predicated region
      $region21: #{net_forward.1} parent=11 // pred_check
        %p234 = pneg %p103
      $region22: #{net_forward.1} parent=11 // pred_check_branch
        %236 = sbr.rel (%p234) target = $region24
      $region23: #{net_forward.1} parent=11 // pred_region
        _
      $region24: #{net_forward.1} parent=11 // pred_fallthru
        _
      // Predicated region
      $region25: #{net_forward.1} parent=11 // pred_check
        %p237 = pneg %p124
      $region26: #{net_forward.1} parent=11 // pred_check_branch
        %239 = sbr.rel (%p237) target = $region28
      $region27: #{net_forward.1} parent=11 // pred_region
        _
      $region28: #{net_forward.1} parent=11 // pred_fallthru
        _
      // Predicated region
      $region29: #{net_forward.1} parent=11 // pred_check
        %p240 = pneg %p145
      $region30: #{net_forward.1} parent=11 // pred_check_branch
        %242 = sbr.rel (%p240) target = $region32
      $region31: #{net_forward.1} parent=11 // pred_region
        _
      $region32: #{net_forward.1} parent=11 // pred_fallthru
        _
      // Predicated region
      $region33: #{net_forward.1} parent=11 // pred_check
        %p243 = pneg %p166
      $region34: #{net_forward.1} parent=11 // pred_check_branch
        %245 = sbr.rel (%p243) target = $region36
      $region35: #{net_forward.1} parent=11 // pred_region
        _
      $region36: #{net_forward.1} parent=11 // pred_fallthru
        _
      // Predicated region
      $region37: #{net_forward.1} parent=11 // pred_check
        %p246 = pneg %p187
      $region38: #{net_forward.1} parent=11 // pred_check_branch
        %248 = sbr.rel (%p246) target = $region40
      $region39: #{net_forward.1} parent=11 // pred_region
        _
      $region40: #{net_forward.1} parent=11 // pred_fallthru
        _
    $region12: #{net_forward.1} parent=5 // pred_fallthru
      _
    %p249 = scmp.lt.s32.totalorder %s14, 2
    // Predicated region
    $region41: #{net_forward.1} parent=5 // pred_check
      %p250 = pneg %p249
    $region42: #{net_forward.1} parent=5 // pred_check_branch
      %252 = sbr.rel (%p250) target = $region44
    $region43: #{net_forward.1} parent=5 // pred_region
      // Predicated region
      $region45: #{net_forward.1} parent=43 // pred_check
        %p253 = pneg %p34
      $region46: #{net_forward.1} parent=43 // pred_check_branch
        %255 = sbr.rel (%p253) target = $region48
      $region47: #{net_forward.1} parent=43 // pred_region
        %p256 = scmp.lt.s32.totalorder %s14, 1
        %s257 = scalar_select %p256, %s14, 1
        %s258 = smul.addr %s257, 172
        %s259 = smul.addr %s258, 4
        %s260 = scalar_lea.vmem %s0, %s259
      $region48: #{net_forward.1} parent=43 // pred_fallthru
        _
    $region44: #{net_forward.1} parent=5 // pred_fallthru
      _
    %p261 = scmp.le.s32.totalorder 1, %s14
    %p262 = scmp.lt.s32.totalorder %s14, 3
    %p263 = pnand %p261, %p262
    %p264 = pneg %p263
    // Predicated region
    $region49: #{net_forward.1} parent=5 // pred_check
      _
    $region50: #{net_forward.1} parent=5 // pred_check_branch
      %266 = sbr.rel (%p263) target = $region52
    $region51: #{net_forward.1} parent=5 // pred_region
      %s267 = ssub.s32 %s14, 1
      %p268 = scmp.lt.s32.totalorder %s19, 1
      %s269 = scalar_select %p268, %s19, 1
      %s270 = smul.addr %s269, 172
      %s271 = smul.addr %s270, 4
      %s272 = scalar_lea.vmem %s0, %s271
      %p273 = pneg %p40
      %p274 = pneg %p37
      %p275 = pneg %p61
      %p276 = pneg %p58
      %p277 = pneg %p82
      %p278 = pneg %p79
      %p279 = pneg %p103
      %p280 = pneg %p100
      %p281 = pneg %p124
      %p282 = pneg %p121
      %p283 = pneg %p145
      %p284 = pneg %p142
      %p285 = pneg %p166
      %p286 = pneg %p163
      %p287 = pneg %p187
      %p288 = pneg %p184
      %p289 = pneg %p213
      %p290 = pneg %p210
      %p291 = scmp.lt.s32.totalorder %s19, 1
      %s292 = scalar_select %p291, %s19, 1
      %s293 = smul.addr %s292, 8
      %s294 = scalar_lea.vmem %s8, %s293
      %p295 = scmp.lt.s32.totalorder %s19, 1
      %s296 = scalar_select %p295, %s19, 1
      %s297 = smul.addr %s296, 172
      %s298 = smul.addr %s297, 4
      %s299 = scalar_lea.vmem %s0, %s298
      %p300 = scmp.lt.s32.totalorder %s19, 1
      %s301 = scalar_select %p300, %s19, 1
      %s302 = smul.addr %s301, 8
      %s303 = scalar_lea.vmem %s8, %s302
      %v305 = vld [vmem:[%s1] sm:$0xf]
      %v306 = vld [vmem:[%s1 + $0x4] sm:$0xf]
      %v307 = vld [vmem:[%s1 + $0x8] sm:$0x3]
      %v308 = vld [vmem:[%s299] sm:$0xff]
      %v309 = vld [vmem:[%s299 + $0x8] sm:$0xff]
      %v310 = vld [vmem:[%s299 + $0x10] sm:$0xff]
      %v311 = vld [vmem:[%s299 + $0x18] sm:$0xff]
      %v312 = vld [vmem:[%s299 + $0x20] sm:$0xff]
      %v313 = vld [vmem:[%s299 + $0x28] sm:$0xff]
      %v314 = vld [vmem:[%s299 + $0x30] sm:$0xff]
      %v315 = vld [vmem:[%s299 + $0x38] sm:$0xff]
      %v316 = vld [vmem:[%s299 + $0x40] sm:$0xff]
      %v317 = vld [vmem:[%s299 + $0x48] sm:$0xff]
      %v318 = vld [vmem:[%s299 + $0x50] sm:$0xff]
      %v319 = vld [vmem:[%s299 + $0x58] sm:$0xff]
      %v320 = vld [vmem:[%s299 + $0x60] sm:$0xff]
      %v321 = vld [vmem:[%s299 + $0x68] sm:$0xff]
      %v322 = vld [vmem:[%s299 + $0x70] sm:$0xff]
      %v323 = vld [vmem:[%s299 + $0x78] sm:$0xff]
      %v324 = vld [vmem:[%s299 + $0x80] sm:$0xff]
      %v325 = vld [vmem:[%s299 + $0x88] sm:$0xff]
      %v326 = vld [vmem:[%s299 + $0x90] sm:$0xff]
      %v327 = vld [vmem:[%s299 + $0x98] sm:$0xff]
      %v328 = vld [vmem:[%s299 + $0xa0] sm:$0xff]
      %v329 = vld [vmem:[%s299 + $0xa8] sm:$0xf]
      %v330 = vld [vmem:[%s299 + $0xac] sm:$0xff]
      %v331 = vld [vmem:[%s299 + $0xb4] sm:$0xff]
      %v332 = vld [vmem:[%s299 + $0xbc] sm:$0xff]
      %v333 = vld [vmem:[%s299 + $0xc4] sm:$0xff]
      %v334 = vld [vmem:[%s299 + $0xcc] sm:$0xff]
      %v335 = vld [vmem:[%s299 + $0xd4] sm:$0xff]
      %v336 = vld [vmem:[%s299 + $0xdc] sm:$0xff]
      %v337 = vld [vmem:[%s299 + $0xe4] sm:$0xff]
      %v338 = vld [vmem:[%s299 + $0xec] sm:$0xff]
      %v339 = vld [vmem:[%s299 + $0xf4] sm:$0xff]
      %v340 = vld [vmem:[%s299 + $0xfc] sm:$0xff]
      %v341 = vld [vmem:[%s299 + $0x104] sm:$0xff]
      %v342 = vld [vmem:[%s299 + $0x10c] sm:$0xff]
      %v343 = vld [vmem:[%s299 + $0x114] sm:$0xff]
      %v344 = vld [vmem:[%s299 + $0x11c] sm:$0xff]
      %v345 = vld [vmem:[%s299 + $0x124] sm:$0xff]
      %v346 = vld [vmem:[%s299 + $0x12c] sm:$0xff]
      %v347 = vld [vmem:[%s299 + $0x134] sm:$0xff]
      %v348 = vld [vmem:[%s299 + $0x13c] sm:$0xff]
      %v349 = vld [vmem:[%s299 + $0x144] sm:$0xff]
      %v350 = vld [vmem:[%s299 + $0x14c] sm:$0xff]
      %v351 = vld [vmem:[%s299 + $0x154] sm:$0xf]
      %v352 = vld [vmem:[%s299 + $0x158] sm:$0xff]
      %v353 = vld [vmem:[%s299 + $0x160] sm:$0xff]
      %v354 = vld [vmem:[%s299 + $0x168] sm:$0xff]
      %v355 = vld [vmem:[%s299 + $0x170] sm:$0xff]
      %v356 = vld [vmem:[%s299 + $0x178] sm:$0xff]
      %v357 = vld [vmem:[%s299 + $0x180] sm:$0xff]
      %v358 = vld [vmem:[%s299 + $0x188] sm:$0xff]
      %v359 = vld [vmem:[%s299 + $0x190] sm:$0xff]
      %v360 = vld [vmem:[%s299 + $0x198] sm:$0xff]
      %v361 = vld [vmem:[%s299 + $0x1a0] sm:$0xff]
      %v362 = vld [vmem:[%s299 + $0x1a8] sm:$0xff]
      %v363 = vld [vmem:[%s299 + $0x1b0] sm:$0xff]
      %v364 = vld [vmem:[%s299 + $0x1b8] sm:$0xff]
      %v365 = vld [vmem:[%s299 + $0x1c0] sm:$0xff]
      %v366 = vld [vmem:[%s299 + $0x1c8] sm:$0xff]
      %v367 = vld [vmem:[%s299 + $0x1d0] sm:$0xff]
      %v368 = vld [vmem:[%s299 + $0x1d8] sm:$0xff]
      %v369 = vld [vmem:[%s299 + $0x1e0] sm:$0xff]
      %v370 = vld [vmem:[%s299 + $0x1e8] sm:$0xff]
      %v371 = vld [vmem:[%s299 + $0x1f0] sm:$0xff]
      %v372 = vld [vmem:[%s299 + $0x1f8] sm:$0xff]
      %v373 = vld [vmem:[%s299 + $0x200] sm:$0xf]
      %v374 = vld [vmem:[%s299 + $0x204] sm:$0x11]
      %v375 = vld [vmem:[%s299 + $0x20c] sm:$0x11]
      %v376 = vld [vmem:[%s299 + $0x214] sm:$0x11]
      %v377 = vld [vmem:[%s299 + $0x21c] sm:$0x11]
      %v378 = vld [vmem:[%s299 + $0x224] sm:$0x11]
      %v379 = vld [vmem:[%s299 + $0x22c] sm:$0x11]
      %v380 = vld [vmem:[%s299 + $0x234] sm:$0x11]
      %v381 = vld [vmem:[%s299 + $0x23c] sm:$0x11]
      %v382 = vld [vmem:[%s299 + $0x244] sm:$0x11]
      %v383 = vld [vmem:[%s299 + $0x24c] sm:$0x11]
      %v384 = vld [vmem:[%s299 + $0x254] sm:$0x11]
      %v385 = vld [vmem:[%s299 + $0x25c] sm:$0x11]
      %v386 = vld [vmem:[%s299 + $0x264] sm:$0x11]
      %v387 = vld [vmem:[%s299 + $0x26c] sm:$0x11]
      %v388 = vld [vmem:[%s299 + $0x274] sm:$0x11]
      %v389 = vld [vmem:[%s299 + $0x27c] sm:$0x11]
      %v390 = vld [vmem:[%s299 + $0x284] sm:$0x11]
      %v391 = vld [vmem:[%s299 + $0x28c] sm:$0x11]
      %v392 = vld [vmem:[%s299 + $0x294] sm:$0x11]
      %v393 = vld [vmem:[%s299 + $0x29c] sm:$0x11]
      %v394 = vld [vmem:[%s299 + $0x2a4] sm:$0x11]
      %v395 = vld [vmem:[%s299 + $0x2ac] sm:$0x1]
      %v399 = vunpack.c.l.b16 %v305
      %v400 = vunpack.c.l.b16 %v306
      %v401 = vunpack.c.l.b16 %v307
      %v402 = vpack.c.b16 %v400, %v399
      %v403 = vpack.c.b16 %v401, %v401
      %v492 = vunpack.c.l.b16 %v308
      %v493 = vunpack.c.h.b16 %v308
      %v494 = vunpack.c.l.b16 %v309
      %v495 = vunpack.c.h.b16 %v309
      %v496 = vunpack.c.l.b16 %v310
      %v497 = vunpack.c.h.b16 %v310
      %v498 = vunpack.c.l.b16 %v311
      %v499 = vunpack.c.h.b16 %v311
      %v500 = vunpack.c.l.b16 %v312
      %v501 = vunpack.c.h.b16 %v312
      %v502 = vunpack.c.l.b16 %v313
      %v503 = vunpack.c.h.b16 %v313
      %v504 = vunpack.c.l.b16 %v314
      %v505 = vunpack.c.h.b16 %v314
      %v506 = vunpack.c.l.b16 %v315
      %v507 = vunpack.c.h.b16 %v315
      %v508 = vunpack.c.l.b16 %v316
      %v509 = vunpack.c.h.b16 %v316
      %v510 = vunpack.c.l.b16 %v317
      %v511 = vunpack.c.h.b16 %v317
      %v512 = vunpack.c.l.b16 %v318
      %v513 = vunpack.c.h.b16 %v318
      %v514 = vunpack.c.l.b16 %v319
      %v515 = vunpack.c.h.b16 %v319
      %v516 = vunpack.c.l.b16 %v320
      %v517 = vunpack.c.h.b16 %v320
      %v518 = vunpack.c.l.b16 %v321
      %v519 = vunpack.c.h.b16 %v321
      %v520 = vunpack.c.l.b16 %v322
      %v521 = vunpack.c.h.b16 %v322
      %v522 = vunpack.c.l.b16 %v323
      %v523 = vunpack.c.h.b16 %v323
      %v524 = vunpack.c.l.b16 %v324
      %v525 = vunpack.c.h.b16 %v324
      %v526 = vunpack.c.l.b16 %v325
      %v527 = vunpack.c.h.b16 %v325
      %v528 = vunpack.c.l.b16 %v326
      %v529 = vunpack.c.h.b16 %v326
      %v530 = vunpack.c.l.b16 %v327
      %v531 = vunpack.c.h.b16 %v327
      %v532 = vunpack.c.l.b16 %v328
      %v533 = vunpack.c.h.b16 %v328
      %v534 = vunpack.c.l.b16 %v329
      %v535 = vunpack.c.l.b16 %v330
      %v536 = vunpack.c.h.b16 %v330
      %v537 = vunpack.c.l.b16 %v331
      %v538 = vunpack.c.h.b16 %v331
      %v539 = vunpack.c.l.b16 %v332
      %v540 = vunpack.c.h.b16 %v332
      %v541 = vunpack.c.l.b16 %v333
      %v542 = vunpack.c.h.b16 %v333
      %v543 = vunpack.c.l.b16 %v334
      %v544 = vunpack.c.h.b16 %v334
      %v545 = vunpack.c.l.b16 %v335
      %v546 = vunpack.c.h.b16 %v335
      %v547 = vunpack.c.l.b16 %v336
      %v548 = vunpack.c.h.b16 %v336
      %v549 = vunpack.c.l.b16 %v337
      %v550 = vunpack.c.h.b16 %v337
      %v551 = vunpack.c.l.b16 %v338
      %v552 = vunpack.c.h.b16 %v338
      %v553 = vunpack.c.l.b16 %v339
      %v554 = vunpack.c.h.b16 %v339
      %v555 = vunpack.c.l.b16 %v340
      %v556 = vunpack.c.h.b16 %v340
      %v557 = vunpack.c.l.b16 %v341
      %v558 = vunpack.c.h.b16 %v341
      %v559 = vunpack.c.l.b16 %v342
      %v560 = vunpack.c.h.b16 %v342
      %v561 = vunpack.c.l.b16 %v343
      %v562 = vunpack.c.h.b16 %v343
      %v563 = vunpack.c.l.b16 %v344
      %v564 = vunpack.c.h.b16 %v344
      %v565 = vunpack.c.l.b16 %v345
      %v566 = vunpack.c.h.b16 %v345
      %v567 = vunpack.c.l.b16 %v346
      %v568 = vunpack.c.h.b16 %v346
      %v569 = vunpack.c.l.b16 %v347
      %v570 = vunpack.c.h.b16 %v347
      %v571 = vunpack.c.l.b16 %v348
      %v572 = vunpack.c.h.b16 %v348
      %v573 = vunpack.c.l.b16 %v349
      %v574 = vunpack.c.h.b16 %v349
      %v575 = vunpack.c.l.b16 %v350
      %v576 = vunpack.c.h.b16 %v350
      %v577 = vunpack.c.l.b16 %v351
      %v578 = vunpack.c.l.b16 %v352
      %v579 = vunpack.c.h.b16 %v352
      %v580 = vunpack.c.l.b16 %v353
      %v581 = vunpack.c.h.b16 %v353
      %v582 = vunpack.c.l.b16 %v354
      %v583 = vunpack.c.h.b16 %v354
      %v584 = vunpack.c.l.b16 %v355
      %v585 = vunpack.c.h.b16 %v355
      %v586 = vunpack.c.l.b16 %v356
      %v587 = vunpack.c.h.b16 %v356
      %v588 = vunpack.c.l.b16 %v357
      %v589 = vunpack.c.h.b16 %v357
      %v590 = vunpack.c.l.b16 %v358
      %v591 = vunpack.c.h.b16 %v358
      %v592 = vunpack.c.l.b16 %v359
      %v593 = vunpack.c.h.b16 %v359
      %v594 = vunpack.c.l.b16 %v360
      %v595 = vunpack.c.h.b16 %v360
      %v596 = vunpack.c.l.b16 %v361
      %v597 = vunpack.c.h.b16 %v361
      %v598 = vunpack.c.l.b16 %v362
      %v599 = vunpack.c.h.b16 %v362
      %v600 = vunpack.c.l.b16 %v363
      %v601 = vunpack.c.h.b16 %v363
      %v602 = vunpack.c.l.b16 %v364
      %v603 = vunpack.c.h.b16 %v364
      %v604 = vunpack.c.l.b16 %v365
      %v605 = vunpack.c.h.b16 %v365
      %v606 = vunpack.c.l.b16 %v366
      %v607 = vunpack.c.h.b16 %v366
      %v608 = vunpack.c.l.b16 %v367
      %v609 = vunpack.c.h.b16 %v367
      %v610 = vunpack.c.l.b16 %v368
      %v611 = vunpack.c.h.b16 %v368
      %v612 = vunpack.c.l.b16 %v369
      %v613 = vunpack.c.h.b16 %v369
      %v614 = vunpack.c.l.b16 %v370
      %v615 = vunpack.c.h.b16 %v370
      %v616 = vunpack.c.l.b16 %v371
      %v617 = vunpack.c.h.b16 %v371
      %v618 = vunpack.c.l.b16 %v372
      %v619 = vunpack.c.h.b16 %v372
      %v620 = vunpack.c.l.b16 %v373
      %v621 = vunpack.c.l.b16 %v374
      %v622 = vunpack.c.h.b16 %v374
      %v623 = vunpack.c.l.b16 %v375
      %v624 = vunpack.c.h.b16 %v375
      %v625 = vunpack.c.l.b16 %v376
      %v626 = vunpack.c.h.b16 %v376
      %v627 = vunpack.c.l.b16 %v377
      %v628 = vunpack.c.h.b16 %v377
      %v629 = vunpack.c.l.b16 %v378
      %v630 = vunpack.c.h.b16 %v378
      %v631 = vunpack.c.l.b16 %v379
      %v632 = vunpack.c.h.b16 %v379
      %v633 = vunpack.c.l.b16 %v380
      %v634 = vunpack.c.h.b16 %v380
      %v635 = vunpack.c.l.b16 %v381
      %v636 = vunpack.c.h.b16 %v381
      %v637 = vunpack.c.l.b16 %v382
      %v638 = vunpack.c.h.b16 %v382
      %v639 = vunpack.c.l.b16 %v383
      %v640 = vunpack.c.h.b16 %v383
      %v641 = vunpack.c.l.b16 %v384
      %v642 = vunpack.c.h.b16 %v384
      %v643 = vunpack.c.l.b16 %v385
      %v644 = vunpack.c.h.b16 %v385
      %v645 = vunpack.c.l.b16 %v386
      %v646 = vunpack.c.h.b16 %v386
      %v647 = vunpack.c.l.b16 %v387
      %v648 = vunpack.c.h.b16 %v387
      %v649 = vunpack.c.l.b16 %v388
      %v650 = vunpack.c.h.b16 %v388
      %v651 = vunpack.c.l.b16 %v389
      %v652 = vunpack.c.h.b16 %v389
      %v653 = vunpack.c.l.b16 %v390
      %v654 = vunpack.c.h.b16 %v390
      %v655 = vunpack.c.l.b16 %v391
      %v656 = vunpack.c.h.b16 %v391
      %v657 = vunpack.c.l.b16 %v392
      %v658 = vunpack.c.h.b16 %v392
      %v659 = vunpack.c.l.b16 %v393
      %v660 = vunpack.c.h.b16 %v393
      %v661 = vunpack.c.l.b16 %v394
      %v662 = vunpack.c.h.b16 %v394
      %v663 = vunpack.c.l.b16 %v395
      %v664 = vpack.c.b16 %v535, %v492
      %v665 = vpack.c.b16 %v536, %v493
      %v666 = vpack.c.b16 %v537, %v494
      %v667 = vpack.c.b16 %v538, %v495
      %v668 = vpack.c.b16 %v539, %v496
      %v669 = vpack.c.b16 %v540, %v497
      %v670 = vpack.c.b16 %v541, %v498
      %v671 = vpack.c.b16 %v542, %v499
      %v672 = vpack.c.b16 %v543, %v500
      %v673 = vpack.c.b16 %v544, %v501
      %v674 = vpack.c.b16 %v545, %v502
      %v675 = vpack.c.b16 %v546, %v503
      %v676 = vpack.c.b16 %v547, %v504
      %v677 = vpack.c.b16 %v548, %v505
      %v678 = vpack.c.b16 %v549, %v506
      %v679 = vpack.c.b16 %v550, %v507
      %v680 = vpack.c.b16 %v551, %v508
      %v681 = vpack.c.b16 %v552, %v509
      %v682 = vpack.c.b16 %v553, %v510
      %v683 = vpack.c.b16 %v554, %v511
      %v684 = vpack.c.b16 %v555, %v512
      %v685 = vpack.c.b16 %v556, %v513
      %v686 = vpack.c.b16 %v557, %v514
      %v687 = vpack.c.b16 %v558, %v515
      %v688 = vpack.c.b16 %v559, %v516
      %v689 = vpack.c.b16 %v560, %v517
      %v690 = vpack.c.b16 %v561, %v518
      %v691 = vpack.c.b16 %v562, %v519
      %v692 = vpack.c.b16 %v563, %v520
      %v693 = vpack.c.b16 %v564, %v521
      %v694 = vpack.c.b16 %v565, %v522
      %v695 = vpack.c.b16 %v566, %v523
      %v696 = vpack.c.b16 %v567, %v524
      %v697 = vpack.c.b16 %v568, %v525
      %v698 = vpack.c.b16 %v569, %v526
      %v699 = vpack.c.b16 %v570, %v527
      %v700 = vpack.c.b16 %v571, %v528
      %v701 = vpack.c.b16 %v572, %v529
      %v702 = vpack.c.b16 %v573, %v530
      %v703 = vpack.c.b16 %v574, %v531
      %v704 = vpack.c.b16 %v575, %v532
      %v705 = vpack.c.b16 %v576, %v533
      %v706 = vpack.c.b16 %v577, %v534
      %v707 = vpack.c.b16 %v621, %v578
      %v708 = vpack.c.b16 %v622, %v579
      %v709 = vpack.c.b16 %v623, %v580
      %v710 = vpack.c.b16 %v624, %v581
      %v711 = vpack.c.b16 %v625, %v582
      %v712 = vpack.c.b16 %v626, %v583
      %v713 = vpack.c.b16 %v627, %v584
      %v714 = vpack.c.b16 %v628, %v585
      %v715 = vpack.c.b16 %v629, %v586
      %v716 = vpack.c.b16 %v630, %v587
      %v717 = vpack.c.b16 %v631, %v588
      %v718 = vpack.c.b16 %v632, %v589
      %v719 = vpack.c.b16 %v633, %v590
      %v720 = vpack.c.b16 %v634, %v591
      %v721 = vpack.c.b16 %v635, %v592
      %v722 = vpack.c.b16 %v636, %v593
      %v723 = vpack.c.b16 %v637, %v594
      %v724 = vpack.c.b16 %v638, %v595
      %v725 = vpack.c.b16 %v639, %v596
      %v726 = vpack.c.b16 %v640, %v597
      %v727 = vpack.c.b16 %v641, %v598
      %v728 = vpack.c.b16 %v642, %v599
      %v729 = vpack.c.b16 %v643, %v600
      %v730 = vpack.c.b16 %v644, %v601
      %v731 = vpack.c.b16 %v645, %v602
      %v732 = vpack.c.b16 %v646, %v603
      %v733 = vpack.c.b16 %v647, %v604
      %v734 = vpack.c.b16 %v648, %v605
      %v735 = vpack.c.b16 %v649, %v606
      %v736 = vpack.c.b16 %v650, %v607
      %v737 = vpack.c.b16 %v651, %v608
      %v738 = vpack.c.b16 %v652, %v609
      %v739 = vpack.c.b16 %v653, %v610
      %v740 = vpack.c.b16 %v654, %v611
      %v741 = vpack.c.b16 %v655, %v612
      %v742 = vpack.c.b16 %v656, %v613
      %v743 = vpack.c.b16 %v657, %v614
      %v744 = vpack.c.b16 %v658, %v615
      %v745 = vpack.c.b16 %v659, %v616
      %v746 = vpack.c.b16 %v660, %v617
      %v747 = vpack.c.b16 %v661, %v618
      %v748 = vpack.c.b16 %v662, %v619
      %v749 = vpack.c.b16 %v663, %v620
      %vm793 = vcmask 203776
      %v795 = vsel %vm793, %v402, 0
      %v798 = vsel %vm793, %v403, 0
      %vm800 = vcmask 1043456
      %vm801 = vcmask 1044480
      %v802 = vsel %vm800, 4294967295, 65535
      %v803 = vsel %vm801, %v802, 0
      %v805 = vand.u32 %v707, %v803
      %v808 = vand.u32 %v708, %v803
      %v811 = vand.u32 %v709, %v803
      %v814 = vand.u32 %v710, %v803
      %v817 = vand.u32 %v711, %v803
      %v820 = vand.u32 %v712, %v803
      %v823 = vand.u32 %v713, %v803
      %v826 = vand.u32 %v714, %v803
      %v829 = vand.u32 %v715, %v803
      %v832 = vand.u32 %v716, %v803
      %v835 = vand.u32 %v717, %v803
      %v838 = vand.u32 %v718, %v803
      %v841 = vand.u32 %v719, %v803
      %v844 = vand.u32 %v720, %v803
      %v847 = vand.u32 %v721, %v803
      %v850 = vand.u32 %v722, %v803
      %v853 = vand.u32 %v723, %v803
      %v856 = vand.u32 %v724, %v803
      %v859 = vand.u32 %v725, %v803
      %v862 = vand.u32 %v726, %v803
      %v865 = vand.u32 %v727, %v803
      %v868 = vand.u32 %v728, %v803
      %v871 = vand.u32 %v729, %v803
      %v874 = vand.u32 %v730, %v803
      %v877 = vand.u32 %v731, %v803
      %v880 = vand.u32 %v732, %v803
      %v883 = vand.u32 %v733, %v803
      %v886 = vand.u32 %v734, %v803
      %v889 = vand.u32 %v735, %v803
      %v892 = vand.u32 %v736, %v803
      %v895 = vand.u32 %v737, %v803
      %v898 = vand.u32 %v738, %v803
      %v901 = vand.u32 %v739, %v803
      %v904 = vand.u32 %v740, %v803
      %v907 = vand.u32 %v741, %v803
      %v910 = vand.u32 %v742, %v803
      %v913 = vand.u32 %v743, %v803
      %v916 = vand.u32 %v744, %v803
      %v919 = vand.u32 %v745, %v803
      %v922 = vand.u32 %v746, %v803
      %v925 = vand.u32 %v747, %v803
      %v928 = vand.u32 %v748, %v803
      %v931 = vand.u32 %v749, %v803
      %933 = vmatpush.bf16.msra.mxu0 0
      %934 = vmatpush.bf16.msra.mxu0 0
      %935 = vmatpush.bf16.msra.mxu0 0
      %936 = vmatpush.bf16.msra.mxu0 0
      %937 = vmatpush.bf16.msra.mxu0 0
      %938 = vmatpush.bf16.msra.mxu0 0
      %939 = vmatpush.bf16.msra.mxu0 %v805
      %940 = vmatpush.bf16.msra.mxu0 %v664
      %941 = vmatmul.bf16.gmra.mxu0 %v795
      %v942 = vpop.f32.mrf.mxu0
      %v943 = vadd.f32 0.0, %v942
      %v944 = vpop.f32.mrf.mxu0
      %v945 = vadd.f32 0.0, %v944
      %946 = vmatmul.bf16.gmra.mxu0 %v798
      %v947 = vpop.f32.mrf.mxu0
      %v948 = vadd.f32 0.0, %v947
      %v949 = vpop.f32.mrf.mxu0
      %950 = vdwg.mxu0
      %951 = vmatpush.bf16.msra.mxu0 0
      %952 = vmatpush.bf16.msra.mxu0 0
      %953 = vmatpush.bf16.msra.mxu0 0
      %954 = vmatpush.bf16.msra.mxu0 0
      %955 = vmatpush.bf16.msra.mxu0 0
      %956 = vmatpush.bf16.msra.mxu0 0
      %957 = vmatpush.bf16.msra.mxu0 %v808
      %958 = vmatpush.bf16.msra.mxu0 %v665
      %959 = vmatmul.bf16.gmra.mxu0 %v795
      %v960 = vpop.f32.mrf.mxu0
      %v961 = vadd.f32 0.0, %v960
      %v962 = vpop.f32.mrf.mxu0
      %v963 = vadd.f32 0.0, %v962
      %964 = vmatmul.bf16.gmra.mxu0 %v798
      %v965 = vpop.f32.mrf.mxu0
      %v966 = vadd.f32 0.0, %v965
      %v967 = vpop.f32.mrf.mxu0
      %968 = vdwg.mxu0
      %969 = vmatpush.bf16.msra.mxu0 0
      %970 = vmatpush.bf16.msra.mxu0 0
      %971 = vmatpush.bf16.msra.mxu0 0
      %972 = vmatpush.bf16.msra.mxu0 0
      %973 = vmatpush.bf16.msra.mxu0 0
      %974 = vmatpush.bf16.msra.mxu0 0
      %975 = vmatpush.bf16.msra.mxu0 %v811
      %976 = vmatpush.bf16.msra.mxu0 %v666
      %977 = vmatmul.bf16.gmra.mxu0 %v795
      %v978 = vpop.f32.mrf.mxu0
      %v979 = vadd.f32 0.0, %v978
      %v980 = vpop.f32.mrf.mxu0
      %v981 = vadd.f32 0.0, %v980
      %982 = vmatmul.bf16.gmra.mxu0 %v798
      %v983 = vpop.f32.mrf.mxu0
      %v984 = vadd.f32 0.0, %v983
      %v985 = vpop.f32.mrf.mxu0
      %986 = vdwg.mxu0
      %987 = vmatpush.bf16.msra.mxu0 0
      %988 = vmatpush.bf16.msra.mxu0 0
      %989 = vmatpush.bf16.msra.mxu0 0
      %990 = vmatpush.bf16.msra.mxu0 0
      %991 = vmatpush.bf16.msra.mxu0 0
      %992 = vmatpush.bf16.msra.mxu0 0
      %993 = vmatpush.bf16.msra.mxu0 %v814
      %994 = vmatpush.bf16.msra.mxu0 %v667
      %995 = vmatmul.bf16.gmra.mxu0 %v795
      %v996 = vpop.f32.mrf.mxu0
      %v997 = vadd.f32 0.0, %v996
      %v998 = vpop.f32.mrf.mxu0
      %v999 = vadd.f32 0.0, %v998
      %1000 = vmatmul.bf16.gmra.mxu0 %v798
      %v1001 = vpop.f32.mrf.mxu0
      %v1002 = vadd.f32 0.0, %v1001
      %v1003 = vpop.f32.mrf.mxu0
      %1004 = vdwg.mxu0
      %1005 = vmatpush.bf16.msra.mxu0 0
      %1006 = vmatpush.bf16.msra.mxu0 0
      %1007 = vmatpush.bf16.msra.mxu0 0
      %1008 = vmatpush.bf16.msra.mxu0 0
      %1009 = vmatpush.bf16.msra.mxu0 0
      %1010 = vmatpush.bf16.msra.mxu0 0
      %1011 = vmatpush.bf16.msra.mxu0 %v817
      %1012 = vmatpush.bf16.msra.mxu0 %v668
      %1013 = vmatmul.bf16.gmra.mxu0 %v795
      %v1014 = vpop.f32.mrf.mxu0
      %v1015 = vadd.f32 0.0, %v1014
      %v1016 = vpop.f32.mrf.mxu0
      %v1017 = vadd.f32 0.0, %v1016
      %1018 = vmatmul.bf16.gmra.mxu0 %v798
      %v1019 = vpop.f32.mrf.mxu0
      %v1020 = vadd.f32 0.0, %v1019
      %v1021 = vpop.f32.mrf.mxu0
      %1022 = vdwg.mxu0
      %1023 = vmatpush.bf16.msra.mxu0 0
      %1024 = vmatpush.bf16.msra.mxu0 0
      %1025 = vmatpush.bf16.msra.mxu0 0
      %1026 = vmatpush.bf16.msra.mxu0 0
      %1027 = vmatpush.bf16.msra.mxu0 0
      %1028 = vmatpush.bf16.msra.mxu0 0
      %1029 = vmatpush.bf16.msra.mxu0 %v820
      %1030 = vmatpush.bf16.msra.mxu0 %v669
      %1031 = vmatmul.bf16.gmra.mxu0 %v795
      %v1032 = vpop.f32.mrf.mxu0
      %v1033 = vadd.f32 0.0, %v1032
      %v1034 = vpop.f32.mrf.mxu0
      %v1035 = vadd.f32 0.0, %v1034
      %1036 = vmatmul.bf16.gmra.mxu0 %v798
      %v1037 = vpop.f32.mrf.mxu0
      %v1038 = vadd.f32 0.0, %v1037
      %v1039 = vpop.f32.mrf.mxu0
      %1040 = vdwg.mxu0
      %1041 = vmatpush.bf16.msra.mxu0 0
      %1042 = vmatpush.bf16.msra.mxu0 0
      %1043 = vmatpush.bf16.msra.mxu0 0
      %1044 = vmatpush.bf16.msra.mxu0 0
      %1045 = vmatpush.bf16.msra.mxu0 0
      %1046 = vmatpush.bf16.msra.mxu0 0
      %1047 = vmatpush.bf16.msra.mxu0 %v823
      %1048 = vmatpush.bf16.msra.mxu0 %v670
      %1049 = vmatmul.bf16.gmra.mxu0 %v795
      %v1050 = vpop.f32.mrf.mxu0
      %v1051 = vadd.f32 0.0, %v1050
      %v1052 = vpop.f32.mrf.mxu0
      %v1053 = vadd.f32 0.0, %v1052
      %1054 = vmatmul.bf16.gmra.mxu0 %v798
      %v1055 = vpop.f32.mrf.mxu0
      %v1056 = vadd.f32 0.0, %v1055
      %v1057 = vpop.f32.mrf.mxu0
      %1058 = vdwg.mxu0
      %1059 = vmatpush.bf16.msra.mxu0 0
      %1060 = vmatpush.bf16.msra.mxu0 0
      %1061 = vmatpush.bf16.msra.mxu0 0
      %1062 = vmatpush.bf16.msra.mxu0 0
      %1063 = vmatpush.bf16.msra.mxu0 0
      %1064 = vmatpush.bf16.msra.mxu0 0
      %1065 = vmatpush.bf16.msra.mxu0 %v826
      %1066 = vmatpush.bf16.msra.mxu0 %v671
      %1067 = vmatmul.bf16.gmra.mxu0 %v795
      %v1068 = vpop.f32.mrf.mxu0
      %v1069 = vadd.f32 0.0, %v1068
      %v1070 = vpop.f32.mrf.mxu0
      %v1071 = vadd.f32 0.0, %v1070
      %1072 = vmatmul.bf16.gmra.mxu0 %v798
      %v1073 = vpop.f32.mrf.mxu0
      %v1074 = vadd.f32 0.0, %v1073
      %v1075 = vpop.f32.mrf.mxu0
      %1076 = vdwg.mxu0
      %1077 = vmatpush.bf16.msra.mxu0 0
      %1078 = vmatpush.bf16.msra.mxu0 0
      %1079 = vmatpush.bf16.msra.mxu0 0
      %1080 = vmatpush.bf16.msra.mxu0 0
      %1081 = vmatpush.bf16.msra.mxu0 0
      %1082 = vmatpush.bf16.msra.mxu0 0
      %1083 = vmatpush.bf16.msra.mxu0 %v829
      %1084 = vmatpush.bf16.msra.mxu0 %v672
      %1085 = vmatmul.bf16.gmra.mxu0 %v795
      %v1086 = vpop.f32.mrf.mxu0
      %v1087 = vadd.f32 0.0, %v1086
      %v1088 = vpop.f32.mrf.mxu0
      %v1089 = vadd.f32 0.0, %v1088
      %1090 = vmatmul.bf16.gmra.mxu0 %v798
      %v1091 = vpop.f32.mrf.mxu0
      %v1092 = vadd.f32 0.0, %v1091
      %v1093 = vpop.f32.mrf.mxu0
      %1094 = vdwg.mxu0
      %1095 = vmatpush.bf16.msra.mxu0 0
      %1096 = vmatpush.bf16.msra.mxu0 0
      %1097 = vmatpush.bf16.msra.mxu0 0
      %1098 = vmatpush.bf16.msra.mxu0 0
      %1099 = vmatpush.bf16.msra.mxu0 0
      %1100 = vmatpush.bf16.msra.mxu0 0
      %1101 = vmatpush.bf16.msra.mxu0 %v832
      %1102 = vmatpush.bf16.msra.mxu0 %v673
      %1103 = vmatmul.bf16.gmra.mxu0 %v795
      %v1104 = vpop.f32.mrf.mxu0
      %v1105 = vadd.f32 0.0, %v1104
      %v1106 = vpop.f32.mrf.mxu0
      %v1107 = vadd.f32 0.0, %v1106
      %1108 = vmatmul.bf16.gmra.mxu0 %v798
      %v1109 = vpop.f32.mrf.mxu0
      %v1110 = vadd.f32 0.0, %v1109
      %v1111 = vpop.f32.mrf.mxu0
      %1112 = vdwg.mxu0
      %1113 = vmatpush.bf16.msra.mxu0 0
      %1114 = vmatpush.bf16.msra.mxu0 0
      %1115 = vmatpush.bf16.msra.mxu0 0
      %1116 = vmatpush.bf16.msra.mxu0 0
      %1117 = vmatpush.bf16.msra.mxu0 0
      %1118 = vmatpush.bf16.msra.mxu0 0
      %1119 = vmatpush.bf16.msra.mxu0 %v835
      %1120 = vmatpush.bf16.msra.mxu0 %v674
      %1121 = vmatmul.bf16.gmra.mxu0 %v795
      %v1122 = vpop.f32.mrf.mxu0
      %v1123 = vadd.f32 0.0, %v1122
      %v1124 = vpop.f32.mrf.mxu0
      %v1125 = vadd.f32 0.0, %v1124
      %1126 = vmatmul.bf16.gmra.mxu0 %v798
      %v1127 = vpop.f32.mrf.mxu0
      %v1128 = vadd.f32 0.0, %v1127
      %v1129 = vpop.f32.mrf.mxu0
      %1130 = vdwg.mxu0
      %1131 = vmatpush.bf16.msra.mxu0 0
      %1132 = vmatpush.bf16.msra.mxu0 0
      %1133 = vmatpush.bf16.msra.mxu0 0
      %1134 = vmatpush.bf16.msra.mxu0 0
      %1135 = vmatpush.bf16.msra.mxu0 0
      %1136 = vmatpush.bf16.msra.mxu0 0
      %1137 = vmatpush.bf16.msra.mxu0 %v838
      %1138 = vmatpush.bf16.msra.mxu0 %v675
      %1139 = vmatmul.bf16.gmra.mxu0 %v795
      %v1140 = vpop.f32.mrf.mxu0
      %v1141 = vadd.f32 0.0, %v1140
      %v1142 = vpop.f32.mrf.mxu0
      %v1143 = vadd.f32 0.0, %v1142
      %1144 = vmatmul.bf16.gmra.mxu0 %v798
      %v1145 = vpop.f32.mrf.mxu0
      %v1146 = vadd.f32 0.0, %v1145
      %v1147 = vpop.f32.mrf.mxu0
      %1148 = vdwg.mxu0
      %1149 = vmatpush.bf16.msra.mxu0 0
      %1150 = vmatpush.bf16.msra.mxu0 0
      %1151 = vmatpush.bf16.msra.mxu0 0
      %1152 = vmatpush.bf16.msra.mxu0 0
      %1153 = vmatpush.bf16.msra.mxu0 0
      %1154 = vmatpush.bf16.msra.mxu0 0
      %1155 = vmatpush.bf16.msra.mxu0 %v841
      %1156 = vmatpush.bf16.msra.mxu0 %v676
      %1157 = vmatmul.bf16.gmra.mxu0 %v795
      %v1158 = vpop.f32.mrf.mxu0
      %v1159 = vadd.f32 0.0, %v1158
      %v1160 = vpop.f32.mrf.mxu0
      %v1161 = vadd.f32 0.0, %v1160
      %1162 = vmatmul.bf16.gmra.mxu0 %v798
      %v1163 = vpop.f32.mrf.mxu0
      %v1164 = vadd.f32 0.0, %v1163
      %v1165 = vpop.f32.mrf.mxu0
      %1166 = vdwg.mxu0
      %1167 = vmatpush.bf16.msra.mxu0 0
      %1168 = vmatpush.bf16.msra.mxu0 0
      %1169 = vmatpush.bf16.msra.mxu0 0
      %1170 = vmatpush.bf16.msra.mxu0 0
      %1171 = vmatpush.bf16.msra.mxu0 0
      %1172 = vmatpush.bf16.msra.mxu0 0
      %1173 = vmatpush.bf16.msra.mxu0 %v844
      %1174 = vmatpush.bf16.msra.mxu0 %v677
      %1175 = vmatmul.bf16.gmra.mxu0 %v795
      %v1176 = vpop.f32.mrf.mxu0
      %v1177 = vadd.f32 0.0, %v1176
      %v1178 = vpop.f32.mrf.mxu0
      %v1179 = vadd.f32 0.0, %v1178
      %1180 = vmatmul.bf16.gmra.mxu0 %v798
      %v1181 = vpop.f32.mrf.mxu0
      %v1182 = vadd.f32 0.0, %v1181
      %v1183 = vpop.f32.mrf.mxu0
      %1184 = vdwg.mxu0
      %1185 = vmatpush.bf16.msra.mxu0 0
      %1186 = vmatpush.bf16.msra.mxu0 0
      %1187 = vmatpush.bf16.msra.mxu0 0
      %1188 = vmatpush.bf16.msra.mxu0 0
      %1189 = vmatpush.bf16.msra.mxu0 0
      %1190 = vmatpush.bf16.msra.mxu0 0
      %1191 = vmatpush.bf16.msra.mxu0 %v847
      %1192 = vmatpush.bf16.msra.mxu0 %v678
      %1193 = vmatmul.bf16.gmra.mxu0 %v795
      %v1194 = vpop.f32.mrf.mxu0
      %v1195 = vadd.f32 0.0, %v1194
      %v1196 = vpop.f32.mrf.mxu0
      %v1197 = vadd.f32 0.0, %v1196
      %1198 = vmatmul.bf16.gmra.mxu0 %v798
      %v1199 = vpop.f32.mrf.mxu0
      %v1200 = vadd.f32 0.0, %v1199
      %v1201 = vpop.f32.mrf.mxu0
      %1202 = vdwg.mxu0
      %1203 = vmatpush.bf16.msra.mxu0 0
      %1204 = vmatpush.bf16.msra.mxu0 0
      %1205 = vmatpush.bf16.msra.mxu0 0
      %1206 = vmatpush.bf16.msra.mxu0 0
      %1207 = vmatpush.bf16.msra.mxu0 0
      %1208 = vmatpush.bf16.msra.mxu0 0
      %1209 = vmatpush.bf16.msra.mxu0 %v850
      %1210 = vmatpush.bf16.msra.mxu0 %v679
      %1211 = vmatmul.bf16.gmra.mxu0 %v795
      %v1212 = vpop.f32.mrf.mxu0
      %v1213 = vadd.f32 0.0, %v1212
      %v1214 = vpop.f32.mrf.mxu0
      %v1215 = vadd.f32 0.0, %v1214
      %1216 = vmatmul.bf16.gmra.mxu0 %v798
      %v1217 = vpop.f32.mrf.mxu0
      %v1218 = vadd.f32 0.0, %v1217
      %v1219 = vpop.f32.mrf.mxu0
      %1220 = vdwg.mxu0
      %1221 = vmatpush.bf16.msra.mxu0 0
      %1222 = vmatpush.bf16.msra.mxu0 0
      %1223 = vmatpush.bf16.msra.mxu0 0
      %1224 = vmatpush.bf16.msra.mxu0 0
      %1225 = vmatpush.bf16.msra.mxu0 0
      %1226 = vmatpush.bf16.msra.mxu0 0
      %1227 = vmatpush.bf16.msra.mxu0 %v853
      %1228 = vmatpush.bf16.msra.mxu0 %v680
      %1229 = vmatmul.bf16.gmra.mxu0 %v795
      %v1230 = vpop.f32.mrf.mxu0
      %v1231 = vadd.f32 0.0, %v1230
      %v1232 = vpop.f32.mrf.mxu0
      %v1233 = vadd.f32 0.0, %v1232
      %1234 = vmatmul.bf16.gmra.mxu0 %v798
      %v1235 = vpop.f32.mrf.mxu0
      %v1236 = vadd.f32 0.0, %v1235
      %v1237 = vpop.f32.mrf.mxu0
      %1238 = vdwg.mxu0
      %1239 = vmatpush.bf16.msra.mxu0 0
      %1240 = vmatpush.bf16.msra.mxu0 0
      %1241 = vmatpush.bf16.msra.mxu0 0
      %1242 = vmatpush.bf16.msra.mxu0 0
      %1243 = vmatpush.bf16.msra.mxu0 0
      %1244 = vmatpush.bf16.msra.mxu0 0
      %1245 = vmatpush.bf16.msra.mxu0 %v856
      %1246 = vmatpush.bf16.msra.mxu0 %v681
      %1247 = vmatmul.bf16.gmra.mxu0 %v795
      %v1248 = vpop.f32.mrf.mxu0
      %v1249 = vadd.f32 0.0, %v1248
      %v1250 = vpop.f32.mrf.mxu0
      %v1251 = vadd.f32 0.0, %v1250
      %1252 = vmatmul.bf16.gmra.mxu0 %v798
      %v1253 = vpop.f32.mrf.mxu0
      %v1254 = vadd.f32 0.0, %v1253
      %v1255 = vpop.f32.mrf.mxu0
      %1256 = vdwg.mxu0
      %1257 = vmatpush.bf16.msra.mxu0 0
      %1258 = vmatpush.bf16.msra.mxu0 0
      %1259 = vmatpush.bf16.msra.mxu0 0
      %1260 = vmatpush.bf16.msra.mxu0 0
      %1261 = vmatpush.bf16.msra.mxu0 0
      %1262 = vmatpush.bf16.msra.mxu0 0
      %1263 = vmatpush.bf16.msra.mxu0 %v859
      %1264 = vmatpush.bf16.msra.mxu0 %v682
      %1265 = vmatmul.bf16.gmra.mxu0 %v795
      %v1266 = vpop.f32.mrf.mxu0
      %v1267 = vadd.f32 0.0, %v1266
      %v1268 = vpop.f32.mrf.mxu0
      %v1269 = vadd.f32 0.0, %v1268
      %1270 = vmatmul.bf16.gmra.mxu0 %v798
      %v1271 = vpop.f32.mrf.mxu0
      %v1272 = vadd.f32 0.0, %v1271
      %v1273 = vpop.f32.mrf.mxu0
      %1274 = vdwg.mxu0
      %1275 = vmatpush.bf16.msra.mxu0 0
      %1276 = vmatpush.bf16.msra.mxu0 0
      %1277 = vmatpush.bf16.msra.mxu0 0
      %1278 = vmatpush.bf16.msra.mxu0 0
      %1279 = vmatpush.bf16.msra.mxu0 0
      %1280 = vmatpush.bf16.msra.mxu0 0
      %1281 = vmatpush.bf16.msra.mxu0 %v862
      %1282 = vmatpush.bf16.msra.mxu0 %v683
      %1283 = vmatmul.bf16.gmra.mxu0 %v795
      %v1284 = vpop.f32.mrf.mxu0
      %v1285 = vadd.f32 0.0, %v1284
      %v1286 = vpop.f32.mrf.mxu0
      %v1287 = vadd.f32 0.0, %v1286
      %1288 = vmatmul.bf16.gmra.mxu0 %v798
      %v1289 = vpop.f32.mrf.mxu0
      %v1290 = vadd.f32 0.0, %v1289
      %v1291 = vpop.f32.mrf.mxu0
      %1292 = vdwg.mxu0
      %1293 = vmatpush.bf16.msra.mxu0 0
      %1294 = vmatpush.bf16.msra.mxu0 0
      %1295 = vmatpush.bf16.msra.mxu0 0
      %1296 = vmatpush.bf16.msra.mxu0 0
      %1297 = vmatpush.bf16.msra.mxu0 0
      %1298 = vmatpush.bf16.msra.mxu0 0
      %1299 = vmatpush.bf16.msra.mxu0 %v865
      %1300 = vmatpush.bf16.msra.mxu0 %v684
      %1301 = vmatmul.bf16.gmra.mxu0 %v795
      %v1302 = vpop.f32.mrf.mxu0
      %v1303 = vadd.f32 0.0, %v1302
      %v1304 = vpop.f32.mrf.mxu0
      %v1305 = vadd.f32 0.0, %v1304
      %1306 = vmatmul.bf16.gmra.mxu0 %v798
      %v1307 = vpop.f32.mrf.mxu0
      %v1308 = vadd.f32 0.0, %v1307
      %v1309 = vpop.f32.mrf.mxu0
      %1310 = vdwg.mxu0
      %1311 = vmatpush.bf16.msra.mxu0 0
      %1312 = vmatpush.bf16.msra.mxu0 0
      %1313 = vmatpush.bf16.msra.mxu0 0
      %1314 = vmatpush.bf16.msra.mxu0 0
      %1315 = vmatpush.bf16.msra.mxu0 0
      %1316 = vmatpush.bf16.msra.mxu0 0
      %1317 = vmatpush.bf16.msra.mxu0 %v868
      %1318 = vmatpush.bf16.msra.mxu0 %v685
      %1319 = vmatmul.bf16.gmra.mxu0 %v795
      %v1320 = vpop.f32.mrf.mxu0
      %v1321 = vadd.f32 0.0, %v1320
      %v1322 = vpop.f32.mrf.mxu0
      %v1323 = vadd.f32 0.0, %v1322
      %1324 = vmatmul.bf16.gmra.mxu0 %v798
      %v1325 = vpop.f32.mrf.mxu0
      %v1326 = vadd.f32 0.0, %v1325
      %v1327 = vpop.f32.mrf.mxu0
      %1328 = vdwg.mxu0
      %1329 = vmatpush.bf16.msra.mxu0 0
      %1330 = vmatpush.bf16.msra.mxu0 0
      %1331 = vmatpush.bf16.msra.mxu0 0
      %1332 = vmatpush.bf16.msra.mxu0 0
      %1333 = vmatpush.bf16.msra.mxu0 0
      %1334 = vmatpush.bf16.msra.mxu0 0
      %1335 = vmatpush.bf16.msra.mxu0 %v871
      %1336 = vmatpush.bf16.msra.mxu0 %v686
      %1337 = vmatmul.bf16.gmra.mxu0 %v795
      %v1338 = vpop.f32.mrf.mxu0
      %v1339 = vadd.f32 0.0, %v1338
      %v1340 = vpop.f32.mrf.mxu0
      %v1341 = vadd.f32 0.0, %v1340
      %1342 = vmatmul.bf16.gmra.mxu0 %v798
      %v1343 = vpop.f32.mrf.mxu0
      %v1344 = vadd.f32 0.0, %v1343
      %v1345 = vpop.f32.mrf.mxu0
      %1346 = vdwg.mxu0
      %1347 = vmatpush.bf16.msra.mxu0 0
      %1348 = vmatpush.bf16.msra.mxu0 0
      %1349 = vmatpush.bf16.msra.mxu0 0
      %1350 = vmatpush.bf16.msra.mxu0 0
      %1351 = vmatpush.bf16.msra.mxu0 0
      %1352 = vmatpush.bf16.msra.mxu0 0
      %1353 = vmatpush.bf16.msra.mxu0 %v874
      %1354 = vmatpush.bf16.msra.mxu0 %v687
      %1355 = vmatmul.bf16.gmra.mxu0 %v795
      %v1356 = vpop.f32.mrf.mxu0
      %v1357 = vadd.f32 0.0, %v1356
      %v1358 = vpop.f32.mrf.mxu0
      %v1359 = vadd.f32 0.0, %v1358
      %1360 = vmatmul.bf16.gmra.mxu0 %v798
      %v1361 = vpop.f32.mrf.mxu0
      %v1362 = vadd.f32 0.0, %v1361
      %v1363 = vpop.f32.mrf.mxu0
      %1364 = vdwg.mxu0
      %1365 = vmatpush.bf16.msra.mxu0 0
      %1366 = vmatpush.bf16.msra.mxu0 0
      %1367 = vmatpush.bf16.msra.mxu0 0
      %1368 = vmatpush.bf16.msra.mxu0 0
      %1369 = vmatpush.bf16.msra.mxu0 0
      %1370 = vmatpush.bf16.msra.mxu0 0
      %1371 = vmatpush.bf16.msra.mxu0 %v877
      %1372 = vmatpush.bf16.msra.mxu0 %v688
      %1373 = vmatmul.bf16.gmra.mxu0 %v795
      %v1374 = vpop.f32.mrf.mxu0
      %v1375 = vadd.f32 0.0, %v1374
      %v1376 = vpop.f32.mrf.mxu0
      %v1377 = vadd.f32 0.0, %v1376
      %1378 = vmatmul.bf16.gmra.mxu0 %v798
      %v1379 = vpop.f32.mrf.mxu0
      %v1380 = vadd.f32 0.0, %v1379
      %v1381 = vpop.f32.mrf.mxu0
      %1382 = vdwg.mxu0
      %1383 = vmatpush.bf16.msra.mxu0 0
      %1384 = vmatpush.bf16.msra.mxu0 0
      %1385 = vmatpush.bf16.msra.mxu0 0
      %1386 = vmatpush.bf16.msra.mxu0 0
      %1387 = vmatpush.bf16.msra.mxu0 0
      %1388 = vmatpush.bf16.msra.mxu0 0
      %1389 = vmatpush.bf16.msra.mxu0 %v880
      %1390 = vmatpush.bf16.msra.mxu0 %v689
      %1391 = vmatmul.bf16.gmra.mxu0 %v795
      %v1392 = vpop.f32.mrf.mxu0
      %v1393 = vadd.f32 0.0, %v1392
      %v1394 = vpop.f32.mrf.mxu0
      %v1395 = vadd.f32 0.0, %v1394
      %1396 = vmatmul.bf16.gmra.mxu0 %v798
      %v1397 = vpop.f32.mrf.mxu0
      %v1398 = vadd.f32 0.0, %v1397
      %v1399 = vpop.f32.mrf.mxu0
      %1400 = vdwg.mxu0
      %1401 = vmatpush.bf16.msra.mxu0 0
      %1402 = vmatpush.bf16.msra.mxu0 0
      %1403 = vmatpush.bf16.msra.mxu0 0
      %1404 = vmatpush.bf16.msra.mxu0 0
      %1405 = vmatpush.bf16.msra.mxu0 0
      %1406 = vmatpush.bf16.msra.mxu0 0
      %1407 = vmatpush.bf16.msra.mxu0 %v883
      %1408 = vmatpush.bf16.msra.mxu0 %v690
      %1409 = vmatmul.bf16.gmra.mxu0 %v795
      %v1410 = vpop.f32.mrf.mxu0
      %v1411 = vadd.f32 0.0, %v1410
      %v1412 = vpop.f32.mrf.mxu0
      %v1413 = vadd.f32 0.0, %v1412
      %1414 = vmatmul.bf16.gmra.mxu0 %v798
      %v1415 = vpop.f32.mrf.mxu0
      %v1416 = vadd.f32 0.0, %v1415
      %v1417 = vpop.f32.mrf.mxu0
      %1418 = vdwg.mxu0
      %1419 = vmatpush.bf16.msra.mxu0 0
      %1420 = vmatpush.bf16.msra.mxu0 0
      %1421 = vmatpush.bf16.msra.mxu0 0
      %1422 = vmatpush.bf16.msra.mxu0 0
      %1423 = vmatpush.bf16.msra.mxu0 0
      %1424 = vmatpush.bf16.msra.mxu0 0
      %1425 = vmatpush.bf16.msra.mxu0 %v886
      %1426 = vmatpush.bf16.msra.mxu0 %v691
      %1427 = vmatmul.bf16.gmra.mxu0 %v795
      %v1428 = vpop.f32.mrf.mxu0
      %v1429 = vadd.f32 0.0, %v1428
      %v1430 = vpop.f32.mrf.mxu0
      %v1431 = vadd.f32 0.0, %v1430
      %1432 = vmatmul.bf16.gmra.mxu0 %v798
      %v1433 = vpop.f32.mrf.mxu0
      %v1434 = vadd.f32 0.0, %v1433
      %v1435 = vpop.f32.mrf.mxu0
      %1436 = vdwg.mxu0
      %1437 = vmatpush.bf16.msra.mxu0 0
      %1438 = vmatpush.bf16.msra.mxu0 0
      %1439 = vmatpush.bf16.msra.mxu0 0
      %1440 = vmatpush.bf16.msra.mxu0 0
      %1441 = vmatpush.bf16.msra.mxu0 0
      %1442 = vmatpush.bf16.msra.mxu0 0
      %1443 = vmatpush.bf16.msra.mxu0 %v889
      %1444 = vmatpush.bf16.msra.mxu0 %v692
      %1445 = vmatmul.bf16.gmra.mxu0 %v795
      %v1446 = vpop.f32.mrf.mxu0
      %v1447 = vadd.f32 0.0, %v1446
      %v1448 = vpop.f32.mrf.mxu0
      %v1449 = vadd.f32 0.0, %v1448
      %1450 = vmatmul.bf16.gmra.mxu0 %v798
      %v1451 = vpop.f32.mrf.mxu0
      %v1452 = vadd.f32 0.0, %v1451
      %v1453 = vpop.f32.mrf.mxu0
      %1454 = vdwg.mxu0
      %1455 = vmatpush.bf16.msra.mxu0 0
      %1456 = vmatpush.bf16.msra.mxu0 0
      %1457 = vmatpush.bf16.msra.mxu0 0
      %1458 = vmatpush.bf16.msra.mxu0 0
      %1459 = vmatpush.bf16.msra.mxu0 0
      %1460 = vmatpush.bf16.msra.mxu0 0
      %1461 = vmatpush.bf16.msra.mxu0 %v892
      %1462 = vmatpush.bf16.msra.mxu0 %v693
      %1463 = vmatmul.bf16.gmra.mxu0 %v795
      %v1464 = vpop.f32.mrf.mxu0
      %v1465 = vadd.f32 0.0, %v1464
      %v1466 = vpop.f32.mrf.mxu0
      %v1467 = vadd.f32 0.0, %v1466
      %1468 = vmatmul.bf16.gmra.mxu0 %v798
      %v1469 = vpop.f32.mrf.mxu0
      %v1470 = vadd.f32 0.0, %v1469
      %v1471 = vpop.f32.mrf.mxu0
      %1472 = vdwg.mxu0
      %1473 = vmatpush.bf16.msra.mxu0 0
      %1474 = vmatpush.bf16.msra.mxu0 0
      %1475 = vmatpush.bf16.msra.mxu0 0
      %1476 = vmatpush.bf16.msra.mxu0 0
      %1477 = vmatpush.bf16.msra.mxu0 0
      %1478 = vmatpush.bf16.msra.mxu0 0
      %1479 = vmatpush.bf16.msra.mxu0 %v895
      %1480 = vmatpush.bf16.msra.mxu0 %v694
      %1481 = vmatmul.bf16.gmra.mxu0 %v795
      %v1482 = vpop.f32.mrf.mxu0
      %v1483 = vadd.f32 0.0, %v1482
      %v1484 = vpop.f32.mrf.mxu0
      %v1485 = vadd.f32 0.0, %v1484
      %1486 = vmatmul.bf16.gmra.mxu0 %v798
      %v1487 = vpop.f32.mrf.mxu0
      %v1488 = vadd.f32 0.0, %v1487
      %v1489 = vpop.f32.mrf.mxu0
      %1490 = vdwg.mxu0
      %1491 = vmatpush.bf16.msra.mxu0 0
      %1492 = vmatpush.bf16.msra.mxu0 0
      %1493 = vmatpush.bf16.msra.mxu0 0
      %1494 = vmatpush.bf16.msra.mxu0 0
      %1495 = vmatpush.bf16.msra.mxu0 0
      %1496 = vmatpush.bf16.msra.mxu0 0
      %1497 = vmatpush.bf16.msra.mxu0 %v898
      %1498 = vmatpush.bf16.msra.mxu0 %v695
      %1499 = vmatmul.bf16.gmra.mxu0 %v795
      %v1500 = vpop.f32.mrf.mxu0
      %v1501 = vadd.f32 0.0, %v1500
      %v1502 = vpop.f32.mrf.mxu0
      %v1503 = vadd.f32 0.0, %v1502
      %1504 = vmatmul.bf16.gmra.mxu0 %v798
      %v1505 = vpop.f32.mrf.mxu0
      %v1506 = vadd.f32 0.0, %v1505
      %v1507 = vpop.f32.mrf.mxu0
      %1508 = vdwg.mxu0
      %1509 = vmatpush.bf16.msra.mxu0 0
      %1510 = vmatpush.bf16.msra.mxu0 0
      %1511 = vmatpush.bf16.msra.mxu0 0
      %1512 = vmatpush.bf16.msra.mxu0 0
      %1513 = vmatpush.bf16.msra.mxu0 0
      %1514 = vmatpush.bf16.msra.mxu0 0
      %1515 = vmatpush.bf16.msra.mxu0 %v901
      %1516 = vmatpush.bf16.msra.mxu0 %v696
      %1517 = vmatmul.bf16.gmra.mxu0 %v795
      %v1518 = vpop.f32.mrf.mxu0
      %v1519 = vadd.f32 0.0, %v1518
      %v1520 = vpop.f32.mrf.mxu0
      %v1521 = vadd.f32 0.0, %v1520
      %1522 = vmatmul.bf16.gmra.mxu0 %v798
      %v1523 = vpop.f32.mrf.mxu0
      %v1524 = vadd.f32 0.0, %v1523
      %v1525 = vpop.f32.mrf.mxu0
      %1526 = vdwg.mxu0
      %1527 = vmatpush.bf16.msra.mxu0 0
      %1528 = vmatpush.bf16.msra.mxu0 0
      %1529 = vmatpush.bf16.msra.mxu0 0
      %1530 = vmatpush.bf16.msra.mxu0 0
      %1531 = vmatpush.bf16.msra.mxu0 0
      %1532 = vmatpush.bf16.msra.mxu0 0
      %1533 = vmatpush.bf16.msra.mxu0 %v904
      %1534 = vmatpush.bf16.msra.mxu0 %v697
      %1535 = vmatmul.bf16.gmra.mxu0 %v795
      %v1536 = vpop.f32.mrf.mxu0
      %v1537 = vadd.f32 0.0, %v1536
      %v1538 = vpop.f32.mrf.mxu0
      %v1539 = vadd.f32 0.0, %v1538
      %1540 = vmatmul.bf16.gmra.mxu0 %v798
      %v1541 = vpop.f32.mrf.mxu0
      %v1542 = vadd.f32 0.0, %v1541
      %v1543 = vpop.f32.mrf.mxu0
      %1544 = vdwg.mxu0
      %1545 = vmatpush.bf16.msra.mxu0 0
      %1546 = vmatpush.bf16.msra.mxu0 0
      %1547 = vmatpush.bf16.msra.mxu0 0
      %1548 = vmatpush.bf16.msra.mxu0 0
      %1549 = vmatpush.bf16.msra.mxu0 0
      %1550 = vmatpush.bf16.msra.mxu0 0
      %1551 = vmatpush.bf16.msra.mxu0 %v907
      %1552 = vmatpush.bf16.msra.mxu0 %v698
      %1553 = vmatmul.bf16.gmra.mxu0 %v795
      %v1554 = vpop.f32.mrf.mxu0
      %v1555 = vadd.f32 0.0, %v1554
      %v1556 = vpop.f32.mrf.mxu0
      %v1557 = vadd.f32 0.0, %v1556
      %1558 = vmatmul.bf16.gmra.mxu0 %v798
      %v1559 = vpop.f32.mrf.mxu0
      %v1560 = vadd.f32 0.0, %v1559
      %v1561 = vpop.f32.mrf.mxu0
      %1562 = vdwg.mxu0
      %1563 = vmatpush.bf16.msra.mxu0 0
      %1564 = vmatpush.bf16.msra.mxu0 0
      %1565 = vmatpush.bf16.msra.mxu0 0
      %1566 = vmatpush.bf16.msra.mxu0 0
      %1567 = vmatpush.bf16.msra.mxu0 0
      %1568 = vmatpush.bf16.msra.mxu0 0
      %1569 = vmatpush.bf16.msra.mxu0 %v910
      %1570 = vmatpush.bf16.msra.mxu0 %v699
      %1571 = vmatmul.bf16.gmra.mxu0 %v795
      %v1572 = vpop.f32.mrf.mxu0
      %v1573 = vadd.f32 0.0, %v1572
      %v1574 = vpop.f32.mrf.mxu0
      %v1575 = vadd.f32 0.0, %v1574
      %1576 = vmatmul.bf16.gmra.mxu0 %v798
      %v1577 = vpop.f32.mrf.mxu0
      %v1578 = vadd.f32 0.0, %v1577
      %v1579 = vpop.f32.mrf.mxu0
      %1580 = vdwg.mxu0
      %1581 = vmatpush.bf16.msra.mxu0 0
      %1582 = vmatpush.bf16.msra.mxu0 0
      %1583 = vmatpush.bf16.msra.mxu0 0
      %1584 = vmatpush.bf16.msra.mxu0 0
      %1585 = vmatpush.bf16.msra.mxu0 0
      %1586 = vmatpush.bf16.msra.mxu0 0
      %1587 = vmatpush.bf16.msra.mxu0 %v913
      %1588 = vmatpush.bf16.msra.mxu0 %v700
      %1589 = vmatmul.bf16.gmra.mxu0 %v795
      %v1590 = vpop.f32.mrf.mxu0
      %v1591 = vadd.f32 0.0, %v1590
      %v1592 = vpop.f32.mrf.mxu0
      %v1593 = vadd.f32 0.0, %v1592
      %1594 = vmatmul.bf16.gmra.mxu0 %v798
      %v1595 = vpop.f32.mrf.mxu0
      %v1596 = vadd.f32 0.0, %v1595
      %v1597 = vpop.f32.mrf.mxu0
      %1598 = vdwg.mxu0
      %1599 = vmatpush.bf16.msra.mxu0 0
      %1600 = vmatpush.bf16.msra.mxu0 0
      %1601 = vmatpush.bf16.msra.mxu0 0
      %1602 = vmatpush.bf16.msra.mxu0 0
      %1603 = vmatpush.bf16.msra.mxu0 0
      %1604 = vmatpush.bf16.msra.mxu0 0
      %1605 = vmatpush.bf16.msra.mxu0 %v916
      %1606 = vmatpush.bf16.msra.mxu0 %v701
      %1607 = vmatmul.bf16.gmra.mxu0 %v795
      %v1608 = vpop.f32.mrf.mxu0
      %v1609 = vadd.f32 0.0, %v1608
      %v1610 = vpop.f32.mrf.mxu0
      %v1611 = vadd.f32 0.0, %v1610
      %1612 = vmatmul.bf16.gmra.mxu0 %v798
      %v1613 = vpop.f32.mrf.mxu0
      %v1614 = vadd.f32 0.0, %v1613
      %v1615 = vpop.f32.mrf.mxu0
      %1616 = vdwg.mxu0
      %1617 = vmatpush.bf16.msra.mxu0 0
      %1618 = vmatpush.bf16.msra.mxu0 0
      %1619 = vmatpush.bf16.msra.mxu0 0
      %1620 = vmatpush.bf16.msra.mxu0 0
      %1621 = vmatpush.bf16.msra.mxu0 0
      %1622 = vmatpush.bf16.msra.mxu0 0
      %1623 = vmatpush.bf16.msra.mxu0 %v919
      %1624 = vmatpush.bf16.msra.mxu0 %v702
      %1625 = vmatmul.bf16.gmra.mxu0 %v795
      %v1626 = vpop.f32.mrf.mxu0
      %v1627 = vadd.f32 0.0, %v1626
      %v1628 = vpop.f32.mrf.mxu0
      %v1629 = vadd.f32 0.0, %v1628
      %1630 = vmatmul.bf16.gmra.mxu0 %v798
      %v1631 = vpop.f32.mrf.mxu0
      %v1632 = vadd.f32 0.0, %v1631
      %v1633 = vpop.f32.mrf.mxu0
      %1634 = vdwg.mxu0
      %1635 = vmatpush.bf16.msra.mxu0 0
      %1636 = vmatpush.bf16.msra.mxu0 0
      %1637 = vmatpush.bf16.msra.mxu0 0
      %1638 = vmatpush.bf16.msra.mxu0 0
      %1639 = vmatpush.bf16.msra.mxu0 0
      %1640 = vmatpush.bf16.msra.mxu0 0
      %1641 = vmatpush.bf16.msra.mxu0 %v922
      %1642 = vmatpush.bf16.msra.mxu0 %v703
      %1643 = vmatmul.bf16.gmra.mxu0 %v795
      %v1644 = vpop.f32.mrf.mxu0
      %v1645 = vadd.f32 0.0, %v1644
      %v1646 = vpop.f32.mrf.mxu0
      %v1647 = vadd.f32 0.0, %v1646
      %1648 = vmatmul.bf16.gmra.mxu0 %v798
      %v1649 = vpop.f32.mrf.mxu0
      %v1650 = vadd.f32 0.0, %v1649
      %v1651 = vpop.f32.mrf.mxu0
      %1652 = vdwg.mxu0
      %1653 = vmatpush.bf16.msra.mxu0 0
      %1654 = vmatpush.bf16.msra.mxu0 0
      %1655 = vmatpush.bf16.msra.mxu0 0
      %1656 = vmatpush.bf16.msra.mxu0 0
      %1657 = vmatpush.bf16.msra.mxu0 0
      %1658 = vmatpush.bf16.msra.mxu0 0
      %1659 = vmatpush.bf16.msra.mxu0 %v925
      %1660 = vmatpush.bf16.msra.mxu0 %v704
      %1661 = vmatmul.bf16.gmra.mxu0 %v795
      %v1662 = vpop.f32.mrf.mxu0
      %v1663 = vadd.f32 0.0, %v1662
      %v1664 = vpop.f32.mrf.mxu0
      %v1665 = vadd.f32 0.0, %v1664
      %1666 = vmatmul.bf16.gmra.mxu0 %v798
      %v1667 = vpop.f32.mrf.mxu0
      %v1668 = vadd.f32 0.0, %v1667
      %v1669 = vpop.f32.mrf.mxu0
      %1670 = vdwg.mxu0
      %1671 = vmatpush.bf16.msra.mxu0 0
      %1672 = vmatpush.bf16.msra.mxu0 0
      %1673 = vmatpush.bf16.msra.mxu0 0
      %1674 = vmatpush.bf16.msra.mxu0 0
      %1675 = vmatpush.bf16.msra.mxu0 0
      %1676 = vmatpush.bf16.msra.mxu0 0
      %1677 = vmatpush.bf16.msra.mxu0 %v928
      %1678 = vmatpush.bf16.msra.mxu0 %v705
      %1679 = vmatmul.bf16.gmra.mxu0 %v795
      %v1680 = vpop.f32.mrf.mxu0
      %v1681 = vadd.f32 0.0, %v1680
      %v1682 = vpop.f32.mrf.mxu0
      %v1683 = vadd.f32 0.0, %v1682
      %1684 = vmatmul.bf16.gmra.mxu0 %v798
      %v1685 = vpop.f32.mrf.mxu0
      %v1686 = vadd.f32 0.0, %v1685
      %v1687 = vpop.f32.mrf.mxu0
      %1688 = vdwg.mxu0
      %1689 = vmatpush.bf16.msra.mxu0 0
      %1690 = vmatpush.bf16.msra.mxu0 0
      %1691 = vmatpush.bf16.msra.mxu0 0
      %1692 = vmatpush.bf16.msra.mxu0 0
      %1693 = vmatpush.bf16.msra.mxu0 0
      %1694 = vmatpush.bf16.msra.mxu0 0
      %1695 = vmatpush.bf16.msra.mxu0 %v931
      %1696 = vmatpush.bf16.msra.mxu0 %v706
      %1697 = vmatmul.bf16.gmra.mxu0 %v795
      %v1698 = vpop.f32.mrf.mxu0
      %v1699 = vadd.f32 0.0, %v1698
      %v1700 = vpop.f32.mrf.mxu0
      %v1701 = vadd.f32 0.0, %v1700
      %1702 = vmatmul.bf16.gmra.mxu0 %v798
      %v1703 = vpop.f32.mrf.mxu0
      %v1704 = vadd.f32 0.0, %v1703
      %v1705 = vpop.f32.mrf.mxu0
      %1706 = vdwg.mxu0
      %1743 = vrot.lane.b32.xlu0 %v1123, 56
      %v1744 = vpop.permute.xlu0 %1743
      %1745 = vrot.lane.b32.xlu0 %v1141, 56
      %v1746 = vpop.permute.xlu0 %1745
      %1747 = vrot.lane.b32.xlu0 %v1159, 56
      %v1748 = vpop.permute.xlu0 %1747
      %1749 = vrot.lane.b32.xlu0 %v1177, 56
      %v1750 = vpop.permute.xlu0 %1749
      %1751 = vrot.lane.b32.xlu0 %v1195, 56
      %v1752 = vpop.permute.xlu0 %1751
      %1753 = vrot.lane.b32.xlu0 %v1213, 56
      %v1754 = vpop.permute.xlu0 %1753
      %1755 = vrot.lane.b32.xlu0 %v1231, 56
      %v1756 = vpop.permute.xlu0 %1755
      %1757 = vrot.lane.b32.xlu0 %v1249, 56
      %v1758 = vpop.permute.xlu0 %1757
      %1759 = vrot.lane.b32.xlu0 %v1267, 56
      %v1760 = vpop.permute.xlu0 %1759
      %1761 = vrot.lane.b32.xlu0 %v1285, 56
      %v1762 = vpop.permute.xlu0 %1761
      %1763 = vrot.lane.b32.xlu0 %v1303, 56
      %v1764 = vpop.permute.xlu0 %1763
      %1765 = vrot.lane.b32.xlu0 %v1321, 56
      %v1766 = vpop.permute.xlu0 %1765
      %1767 = vrot.lane.b32.xlu0 %v1125, 56
      %v1768 = vpop.permute.xlu0 %1767
      %1769 = vrot.lane.b32.xlu0 %v1143, 56
      %v1770 = vpop.permute.xlu0 %1769
      %1771 = vrot.lane.b32.xlu0 %v1161, 56
      %v1772 = vpop.permute.xlu0 %1771
      %1773 = vrot.lane.b32.xlu0 %v1179, 56
      %v1774 = vpop.permute.xlu0 %1773
      %1775 = vrot.lane.b32.xlu0 %v1197, 56
      %v1776 = vpop.permute.xlu0 %1775
      %1777 = vrot.lane.b32.xlu0 %v1215, 56
      %v1778 = vpop.permute.xlu0 %1777
      %1779 = vrot.lane.b32.xlu0 %v1233, 56
      %v1780 = vpop.permute.xlu0 %1779
      %1781 = vrot.lane.b32.xlu0 %v1251, 56
      %v1782 = vpop.permute.xlu0 %1781
      %1783 = vrot.lane.b32.xlu0 %v1269, 56
      %v1784 = vpop.permute.xlu0 %1783
      %1785 = vrot.lane.b32.xlu0 %v1287, 56
      %v1786 = vpop.permute.xlu0 %1785
      %1787 = vrot.lane.b32.xlu0 %v1305, 56
      %v1788 = vpop.permute.xlu0 %1787
      %1789 = vrot.lane.b32.xlu0 %v1323, 56
      %v1790 = vpop.permute.xlu0 %1789
      %1791 = vrot.lane.b32.xlu0 %v1128, 56
      %v1792 = vpop.permute.xlu0 %1791
      %1793 = vrot.lane.b32.xlu0 %v1146, 56
      %v1794 = vpop.permute.xlu0 %1793
      %1795 = vrot.lane.b32.xlu0 %v1164, 56
      %v1796 = vpop.permute.xlu0 %1795
      %1797 = vrot.lane.b32.xlu0 %v1182, 56
      %v1798 = vpop.permute.xlu0 %1797
      %1799 = vrot.lane.b32.xlu0 %v1200, 56
      %v1800 = vpop.permute.xlu0 %1799
      %1801 = vrot.lane.b32.xlu0 %v1218, 56
      %v1802 = vpop.permute.xlu0 %1801
      %1803 = vrot.lane.b32.xlu0 %v1236, 56
      %v1804 = vpop.permute.xlu0 %1803
      %1805 = vrot.lane.b32.xlu0 %v1254, 56
      %v1806 = vpop.permute.xlu0 %1805
      %1807 = vrot.lane.b32.xlu0 %v1272, 56
      %v1808 = vpop.permute.xlu0 %1807
      %1809 = vrot.lane.b32.xlu0 %v1290, 56
      %v1810 = vpop.permute.xlu0 %1809
      %1811 = vrot.lane.b32.xlu0 %v1308, 56
      %v1812 = vpop.permute.xlu0 %1811
      %1813 = vrot.lane.b32.xlu0 %v1326, 56
      %v1814 = vpop.permute.xlu0 %1813
      %vm1815 = vcmask 457728
      %v1816 = vsel %vm1815, %v1744, %v1746
      %v1817 = vsel %vm1815, %v1746, %v1748
      %v1818 = vsel %vm1815, %v1748, %v1750
      %v1819 = vsel %vm1815, %v1750, %v1752
      %v1820 = vsel %vm1815, %v1752, %v1754
      %v1821 = vsel %vm1815, %v1754, %v1756
      %v1822 = vsel %vm1815, %v1756, %v1758
      %v1823 = vsel %vm1815, %v1758, %v1760
      %v1824 = vsel %vm1815, %v1760, %v1762
      %v1825 = vsel %vm1815, %v1762, %v1764
      %v1826 = vsel %vm1815, %v1764, %v1766
      %v1827 = vsel %vm1815, %v1768, %v1770
      %v1828 = vsel %vm1815, %v1770, %v1772
      %v1829 = vsel %vm1815, %v1772, %v1774
      %v1830 = vsel %vm1815, %v1774, %v1776
      %v1831 = vsel %vm1815, %v1776, %v1778
      %v1832 = vsel %vm1815, %v1778, %v1780
      %v1833 = vsel %vm1815, %v1780, %v1782
      %v1834 = vsel %vm1815, %v1782, %v1784
      %v1835 = vsel %vm1815, %v1784, %v1786
      %v1836 = vsel %vm1815, %v1786, %v1788
      %v1837 = vsel %vm1815, %v1788, %v1790
      %v1838 = vsel %vm1815, %v1792, %v1794
      %v1839 = vsel %vm1815, %v1794, %v1796
      %v1840 = vsel %vm1815, %v1796, %v1798
      %v1841 = vsel %vm1815, %v1798, %v1800
      %v1842 = vsel %vm1815, %v1800, %v1802
      %v1843 = vsel %vm1815, %v1802, %v1804
      %v1844 = vsel %vm1815, %v1804, %v1806
      %v1845 = vsel %vm1815, %v1806, %v1808
      %v1846 = vsel %vm1815, %v1808, %v1810
      %v1847 = vsel %vm1815, %v1810, %v1812
      %v1848 = vsel %vm1815, %v1812, %v1814
      %v1882 = vmax.f32 %v943, %v1816
      %v1883 = vmax.f32 %v961, %v1817
      %v1884 = vmax.f32 %v979, %v1818
      %v1885 = vmax.f32 %v997, %v1819
      %v1886 = vmax.f32 %v1015, %v1820
      %v1887 = vmax.f32 %v1033, %v1821
      %v1888 = vmax.f32 %v1051, %v1822
      %v1889 = vmax.f32 %v1069, %v1823
      %v1890 = vmax.f32 %v1087, %v1824
      %v1891 = vmax.f32 %v1105, %v1825
      %v1892 = vmax.f32 %v1123, %v1826
      %v1893 = vmax.f32 %v945, %v1827
      %v1894 = vmax.f32 %v963, %v1828
      %v1895 = vmax.f32 %v981, %v1829
      %v1896 = vmax.f32 %v999, %v1830
      %v1897 = vmax.f32 %v1017, %v1831
      %v1898 = vmax.f32 %v1035, %v1832
      %v1899 = vmax.f32 %v1053, %v1833
      %v1900 = vmax.f32 %v1071, %v1834
      %v1901 = vmax.f32 %v1089, %v1835
      %v1902 = vmax.f32 %v1107, %v1836
      %v1903 = vmax.f32 %v1125, %v1837
      %v1904 = vmax.f32 %v948, %v1838
      %v1905 = vmax.f32 %v966, %v1839
      %v1906 = vmax.f32 %v984, %v1840
      %v1907 = vmax.f32 %v1002, %v1841
      %v1908 = vmax.f32 %v1020, %v1842
      %v1909 = vmax.f32 %v1038, %v1843
      %v1910 = vmax.f32 %v1056, %v1844
      %v1911 = vmax.f32 %v1074, %v1845
      %v1912 = vmax.f32 %v1092, %v1846
      %v1913 = vmax.f32 %v1110, %v1847
      %v1914 = vmax.f32 %v1128, %v1848
      %1951 = vrot.lane.b32.xlu0 %v1501, 56
      %v1952 = vpop.permute.xlu0 %1951
      %1953 = vrot.lane.b32.xlu0 %v1519, 56
      %v1954 = vpop.permute.xlu0 %1953
      %1955 = vrot.lane.b32.xlu0 %v1537, 56
      %v1956 = vpop.permute.xlu0 %1955
      %1957 = vrot.lane.b32.xlu0 %v1555, 56
      %v1958 = vpop.permute.xlu0 %1957
      %1959 = vrot.lane.b32.xlu0 %v1573, 56
      %v1960 = vpop.permute.xlu0 %1959
      %1961 = vrot.lane.b32.xlu0 %v1591, 56
      %v1962 = vpop.permute.xlu0 %1961
      %1963 = vrot.lane.b32.xlu0 %v1609, 56
      %v1964 = vpop.permute.xlu0 %1963
      %1965 = vrot.lane.b32.xlu0 %v1627, 56
      %v1966 = vpop.permute.xlu0 %1965
      %1967 = vrot.lane.b32.xlu0 %v1645, 56
      %v1968 = vpop.permute.xlu0 %1967
      %1969 = vrot.lane.b32.xlu0 %v1663, 56
      %v1970 = vpop.permute.xlu0 %1969
      %1971 = vrot.lane.b32.xlu0 %v1681, 56
      %v1972 = vpop.permute.xlu0 %1971
      %1973 = vrot.lane.b32.xlu0 %v1699, 56
      %v1974 = vpop.permute.xlu0 %1973
      %1975 = vrot.lane.b32.xlu0 %v1503, 56
      %v1976 = vpop.permute.xlu0 %1975
      %1977 = vrot.lane.b32.xlu0 %v1521, 56
      %v1978 = vpop.permute.xlu0 %1977
      %1979 = vrot.lane.b32.xlu0 %v1539, 56
      %v1980 = vpop.permute.xlu0 %1979
      %1981 = vrot.lane.b32.xlu0 %v1557, 56
      %v1982 = vpop.permute.xlu0 %1981
      %1983 = vrot.lane.b32.xlu0 %v1575, 56
      %v1984 = vpop.permute.xlu0 %1983
      %1985 = vrot.lane.b32.xlu0 %v1593, 56
      %v1986 = vpop.permute.xlu0 %1985
      %1987 = vrot.lane.b32.xlu0 %v1611, 56
      %v1988 = vpop.permute.xlu0 %1987
      %1989 = vrot.lane.b32.xlu0 %v1629, 56
      %v1990 = vpop.permute.xlu0 %1989
      %1991 = vrot.lane.b32.xlu0 %v1647, 56
      %v1992 = vpop.permute.xlu0 %1991
      %1993 = vrot.lane.b32.xlu0 %v1665, 56
      %v1994 = vpop.permute.xlu0 %1993
      %1995 = vrot.lane.b32.xlu0 %v1683, 56
      %v1996 = vpop.permute.xlu0 %1995
      %1997 = vrot.lane.b32.xlu0 %v1701, 56
      %v1998 = vpop.permute.xlu0 %1997
      %1999 = vrot.lane.b32.xlu0 %v1506, 56
      %v2000 = vpop.permute.xlu0 %1999
      %2001 = vrot.lane.b32.xlu0 %v1524, 56
      %v2002 = vpop.permute.xlu0 %2001
      %2003 = vrot.lane.b32.xlu0 %v1542, 56
      %v2004 = vpop.permute.xlu0 %2003
      %2005 = vrot.lane.b32.xlu0 %v1560, 56
      %v2006 = vpop.permute.xlu0 %2005
      %2007 = vrot.lane.b32.xlu0 %v1578, 56
      %v2008 = vpop.permute.xlu0 %2007
      %2009 = vrot.lane.b32.xlu0 %v1596, 56
      %v2010 = vpop.permute.xlu0 %2009
      %2011 = vrot.lane.b32.xlu0 %v1614, 56
      %v2012 = vpop.permute.xlu0 %2011
      %2013 = vrot.lane.b32.xlu0 %v1632, 56
      %v2014 = vpop.permute.xlu0 %2013
      %2015 = vrot.lane.b32.xlu0 %v1650, 56
      %v2016 = vpop.permute.xlu0 %2015
      %2017 = vrot.lane.b32.xlu0 %v1668, 56
      %v2018 = vpop.permute.xlu0 %2017
      %2019 = vrot.lane.b32.xlu0 %v1686, 56
      %v2020 = vpop.permute.xlu0 %2019
      %2021 = vrot.lane.b32.xlu0 %v1704, 56
      %v2022 = vpop.permute.xlu0 %2021
      %v2023 = vsel %vm1815, %v1952, %v1954
      %v2024 = vsel %vm1815, %v1954, %v1956
      %v2025 = vsel %vm1815, %v1956, %v1958
      %v2026 = vsel %vm1815, %v1958, %v1960
      %v2027 = vsel %vm1815, %v1960, %v1962
      %v2028 = vsel %vm1815, %v1962, %v1964
      %v2029 = vsel %vm1815, %v1964, %v1966
      %v2030 = vsel %vm1815, %v1966, %v1968
      %v2031 = vsel %vm1815, %v1968, %v1970
      %v2032 = vsel %vm1815, %v1970, %v1972
      %v2033 = vsel %vm1815, %v1972, %v1974
      %v2034 = vsel %vm1815, %v1976, %v1978
      %v2035 = vsel %vm1815, %v1978, %v1980
      %v2036 = vsel %vm1815, %v1980, %v1982
      %v2037 = vsel %vm1815, %v1982, %v1984
      %v2038 = vsel %vm1815, %v1984, %v1986
      %v2039 = vsel %vm1815, %v1986, %v1988
      %v2040 = vsel %vm1815, %v1988, %v1990
      %v2041 = vsel %vm1815, %v1990, %v1992
      %v2042 = vsel %vm1815, %v1992, %v1994
      %v2043 = vsel %vm1815, %v1994, %v1996
      %v2044 = vsel %vm1815, %v1996, %v1998
      %v2045 = vsel %vm1815, %v2000, %v2002
      %v2046 = vsel %vm1815, %v2002, %v2004
      %v2047 = vsel %vm1815, %v2004, %v2006
      %v2048 = vsel %vm1815, %v2006, %v2008
      %v2049 = vsel %vm1815, %v2008, %v2010
      %v2050 = vsel %vm1815, %v2010, %v2012
      %v2051 = vsel %vm1815, %v2012, %v2014
      %v2052 = vsel %vm1815, %v2014, %v2016
      %v2053 = vsel %vm1815, %v2016, %v2018
      %v2054 = vsel %vm1815, %v2018, %v2020
      %v2055 = vsel %vm1815, %v2020, %v2022
      %v2089 = vmax.f32 %v1321, %v2023
      %v2090 = vmax.f32 %v1339, %v2024
      %v2091 = vmax.f32 %v1357, %v2025
      %v2092 = vmax.f32 %v1375, %v2026
      %v2093 = vmax.f32 %v1393, %v2027
      %v2094 = vmax.f32 %v1411, %v2028
      %v2095 = vmax.f32 %v1429, %v2029
      %v2096 = vmax.f32 %v1447, %v2030
      %v2097 = vmax.f32 %v1465, %v2031
      %v2098 = vmax.f32 %v1483, %v2032
      %v2099 = vmax.f32 %v1501, %v2033
      %v2100 = vmax.f32 %v1323, %v2034
      %v2101 = vmax.f32 %v1341, %v2035
      %v2102 = vmax.f32 %v1359, %v2036
      %v2103 = vmax.f32 %v1377, %v2037
      %v2104 = vmax.f32 %v1395, %v2038
      %v2105 = vmax.f32 %v1413, %v2039
      %v2106 = vmax.f32 %v1431, %v2040
      %v2107 = vmax.f32 %v1449, %v2041
      %v2108 = vmax.f32 %v1467, %v2042
      %v2109 = vmax.f32 %v1485, %v2043
      %v2110 = vmax.f32 %v1503, %v2044
      %v2111 = vmax.f32 %v1326, %v2045
      %v2112 = vmax.f32 %v1344, %v2046
      %v2113 = vmax.f32 %v1362, %v2047
      %v2114 = vmax.f32 %v1380, %v2048
      %v2115 = vmax.f32 %v1398, %v2049
      %v2116 = vmax.f32 %v1416, %v2050
      %v2117 = vmax.f32 %v1434, %v2051
      %v2118 = vmax.f32 %v1452, %v2052
      %v2119 = vmax.f32 %v1470, %v2053
      %v2120 = vmax.f32 %v1488, %v2054
      %v2121 = vmax.f32 %v1506, %v2055
      %2155 = vrot.lane.b32.xlu0 %v2089, 112
      %v2156 = vpop.permute.xlu0 %2155
      %2157 = vrot.lane.b32.xlu0 %v2090, 112
      %v2158 = vpop.permute.xlu0 %2157
      %2159 = vrot.lane.b32.xlu0 %v2091, 112
      %v2160 = vpop.permute.xlu0 %2159
      %2161 = vrot.lane.b32.xlu0 %v2092, 112
      %v2162 = vpop.permute.xlu0 %2161
      %2163 = vrot.lane.b32.xlu0 %v2093, 112
      %v2164 = vpop.permute.xlu0 %2163
      %2165 = vrot.lane.b32.xlu0 %v2094, 112
      %v2166 = vpop.permute.xlu0 %2165
      %2167 = vrot.lane.b32.xlu0 %v2095, 112
      %v2168 = vpop.permute.xlu0 %2167
      %2169 = vrot.lane.b32.xlu0 %v2096, 112
      %v2170 = vpop.permute.xlu0 %2169
      %2171 = vrot.lane.b32.xlu0 %v2097, 112
      %v2172 = vpop.permute.xlu0 %2171
      %2173 = vrot.lane.b32.xlu0 %v2098, 112
      %v2174 = vpop.permute.xlu0 %2173
      %2175 = vrot.lane.b32.xlu0 %v2099, 112
      %v2176 = vpop.permute.xlu0 %2175
      %2177 = vrot.lane.b32.xlu0 %v2100, 112
      %v2178 = vpop.permute.xlu0 %2177
      %2179 = vrot.lane.b32.xlu0 %v2101, 112
      %v2180 = vpop.permute.xlu0 %2179
      %2181 = vrot.lane.b32.xlu0 %v2102, 112
      %v2182 = vpop.permute.xlu0 %2181
      %2183 = vrot.lane.b32.xlu0 %v2103, 112
      %v2184 = vpop.permute.xlu0 %2183
      %2185 = vrot.lane.b32.xlu0 %v2104, 112
      %v2186 = vpop.permute.xlu0 %2185
      %2187 = vrot.lane.b32.xlu0 %v2105, 112
      %v2188 = vpop.permute.xlu0 %2187
      %2189 = vrot.lane.b32.xlu0 %v2106, 112
      %v2190 = vpop.permute.xlu0 %2189
      %2191 = vrot.lane.b32.xlu0 %v2107, 112
      %v2192 = vpop.permute.xlu0 %2191
      %2193 = vrot.lane.b32.xlu0 %v2108, 112
      %v2194 = vpop.permute.xlu0 %2193
      %2195 = vrot.lane.b32.xlu0 %v2109, 112
      %v2196 = vpop.permute.xlu0 %2195
      %2197 = vrot.lane.b32.xlu0 %v2110, 112
      %v2198 = vpop.permute.xlu0 %2197
      %2199 = vrot.lane.b32.xlu0 %v2111, 112
      %v2200 = vpop.permute.xlu0 %2199
      %2201 = vrot.lane.b32.xlu0 %v2112, 112
      %v2202 = vpop.permute.xlu0 %2201
      %2203 = vrot.lane.b32.xlu0 %v2113, 112
      %v2204 = vpop.permute.xlu0 %2203
      %2205 = vrot.lane.b32.xlu0 %v2114, 112
      %v2206 = vpop.permute.xlu0 %2205
      %2207 = vrot.lane.b32.xlu0 %v2115, 112
      %v2208 = vpop.permute.xlu0 %2207
      %2209 = vrot.lane.b32.xlu0 %v2116, 112
      %v2210 = vpop.permute.xlu0 %2209
      %2211 = vrot.lane.b32.xlu0 %v2117, 112
      %v2212 = vpop.permute.xlu0 %2211
      %2213 = vrot.lane.b32.xlu0 %v2118, 112
      %v2214 = vpop.permute.xlu0 %2213
      %2215 = vrot.lane.b32.xlu0 %v2119, 112
      %v2216 = vpop.permute.xlu0 %2215
      %2217 = vrot.lane.b32.xlu0 %v2120, 112
      %v2218 = vpop.permute.xlu0 %2217
      %2219 = vrot.lane.b32.xlu0 %v2121, 112
      %v2220 = vpop.permute.xlu0 %2219
      %vm2221 = vcmask 916480
      %v2222 = vsel %vm2221, %v2156, %v2158
      %v2223 = vsel %vm2221, %v2158, %v2160
      %v2224 = vsel %vm2221, %v2160, %v2162
      %v2225 = vsel %vm2221, %v2162, %v2164
      %v2226 = vsel %vm2221, %v2164, %v2166
      %v2227 = vsel %vm2221, %v2166, %v2168
      %v2228 = vsel %vm2221, %v2168, %v2170
      %v2229 = vsel %vm2221, %v2170, %v2172
      %v2230 = vsel %vm2221, %v2172, %v2174
      %v2231 = vsel %vm2221, %v2174, %v2176
      %v2232 = vsel %vm2221, %v2178, %v2180
      %v2233 = vsel %vm2221, %v2180, %v2182
      %v2234 = vsel %vm2221, %v2182, %v2184
      %v2235 = vsel %vm2221, %v2184, %v2186
      %v2236 = vsel %vm2221, %v2186, %v2188
      %v2237 = vsel %vm2221, %v2188, %v2190
      %v2238 = vsel %vm2221, %v2190, %v2192
      %v2239 = vsel %vm2221, %v2192, %v2194
      %v2240 = vsel %vm2221, %v2194, %v2196
      %v2241 = vsel %vm2221, %v2196, %v2198
      %v2242 = vsel %vm2221, %v2200, %v2202
      %v2243 = vsel %vm2221, %v2202, %v2204
      %v2244 = vsel %vm2221, %v2204, %v2206
      %v2245 = vsel %vm2221, %v2206, %v2208
      %v2246 = vsel %vm2221, %v2208, %v2210
      %v2247 = vsel %vm2221, %v2210, %v2212
      %v2248 = vsel %vm2221, %v2212, %v2214
      %v2249 = vsel %vm2221, %v2214, %v2216
      %v2250 = vsel %vm2221, %v2216, %v2218
      %v2251 = vsel %vm2221, %v2218, %v2220
      %v2285 = vmax.f32 %v1882, %v2222
      %v2286 = vmax.f32 %v1883, %v2223
      %v2287 = vmax.f32 %v1884, %v2224
      %v2288 = vmax.f32 %v1885, %v2225
      %v2289 = vmax.f32 %v1886, %v2226
      %v2290 = vmax.f32 %v1887, %v2227
      %v2291 = vmax.f32 %v1888, %v2228
      %v2292 = vmax.f32 %v1889, %v2229
      %v2293 = vmax.f32 %v1890, %v2230
      %v2294 = vmax.f32 %v1891, %v2231
      %v2295 = vmax.f32 %v1892, %v2176
      %v2296 = vmax.f32 %v1893, %v2232
      %v2297 = vmax.f32 %v1894, %v2233
      %v2298 = vmax.f32 %v1895, %v2234
      %v2299 = vmax.f32 %v1896, %v2235
      %v2300 = vmax.f32 %v1897, %v2236
      %v2301 = vmax.f32 %v1898, %v2237
      %v2302 = vmax.f32 %v1899, %v2238
      %v2303 = vmax.f32 %v1900, %v2239
      %v2304 = vmax.f32 %v1901, %v2240
      %v2305 = vmax.f32 %v1902, %v2241
      %v2306 = vmax.f32 %v1903, %v2198
      %v2307 = vmax.f32 %v1904, %v2242
      %v2308 = vmax.f32 %v1905, %v2243
      %v2309 = vmax.f32 %v1906, %v2244
      %v2310 = vmax.f32 %v1907, %v2245
      %v2311 = vmax.f32 %v1908, %v2246
      %v2312 = vmax.f32 %v1909, %v2247
      %v2313 = vmax.f32 %v1910, %v2248
      %v2314 = vmax.f32 %v1911, %v2249
      %v2315 = vmax.f32 %v1912, %v2250
      %v2316 = vmax.f32 %v1913, %v2251
      %v2317 = vmax.f32 %v1914, %v2220
      %v2318 = vld [vmem:[%s2] sm:$0xff]
      %v2319 = vld [vmem:[%s2 + $0x8] sm:$0xff]
      %v2320 = vld [vmem:[%s2 + $0x10] sm:$0xf]
      %2322 = vset.pattern.permute.xlu0 0
      %2323 = vperm.xlu0 %2322, %v2318
      %v2324 = vpop.permute.xlu0 %2323
      %2327 = vset.pattern.permute.xlu0 0
      %2328 = vperm.xlu0 %2327, %v2319
      %v2329 = vpop.permute.xlu0 %2328
      %2332 = vset.pattern.permute.xlu0 0
      %2333 = vperm.xlu0 %2332, %v2320
      %v2334 = vpop.permute.xlu0 %2333
      %v2336 = vadd.f32 %v2285, %v2324
      %v2337 = vadd.f32 %v2286, %v2324
      %v2338 = vadd.f32 %v2287, %v2324
      %v2339 = vadd.f32 %v2288, %v2324
      %v2340 = vadd.f32 %v2289, %v2324
      %v2341 = vadd.f32 %v2290, %v2324
      %v2342 = vadd.f32 %v2291, %v2324
      %v2343 = vadd.f32 %v2292, %v2324
      %v2344 = vadd.f32 %v2293, %v2324
      %v2345 = vadd.f32 %v2294, %v2324
      %v2346 = vadd.f32 %v2295, %v2324
      %v2347 = vadd.f32 %v2296, %v2329
      %v2348 = vadd.f32 %v2297, %v2329
      %v2349 = vadd.f32 %v2298, %v2329
      %v2350 = vadd.f32 %v2299, %v2329
      %v2351 = vadd.f32 %v2300, %v2329
      %v2352 = vadd.f32 %v2301, %v2329
      %v2353 = vadd.f32 %v2302, %v2329
      %v2354 = vadd.f32 %v2303, %v2329
      %v2355 = vadd.f32 %v2304, %v2329
      %v2356 = vadd.f32 %v2305, %v2329
      %v2357 = vadd.f32 %v2306, %v2329
      %v2358 = vadd.f32 %v2307, %v2334
      %v2359 = vadd.f32 %v2308, %v2334
      %v2360 = vadd.f32 %v2309, %v2334
      %v2361 = vadd.f32 %v2310, %v2334
      %v2362 = vadd.f32 %v2311, %v2334
      %v2363 = vadd.f32 %v2312, %v2334
      %v2364 = vadd.f32 %v2313, %v2334
      %v2365 = vadd.f32 %v2314, %v2334
      %v2366 = vadd.f32 %v2315, %v2334
      %v2367 = vadd.f32 %v2316, %v2334
      %v2368 = vadd.f32 %v2317, %v2334
      %v2369 = vmax.f32 %v2336, 0.0
      %v2370 = vmax.f32 %v2337, 0.0
      %v2371 = vmax.f32 %v2338, 0.0
      %v2372 = vmax.f32 %v2339, 0.0
      %v2373 = vmax.f32 %v2340, 0.0
      %v2374 = vmax.f32 %v2341, 0.0
      %v2375 = vmax.f32 %v2342, 0.0
      %v2376 = vmax.f32 %v2343, 0.0
      %v2377 = vmax.f32 %v2344, 0.0
      %v2378 = vmax.f32 %v2345, 0.0
      %v2379 = vmax.f32 %v2346, 0.0
      %v2380 = vmax.f32 %v2347, 0.0
      %v2381 = vmax.f32 %v2348, 0.0
      %v2382 = vmax.f32 %v2349, 0.0
      %v2383 = vmax.f32 %v2350, 0.0
      %v2384 = vmax.f32 %v2351, 0.0
      %v2385 = vmax.f32 %v2352, 0.0
      %v2386 = vmax.f32 %v2353, 0.0
      %v2387 = vmax.f32 %v2354, 0.0
      %v2388 = vmax.f32 %v2355, 0.0
      %v2389 = vmax.f32 %v2356, 0.0
      %v2390 = vmax.f32 %v2357, 0.0
      %v2391 = vmax.f32 %v2358, 0.0
      %v2392 = vmax.f32 %v2359, 0.0
      %v2393 = vmax.f32 %v2360, 0.0
      %v2394 = vmax.f32 %v2361, 0.0
      %v2395 = vmax.f32 %v2362, 0.0
      %v2396 = vmax.f32 %v2363, 0.0
      %v2397 = vmax.f32 %v2364, 0.0
      %v2398 = vmax.f32 %v2365, 0.0
      %v2399 = vmax.f32 %v2366, 0.0
      %v2400 = vmax.f32 %v2367, 0.0
      %v2401 = vmax.f32 %v2368, 0.0
      %2408 = vrot.lane.b32.xlu0 %v2370, 87
      %v2409 = vpop.permute.xlu0 %2408
      %2410 = vrot.lane.b32.xlu0 %v2371, 87
      %v2411 = vpop.permute.xlu0 %2410
      %2412 = vrot.lane.b32.xlu0 %v2381, 87
      %v2413 = vpop.permute.xlu0 %2412
      %2414 = vrot.lane.b32.xlu0 %v2382, 87
      %v2415 = vpop.permute.xlu0 %2414
      %2416 = vrot.lane.b32.xlu0 %v2392, 87
      %v2417 = vpop.permute.xlu0 %2416
      %2418 = vrot.lane.b32.xlu0 %v2393, 87
      %v2419 = vpop.permute.xlu0 %2418
      %vm2420 = vcmask 711680
      %v2421 = vsel %vm2420, %v2409, %v2411
      %v2422 = vsel %vm2420, %v2413, %v2415
      %v2423 = vsel %vm2420, %v2417, %v2419
      %2427 = vrot.lane.b32.xlu0 %v2371, 46
      %v2428 = vpop.permute.xlu0 %2427
      %2429 = vrot.lane.b32.xlu0 %v2372, 46
      %v2430 = vpop.permute.xlu0 %2429
      %2431 = vrot.lane.b32.xlu0 %v2382, 46
      %v2432 = vpop.permute.xlu0 %2431
      %2433 = vrot.lane.b32.xlu0 %v2383, 46
      %v2434 = vpop.permute.xlu0 %2433
      %2435 = vrot.lane.b32.xlu0 %v2393, 46
      %v2436 = vpop.permute.xlu0 %2435
      %2437 = vrot.lane.b32.xlu0 %v2394, 46
      %v2438 = vpop.permute.xlu0 %2437
      %vm2439 = vcmask 375808
      %v2440 = vsel %vm2439, %v2428, %v2430
      %v2441 = vsel %vm2439, %v2432, %v2434
      %v2442 = vsel %vm2439, %v2436, %v2438
      %2449 = vrot.lane.b32.xlu0 %v2372, 5
      %v2450 = vpop.permute.xlu0 %2449
      %2451 = vrot.lane.b32.xlu0 %v2373, 5
      %v2452 = vpop.permute.xlu0 %2451
      %2453 = vrot.lane.b32.xlu0 %v2374, 5
      %v2454 = vpop.permute.xlu0 %2453
      %2455 = vrot.lane.b32.xlu0 %v2383, 5
      %v2456 = vpop.permute.xlu0 %2455
      %2457 = vrot.lane.b32.xlu0 %v2384, 5
      %v2458 = vpop.permute.xlu0 %2457
      %2459 = vrot.lane.b32.xlu0 %v2385, 5
      %v2460 = vpop.permute.xlu0 %2459
      %2461 = vrot.lane.b32.xlu0 %v2394, 5
      %v2462 = vpop.permute.xlu0 %2461
      %2463 = vrot.lane.b32.xlu0 %v2395, 5
      %v2464 = vpop.permute.xlu0 %2463
      %2465 = vrot.lane.b32.xlu0 %v2396, 5
      %v2466 = vpop.permute.xlu0 %2465
      %vm2467 = vcmask 39936
      %v2468 = vsel %vm2467, %v2450, %v2452
      %v2469 = vsel %vm2467, %v2452, %v2454
      %v2470 = vsel %vm2467, %v2456, %v2458
      %v2471 = vsel %vm2467, %v2458, %v2460
      %v2472 = vsel %vm2467, %v2462, %v2464
      %v2473 = vsel %vm2467, %v2464, %v2466
      %2477 = vrot.lane.b32.xlu0 %v2374, 92
      %v2478 = vpop.permute.xlu0 %2477
      %2479 = vrot.lane.b32.xlu0 %v2375, 92
      %v2480 = vpop.permute.xlu0 %2479
      %2481 = vrot.lane.b32.xlu0 %v2385, 92
      %v2482 = vpop.permute.xlu0 %2481
      %2483 = vrot.lane.b32.xlu0 %v2386, 92
      %v2484 = vpop.permute.xlu0 %2483
      %2485 = vrot.lane.b32.xlu0 %v2396, 92
      %v2486 = vpop.permute.xlu0 %2485
      %2487 = vrot.lane.b32.xlu0 %v2397, 92
      %v2488 = vpop.permute.xlu0 %2487
      %vm2489 = vcmask 752640
      %v2490 = vsel %vm2489, %v2478, %v2480
      %v2491 = vsel %vm2489, %v2482, %v2484
      %v2492 = vsel %vm2489, %v2486, %v2488
      %2496 = vrot.lane.b32.xlu0 %v2375, 51
      %v2497 = vpop.permute.xlu0 %2496
      %2498 = vrot.lane.b32.xlu0 %v2376, 51
      %v2499 = vpop.permute.xlu0 %2498
      %2500 = vrot.lane.b32.xlu0 %v2386, 51
      %v2501 = vpop.permute.xlu0 %2500
      %2502 = vrot.lane.b32.xlu0 %v2387, 51
      %v2503 = vpop.permute.xlu0 %2502
      %2504 = vrot.lane.b32.xlu0 %v2397, 51
      %v2505 = vpop.permute.xlu0 %2504
      %2506 = vrot.lane.b32.xlu0 %v2398, 51
      %v2507 = vpop.permute.xlu0 %2506
      %vm2508 = vcmask 416768
      %v2509 = vsel %vm2508, %v2497, %v2499
      %v2510 = vsel %vm2508, %v2501, %v2503
      %v2511 = vsel %vm2508, %v2505, %v2507
      %2518 = vrot.lane.b32.xlu0 %v2376, 10
      %v2519 = vpop.permute.xlu0 %2518
      %2520 = vrot.lane.b32.xlu0 %v2377, 10
      %v2521 = vpop.permute.xlu0 %2520
      %2522 = vrot.lane.b32.xlu0 %v2378, 10
      %v2523 = vpop.permute.xlu0 %2522
      %2524 = vrot.lane.b32.xlu0 %v2387, 10
      %v2525 = vpop.permute.xlu0 %2524
      %2526 = vrot.lane.b32.xlu0 %v2388, 10
      %v2527 = vpop.permute.xlu0 %2526
      %2528 = vrot.lane.b32.xlu0 %v2389, 10
      %v2529 = vpop.permute.xlu0 %2528
      %2530 = vrot.lane.b32.xlu0 %v2398, 10
      %v2531 = vpop.permute.xlu0 %2530
      %2532 = vrot.lane.b32.xlu0 %v2399, 10
      %v2533 = vpop.permute.xlu0 %2532
      %2534 = vrot.lane.b32.xlu0 %v2400, 10
      %v2535 = vpop.permute.xlu0 %2534
      %vm2536 = vcmask 80896
      %v2537 = vsel %vm2536, %v2519, %v2521
      %v2538 = vsel %vm2536, %v2521, %v2523
      %v2539 = vsel %vm2536, %v2525, %v2527
      %v2540 = vsel %vm2536, %v2527, %v2529
      %v2541 = vsel %vm2536, %v2531, %v2533
      %v2542 = vsel %vm2536, %v2533, %v2535
      %2546 = vrot.lane.b32.xlu0 %v2378, 97
      %v2547 = vpop.permute.xlu0 %2546
      %2548 = vrot.lane.b32.xlu0 %v2379, 97
      %v2549 = vpop.permute.xlu0 %2548
      %2550 = vrot.lane.b32.xlu0 %v2389, 97
      %v2551 = vpop.permute.xlu0 %2550
      %2552 = vrot.lane.b32.xlu0 %v2390, 97
      %v2553 = vpop.permute.xlu0 %2552
      %2554 = vrot.lane.b32.xlu0 %v2400, 97
      %v2555 = vpop.permute.xlu0 %2554
      %2556 = vrot.lane.b32.xlu0 %v2401, 97
      %v2557 = vpop.permute.xlu0 %2556
      %vm2558 = vcmask 793600
      %v2559 = vsel %vm2558, %v2547, %v2549
      %v2560 = vsel %vm2558, %v2551, %v2553
      %v2561 = vsel %vm2558, %v2555, %v2557
      %v2565 = vrot.slane %v2370, 4
      %v2566 = vrot.slane %v2381, 4
      %v2567 = vrot.slane %v2392, 4
      %v2568 = vrot.slane %v2411, 4
      %v2569 = vrot.slane %v2415, 4
      %v2570 = vrot.slane %v2419, 4
      %v2571 = vrot.slane %v2430, 4
      %v2572 = vrot.slane %v2434, 4
      %v2573 = vrot.slane %v2438, 4
      %v2574 = vrot.slane %v2469, 4
      %v2575 = vrot.slane %v2471, 4
      %v2576 = vrot.slane %v2473, 4
      %v2577 = vrot.slane %v2480, 4
      %v2578 = vrot.slane %v2484, 4
      %v2579 = vrot.slane %v2488, 4
      %v2580 = vrot.slane %v2499, 4
      %v2581 = vrot.slane %v2503, 4
      %v2582 = vrot.slane %v2507, 4
      %v2583 = vrot.slane %v2538, 4
      %v2584 = vrot.slane %v2540, 4
      %v2585 = vrot.slane %v2542, 4
      %v2586 = vrot.slane %v2549, 4
      %v2587 = vrot.slane %v2553, 4
      %v2588 = vrot.slane %v2557, 4
      %v2589 = vsel %vm800, %v2369, %v2565
      %v2590 = vsel %vm800, %v2565, %v2369
      %v2591 = vrot.slane %v2590, 4
      %v2592 = vsel %vm800, %v2380, %v2566
      %v2593 = vsel %vm800, %v2566, %v2380
      %v2594 = vrot.slane %v2593, 4
      %v2595 = vsel %vm800, %v2391, %v2567
      %v2596 = vsel %vm800, %v2421, %v2568
      %v2597 = vsel %vm800, %v2568, %v2421
      %v2598 = vrot.slane %v2597, 4
      %v2599 = vsel %vm800, %v2422, %v2569
      %v2600 = vsel %vm800, %v2569, %v2422
      %v2601 = vrot.slane %v2600, 4
      %v2602 = vsel %vm800, %v2423, %v2570
      %v2603 = vsel %vm800, %v2440, %v2571
      %v2604 = vsel %vm800, %v2571, %v2440
      %v2605 = vrot.slane %v2604, 4
      %v2606 = vsel %vm800, %v2441, %v2572
      %v2607 = vsel %vm800, %v2572, %v2441
      %v2608 = vrot.slane %v2607, 4
      %v2609 = vsel %vm800, %v2442, %v2573
      %v2610 = vsel %vm800, %v2468, %v2574
      %v2611 = vsel %vm800, %v2574, %v2468
      %v2612 = vrot.slane %v2611, 4
      %v2613 = vsel %vm800, %v2470, %v2575
      %v2614 = vsel %vm800, %v2575, %v2470
      %v2615 = vrot.slane %v2614, 4
      %v2616 = vsel %vm800, %v2472, %v2576
      %v2617 = vsel %vm800, %v2490, %v2577
      %v2618 = vsel %vm800, %v2577, %v2490
      %v2619 = vrot.slane %v2618, 4
      %v2620 = vsel %vm800, %v2491, %v2578
      %v2621 = vsel %vm800, %v2578, %v2491
      %v2622 = vrot.slane %v2621, 4
      %v2623 = vsel %vm800, %v2492, %v2579
      %v2624 = vsel %vm800, %v2509, %v2580
      %v2625 = vsel %vm800, %v2580, %v2509
      %v2626 = vrot.slane %v2625, 4
      %v2627 = vsel %vm800, %v2510, %v2581
      %v2628 = vsel %vm800, %v2581, %v2510
      %v2629 = vrot.slane %v2628, 4
      %v2630 = vsel %vm800, %v2511, %v2582
      %v2631 = vsel %vm800, %v2537, %v2583
      %v2632 = vsel %vm800, %v2583, %v2537
      %v2633 = vrot.slane %v2632, 4
      %v2634 = vsel %vm800, %v2539, %v2584
      %v2635 = vsel %vm800, %v2584, %v2539
      %v2636 = vrot.slane %v2635, 4
      %v2637 = vsel %vm800, %v2541, %v2585
      %v2638 = vsel %vm800, %v2559, %v2586
      %v2639 = vsel %vm800, %v2586, %v2559
      %v2640 = vrot.slane %v2639, 4
      %v2641 = vsel %vm800, %v2560, %v2587
      %v2642 = vsel %vm800, %v2587, %v2560
      %v2643 = vrot.slane %v2642, 4
      %v2644 = vsel %vm800, %v2561, %v2588
      %v2685 = vrot.slane %v2603, 4
      %vm2686 = vcmask 1047556
      %v2687 = vsel %vm2686, %v2685, %v2589
      %v2688 = vrot.slane %v2589, 4
      %v2689 = vsel %vm2686, %v2603, %v2688
      %v2691 = vunpack.c.l.s4 1983009808
      %v2692 = vunpack.c.0.s8 %v2691
      %v2693 = vperm.slane %v2687, %v2692
      %v2695 = vunpack.c.l.s4 1983009808
      %v2696 = vunpack.c.0.s8 %v2695
      %v2697 = vperm.slane %v2689, %v2696
      %v2698 = vrot.slane %v2610, 4
      %v2699 = vsel %vm2686, %v2698, %v2596
      %v2700 = vrot.slane %v2596, 4
      %v2701 = vsel %vm2686, %v2610, %v2700
      %v2703 = vunpack.c.l.s4 1983009808
      %v2704 = vunpack.c.0.s8 %v2703
      %v2705 = vperm.slane %v2699, %v2704
      %v2707 = vunpack.c.l.s4 1983009808
      %v2708 = vunpack.c.0.s8 %v2707
      %v2709 = vperm.slane %v2701, %v2708
      %v2710 = vrot.slane %v2705, 4
      %v2711 = vsel %vm2686, %v2710, %v2693
      %v2712 = vrot.slane %v2693, 4
      %v2713 = vsel %vm2686, %v2705, %v2712
      %v2715 = vunpack.c.l.s4 1934713408
      %v2716 = vunpack.c.0.s8 %v2715
      %v2717 = vperm.slane %v2711, %v2716
      %v2719 = vunpack.c.l.s4 1934713408
      %v2720 = vunpack.c.0.s8 %v2719
      %v2721 = vperm.slane %v2713, %v2720
      %v2722 = vrot.slane %v2709, 4
      %v2723 = vsel %vm2686, %v2722, %v2697
      %v2724 = vrot.slane %v2697, 4
      %v2725 = vsel %vm2686, %v2709, %v2724
      %v2727 = vunpack.c.l.s4 1934713408
      %v2728 = vunpack.c.0.s8 %v2727
      %v2729 = vperm.slane %v2723, %v2728
      %v2731 = vunpack.c.l.s4 1934713408
      %v2732 = vunpack.c.0.s8 %v2731
      %v2733 = vperm.slane %v2725, %v2732
      %v2734 = vrot.slane %v2729, 4
      %v2735 = vsel %vm2686, %v2734, %v2717
      %v2736 = vrot.slane %v2717, 4
      %v2737 = vsel %vm2686, %v2729, %v2736
      %v2738 = vrot.slane %v2733, 4
      %v2739 = vsel %vm2686, %v2738, %v2721
      %v2740 = vrot.slane %v2721, 4
      %v2741 = vsel %vm2686, %v2733, %v2740
      %v2742 = vrot.slane %v2631, 4
      %v2743 = vsel %vm2686, %v2742, %v2617
      %v2744 = vrot.slane %v2617, 4
      %v2745 = vsel %vm2686, %v2631, %v2744
      %v2747 = vunpack.c.l.s4 1983009808
      %v2748 = vunpack.c.0.s8 %v2747
      %v2749 = vperm.slane %v2743, %v2748
      %v2751 = vunpack.c.l.s4 1983009808
      %v2752 = vunpack.c.0.s8 %v2751
      %v2753 = vperm.slane %v2745, %v2752
      %v2754 = vrot.slane %v2638, 4
      %v2755 = vsel %vm2686, %v2754, %v2624
      %v2756 = vrot.slane %v2624, 4
      %v2757 = vsel %vm2686, %v2638, %v2756
      %v2759 = vunpack.c.l.s4 1983009808
      %v2760 = vunpack.c.0.s8 %v2759
      %v2761 = vperm.slane %v2755, %v2760
      %v2763 = vunpack.c.l.s4 1983009808
      %v2764 = vunpack.c.0.s8 %v2763
      %v2765 = vperm.slane %v2757, %v2764
      %v2766 = vrot.slane %v2761, 4
      %v2767 = vsel %vm2686, %v2766, %v2749
      %v2768 = vrot.slane %v2749, 4
      %v2769 = vsel %vm2686, %v2761, %v2768
      %v2771 = vunpack.c.l.s4 1934713408
      %v2772 = vunpack.c.0.s8 %v2771
      %v2773 = vperm.slane %v2767, %v2772
      %v2775 = vunpack.c.l.s4 1934713408
      %v2776 = vunpack.c.0.s8 %v2775
      %v2777 = vperm.slane %v2769, %v2776
      %v2778 = vrot.slane %v2765, 4
      %v2779 = vsel %vm2686, %v2778, %v2753
      %v2780 = vrot.slane %v2753, 4
      %v2781 = vsel %vm2686, %v2765, %v2780
      %v2783 = vunpack.c.l.s4 1934713408
      %v2784 = vunpack.c.0.s8 %v2783
      %v2785 = vperm.slane %v2779, %v2784
      %v2787 = vunpack.c.l.s4 1934713408
      %v2788 = vunpack.c.0.s8 %v2787
      %v2789 = vperm.slane %v2781, %v2788
      %v2790 = vrot.slane %v2785, 4
      %v2791 = vsel %vm2686, %v2790, %v2773
      %v2792 = vrot.slane %v2773, 4
      %v2793 = vsel %vm2686, %v2785, %v2792
      %v2794 = vrot.slane %v2789, 4
      %v2795 = vsel %vm2686, %v2794, %v2777
      %v2796 = vrot.slane %v2777, 4
      %v2797 = vsel %vm2686, %v2789, %v2796
      %v2798 = vrot.slane %v2605, 4
      %v2799 = vsel %vm2686, %v2798, %v2591
      %v2800 = vrot.slane %v2591, 4
      %v2801 = vsel %vm2686, %v2605, %v2800
      %v2803 = vunpack.c.l.s4 1983009808
      %v2804 = vunpack.c.0.s8 %v2803
      %v2805 = vperm.slane %v2799, %v2804
      %v2807 = vunpack.c.l.s4 1983009808
      %v2808 = vunpack.c.0.s8 %v2807
      %v2809 = vperm.slane %v2801, %v2808
      %v2810 = vrot.slane %v2612, 4
      %v2811 = vsel %vm2686, %v2810, %v2598
      %v2812 = vrot.slane %v2598, 4
      %v2813 = vsel %vm2686, %v2612, %v2812
      %v2815 = vunpack.c.l.s4 1983009808
      %v2816 = vunpack.c.0.s8 %v2815
      %v2817 = vperm.slane %v2811, %v2816
      %v2819 = vunpack.c.l.s4 1983009808
      %v2820 = vunpack.c.0.s8 %v2819
      %v2821 = vperm.slane %v2813, %v2820
      %v2822 = vrot.slane %v2817, 4
      %v2823 = vsel %vm2686, %v2822, %v2805
      %v2824 = vrot.slane %v2805, 4
      %v2825 = vsel %vm2686, %v2817, %v2824
      %v2827 = vunpack.c.l.s4 1934713408
      %v2828 = vunpack.c.0.s8 %v2827
      %v2829 = vperm.slane %v2823, %v2828
      %v2831 = vunpack.c.l.s4 1934713408
      %v2832 = vunpack.c.0.s8 %v2831
      %v2833 = vperm.slane %v2825, %v2832
      %v2834 = vrot.slane %v2821, 4
      %v2835 = vsel %vm2686, %v2834, %v2809
      %v2836 = vrot.slane %v2809, 4
      %v2837 = vsel %vm2686, %v2821, %v2836
      %v2839 = vunpack.c.l.s4 1934713408
      %v2840 = vunpack.c.0.s8 %v2839
      %v2841 = vperm.slane %v2835, %v2840
      %v2843 = vunpack.c.l.s4 1934713408
      %v2844 = vunpack.c.0.s8 %v2843
      %v2845 = vperm.slane %v2837, %v2844
      %v2846 = vrot.slane %v2841, 4
      %v2847 = vsel %vm2686, %v2846, %v2829
      %v2848 = vrot.slane %v2829, 4
      %v2849 = vsel %vm2686, %v2841, %v2848
      %v2850 = vrot.slane %v2845, 4
      %v2851 = vsel %vm2686, %v2850, %v2833
      %v2852 = vrot.slane %v2833, 4
      %v2853 = vsel %vm2686, %v2845, %v2852
      %v2854 = vrot.slane %v2633, 4
      %v2855 = vsel %vm2686, %v2854, %v2619
      %v2856 = vrot.slane %v2619, 4
      %v2857 = vsel %vm2686, %v2633, %v2856
      %v2859 = vunpack.c.l.s4 1983009808
      %v2860 = vunpack.c.0.s8 %v2859
      %v2861 = vperm.slane %v2855, %v2860
      %v2863 = vunpack.c.l.s4 1983009808
      %v2864 = vunpack.c.0.s8 %v2863
      %v2865 = vperm.slane %v2857, %v2864
      %v2866 = vrot.slane %v2640, 4
      %v2867 = vsel %vm2686, %v2866, %v2626
      %v2868 = vrot.slane %v2626, 4
      %v2869 = vsel %vm2686, %v2640, %v2868
      %v2871 = vunpack.c.l.s4 1983009808
      %v2872 = vunpack.c.0.s8 %v2871
      %v2873 = vperm.slane %v2867, %v2872
      %v2875 = vunpack.c.l.s4 1983009808
      %v2876 = vunpack.c.0.s8 %v2875
      %v2877 = vperm.slane %v2869, %v2876
      %v2878 = vrot.slane %v2873, 4
      %v2879 = vsel %vm2686, %v2878, %v2861
      %v2880 = vrot.slane %v2861, 4
      %v2881 = vsel %vm2686, %v2873, %v2880
      %v2883 = vunpack.c.l.s4 1934713408
      %v2884 = vunpack.c.0.s8 %v2883
      %v2885 = vperm.slane %v2879, %v2884
      %v2887 = vunpack.c.l.s4 1934713408
      %v2888 = vunpack.c.0.s8 %v2887
      %v2889 = vperm.slane %v2881, %v2888
      %v2890 = vrot.slane %v2877, 4
      %v2891 = vsel %vm2686, %v2890, %v2865
      %v2892 = vrot.slane %v2865, 4
      %v2893 = vsel %vm2686, %v2877, %v2892
      %v2895 = vunpack.c.l.s4 1934713408
      %v2896 = vunpack.c.0.s8 %v2895
      %v2897 = vperm.slane %v2891, %v2896
      %v2899 = vunpack.c.l.s4 1934713408
      %v2900 = vunpack.c.0.s8 %v2899
      %v2901 = vperm.slane %v2893, %v2900
      %v2902 = vrot.slane %v2897, 4
      %v2903 = vsel %vm2686, %v2902, %v2885
      %v2904 = vrot.slane %v2885, 4
      %v2905 = vsel %vm2686, %v2897, %v2904
      %v2906 = vrot.slane %v2901, 4
      %v2907 = vsel %vm2686, %v2906, %v2889
      %v2908 = vrot.slane %v2889, 4
      %v2909 = vsel %vm2686, %v2901, %v2908
      %v2910 = vrot.slane %v2606, 4
      %v2911 = vsel %vm2686, %v2910, %v2592
      %v2912 = vrot.slane %v2592, 4
      %v2913 = vsel %vm2686, %v2606, %v2912
      %v2915 = vunpack.c.l.s4 1983009808
      %v2916 = vunpack.c.0.s8 %v2915
      %v2917 = vperm.slane %v2911, %v2916
      %v2919 = vunpack.c.l.s4 1983009808
      %v2920 = vunpack.c.0.s8 %v2919
      %v2921 = vperm.slane %v2913, %v2920
      %v2922 = vrot.slane %v2613, 4
      %v2923 = vsel %vm2686, %v2922, %v2599
      %v2924 = vrot.slane %v2599, 4
      %v2925 = vsel %vm2686, %v2613, %v2924
      %v2927 = vunpack.c.l.s4 1983009808
      %v2928 = vunpack.c.0.s8 %v2927
      %v2929 = vperm.slane %v2923, %v2928
      %v2931 = vunpack.c.l.s4 1983009808
      %v2932 = vunpack.c.0.s8 %v2931
      %v2933 = vperm.slane %v2925, %v2932
      %v2934 = vrot.slane %v2929, 4
      %v2935 = vsel %vm2686, %v2934, %v2917
      %v2936 = vrot.slane %v2917, 4
      %v2937 = vsel %vm2686, %v2929, %v2936
      %v2939 = vunpack.c.l.s4 1934713408
      %v2940 = vunpack.c.0.s8 %v2939
      %v2941 = vperm.slane %v2935, %v2940
      %v2943 = vunpack.c.l.s4 1934713408
      %v2944 = vunpack.c.0.s8 %v2943
      %v2945 = vperm.slane %v2937, %v2944
      %v2946 = vrot.slane %v2933, 4
      %v2947 = vsel %vm2686, %v2946, %v2921
      %v2948 = vrot.slane %v2921, 4
      %v2949 = vsel %vm2686, %v2933, %v2948
      %v2951 = vunpack.c.l.s4 1934713408
      %v2952 = vunpack.c.0.s8 %v2951
      %v2953 = vperm.slane %v2947, %v2952
      %v2955 = vunpack.c.l.s4 1934713408
      %v2956 = vunpack.c.0.s8 %v2955
      %v2957 = vperm.slane %v2949, %v2956
      %v2958 = vrot.slane %v2953, 4
      %v2959 = vsel %vm2686, %v2958, %v2941
      %v2960 = vrot.slane %v2941, 4
      %v2961 = vsel %vm2686, %v2953, %v2960
      %v2962 = vrot.slane %v2957, 4
      %v2963 = vsel %vm2686, %v2962, %v2945
      %v2964 = vrot.slane %v2945, 4
      %v2965 = vsel %vm2686, %v2957, %v2964
      %v2966 = vrot.slane %v2634, 4
      %v2967 = vsel %vm2686, %v2966, %v2620
      %v2968 = vrot.slane %v2620, 4
      %v2969 = vsel %vm2686, %v2634, %v2968
      %v2971 = vunpack.c.l.s4 1983009808
      %v2972 = vunpack.c.0.s8 %v2971
      %v2973 = vperm.slane %v2967, %v2972
      %v2975 = vunpack.c.l.s4 1983009808
      %v2976 = vunpack.c.0.s8 %v2975
      %v2977 = vperm.slane %v2969, %v2976
      %v2978 = vrot.slane %v2641, 4
      %v2979 = vsel %vm2686, %v2978, %v2627
      %v2980 = vrot.slane %v2627, 4
      %v2981 = vsel %vm2686, %v2641, %v2980
      %v2983 = vunpack.c.l.s4 1983009808
      %v2984 = vunpack.c.0.s8 %v2983
      %v2985 = vperm.slane %v2979, %v2984
      %v2987 = vunpack.c.l.s4 1983009808
      %v2988 = vunpack.c.0.s8 %v2987
      %v2989 = vperm.slane %v2981, %v2988
      %v2990 = vrot.slane %v2985, 4
      %v2991 = vsel %vm2686, %v2990, %v2973
      %v2992 = vrot.slane %v2973, 4
      %v2993 = vsel %vm2686, %v2985, %v2992
      %v2995 = vunpack.c.l.s4 1934713408
      %v2996 = vunpack.c.0.s8 %v2995
      %v2997 = vperm.slane %v2991, %v2996
      %v2999 = vunpack.c.l.s4 1934713408
      %v3000 = vunpack.c.0.s8 %v2999
      %v3001 = vperm.slane %v2993, %v3000
      %v3002 = vrot.slane %v2989, 4
      %v3003 = vsel %vm2686, %v3002, %v2977
      %v3004 = vrot.slane %v2977, 4
      %v3005 = vsel %vm2686, %v2989, %v3004
      %v3007 = vunpack.c.l.s4 1934713408
      %v3008 = vunpack.c.0.s8 %v3007
      %v3009 = vperm.slane %v3003, %v3008
      %v3011 = vunpack.c.l.s4 1934713408
      %v3012 = vunpack.c.0.s8 %v3011
      %v3013 = vperm.slane %v3005, %v3012
      %v3014 = vrot.slane %v3009, 4
      %v3015 = vsel %vm2686, %v3014, %v2997
      %v3016 = vrot.slane %v2997, 4
      %v3017 = vsel %vm2686, %v3009, %v3016
      %v3018 = vrot.slane %v3013, 4
      %v3019 = vsel %vm2686, %v3018, %v3001
      %v3020 = vrot.slane %v3001, 4
      %v3021 = vsel %vm2686, %v3013, %v3020
      %v3022 = vrot.slane %v2608, 4
      %v3023 = vsel %vm2686, %v3022, %v2594
      %v3024 = vrot.slane %v2594, 4
      %v3025 = vsel %vm2686, %v2608, %v3024
      %v3027 = vunpack.c.l.s4 1983009808
      %v3028 = vunpack.c.0.s8 %v3027
      %v3029 = vperm.slane %v3023, %v3028
      %v3031 = vunpack.c.l.s4 1983009808
      %v3032 = vunpack.c.0.s8 %v3031
      %v3033 = vperm.slane %v3025, %v3032
      %v3034 = vrot.slane %v2615, 4
      %v3035 = vsel %vm2686, %v3034, %v2601
      %v3036 = vrot.slane %v2601, 4
      %v3037 = vsel %vm2686, %v2615, %v3036
      %v3039 = vunpack.c.l.s4 1983009808
      %v3040 = vunpack.c.0.s8 %v3039
      %v3041 = vperm.slane %v3035, %v3040
      %v3043 = vunpack.c.l.s4 1983009808
      %v3044 = vunpack.c.0.s8 %v3043
      %v3045 = vperm.slane %v3037, %v3044
      %v3046 = vrot.slane %v3041, 4
      %v3047 = vsel %vm2686, %v3046, %v3029
      %v3048 = vrot.slane %v3029, 4
      %v3049 = vsel %vm2686, %v3041, %v3048
      %v3051 = vunpack.c.l.s4 1934713408
      %v3052 = vunpack.c.0.s8 %v3051
      %v3053 = vperm.slane %v3047, %v3052
      %v3055 = vunpack.c.l.s4 1934713408
      %v3056 = vunpack.c.0.s8 %v3055
      %v3057 = vperm.slane %v3049, %v3056
      %v3058 = vrot.slane %v3045, 4
      %v3059 = vsel %vm2686, %v3058, %v3033
      %v3060 = vrot.slane %v3033, 4
      %v3061 = vsel %vm2686, %v3045, %v3060
      %v3063 = vunpack.c.l.s4 1934713408
      %v3064 = vunpack.c.0.s8 %v3063
      %v3065 = vperm.slane %v3059, %v3064
      %v3067 = vunpack.c.l.s4 1934713408
      %v3068 = vunpack.c.0.s8 %v3067
      %v3069 = vperm.slane %v3061, %v3068
      %v3070 = vrot.slane %v3065, 4
      %v3071 = vsel %vm2686, %v3070, %v3053
      %v3072 = vrot.slane %v3053, 4
      %v3073 = vsel %vm2686, %v3065, %v3072
      %v3074 = vrot.slane %v3069, 4
      %v3075 = vsel %vm2686, %v3074, %v3057
      %v3076 = vrot.slane %v3057, 4
      %v3077 = vsel %vm2686, %v3069, %v3076
      %v3078 = vrot.slane %v2636, 4
      %v3079 = vsel %vm2686, %v3078, %v2622
      %v3080 = vrot.slane %v2622, 4
      %v3081 = vsel %vm2686, %v2636, %v3080
      %v3083 = vunpack.c.l.s4 1983009808
      %v3084 = vunpack.c.0.s8 %v3083
      %v3085 = vperm.slane %v3079, %v3084
      %v3087 = vunpack.c.l.s4 1983009808
      %v3088 = vunpack.c.0.s8 %v3087
      %v3089 = vperm.slane %v3081, %v3088
      %v3090 = vrot.slane %v2643, 4
      %v3091 = vsel %vm2686, %v3090, %v2629
      %v3092 = vrot.slane %v2629, 4
      %v3093 = vsel %vm2686, %v2643, %v3092
      %v3095 = vunpack.c.l.s4 1983009808
      %v3096 = vunpack.c.0.s8 %v3095
      %v3097 = vperm.slane %v3091, %v3096
      %v3099 = vunpack.c.l.s4 1983009808
      %v3100 = vunpack.c.0.s8 %v3099
      %v3101 = vperm.slane %v3093, %v3100
      %v3102 = vrot.slane %v3097, 4
      %v3103 = vsel %vm2686, %v3102, %v3085
      %v3104 = vrot.slane %v3085, 4
      %v3105 = vsel %vm2686, %v3097, %v3104
      %v3107 = vunpack.c.l.s4 1934713408
      %v3108 = vunpack.c.0.s8 %v3107
      %v3109 = vperm.slane %v3103, %v3108
      %v3111 = vunpack.c.l.s4 1934713408
      %v3112 = vunpack.c.0.s8 %v3111
      %v3113 = vperm.slane %v3105, %v3112
      %v3114 = vrot.slane %v3101, 4
      %v3115 = vsel %vm2686, %v3114, %v3089
      %v3116 = vrot.slane %v3089, 4
      %v3117 = vsel %vm2686, %v3101, %v3116
      %v3119 = vunpack.c.l.s4 1934713408
      %v3120 = vunpack.c.0.s8 %v3119
      %v3121 = vperm.slane %v3115, %v3120
      %v3123 = vunpack.c.l.s4 1934713408
      %v3124 = vunpack.c.0.s8 %v3123
      %v3125 = vperm.slane %v3117, %v3124
      %v3126 = vrot.slane %v3121, 4
      %v3127 = vsel %vm2686, %v3126, %v3109
      %v3128 = vrot.slane %v3109, 4
      %v3129 = vsel %vm2686, %v3121, %v3128
      %v3130 = vrot.slane %v3125, 4
      %v3131 = vsel %vm2686, %v3130, %v3113
      %v3132 = vrot.slane %v3113, 4
      %v3133 = vsel %vm2686, %v3125, %v3132
      %v3134 = vrot.slane %v2609, 4
      %v3135 = vsel %vm2686, %v3134, %v2595
      %v3136 = vrot.slane %v2595, 4
      %v3137 = vsel %vm2686, %v2609, %v3136
      %v3139 = vunpack.c.l.s4 1983009808
      %v3140 = vunpack.c.0.s8 %v3139
      %v3141 = vperm.slane %v3135, %v3140
      %v3143 = vunpack.c.l.s4 1983009808
      %v3144 = vunpack.c.0.s8 %v3143
      %v3145 = vperm.slane %v3137, %v3144
      %v3146 = vrot.slane %v2616, 4
      %v3147 = vsel %vm2686, %v3146, %v2602
      %v3148 = vrot.slane %v2602, 4
      %v3149 = vsel %vm2686, %v2616, %v3148
      %v3151 = vunpack.c.l.s4 1983009808
      %v3152 = vunpack.c.0.s8 %v3151
      %v3153 = vperm.slane %v3147, %v3152
      %v3155 = vunpack.c.l.s4 1983009808
      %v3156 = vunpack.c.0.s8 %v3155
      %v3157 = vperm.slane %v3149, %v3156
      %v3158 = vrot.slane %v3153, 4
      %v3159 = vsel %vm2686, %v3158, %v3141
      %v3160 = vrot.slane %v3141, 4
      %v3161 = vsel %vm2686, %v3153, %v3160
      %v3163 = vunpack.c.l.s4 1934713408
      %v3164 = vunpack.c.0.s8 %v3163
      %v3165 = vperm.slane %v3159, %v3164
      %v3167 = vunpack.c.l.s4 1934713408
      %v3168 = vunpack.c.0.s8 %v3167
      %v3169 = vperm.slane %v3161, %v3168
      %v3170 = vrot.slane %v3157, 4
      %v3171 = vsel %vm2686, %v3170, %v3145
      %v3172 = vrot.slane %v3145, 4
      %v3173 = vsel %vm2686, %v3157, %v3172
      %v3175 = vunpack.c.l.s4 1934713408
      %v3176 = vunpack.c.0.s8 %v3175
      %v3177 = vperm.slane %v3171, %v3176
      %v3179 = vunpack.c.l.s4 1934713408
      %v3180 = vunpack.c.0.s8 %v3179
      %v3181 = vperm.slane %v3173, %v3180
      %v3182 = vrot.slane %v3177, 4
      %v3183 = vsel %vm2686, %v3182, %v3165
      %v3184 = vrot.slane %v3165, 4
      %v3185 = vsel %vm2686, %v3177, %v3184
      %v3186 = vrot.slane %v3181, 4
      %v3187 = vsel %vm2686, %v3186, %v3169
      %v3188 = vrot.slane %v3169, 4
      %v3189 = vsel %vm2686, %v3181, %v3188
      %v3190 = vrot.slane %v2637, 4
      %v3191 = vsel %vm2686, %v3190, %v2623
      %v3192 = vrot.slane %v2623, 4
      %v3193 = vsel %vm2686, %v2637, %v3192
      %v3195 = vunpack.c.l.s4 1983009808
      %v3196 = vunpack.c.0.s8 %v3195
      %v3197 = vperm.slane %v3191, %v3196
      %v3199 = vunpack.c.l.s4 1983009808
      %v3200 = vunpack.c.0.s8 %v3199
      %v3201 = vperm.slane %v3193, %v3200
      %v3202 = vrot.slane %v2644, 4
      %v3203 = vsel %vm2686, %v3202, %v2630
      %v3204 = vrot.slane %v2630, 4
      %v3205 = vsel %vm2686, %v2644, %v3204
      %v3207 = vunpack.c.l.s4 1983009808
      %v3208 = vunpack.c.0.s8 %v3207
      %v3209 = vperm.slane %v3203, %v3208
      %v3211 = vunpack.c.l.s4 1983009808
      %v3212 = vunpack.c.0.s8 %v3211
      %v3213 = vperm.slane %v3205, %v3212
      %v3214 = vrot.slane %v3209, 4
      %v3215 = vsel %vm2686, %v3214, %v3197
      %v3216 = vrot.slane %v3197, 4
      %v3217 = vsel %vm2686, %v3209, %v3216
      %v3219 = vunpack.c.l.s4 1934713408
      %v3220 = vunpack.c.0.s8 %v3219
      %v3221 = vperm.slane %v3215, %v3220
      %v3223 = vunpack.c.l.s4 1934713408
      %v3224 = vunpack.c.0.s8 %v3223
      %v3225 = vperm.slane %v3217, %v3224
      %v3226 = vrot.slane %v3213, 4
      %v3227 = vsel %vm2686, %v3226, %v3201
      %v3228 = vrot.slane %v3201, 4
      %v3229 = vsel %vm2686, %v3213, %v3228
      %v3231 = vunpack.c.l.s4 1934713408
      %v3232 = vunpack.c.0.s8 %v3231
      %v3233 = vperm.slane %v3227, %v3232
      %v3235 = vunpack.c.l.s4 1934713408
      %v3236 = vunpack.c.0.s8 %v3235
      %v3237 = vperm.slane %v3229, %v3236
      %v3238 = vrot.slane %v3233, 4
      %v3239 = vsel %vm2686, %v3238, %v3221
      %v3240 = vrot.slane %v3221, 4
      %v3241 = vsel %vm2686, %v3233, %v3240
      %v3242 = vrot.slane %v3237, 4
      %v3243 = vsel %vm2686, %v3242, %v3225
      %v3244 = vrot.slane %v3225, 4
      %v3245 = vsel %vm2686, %v3237, %v3244
      %3248 = vst [vmem:[#allocation1] ss:$2 sm:$0xff] %v2735
      %s3249 = scalar_lea.vmem [#allocation1], 1
      %3250 = vst [vmem:[%s3249] ss:$2 sm:$0xff] %v2791
      %v3251 = vld.sshfl [vmem:[#allocation1] sm:$0xff pattern:$0x75316420]
      %v3252 = vld.sshfl [vmem:[#allocation1 + $0x8] sm:$0xff pattern:$0x75316420]
      %3257 = vst [vmem:[#allocation1] ss:$2 sm:$0xff] %v2737
      %s3258 = scalar_lea.vmem [#allocation1], 1
      %3259 = vst [vmem:[%s3258] ss:$2 sm:$0xff] %v2793
      %v3260 = vld.sshfl [vmem:[#allocation1] sm:$0xff pattern:$0x75316420]
      %v3261 = vld.sshfl [vmem:[#allocation1 + $0x8] sm:$0xff pattern:$0x75316420]
      %3262 = vrot.lane.b32.xlu0 %v3260, 41
      %v3263 = vpop.permute.xlu0 %3262
      %3264 = vrot.lane.b32.xlu0 %v3261, 41
      %v3265 = vpop.permute.xlu0 %3264
      %vm3266 = vcmask 334848
      %v3267 = vsel %vm3266, %v3263, %v3265
      %3272 = vst [vmem:[#allocation1] ss:$2 sm:$0xff] %v2739
      %s3273 = scalar_lea.vmem [#allocation1], 1
      %3274 = vst [vmem:[%s3273] ss:$2 sm:$0xff] %v2795
      %v3275 = vld.sshfl [vmem:[#allocation1] sm:$0xff pattern:$0x75316420]
      %v3276 = vld.sshfl [vmem:[#allocation1 + $0x8] sm:$0xff pattern:$0x75316420]
      %3277 = vrot.lane.b32.xlu0 %v3275, 82
      %v3278 = vpop.permute.xlu0 %3277
      %3279 = vrot.lane.b32.xlu0 %v3276, 82
      %v3280 = vpop.permute.xlu0 %3279
      %vm3281 = vcmask 670720
      %v3282 = vsel %vm3281, %v3278, %v3280
      %3287 = vst [vmem:[#allocation1] ss:$2 sm:$0xff] %v2741
      %s3288 = scalar_lea.vmem [#allocation1], 1
      %3289 = vst [vmem:[%s3288] ss:$2 sm:$0xff] %v2797
      %v3290 = vld.sshfl [vmem:[#allocation1] sm:$0xff pattern:$0x75316420]
      %v3291 = vld.sshfl [vmem:[#allocation1 + $0x8] sm:$0xff pattern:$0x75316420]
      %3292 = vrot.lane.b32.xlu0 %v3290, 123
      %v3293 = vpop.permute.xlu0 %3292
      %3294 = vrot.lane.b32.xlu0 %v3291, 123
      %v3295 = vpop.permute.xlu0 %3294
      %vm3296 = vcmask 1006592
      %v3297 = vsel %vm3296, %v3293, %v3295
      %3303 = vst [vmem:[#allocation1] ss:$2 sm:$0xff] %v2847
      %s3304 = scalar_lea.vmem [#allocation1], 1
      %3305 = vst [vmem:[%s3304] ss:$2 sm:$0xff] %v2903
      %v3306 = vld.sshfl [vmem:[#allocation1] sm:$0xff pattern:$0x75316420]
      %v3307 = vld.sshfl [vmem:[#allocation1 + $0x8] sm:$0xff pattern:$0x75316420]
      %3308 = vrot.lane.b32.xlu0 %v3306, 36
      %v3309 = vpop.permute.xlu0 %3308
      %3310 = vrot.lane.b32.xlu0 %v3307, 36
      %v3311 = vpop.permute.xlu0 %3310
      %vm3312 = vcmask 293888
      %v3313 = vsel %vm3312, %v3309, %v3311
      %3318 = vst [vmem:[#allocation1] ss:$2 sm:$0xff] %v2849
      %s3319 = scalar_lea.vmem [#allocation1], 1
      %3320 = vst [vmem:[%s3319] ss:$2 sm:$0xff] %v2905
      %v3321 = vld.sshfl [vmem:[#allocation1] sm:$0xff pattern:$0x75316420]
      %v3322 = vld.sshfl [vmem:[#allocation1 + $0x8] sm:$0xff pattern:$0x75316420]
      %3323 = vrot.lane.b32.xlu0 %v3321, 77
      %v3324 = vpop.permute.xlu0 %3323
      %3325 = vrot.lane.b32.xlu0 %v3322, 77
      %v3326 = vpop.permute.xlu0 %3325
      %vm3327 = vcmask 629760
      %v3328 = vsel %vm3327, %v3324, %v3326
      %3333 = vst [vmem:[#allocation1] ss:$2 sm:$0xff] %v2851
      %s3334 = scalar_lea.vmem [#allocation1], 1
      %3335 = vst [vmem:[%s3334] ss:$2 sm:$0xff] %v2907
      %v3336 = vld.sshfl [vmem:[#allocation1] sm:$0xff pattern:$0x75316420]
      %v3337 = vld.sshfl [vmem:[#allocation1 + $0x8] sm:$0xff pattern:$0x75316420]
      %3338 = vrot.lane.b32.xlu0 %v3336, 118
      %v3339 = vpop.permute.xlu0 %3338
      %3340 = vrot.lane.b32.xlu0 %v3337, 118
      %v3341 = vpop.permute.xlu0 %3340
      %vm3342 = vcmask 965632
      %v3343 = vsel %vm3342, %v3339, %v3341
      %3349 = vst [vmem:[#allocation1] ss:$2 sm:$0xff] %v2853
      %s3350 = scalar_lea.vmem [#allocation1], 1
      %3351 = vst [vmem:[%s3350] ss:$2 sm:$0xff] %v2909
      %v3352 = vld.sshfl [vmem:[#allocation1] sm:$0xff pattern:$0x75316420]
      %v3353 = vld.sshfl [vmem:[#allocation1 + $0x8] sm:$0xff pattern:$0x75316420]
      %3354 = vrot.lane.b32.xlu0 %v3352, 31
      %v3355 = vpop.permute.xlu0 %3354
      %3356 = vrot.lane.b32.xlu0 %v3353, 31
      %v3357 = vpop.permute.xlu0 %3356
      %vm3358 = vcmask 252928
      %v3359 = vsel %vm3358, %v3355, %v3357
      %3364 = vst [vmem:[#allocation1] ss:$2 sm:$0xff] %v2959
      %s3365 = scalar_lea.vmem [#allocation1], 1
      %3366 = vst [vmem:[%s3365] ss:$2 sm:$0xff] %v3015
      %v3367 = vld.sshfl [vmem:[#allocation1] sm:$0xff pattern:$0x75316420]
      %v3368 = vld.sshfl [vmem:[#allocation1 + $0x8] sm:$0xff pattern:$0x75316420]
      %3369 = vrot.lane.b32.xlu0 %v3367, 72
      %v3370 = vpop.permute.xlu0 %3369
      %3371 = vrot.lane.b32.xlu0 %v3368, 72
      %v3372 = vpop.permute.xlu0 %3371
      %vm3373 = vcmask 588800
      %v3374 = vsel %vm3373, %v3370, %v3372
      %3379 = vst [vmem:[#allocation1] ss:$2 sm:$0xff] %v2961
      %s3380 = scalar_lea.vmem [#allocation1], 1
      %3381 = vst [vmem:[%s3380] ss:$2 sm:$0xff] %v3017
      %v3382 = vld.sshfl [vmem:[#allocation1] sm:$0xff pattern:$0x75316420]
      %v3383 = vld.sshfl [vmem:[#allocation1 + $0x8] sm:$0xff pattern:$0x75316420]
      %3384 = vrot.lane.b32.xlu0 %v3382, 113
      %v3385 = vpop.permute.xlu0 %3384
      %3386 = vrot.lane.b32.xlu0 %v3383, 113
      %v3387 = vpop.permute.xlu0 %3386
      %vm3388 = vcmask 924672
      %v3389 = vsel %vm3388, %v3385, %v3387
      %3395 = vst [vmem:[#allocation1] ss:$2 sm:$0xff] %v2963
      %s3396 = scalar_lea.vmem [#allocation1], 1
      %3397 = vst [vmem:[%s3396] ss:$2 sm:$0xff] %v3019
      %v3398 = vld.sshfl [vmem:[#allocation1] sm:$0xff pattern:$0x75316420]
      %v3399 = vld.sshfl [vmem:[#allocation1 + $0x8] sm:$0xff pattern:$0x75316420]
      %3400 = vrot.lane.b32.xlu0 %v3398, 26
      %v3401 = vpop.permute.xlu0 %3400
      %3402 = vrot.lane.b32.xlu0 %v3399, 26
      %v3403 = vpop.permute.xlu0 %3402
      %vm3404 = vcmask 211968
      %v3405 = vsel %vm3404, %v3401, %v3403
      %3410 = vst [vmem:[#allocation1] ss:$2 sm:$0xff] %v2965
      %s3411 = scalar_lea.vmem [#allocation1], 1
      %3412 = vst [vmem:[%s3411] ss:$2 sm:$0xff] %v3021
      %v3413 = vld.sshfl [vmem:[#allocation1] sm:$0xff pattern:$0x75316420]
      %v3414 = vld.sshfl [vmem:[#allocation1 + $0x8] sm:$0xff pattern:$0x75316420]
      %3415 = vrot.lane.b32.xlu0 %v3413, 67
      %v3416 = vpop.permute.xlu0 %3415
      %3417 = vrot.lane.b32.xlu0 %v3414, 67
      %v3418 = vpop.permute.xlu0 %3417
      %vm3419 = vcmask 547840
      %v3420 = vsel %vm3419, %v3416, %v3418
      %3425 = vst [vmem:[#allocation1] ss:$2 sm:$0xff] %v3071
      %s3426 = scalar_lea.vmem [#allocation1], 1
      %3427 = vst [vmem:[%s3426] ss:$2 sm:$0xff] %v3127
      %v3428 = vld.sshfl [vmem:[#allocation1] sm:$0xff pattern:$0x75316420]
      %v3429 = vld.sshfl [vmem:[#allocation1 + $0x8] sm:$0xff pattern:$0x75316420]
      %3430 = vrot.lane.b32.xlu0 %v3428, 108
      %v3431 = vpop.permute.xlu0 %3430
      %3432 = vrot.lane.b32.xlu0 %v3429, 108
      %v3433 = vpop.permute.xlu0 %3432
      %vm3434 = vcmask 883712
      %v3435 = vsel %vm3434, %v3431, %v3433
      %3441 = vst [vmem:[#allocation1] ss:$2 sm:$0xff] %v3073
      %s3442 = scalar_lea.vmem [#allocation1], 1
      %3443 = vst [vmem:[%s3442] ss:$2 sm:$0xff] %v3129
      %v3444 = vld.sshfl [vmem:[#allocation1] sm:$0xff pattern:$0x75316420]
      %v3445 = vld.sshfl [vmem:[#allocation1 + $0x8] sm:$0xff pattern:$0x75316420]
      %3446 = vrot.lane.b32.xlu0 %v3444, 21
      %v3447 = vpop.permute.xlu0 %3446
      %3448 = vrot.lane.b32.xlu0 %v3445, 21
      %v3449 = vpop.permute.xlu0 %3448
      %vm3450 = vcmask 171008
      %v3451 = vsel %vm3450, %v3447, %v3449
      %3456 = vst [vmem:[#allocation1] ss:$2 sm:$0xff] %v3075
      %s3457 = scalar_lea.vmem [#allocation1], 1
      %3458 = vst [vmem:[%s3457] ss:$2 sm:$0xff] %v3131
      %v3459 = vld.sshfl [vmem:[#allocation1] sm:$0xff pattern:$0x75316420]
      %v3460 = vld.sshfl [vmem:[#allocation1 + $0x8] sm:$0xff pattern:$0x75316420]
      %3461 = vrot.lane.b32.xlu0 %v3459, 62
      %v3462 = vpop.permute.xlu0 %3461
      %3463 = vrot.lane.b32.xlu0 %v3460, 62
      %v3464 = vpop.permute.xlu0 %3463
      %vm3465 = vcmask 506880
      %v3466 = vsel %vm3465, %v3462, %v3464
      %3471 = vst [vmem:[#allocation1] ss:$2 sm:$0xff] %v3077
      %s3472 = scalar_lea.vmem [#allocation1], 1
      %3473 = vst [vmem:[%s3472] ss:$2 sm:$0xff] %v3133
      %v3474 = vld.sshfl [vmem:[#allocation1] sm:$0xff pattern:$0x75316420]
      %v3475 = vld.sshfl [vmem:[#allocation1 + $0x8] sm:$0xff pattern:$0x75316420]
      %3476 = vrot.lane.b32.xlu0 %v3474, 103
      %v3477 = vpop.permute.xlu0 %3476
      %3478 = vrot.lane.b32.xlu0 %v3475, 103
      %v3479 = vpop.permute.xlu0 %3478
      %vm3480 = vcmask 842752
      %v3481 = vsel %vm3480, %v3477, %v3479
      %3487 = vst [vmem:[#allocation1] ss:$2 sm:$0xff] %v3183
      %s3488 = scalar_lea.vmem [#allocation1], 1
      %3489 = vst [vmem:[%s3488] ss:$2 sm:$0xff] %v3239
      %v3490 = vld.sshfl [vmem:[#allocation1] sm:$0xff pattern:$0x75316420]
      %v3491 = vld.sshfl [vmem:[#allocation1 + $0x8] sm:$0xff pattern:$0x75316420]
      %3492 = vrot.lane.b32.xlu0 %v3490, 16
      %v3493 = vpop.permute.xlu0 %3492
      %3494 = vrot.lane.b32.xlu0 %v3491, 16
      %v3495 = vpop.permute.xlu0 %3494
      %vm3496 = vcmask 130048
      %v3497 = vsel %vm3496, %v3493, %v3495
      %3502 = vst [vmem:[#allocation1] ss:$2 sm:$0xff] %v3185
      %s3503 = scalar_lea.vmem [#allocation1], 1
      %3504 = vst [vmem:[%s3503] ss:$2 sm:$0xff] %v3241
      %v3505 = vld.sshfl [vmem:[#allocation1] sm:$0xff pattern:$0x75316420]
      %v3506 = vld.sshfl [vmem:[#allocation1 + $0x8] sm:$0xff pattern:$0x75316420]
      %3507 = vrot.lane.b32.xlu0 %v3505, 57
      %v3508 = vpop.permute.xlu0 %3507
      %3509 = vrot.lane.b32.xlu0 %v3506, 57
      %v3510 = vpop.permute.xlu0 %3509
      %vm3511 = vcmask 465920
      %v3512 = vsel %vm3511, %v3508, %v3510
      %3517 = vst [vmem:[#allocation1] ss:$2 sm:$0xff] %v3187
      %s3518 = scalar_lea.vmem [#allocation1], 1
      %3519 = vst [vmem:[%s3518] ss:$2 sm:$0xff] %v3243
      %v3520 = vld.sshfl [vmem:[#allocation1] sm:$0xff pattern:$0x75316420]
      %v3521 = vld.sshfl [vmem:[#allocation1 + $0x8] sm:$0xff pattern:$0x75316420]
      %3522 = vrot.lane.b32.xlu0 %v3520, 98
      %v3523 = vpop.permute.xlu0 %3522
      %3524 = vrot.lane.b32.xlu0 %v3521, 98
      %v3525 = vpop.permute.xlu0 %3524
      %vm3526 = vcmask 801792
      %v3527 = vsel %vm3526, %v3523, %v3525
      %3533 = vst [vmem:[#allocation1] ss:$2 sm:$0xff] %v3189
      %s3534 = scalar_lea.vmem [#allocation1], 1
      %3535 = vst [vmem:[%s3534] ss:$2 sm:$0xff] %v3245
      %v3536 = vld.sshfl [vmem:[#allocation1] sm:$0xff pattern:$0x75316420]
      %v3537 = vld.sshfl [vmem:[#allocation1 + $0x8] sm:$0xff pattern:$0x75316420]
      %3538 = vrot.lane.b32.xlu0 %v3536, 11
      %v3539 = vpop.permute.xlu0 %3538
      %3540 = vrot.lane.b32.xlu0 %v3537, 11
      %v3541 = vpop.permute.xlu0 %3540
      %vm3542 = vcmask 89088
      %v3543 = vsel %vm3542, %v3539, %v3541
      %v3546 = vsel %vm3266, %v3252, %v3263
      %v3547 = vsel %vm3281, %v3267, %v3278
      %v3548 = vsel %vm3296, %v3282, %v3293
      %v3549 = vsel %vm3312, %v3295, %v3309
      %v3550 = vsel %vm3327, %v3313, %v3324
      %v3551 = vsel %vm3342, %v3328, %v3339
      %v3552 = vsel %vm3358, %v3341, %v3355
      %v3553 = vsel %vm3373, %v3359, %v3370
      %v3554 = vsel %vm3388, %v3374, %v3385
      %v3555 = vsel %vm3404, %v3387, %v3401
      %v3556 = vsel %vm3419, %v3405, %v3416
      %v3557 = vsel %vm3434, %v3420, %v3431
      %v3558 = vsel %vm3450, %v3433, %v3447
      %v3559 = vsel %vm3465, %v3451, %v3462
      %v3560 = vsel %vm3480, %v3466, %v3477
      %v3561 = vsel %vm3496, %v3479, %v3493
      %v3562 = vsel %vm3511, %v3497, %v3508
      %v3563 = vsel %vm3526, %v3512, %v3523
      %v3564 = vsel %vm3542, %v3525, %v3539
      %v3565 = vpack.c.bf16 %v3251, %v3251
      %v3566 = vpack.c.bf16 %v3546, %v3546
      %v3567 = vpack.c.bf16 %v3547, %v3547
      %v3568 = vpack.c.bf16 %v3548, %v3548
      %v3569 = vpack.c.bf16 %v3297, %v3297
      %v3570 = vpack.c.bf16 %v3549, %v3549
      %v3571 = vpack.c.bf16 %v3550, %v3550
      %v3572 = vpack.c.bf16 %v3551, %v3551
      %v3573 = vpack.c.bf16 %v3343, %v3343
      %v3574 = vpack.c.bf16 %v3552, %v3552
      %v3575 = vpack.c.bf16 %v3553, %v3553
      %v3576 = vpack.c.bf16 %v3554, %v3554
      %v3577 = vpack.c.bf16 %v3389, %v3389
      %v3578 = vpack.c.bf16 %v3555, %v3555
      %v3579 = vpack.c.bf16 %v3556, %v3556
      %v3580 = vpack.c.bf16 %v3557, %v3557
      %v3581 = vpack.c.bf16 %v3435, %v3435
      %v3582 = vpack.c.bf16 %v3558, %v3558
      %v3583 = vpack.c.bf16 %v3559, %v3559
      %v3584 = vpack.c.bf16 %v3560, %v3560
      %v3585 = vpack.c.bf16 %v3481, %v3481
      %v3586 = vpack.c.bf16 %v3561, %v3561
      %v3587 = vpack.c.bf16 %v3562, %v3562
      %v3588 = vpack.c.bf16 %v3563, %v3563
      %v3589 = vpack.c.bf16 %v3527, %v3527
      %v3590 = vpack.c.bf16 %v3564, %v3564
      %v3591 = vpack.c.bf16 %v3543, %v3543
      %v3592 = vld [vmem:[%s3] sm:$0xff]
      %v3593 = vld [vmem:[%s3 + $0x8] sm:$0xff]
      %v3594 = vld [vmem:[%s3 + $0x10] sm:$0xff]
      %v3595 = vld [vmem:[%s3 + $0x18] sm:$0xff]
      %v3596 = vld [vmem:[%s3 + $0x20] sm:$0xff]
      %v3597 = vld [vmem:[%s3 + $0x28] sm:$0xff]
      %v3598 = vld [vmem:[%s3 + $0x30] sm:$0xff]
      %v3599 = vld [vmem:[%s3 + $0x38] sm:$0xff]
      %v3600 = vld [vmem:[%s3 + $0x40] sm:$0xff]
      %v3601 = vld [vmem:[%s3 + $0x48] sm:$0xff]
      %v3602 = vld [vmem:[%s3 + $0x50] sm:$0xff]
      %v3603 = vld [vmem:[%s3 + $0x58] sm:$0xff]
      %v3604 = vld [vmem:[%s3 + $0x60] sm:$0xff]
      %v3605 = vld [vmem:[%s3 + $0x68] sm:$0xff]
      %v3606 = vld [vmem:[%s3 + $0x70] sm:$0xff]
      %v3607 = vld [vmem:[%s3 + $0x78] sm:$0xff]
      %v3608 = vld [vmem:[%s3 + $0x80] sm:$0xff]
      %v3609 = vld [vmem:[%s3 + $0x88] sm:$0xff]
      %v3610 = vld [vmem:[%s3 + $0x90] sm:$0xff]
      %v3611 = vld [vmem:[%s3 + $0x98] sm:$0xff]
      %v3612 = vld [vmem:[%s3 + $0xa0] sm:$0xff]
      %v3613 = vld [vmem:[%s3 + $0xa8] sm:$0xff]
      %v3614 = vld [vmem:[%s3 + $0xb0] sm:$0xff]
      %v3615 = vld [vmem:[%s3 + $0xb8] sm:$0xff]
      %v3616 = vld [vmem:[%s3 + $0xc0] sm:$0xff]
      %v3617 = vld [vmem:[%s3 + $0xc8] sm:$0xff]
      %v3618 = vld [vmem:[%s3 + $0xd0] sm:$0xff]
      %v3619 = vld [vmem:[%s3 + $0xd8] sm:$0xff]
      %v3620 = vld [vmem:[%s3 + $0xe0] sm:$0xff]
      %v3621 = vld [vmem:[%s3 + $0xe8] sm:$0xff]
      %v3622 = vld [vmem:[%s3 + $0xf0] sm:$0xff]
      %v3623 = vld [vmem:[%s3 + $0xf8] sm:$0xff]
      %v3624 = vld [vmem:[%s3 + $0x100] sm:$0xff]
      %v3625 = vld [vmem:[%s3 + $0x108] sm:$0xff]
      %v3626 = vld [vmem:[%s3 + $0x110] sm:$0xff]
      %v3627 = vld [vmem:[%s3 + $0x118] sm:$0xff]
      %v3628 = vld [vmem:[%s3 + $0x120] sm:$0xff]
      %v3629 = vld [vmem:[%s3 + $0x128] sm:$0xff]
      %v3630 = vld [vmem:[%s3 + $0x130] sm:$0xff]
      %v3631 = vld [vmem:[%s3 + $0x138] sm:$0xff]
      %v3632 = vld [vmem:[%s3 + $0x140] sm:$0xff]
      %v3633 = vld [vmem:[%s3 + $0x148] sm:$0xff]
      %v3634 = vld [vmem:[%s3 + $0x150] sm:$0xff]
      %v3635 = vld [vmem:[%s3 + $0x158] sm:$0xff]
      %v3636 = vld [vmem:[%s3 + $0x160] sm:$0xff]
      %v3637 = vld [vmem:[%s3 + $0x168] sm:$0xff]
      %v3638 = vld [vmem:[%s3 + $0x170] sm:$0xff]
      %v3639 = vld [vmem:[%s3 + $0x178] sm:$0xff]
      %v3640 = vld [vmem:[%s3 + $0x180] sm:$0xff]
      %v3641 = vld [vmem:[%s3 + $0x188] sm:$0xff]
      %v3642 = vld [vmem:[%s3 + $0x190] sm:$0xff]
      %v3643 = vld [vmem:[%s3 + $0x198] sm:$0xff]
      %v3644 = vld [vmem:[%s3 + $0x1a0] sm:$0xff]
      %v3645 = vld [vmem:[%s3 + $0x1a8] sm:$0xff]
      %v3646 = vld [vmem:[%s3 + $0x1b0] sm:$0xff]
      %v3647 = vld [vmem:[%s3 + $0x1b8] sm:$0xff]
      %v3648 = vld [vmem:[%s3 + $0x1c0] sm:$0xff]
      %v3649 = vld [vmem:[%s3 + $0x1c8] sm:$0xff]
      %v3650 = vld [vmem:[%s3 + $0x1d0] sm:$0xff]
      %v3651 = vld [vmem:[%s3 + $0x1d8] sm:$0xff]
      %v3652 = vld [vmem:[%s3 + $0x1e0] sm:$0xff]
      %v3653 = vld [vmem:[%s3 + $0x1e8] sm:$0xff]
      %v3654 = vld [vmem:[%s3 + $0x1f0] sm:$0xff]
      %v3655 = vld [vmem:[%s3 + $0x1f8] sm:$0xff]
      %v3656 = vld [vmem:[%s3 + $0x200] sm:$0xff]
      %v3657 = vld [vmem:[%s3 + $0x208] sm:$0xff]
      %v3658 = vld [vmem:[%s3 + $0x210] sm:$0xff]
      %v3659 = vld [vmem:[%s3 + $0x218] sm:$0xff]
      %v3660 = vld [vmem:[%s3 + $0x220] sm:$0xff]
      %v3661 = vld [vmem:[%s3 + $0x228] sm:$0xff]
      %v3662 = vld [vmem:[%s3 + $0x230] sm:$0xff]
      %v3663 = vld [vmem:[%s3 + $0x238] sm:$0xff]
      %v3664 = vld [vmem:[%s3 + $0x240] sm:$0xff]
      %v3665 = vld [vmem:[%s3 + $0x248] sm:$0xff]
      %v3666 = vld [vmem:[%s3 + $0x250] sm:$0xff]
      %v3667 = vld [vmem:[%s3 + $0x258] sm:$0xff]
      %v3668 = vld [vmem:[%s3 + $0x260] sm:$0xff]
      %v3669 = vld [vmem:[%s3 + $0x268] sm:$0xff]
      %v3670 = vld [vmem:[%s3 + $0x270] sm:$0xff]
      %v3671 = vld [vmem:[%s3 + $0x278] sm:$0xff]
      %v3672 = vld [vmem:[%s3 + $0x280] sm:$0xff]
      %v3673 = vld [vmem:[%s3 + $0x288] sm:$0xff]
      %v3674 = vld [vmem:[%s3 + $0x290] sm:$0xff]
      %v3675 = vld [vmem:[%s3 + $0x298] sm:$0xff]
      %v3676 = vld [vmem:[%s3 + $0x2a0] sm:$0xff]
      %v3677 = vld [vmem:[%s3 + $0x2a8] sm:$0xff]
      %v3678 = vld [vmem:[%s3 + $0x2b0] sm:$0xff]
      %v3679 = vld [vmem:[%s3 + $0x2b8] sm:$0xff]
      %v3680 = vld [vmem:[%s3 + $0x2c0] sm:$0xff]
      %v3681 = vld [vmem:[%s3 + $0x2c8] sm:$0xff]
      %v3682 = vld [vmem:[%s3 + $0x2d0] sm:$0xff]
      %v3683 = vld [vmem:[%s3 + $0x2d8] sm:$0xff]
      %v3684 = vld [vmem:[%s3 + $0x2e0] sm:$0xff]
      %v3685 = vld [vmem:[%s3 + $0x2e8] sm:$0xff]
      %v3686 = vld [vmem:[%s3 + $0x2f0] sm:$0xff]
      %v3687 = vld [vmem:[%s3 + $0x2f8] sm:$0xff]
      %v3688 = vld [vmem:[%s3 + $0x300] sm:$0xff]
      %v3689 = vld [vmem:[%s3 + $0x308] sm:$0xff]
      %v3690 = vld [vmem:[%s3 + $0x310] sm:$0xff]
      %v3691 = vld [vmem:[%s3 + $0x318] sm:$0xff]
      %v3692 = vld [vmem:[%s3 + $0x320] sm:$0xff]
      %v3693 = vld [vmem:[%s3 + $0x328] sm:$0xff]
      %v3694 = vld [vmem:[%s3 + $0x330] sm:$0xff]
      %v3695 = vld [vmem:[%s3 + $0x338] sm:$0xff]
      %v3696 = vld [vmem:[%s3 + $0x340] sm:$0xff]
      %v3697 = vld [vmem:[%s3 + $0x348] sm:$0xff]
      %v3698 = vld [vmem:[%s3 + $0x350] sm:$0xff]
      %v3699 = vld [vmem:[%s3 + $0x358] sm:$0xff]
      %v3700 = vld [vmem:[%s3 + $0x360] sm:$0xff]
      %v3701 = vld [vmem:[%s3 + $0x368] sm:$0xff]
      %v3702 = vld [vmem:[%s3 + $0x370] sm:$0xff]
      %v3703 = vld [vmem:[%s3 + $0x378] sm:$0xff]
      %v3704 = vld [vmem:[%s3 + $0x380] sm:$0xff]
      %v3705 = vld [vmem:[%s3 + $0x388] sm:$0xff]
      %v3706 = vld [vmem:[%s3 + $0x390] sm:$0xff]
      %v3707 = vld [vmem:[%s3 + $0x398] sm:$0xff]
      %v3708 = vld [vmem:[%s3 + $0x3a0] sm:$0xff]
      %v3709 = vld [vmem:[%s3 + $0x3a8] sm:$0xff]
      %v3710 = vld [vmem:[%s3 + $0x3b0] sm:$0xff]
      %v3711 = vld [vmem:[%s3 + $0x3b8] sm:$0xff]
      %v3712 = vld [vmem:[%s3 + $0x3c0] sm:$0xff]
      %v3713 = vld [vmem:[%s3 + $0x3c8] sm:$0xff]
      %v3714 = vld [vmem:[%s3 + $0x3d0] sm:$0xff]
      %v3715 = vld [vmem:[%s3 + $0x3d8] sm:$0xff]
      %v3716 = vld [vmem:[%s3 + $0x3e0] sm:$0xff]
      %v3717 = vld [vmem:[%s3 + $0x3e8] sm:$0xff]
      %v3718 = vld [vmem:[%s3 + $0x3f0] sm:$0xff]
      %v3719 = vld [vmem:[%s3 + $0x3f8] sm:$0xff]
      %v3720 = vld [vmem:[%s3 + $0x400] sm:$0xff]
      %v3721 = vld [vmem:[%s3 + $0x408] sm:$0xff]
      %v3722 = vld [vmem:[%s3 + $0x410] sm:$0xff]
      %v3723 = vld [vmem:[%s3 + $0x418] sm:$0xff]
      %v3724 = vld [vmem:[%s3 + $0x420] sm:$0xff]
      %v3725 = vld [vmem:[%s3 + $0x428] sm:$0xff]
      %v3726 = vld [vmem:[%s3 + $0x430] sm:$0xff]
      %v3727 = vld [vmem:[%s3 + $0x438] sm:$0xff]
      %v3728 = vld [vmem:[%s3 + $0x440] sm:$0xff]
      %v3729 = vld [vmem:[%s3 + $0x448] sm:$0xff]
      %v3730 = vld [vmem:[%s3 + $0x450] sm:$0xff]
      %v3731 = vld [vmem:[%s3 + $0x458] sm:$0xff]
      %v3732 = vld [vmem:[%s3 + $0x460] sm:$0xff]
      %v3733 = vld [vmem:[%s3 + $0x468] sm:$0xff]
      %v3734 = vld [vmem:[%s3 + $0x470] sm:$0xff]
      %v3735 = vld [vmem:[%s3 + $0x478] sm:$0xff]
      %v3736 = vld [vmem:[%s3 + $0x480] sm:$0xff]
      %v3737 = vld [vmem:[%s3 + $0x488] sm:$0xff]
      %v3738 = vld [vmem:[%s3 + $0x490] sm:$0xff]
      %v3739 = vld [vmem:[%s3 + $0x498] sm:$0xff]
      %v3740 = vld [vmem:[%s3 + $0x4a0] sm:$0xff]
      %v3741 = vld [vmem:[%s3 + $0x4a8] sm:$0xff]
      %v3742 = vld [vmem:[%s3 + $0x4b0] sm:$0xff]
      %v3743 = vld [vmem:[%s3 + $0x4b8] sm:$0xff]
      %v3744 = vld [vmem:[%s3 + $0x4c0] sm:$0xff]
      %v3745 = vld [vmem:[%s3 + $0x4c8] sm:$0xff]
      %v3746 = vld [vmem:[%s3 + $0x4d0] sm:$0xff]
      %v3747 = vld [vmem:[%s3 + $0x4d8] sm:$0xff]
      %v3748 = vld [vmem:[%s3 + $0x4e0] sm:$0xff]
      %v3749 = vld [vmem:[%s3 + $0x4e8] sm:$0xff]
      %v3750 = vld [vmem:[%s3 + $0x4f0] sm:$0xff]
      %v3751 = vld [vmem:[%s3 + $0x4f8] sm:$0xff]
      %v3752 = vld [vmem:[%s3 + $0x500] sm:$0xff]
      %v3753 = vld [vmem:[%s3 + $0x508] sm:$0xff]
      %v3754 = vld [vmem:[%s3 + $0x510] sm:$0xff]
      %v3755 = vld [vmem:[%s3 + $0x518] sm:$0xff]
      %v3756 = vld [vmem:[%s3 + $0x520] sm:$0xff]
      %v3757 = vld [vmem:[%s3 + $0x528] sm:$0xff]
      %v3758 = vld [vmem:[%s3 + $0x530] sm:$0xff]
      %v3759 = vld [vmem:[%s3 + $0x538] sm:$0xff]
      %v3760 = vld [vmem:[%s3 + $0x540] sm:$0xff]
      %v3761 = vld [vmem:[%s3 + $0x548] sm:$0xff]
      %v3762 = vld [vmem:[%s3 + $0x550] sm:$0xff]
      %v3763 = vld [vmem:[%s3 + $0x558] sm:$0xff]
      %v3764 = vld [vmem:[%s3 + $0x560] sm:$0xff]
      %v3765 = vld [vmem:[%s3 + $0x568] sm:$0xff]
      %v3766 = vld [vmem:[%s3 + $0x570] sm:$0xff]
      %v3767 = vld [vmem:[%s3 + $0x578] sm:$0xff]
      %v3768 = vld [vmem:[%s3 + $0x580] sm:$0xff]
      %v3769 = vld [vmem:[%s3 + $0x588] sm:$0xff]
      %v3770 = vld [vmem:[%s3 + $0x590] sm:$0xff]
      %v3771 = vld [vmem:[%s3 + $0x598] sm:$0xff]
      %v3772 = vld [vmem:[%s3 + $0x5a0] sm:$0xff]
      %v3773 = vld [vmem:[%s3 + $0x5a8] sm:$0xff]
      %v3774 = vld [vmem:[%s3 + $0x5b0] sm:$0xff]
      %v3775 = vld [vmem:[%s3 + $0x5b8] sm:$0xff]
      %v3776 = vld [vmem:[%s3 + $0x5c0] sm:$0xff]
      %v3777 = vld [vmem:[%s3 + $0x5c8] sm:$0xff]
      %v3778 = vld [vmem:[%s3 + $0x5d0] sm:$0xff]
      %v3779 = vld [vmem:[%s3 + $0x5d8] sm:$0xff]
      %v3780 = vld [vmem:[%s3 + $0x5e0] sm:$0xff]
      %v3781 = vld [vmem:[%s3 + $0x5e8] sm:$0xff]
      %v3782 = vld [vmem:[%s3 + $0x5f0] sm:$0xff]
      %v3783 = vld [vmem:[%s3 + $0x5f8] sm:$0xff]
      %v3784 = vld [vmem:[%s3 + $0x600] sm:$0xff]
      %v3785 = vld [vmem:[%s3 + $0x608] sm:$0xff]
      %v3786 = vld [vmem:[%s3 + $0x610] sm:$0xff]
      %v3787 = vld [vmem:[%s3 + $0x618] sm:$0xff]
      %v3788 = vld [vmem:[%s3 + $0x620] sm:$0xff]
      %v3789 = vld [vmem:[%s3 + $0x628] sm:$0xff]
      %v3790 = vld [vmem:[%s3 + $0x630] sm:$0xff]
      %v3791 = vld [vmem:[%s3 + $0x638] sm:$0xff]
      %v3792 = vld [vmem:[%s3 + $0x640] sm:$0xff]
      %v3793 = vld [vmem:[%s3 + $0x648] sm:$0xff]
      %v3794 = vld [vmem:[%s3 + $0x650] sm:$0xff]
      %v3795 = vld [vmem:[%s3 + $0x658] sm:$0xff]
      %v3796 = vld [vmem:[%s3 + $0x660] sm:$0xff]
      %v3797 = vld [vmem:[%s3 + $0x668] sm:$0xff]
      %v3798 = vld [vmem:[%s3 + $0x670] sm:$0xff]
      %v3799 = vld [vmem:[%s3 + $0x678] sm:$0xff]
      %v3800 = vld [vmem:[%s3 + $0x680] sm:$0xff]
      %v3801 = vld [vmem:[%s3 + $0x688] sm:$0xff]
      %v3802 = vld [vmem:[%s3 + $0x690] sm:$0xff]
      %v3803 = vld [vmem:[%s3 + $0x698] sm:$0xff]
      %v3804 = vld [vmem:[%s3 + $0x6a0] sm:$0xff]
      %v3805 = vld [vmem:[%s3 + $0x6a8] sm:$0xff]
      %v3806 = vld [vmem:[%s3 + $0x6b0] sm:$0xff]
      %v3807 = vld [vmem:[%s3 + $0x6b8] sm:$0xff]
      %v3808 = vld [vmem:[%s3 + $0x6c0] sm:$0xff]
      %v3809 = vld [vmem:[%s3 + $0x6c8] sm:$0xff]
      %v3810 = vld [vmem:[%s3 + $0x6d0] sm:$0xff]
      %v3811 = vld [vmem:[%s3 + $0x6d8] sm:$0xff]
      %v3812 = vld [vmem:[%s3 + $0x6e0] sm:$0xff]
      %v3813 = vld [vmem:[%s3 + $0x6e8] sm:$0xff]
      %v3814 = vld [vmem:[%s3 + $0x6f0] sm:$0xff]
      %v3815 = vld [vmem:[%s3 + $0x6f8] sm:$0xff]
      %v3816 = vld [vmem:[%s3 + $0x700] sm:$0xff]
      %v3817 = vld [vmem:[%s3 + $0x708] sm:$0xff]
      %v3818 = vld [vmem:[%s3 + $0x710] sm:$0xff]
      %v3819 = vld [vmem:[%s3 + $0x718] sm:$0xff]
      %v3820 = vld [vmem:[%s3 + $0x720] sm:$0xff]
      %v3821 = vld [vmem:[%s3 + $0x728] sm:$0xff]
      %v3822 = vld [vmem:[%s3 + $0x730] sm:$0xff]
      %v3823 = vld [vmem:[%s3 + $0x738] sm:$0xff]
      %v3824 = vld [vmem:[%s3 + $0x740] sm:$0xff]
      %v3825 = vld [vmem:[%s3 + $0x748] sm:$0xff]
      %v3826 = vld [vmem:[%s3 + $0x750] sm:$0xff]
      %v3827 = vld [vmem:[%s3 + $0x758] sm:$0xff]
      %v3828 = vld [vmem:[%s3 + $0x760] sm:$0xff]
      %v3829 = vld [vmem:[%s3 + $0x768] sm:$0xff]
      %v3830 = vld [vmem:[%s3 + $0x770] sm:$0xff]
      %v3831 = vld [vmem:[%s3 + $0x778] sm:$0xff]
      %v3832 = vld [vmem:[%s3 + $0x780] sm:$0xff]
      %v3833 = vld [vmem:[%s3 + $0x788] sm:$0xff]
      %v3834 = vld [vmem:[%s3 + $0x790] sm:$0xff]
      %v3835 = vld [vmem:[%s3 + $0x798] sm:$0xff]
      %v3836 = vld [vmem:[%s3 + $0x7a0] sm:$0xff]
      %v3837 = vld [vmem:[%s3 + $0x7a8] sm:$0xff]
      %v3838 = vld [vmem:[%s3 + $0x7b0] sm:$0xff]
      %v3839 = vld [vmem:[%s3 + $0x7b8] sm:$0xff]
      %v3840 = vld [vmem:[%s3 + $0x7c0] sm:$0xff]
      %v3841 = vld [vmem:[%s3 + $0x7c8] sm:$0xff]
      %v3842 = vld [vmem:[%s3 + $0x7d0] sm:$0xff]
      %v3843 = vld [vmem:[%s3 + $0x7d8] sm:$0xff]
      %v3844 = vld [vmem:[%s3 + $0x7e0] sm:$0xff]
      %v3845 = vld [vmem:[%s3 + $0x7e8] sm:$0xff]
      %v3846 = vld [vmem:[%s3 + $0x7f0] sm:$0xff]
      %v3847 = vld [vmem:[%s3 + $0x7f8] sm:$0xff]
      %v3848 = vld [vmem:[%s3 + $0x800] sm:$0xff]
      %v3849 = vld [vmem:[%s3 + $0x808] sm:$0xff]
      %v3850 = vld [vmem:[%s3 + $0x810] sm:$0xff]
      %v3851 = vld [vmem:[%s3 + $0x818] sm:$0xff]
      %v3852 = vld [vmem:[%s3 + $0x820] sm:$0xff]
      %v3853 = vld [vmem:[%s3 + $0x828] sm:$0xff]
      %v3854 = vld [vmem:[%s3 + $0x830] sm:$0xff]
      %v3855 = vld [vmem:[%s3 + $0x838] sm:$0xff]
      %v3856 = vld [vmem:[%s3 + $0x840] sm:$0xff]
      %v3857 = vld [vmem:[%s3 + $0x848] sm:$0xff]
      %v3858 = vld [vmem:[%s3 + $0x850] sm:$0xff]
      %v3859 = vld [vmem:[%s3 + $0x858] sm:$0xff]
      %v3860 = vld [vmem:[%s3 + $0x860] sm:$0xff]
      %v3861 = vld [vmem:[%s3 + $0x868] sm:$0xff]
      %v3862 = vld [vmem:[%s3 + $0x870] sm:$0xff]
      %v3863 = vld [vmem:[%s3 + $0x878] sm:$0xff]
      %v3864 = vld [vmem:[%s3 + $0x880] sm:$0xff]
      %v3865 = vld [vmem:[%s3 + $0x888] sm:$0xff]
      %v3866 = vld [vmem:[%s3 + $0x890] sm:$0xff]
      %v3867 = vld [vmem:[%s3 + $0x898] sm:$0xff]
      %v3868 = vld [vmem:[%s3 + $0x8a0] sm:$0xff]
      %v3869 = vld [vmem:[%s3 + $0x8a8] sm:$0xff]
      %v3870 = vld [vmem:[%s3 + $0x8b0] sm:$0xff]
      %v3871 = vld [vmem:[%s3 + $0x8b8] sm:$0xff]
      %v3872 = vld [vmem:[%s3 + $0x8c0] sm:$0xff]
      %v3873 = vld [vmem:[%s3 + $0x8c8] sm:$0xff]
      %v3874 = vld [vmem:[%s3 + $0x8d0] sm:$0xff]
      %v3875 = vld [vmem:[%s3 + $0x8d8] sm:$0xff]
      %v3876 = vld [vmem:[%s3 + $0x8e0] sm:$0xff]
      %v3877 = vld [vmem:[%s3 + $0x8e8] sm:$0xff]
      %v3878 = vld [vmem:[%s3 + $0x8f0] sm:$0xff]
      %v3879 = vld [vmem:[%s3 + $0x8f8] sm:$0xff]
      %v3880 = vld [vmem:[%s3 + $0x900] sm:$0xff]
      %v3881 = vld [vmem:[%s3 + $0x908] sm:$0xff]
      %v3882 = vld [vmem:[%s3 + $0x910] sm:$0xff]
      %v3883 = vld [vmem:[%s3 + $0x918] sm:$0xff]
      %v3884 = vld [vmem:[%s3 + $0x920] sm:$0xff]
      %v3885 = vld [vmem:[%s3 + $0x928] sm:$0xff]
      %v3886 = vld [vmem:[%s3 + $0x930] sm:$0xff]
      %v3887 = vld [vmem:[%s3 + $0x938] sm:$0xff]
      %v3888 = vld [vmem:[%s3 + $0x940] sm:$0xff]
      %v3889 = vld [vmem:[%s3 + $0x948] sm:$0xff]
      %v3890 = vld [vmem:[%s3 + $0x950] sm:$0xff]
      %v3891 = vld [vmem:[%s3 + $0x958] sm:$0xff]
      %v3892 = vld [vmem:[%s3 + $0x960] sm:$0xff]
      %v3893 = vld [vmem:[%s3 + $0x968] sm:$0xff]
      %v3894 = vld [vmem:[%s3 + $0x970] sm:$0xff]
      %v3895 = vld [vmem:[%s3 + $0x978] sm:$0xff]
      %v3896 = vld [vmem:[%s3 + $0x980] sm:$0xff]
      %v3897 = vld [vmem:[%s3 + $0x988] sm:$0xff]
      %v3898 = vld [vmem:[%s3 + $0x990] sm:$0xff]
      %v3899 = vld [vmem:[%s3 + $0x998] sm:$0xff]
      %v3900 = vld [vmem:[%s3 + $0x9a0] sm:$0xff]
      %v3901 = vld [vmem:[%s3 + $0x9a8] sm:$0xff]
      %v3902 = vld [vmem:[%s3 + $0x9b0] sm:$0xff]
      %v3903 = vld [vmem:[%s3 + $0x9b8] sm:$0xff]
      %v3904 = vld [vmem:[%s3 + $0x9c0] sm:$0xff]
      %v3905 = vld [vmem:[%s3 + $0x9c8] sm:$0xff]
      %v3906 = vld [vmem:[%s3 + $0x9d0] sm:$0xff]
      %v3907 = vld [vmem:[%s3 + $0x9d8] sm:$0xff]
      %v3908 = vld [vmem:[%s3 + $0x9e0] sm:$0xff]
      %v3909 = vld [vmem:[%s3 + $0x9e8] sm:$0xff]
      %v3910 = vld [vmem:[%s3 + $0x9f0] sm:$0xff]
      %v3911 = vld [vmem:[%s3 + $0x9f8] sm:$0xff]
      %v3912 = vld [vmem:[%s3 + $0xa00] sm:$0xff]
      %v3913 = vld [vmem:[%s3 + $0xa08] sm:$0xff]
      %v3914 = vld [vmem:[%s3 + $0xa10] sm:$0xff]
      %v3915 = vld [vmem:[%s3 + $0xa18] sm:$0xff]
      %v3916 = vld [vmem:[%s3 + $0xa20] sm:$0xff]
      %v3917 = vld [vmem:[%s3 + $0xa28] sm:$0xff]
      %v3918 = vld [vmem:[%s3 + $0xa30] sm:$0xff]
      %v3919 = vld [vmem:[%s3 + $0xa38] sm:$0xff]
      %v3920 = vld [vmem:[%s3 + $0xa40] sm:$0xff]
      %v3921 = vld [vmem:[%s3 + $0xa48] sm:$0xff]
      %v3922 = vld [vmem:[%s3 + $0xa50] sm:$0xff]
      %v3923 = vld [vmem:[%s3 + $0xa58] sm:$0xff]
      %v3924 = vld [vmem:[%s3 + $0xa60] sm:$0xff]
      %v3925 = vld [vmem:[%s3 + $0xa68] sm:$0xff]
      %v3926 = vld [vmem:[%s3 + $0xa70] sm:$0xff]
      %v3927 = vld [vmem:[%s3 + $0xa78] sm:$0xff]
      %v3928 = vld [vmem:[%s3 + $0xa80] sm:$0xff]
      %v3929 = vld [vmem:[%s3 + $0xa88] sm:$0xff]
      %v3930 = vld [vmem:[%s3 + $0xa90] sm:$0xff]
      %v3931 = vld [vmem:[%s3 + $0xa98] sm:$0xff]
      %v3932 = vld [vmem:[%s3 + $0xaa0] sm:$0xff]
      %v3933 = vld [vmem:[%s3 + $0xaa8] sm:$0xff]
      %v3934 = vld [vmem:[%s3 + $0xab0] sm:$0xff]
      %v3935 = vld [vmem:[%s3 + $0xab8] sm:$0xff]
      %v3936 = vld [vmem:[%s3 + $0xac0] sm:$0xff]
      %v3937 = vld [vmem:[%s3 + $0xac8] sm:$0xff]
      %v3938 = vld [vmem:[%s3 + $0xad0] sm:$0xff]
      %v3939 = vld [vmem:[%s3 + $0xad8] sm:$0xff]
      %v3940 = vld [vmem:[%s3 + $0xae0] sm:$0xff]
      %v3941 = vld [vmem:[%s3 + $0xae8] sm:$0xff]
      %v3942 = vld [vmem:[%s3 + $0xaf0] sm:$0xff]
      %v3943 = vld [vmem:[%s3 + $0xaf8] sm:$0xff]
      %v3944 = vld [vmem:[%s3 + $0xb00] sm:$0xff]
      %v3945 = vld [vmem:[%s3 + $0xb08] sm:$0xff]
      %v3946 = vld [vmem:[%s3 + $0xb10] sm:$0xff]
      %v3947 = vld [vmem:[%s3 + $0xb18] sm:$0xff]
      %v3948 = vld [vmem:[%s3 + $0xb20] sm:$0xff]
      %v3949 = vld [vmem:[%s3 + $0xb28] sm:$0xff]
      %v3950 = vld [vmem:[%s3 + $0xb30] sm:$0xff]
      %v3951 = vld [vmem:[%s3 + $0xb38] sm:$0xff]
      %v3952 = vld [vmem:[%s3 + $0xb40] sm:$0xff]
      %v3953 = vld [vmem:[%s3 + $0xb48] sm:$0xff]
      %v3954 = vld [vmem:[%s3 + $0xb50] sm:$0xff]
      %v3955 = vld [vmem:[%s3 + $0xb58] sm:$0xff]
      %v3956 = vld [vmem:[%s3 + $0xb60] sm:$0xff]
      %v3957 = vld [vmem:[%s3 + $0xb68] sm:$0xff]
      %v3958 = vld [vmem:[%s3 + $0xb70] sm:$0xff]
      %v3959 = vld [vmem:[%s3 + $0xb78] sm:$0xff]
      %v3960 = vld [vmem:[%s3 + $0xb80] sm:$0xff]
      %v3961 = vld [vmem:[%s3 + $0xb88] sm:$0xff]
      %v3962 = vld [vmem:[%s3 + $0xb90] sm:$0xff]
      %v3963 = vld [vmem:[%s3 + $0xb98] sm:$0xff]
      %v3964 = vld [vmem:[%s3 + $0xba0] sm:$0xff]
      %v3965 = vld [vmem:[%s3 + $0xba8] sm:$0xff]
      %v3966 = vld [vmem:[%s3 + $0xbb0] sm:$0xff]
      %v3967 = vld [vmem:[%s3 + $0xbb8] sm:$0xff]
      %v3968 = vld [vmem:[%s3 + $0xbc0] sm:$0xff]
      %v3969 = vld [vmem:[%s3 + $0xbc8] sm:$0xff]
      %v3970 = vld [vmem:[%s3 + $0xbd0] sm:$0xff]
      %v3971 = vld [vmem:[%s3 + $0xbd8] sm:$0xff]
      %v3972 = vld [vmem:[%s3 + $0xbe0] sm:$0xff]
      %v3973 = vld [vmem:[%s3 + $0xbe8] sm:$0xff]
      %v3974 = vld [vmem:[%s3 + $0xbf0] sm:$0xff]
      %v3975 = vld [vmem:[%s3 + $0xbf8] sm:$0xff]
      %v3976 = vld [vmem:[%s3 + $0xc00] sm:$0xff]
      %v3977 = vld [vmem:[%s3 + $0xc08] sm:$0xff]
      %v3978 = vld [vmem:[%s3 + $0xc10] sm:$0xff]
      %v3979 = vld [vmem:[%s3 + $0xc18] sm:$0xff]
      %v3980 = vld [vmem:[%s3 + $0xc20] sm:$0xff]
      %v3981 = vld [vmem:[%s3 + $0xc28] sm:$0xff]
      %v3982 = vld [vmem:[%s3 + $0xc30] sm:$0xff]
      %v3983 = vld [vmem:[%s3 + $0xc38] sm:$0xff]
      %v3984 = vld [vmem:[%s3 + $0xc40] sm:$0xff]
      %v3985 = vld [vmem:[%s3 + $0xc48] sm:$0xff]
      %v3986 = vld [vmem:[%s3 + $0xc50] sm:$0xff]
      %v3987 = vld [vmem:[%s3 + $0xc58] sm:$0xff]
      %v3988 = vld [vmem:[%s3 + $0xc60] sm:$0xff]
      %v3989 = vld [vmem:[%s3 + $0xc68] sm:$0xff]
      %v3990 = vld [vmem:[%s3 + $0xc70] sm:$0xff]
      %v3991 = vld [vmem:[%s3 + $0xc78] sm:$0xff]
      %v3992 = vld [vmem:[%s3 + $0xc80] sm:$0xff]
      %v3993 = vld [vmem:[%s3 + $0xc88] sm:$0xff]
      %v3994 = vld [vmem:[%s3 + $0xc90] sm:$0xff]
      %v3995 = vld [vmem:[%s3 + $0xc98] sm:$0xff]
      %v3996 = vld [vmem:[%s3 + $0xca0] sm:$0xff]
      %v3997 = vld [vmem:[%s3 + $0xca8] sm:$0xff]
      %v3998 = vld [vmem:[%s3 + $0xcb0] sm:$0xff]
      %v3999 = vld [vmem:[%s3 + $0xcb8] sm:$0xff]
      %v4000 = vld [vmem:[%s3 + $0xcc0] sm:$0xff]
      %v4001 = vld [vmem:[%s3 + $0xcc8] sm:$0xff]
      %v4002 = vld [vmem:[%s3 + $0xcd0] sm:$0xff]
      %v4003 = vld [vmem:[%s3 + $0xcd8] sm:$0xff]
      %v4004 = vld [vmem:[%s3 + $0xce0] sm:$0xff]
      %v4005 = vld [vmem:[%s3 + $0xce8] sm:$0xff]
      %v4006 = vld [vmem:[%s3 + $0xcf0] sm:$0xff]
      %v4007 = vld [vmem:[%s3 + $0xcf8] sm:$0xff]
      %v4008 = vld [vmem:[%s3 + $0xd00] sm:$0xff]
      %v4009 = vld [vmem:[%s3 + $0xd08] sm:$0xff]
      %v4010 = vld [vmem:[%s3 + $0xd10] sm:$0xff]
      %v4011 = vld [vmem:[%s3 + $0xd18] sm:$0xff]
      %v4012 = vld [vmem:[%s3 + $0xd20] sm:$0xff]
      %v4013 = vld [vmem:[%s3 + $0xd28] sm:$0xff]
      %v4014 = vld [vmem:[%s3 + $0xd30] sm:$0xff]
      %v4015 = vld [vmem:[%s3 + $0xd38] sm:$0xff]
      %v4016 = vld [vmem:[%s3 + $0xd40] sm:$0xff]
      %v4017 = vld [vmem:[%s3 + $0xd48] sm:$0xff]
      %v4018 = vld [vmem:[%s3 + $0xd50] sm:$0xff]
      %v4019 = vld [vmem:[%s3 + $0xd58] sm:$0xff]
      %v4020 = vld [vmem:[%s3 + $0xd60] sm:$0xff]
      %v4021 = vld [vmem:[%s3 + $0xd68] sm:$0xff]
      %v4022 = vld [vmem:[%s3 + $0xd70] sm:$0xff]
      %v4023 = vld [vmem:[%s3 + $0xd78] sm:$0xff]
      %v4024 = vld [vmem:[%s3 + $0xd80] sm:$0xff]
      %v4025 = vld [vmem:[%s3 + $0xd88] sm:$0xff]
      %v4026 = vld [vmem:[%s3 + $0xd90] sm:$0xff]
      %v4027 = vld [vmem:[%s3 + $0xd98] sm:$0xff]
      %v4028 = vld [vmem:[%s3 + $0xda0] sm:$0xff]
      %v4029 = vld [vmem:[%s3 + $0xda8] sm:$0xff]
      %v4030 = vld [vmem:[%s3 + $0xdb0] sm:$0xff]
      %v4031 = vld [vmem:[%s3 + $0xdb8] sm:$0xff]
      %v4032 = vld [vmem:[%s3 + $0xdc0] sm:$0xff]
      %v4033 = vld [vmem:[%s3 + $0xdc8] sm:$0xff]
      %v4034 = vld [vmem:[%s3 + $0xdd0] sm:$0xff]
      %v4035 = vld [vmem:[%s3 + $0xdd8] sm:$0xff]
      %v4036 = vld [vmem:[%s3 + $0xde0] sm:$0xff]
      %v4037 = vld [vmem:[%s3 + $0xde8] sm:$0xff]
      %v4038 = vld [vmem:[%s3 + $0xdf0] sm:$0xff]
      %v4039 = vld [vmem:[%s3 + $0xdf8] sm:$0xff]
      %v4040 = vld [vmem:[%s3 + $0xe00] sm:$0xff]
      %v4041 = vld [vmem:[%s3 + $0xe08] sm:$0xff]
      %v4042 = vld [vmem:[%s3 + $0xe10] sm:$0xff]
      %v4043 = vld [vmem:[%s3 + $0xe18] sm:$0xff]
      %v4044 = vld [vmem:[%s3 + $0xe20] sm:$0xff]
      %v4045 = vld [vmem:[%s3 + $0xe28] sm:$0xff]
      %v4046 = vld [vmem:[%s3 + $0xe30] sm:$0xff]
      %v4047 = vld [vmem:[%s3 + $0xe38] sm:$0xff]
      %v4048 = vld [vmem:[%s3 + $0xe40] sm:$0xff]
      %v4049 = vld [vmem:[%s3 + $0xe48] sm:$0xff]
      %v4050 = vld [vmem:[%s3 + $0xe50] sm:$0xff]
      %v4051 = vld [vmem:[%s3 + $0xe58] sm:$0xff]
      %v4052 = vld [vmem:[%s3 + $0xe60] sm:$0xff]
      %v4053 = vld [vmem:[%s3 + $0xe68] sm:$0xff]
      %v4054 = vld [vmem:[%s3 + $0xe70] sm:$0xff]
      %v4055 = vld [vmem:[%s3 + $0xe78] sm:$0xff]
      %v4056 = vld [vmem:[%s3 + $0xe80] sm:$0xff]
      %v4057 = vld [vmem:[%s3 + $0xe88] sm:$0xff]
      %v4058 = vld [vmem:[%s3 + $0xe90] sm:$0xff]
      %v4059 = vld [vmem:[%s3 + $0xe98] sm:$0xff]
      %v4060 = vld [vmem:[%s3 + $0xea0] sm:$0xff]
      %v4061 = vld [vmem:[%s3 + $0xea8] sm:$0xff]
      %v4062 = vld [vmem:[%s3 + $0xeb0] sm:$0xff]
      %v4063 = vld [vmem:[%s3 + $0xeb8] sm:$0xff]
      %v4064 = vld [vmem:[%s3 + $0xec0] sm:$0xff]
      %v4065 = vld [vmem:[%s3 + $0xec8] sm:$0xff]
      %v4066 = vld [vmem:[%s3 + $0xed0] sm:$0xff]
      %v4067 = vld [vmem:[%s3 + $0xed8] sm:$0xff]
      %v4068 = vld [vmem:[%s3 + $0xee0] sm:$0xff]
      %v4069 = vld [vmem:[%s3 + $0xee8] sm:$0xff]
      %v4070 = vld [vmem:[%s3 + $0xef0] sm:$0xff]
      %v4071 = vld [vmem:[%s3 + $0xef8] sm:$0xff]
      %v4072 = vld [vmem:[%s3 + $0xf00] sm:$0xff]
      %v4073 = vld [vmem:[%s3 + $0xf08] sm:$0xff]
      %v4074 = vld [vmem:[%s3 + $0xf10] sm:$0xff]
      %v4075 = vld [vmem:[%s3 + $0xf18] sm:$0xff]
      %v4076 = vld [vmem:[%s3 + $0xf20] sm:$0xff]
      %v4077 = vld [vmem:[%s3 + $0xf28] sm:$0xff]
      %v4078 = vld [vmem:[%s3 + $0xf30] sm:$0xff]
      %v4079 = vld [vmem:[%s3 + $0xf38] sm:$0xff]
      %v4080 = vld [vmem:[%s3 + $0xf40] sm:$0xff]
      %v4081 = vld [vmem:[%s3 + $0xf48] sm:$0xff]
      %v4082 = vld [vmem:[%s3 + $0xf50] sm:$0xff]
      %v4083 = vld [vmem:[%s3 + $0xf58] sm:$0xff]
      %v4084 = vld [vmem:[%s3 + $0xf60] sm:$0xff]
      %v4085 = vld [vmem:[%s3 + $0xf68] sm:$0xff]
      %v4086 = vld [vmem:[%s3 + $0xf70] sm:$0xff]
      %v4087 = vld [vmem:[%s3 + $0xf78] sm:$0xff]
      %v4088 = vld [vmem:[%s3 + $0xf80] sm:$0xff]
      %v4089 = vld [vmem:[%s3 + $0xf88] sm:$0xff]
      %v4090 = vld [vmem:[%s3 + $0xf90] sm:$0xff]
      %v4091 = vld [vmem:[%s3 + $0xf98] sm:$0xff]
      %v4092 = vld [vmem:[%s3 + $0xfa0] sm:$0xff]
      %v4093 = vld [vmem:[%s3 + $0xfa8] sm:$0xff]
      %v4094 = vld [vmem:[%s3 + $0xfb0] sm:$0xff]
      %v4095 = vld [vmem:[%s3 + $0xfb8] sm:$0xff]
      %v4096 = vld [vmem:[%s3 + $0xfc0] sm:$0xff]
      %v4097 = vld [vmem:[%s3 + $0xfc8] sm:$0xff]
      %v4098 = vld [vmem:[%s3 + $0xfd0] sm:$0xff]
      %v4099 = vld [vmem:[%s3 + $0xfd8] sm:$0xff]
      %v4100 = vld [vmem:[%s3 + $0xfe0] sm:$0xff]
      %v4101 = vld [vmem:[%s3 + $0xfe8] sm:$0xff]
      %v4102 = vld [vmem:[%s3 + $0xff0] sm:$0xff]
      %v4103 = vld [vmem:[%s3 + $0xff8] sm:$0xff]
      %v4104 = vld [vmem:[%s3 + $0x1000] sm:$0xff]
      %v4105 = vld [vmem:[%s3 + $0x1008] sm:$0xff]
      %v4106 = vld [vmem:[%s3 + $0x1010] sm:$0xff]
      %v4107 = vld [vmem:[%s3 + $0x1018] sm:$0xff]
      %v4108 = vld [vmem:[%s3 + $0x1020] sm:$0xff]
      %v4109 = vld [vmem:[%s3 + $0x1028] sm:$0xff]
      %v4110 = vld [vmem:[%s3 + $0x1030] sm:$0xff]
      %v4111 = vld [vmem:[%s3 + $0x1038] sm:$0xff]
      %v4112 = vld [vmem:[%s3 + $0x1040] sm:$0xff]
      %v4113 = vld [vmem:[%s3 + $0x1048] sm:$0xff]
      %v4114 = vld [vmem:[%s3 + $0x1050] sm:$0xff]
      %v4115 = vld [vmem:[%s3 + $0x1058] sm:$0xff]
      %v4116 = vld [vmem:[%s3 + $0x1060] sm:$0xff]
      %v4117 = vld [vmem:[%s3 + $0x1068] sm:$0xff]
      %v4118 = vld [vmem:[%s3 + $0x1070] sm:$0xff]
      %v4119 = vld [vmem:[%s3 + $0x1078] sm:$0xff]
      %v4120 = vld [vmem:[%s3 + $0x1080] sm:$0xff]
      %v4121 = vld [vmem:[%s3 + $0x1088] sm:$0xff]
      %v4122 = vld [vmem:[%s3 + $0x1090] sm:$0xff]
      %v4123 = vld [vmem:[%s3 + $0x1098] sm:$0xff]
      %v4124 = vld [vmem:[%s3 + $0x10a0] sm:$0xff]
      %v4125 = vld [vmem:[%s3 + $0x10a8] sm:$0xff]
      %v4126 = vld [vmem:[%s3 + $0x10b0] sm:$0xff]
      %v4127 = vld [vmem:[%s3 + $0x10b8] sm:$0xff]
      %v4128 = vld [vmem:[%s3 + $0x10c0] sm:$0xff]
      %v4129 = vld [vmem:[%s3 + $0x10c8] sm:$0xff]
      %v4130 = vld [vmem:[%s3 + $0x10d0] sm:$0xff]
      %v4131 = vld [vmem:[%s3 + $0x10d8] sm:$0xff]
      %v4132 = vld [vmem:[%s3 + $0x10e0] sm:$0xff]
      %v4133 = vld [vmem:[%s3 + $0x10e8] sm:$0xff]
      %v4134 = vld [vmem:[%s3 + $0x10f0] sm:$0xff]
      %v4135 = vld [vmem:[%s3 + $0x10f8] sm:$0xff]
      %v4136 = vld [vmem:[%s3 + $0x1100] sm:$0xff]
      %v4137 = vld [vmem:[%s3 + $0x1108] sm:$0xff]
      %v4138 = vld [vmem:[%s3 + $0x1110] sm:$0xff]
      %v4139 = vld [vmem:[%s3 + $0x1118] sm:$0xff]
      %v4140 = vld [vmem:[%s3 + $0x1120] sm:$0xff]
      %v4141 = vld [vmem:[%s3 + $0x1128] sm:$0xff]
      %v4142 = vld [vmem:[%s3 + $0x1130] sm:$0xff]
      %v4143 = vld [vmem:[%s3 + $0x1138] sm:$0xff]
      %v4144 = vld [vmem:[%s3 + $0x1140] sm:$0xff]
      %v4145 = vld [vmem:[%s3 + $0x1148] sm:$0xff]
      %v4146 = vld [vmem:[%s3 + $0x1150] sm:$0xff]
      %v4147 = vld [vmem:[%s3 + $0x1158] sm:$0xff]
      %v4148 = vld [vmem:[%s3 + $0x1160] sm:$0xff]
      %v4149 = vld [vmem:[%s3 + $0x1168] sm:$0xff]
      %v4150 = vld [vmem:[%s3 + $0x1170] sm:$0xff]
      %v4151 = vld [vmem:[%s3 + $0x1178] sm:$0xff]
      %v4152 = vld [vmem:[%s3 + $0x1180] sm:$0xff]
      %v4153 = vld [vmem:[%s3 + $0x1188] sm:$0xff]
      %v4154 = vld [vmem:[%s3 + $0x1190] sm:$0xff]
      %v4155 = vld [vmem:[%s3 + $0x1198] sm:$0xff]
      %v4156 = vld [vmem:[%s3 + $0x11a0] sm:$0xff]
      %v4157 = vld [vmem:[%s3 + $0x11a8] sm:$0xff]
      %v4158 = vld [vmem:[%s3 + $0x11b0] sm:$0xff]
      %v4159 = vld [vmem:[%s3 + $0x11b8] sm:$0xff]
      %v4160 = vld [vmem:[%s3 + $0x11c0] sm:$0xff]
      %v4161 = vld [vmem:[%s3 + $0x11c8] sm:$0xff]
      %v4162 = vld [vmem:[%s3 + $0x11d0] sm:$0xff]
      %v4163 = vld [vmem:[%s3 + $0x11d8] sm:$0xff]
      %v4164 = vld [vmem:[%s3 + $0x11e0] sm:$0xff]
      %v4165 = vld [vmem:[%s3 + $0x11e8] sm:$0xff]
      %v4166 = vld [vmem:[%s3 + $0x11f0] sm:$0xff]
      %v4167 = vld [vmem:[%s3 + $0x11f8] sm:$0xff]
      %v4168 = vld [vmem:[%s3 + $0x1200] sm:$0xff]
      %v4169 = vld [vmem:[%s3 + $0x1208] sm:$0xff]
      %v4170 = vld [vmem:[%s3 + $0x1210] sm:$0xff]
      %v4171 = vld [vmem:[%s3 + $0x1218] sm:$0xff]
      %v4172 = vld [vmem:[%s3 + $0x1220] sm:$0xff]
      %v4173 = vld [vmem:[%s3 + $0x1228] sm:$0xff]
      %v4174 = vld [vmem:[%s3 + $0x1230] sm:$0xff]
      %v4175 = vld [vmem:[%s3 + $0x1238] sm:$0xff]
      %v4176 = vld [vmem:[%s3 + $0x1240] sm:$0xff]
      %v4177 = vld [vmem:[%s3 + $0x1248] sm:$0xff]
      %v4178 = vld [vmem:[%s3 + $0x1250] sm:$0xff]
      %v4179 = vld [vmem:[%s3 + $0x1258] sm:$0xff]
      %v4180 = vld [vmem:[%s3 + $0x1260] sm:$0xff]
      %v4181 = vld [vmem:[%s3 + $0x1268] sm:$0xff]
      %v4182 = vld [vmem:[%s3 + $0x1270] sm:$0xff]
      %v4183 = vld [vmem:[%s3 + $0x1278] sm:$0xff]
      %v4184 = vld [vmem:[%s3 + $0x1280] sm:$0xff]
      %v4185 = vld [vmem:[%s3 + $0x1288] sm:$0xff]
      %v4186 = vld [vmem:[%s3 + $0x1290] sm:$0xff]
      %v4187 = vld [vmem:[%s3 + $0x1298] sm:$0xff]
      %v4188 = vld [vmem:[%s3 + $0x12a0] sm:$0xff]
      %v4189 = vld [vmem:[%s3 + $0x12a8] sm:$0xff]
      %v4190 = vld [vmem:[%s3 + $0x12b0] sm:$0xff]
      %v4191 = vld [vmem:[%s3 + $0x12b8] sm:$0xff]
      %v4192 = vld [vmem:[%s3 + $0x12c0] sm:$0xff]
      %v4193 = vld [vmem:[%s3 + $0x12c8] sm:$0xff]
      %v4194 = vld [vmem:[%s3 + $0x12d0] sm:$0xff]
      %v4195 = vld [vmem:[%s3 + $0x12d8] sm:$0xff]
      %v4196 = vld [vmem:[%s3 + $0x12e0] sm:$0xff]
      %v4197 = vld [vmem:[%s3 + $0x12e8] sm:$0xff]
      %v4198 = vld [vmem:[%s3 + $0x12f0] sm:$0xff]
      %v4199 = vld [vmem:[%s3 + $0x12f8] sm:$0xff]
      %v4200 = vld [vmem:[%s3 + $0x1300] sm:$0xff]
      %v4201 = vld [vmem:[%s3 + $0x1308] sm:$0xff]
      %v4202 = vld [vmem:[%s3 + $0x1310] sm:$0xff]
      %v4203 = vld [vmem:[%s3 + $0x1318] sm:$0xff]
      %v4204 = vld [vmem:[%s3 + $0x1320] sm:$0xff]
      %v4205 = vld [vmem:[%s3 + $0x1328] sm:$0xff]
      %v4206 = vld [vmem:[%s3 + $0x1330] sm:$0xff]
      %v4207 = vld [vmem:[%s3 + $0x1338] sm:$0xff]
      %v4208 = vld [vmem:[%s3 + $0x1340] sm:$0xff]
      %v4209 = vld [vmem:[%s3 + $0x1348] sm:$0xff]
      %v4210 = vld [vmem:[%s3 + $0x1350] sm:$0xff]
      %v4211 = vld [vmem:[%s3 + $0x1358] sm:$0xff]
      %v4212 = vld [vmem:[%s3 + $0x1360] sm:$0xff]
      %v4213 = vld [vmem:[%s3 + $0x1368] sm:$0xff]
      %v4214 = vld [vmem:[%s3 + $0x1370] sm:$0xff]
      %v4215 = vld [vmem:[%s3 + $0x1378] sm:$0xff]
      %v4216 = vld [vmem:[%s3 + $0x1380] sm:$0xff]
      %v4217 = vld [vmem:[%s3 + $0x1388] sm:$0xff]
      %v4218 = vld [vmem:[%s3 + $0x1390] sm:$0xff]
      %v4219 = vld [vmem:[%s3 + $0x1398] sm:$0xff]
      %v4220 = vld [vmem:[%s3 + $0x13a0] sm:$0xff]
      %v4221 = vld [vmem:[%s3 + $0x13a8] sm:$0xff]
      %v4222 = vld [vmem:[%s3 + $0x13b0] sm:$0xff]
      %v4223 = vld [vmem:[%s3 + $0x13b8] sm:$0xff]
      %v4224 = vld [vmem:[%s3 + $0x13c0] sm:$0xff]
      %v4225 = vld [vmem:[%s3 + $0x13c8] sm:$0xff]
      %v4226 = vld [vmem:[%s3 + $0x13d0] sm:$0xff]
      %v4227 = vld [vmem:[%s3 + $0x13d8] sm:$0xff]
      %v4228 = vld [vmem:[%s3 + $0x13e0] sm:$0xff]
      %v4229 = vld [vmem:[%s3 + $0x13e8] sm:$0xff]
      %v4230 = vld [vmem:[%s3 + $0x13f0] sm:$0xff]
      %v4231 = vld [vmem:[%s3 + $0x13f8] sm:$0xff]
      %v4232 = vld [vmem:[%s3 + $0x1400] sm:$0xff]
      %v4233 = vld [vmem:[%s3 + $0x1408] sm:$0xff]
      %v4234 = vld [vmem:[%s3 + $0x1410] sm:$0xff]
      %v4235 = vld [vmem:[%s3 + $0x1418] sm:$0xff]
      %v4236 = vld [vmem:[%s3 + $0x1420] sm:$0xff]
      %v4237 = vld [vmem:[%s3 + $0x1428] sm:$0xff]
      %v4238 = vld [vmem:[%s3 + $0x1430] sm:$0xff]
      %v4239 = vld [vmem:[%s3 + $0x1438] sm:$0xff]
      %v4240 = vld [vmem:[%s3 + $0x1440] sm:$0xff]
      %v4241 = vld [vmem:[%s3 + $0x1448] sm:$0xff]
      %v4242 = vld [vmem:[%s3 + $0x1450] sm:$0xff]
      %v4243 = vld [vmem:[%s3 + $0x1458] sm:$0xff]
      %v4244 = vld [vmem:[%s3 + $0x1460] sm:$0xff]
      %v4245 = vld [vmem:[%s3 + $0x1468] sm:$0xff]
      %v4246 = vld [vmem:[%s3 + $0x1470] sm:$0xff]
      %v4247 = vld [vmem:[%s3 + $0x1478] sm:$0xff]
      %v4248 = vld [vmem:[%s3 + $0x1480] sm:$0xff]
      %v4249 = vld [vmem:[%s3 + $0x1488] sm:$0xff]
      %v4250 = vld [vmem:[%s3 + $0x1490] sm:$0xff]
      %v4251 = vld [vmem:[%s3 + $0x1498] sm:$0xff]
      %v4252 = vld [vmem:[%s3 + $0x14a0] sm:$0xff]
      %v4253 = vld [vmem:[%s3 + $0x14a8] sm:$0xff]
      %v4254 = vld [vmem:[%s3 + $0x14b0] sm:$0xff]
      %v4255 = vld [vmem:[%s3 + $0x14b8] sm:$0xff]
      %v4256 = vld [vmem:[%s3 + $0x14c0] sm:$0xff]
      %v4257 = vld [vmem:[%s3 + $0x14c8] sm:$0xff]
      %v4258 = vld [vmem:[%s3 + $0x14d0] sm:$0xff]
      %v4259 = vld [vmem:[%s3 + $0x14d8] sm:$0xff]
      %v4260 = vld [vmem:[%s3 + $0x14e0] sm:$0xff]
      %v4261 = vld [vmem:[%s3 + $0x14e8] sm:$0xff]
      %v4262 = vld [vmem:[%s3 + $0x14f0] sm:$0xff]
      %v4263 = vld [vmem:[%s3 + $0x14f8] sm:$0xff]
      %v4264 = vld [vmem:[%s3 + $0x1500] sm:$0xff]
      %v4265 = vld [vmem:[%s3 + $0x1508] sm:$0xff]
      %v4266 = vld [vmem:[%s3 + $0x1510] sm:$0xff]
      %v4267 = vld [vmem:[%s3 + $0x1518] sm:$0xff]
      %v4268 = vld [vmem:[%s3 + $0x1520] sm:$0xff]
      %v4269 = vld [vmem:[%s3 + $0x1528] sm:$0xff]
      %v4270 = vld [vmem:[%s3 + $0x1530] sm:$0xff]
      %v4271 = vld [vmem:[%s3 + $0x1538] sm:$0xff]
      %v4272 = vld [vmem:[%s3 + $0x1540] sm:$0xff]
      %v4273 = vld [vmem:[%s3 + $0x1548] sm:$0xff]
      %v4274 = vld [vmem:[%s3 + $0x1550] sm:$0xff]
      %v4275 = vld [vmem:[%s3 + $0x1558] sm:$0xff]
      %v4276 = vld [vmem:[%s3 + $0x1560] sm:$0xff]
      %v4277 = vld [vmem:[%s3 + $0x1568] sm:$0xff]
      %v4278 = vld [vmem:[%s3 + $0x1570] sm:$0xff]
      %v4279 = vld [vmem:[%s3 + $0x1578] sm:$0xff]
      %v4280 = vld [vmem:[%s3 + $0x1580] sm:$0xff]
      %v4281 = vld [vmem:[%s3 + $0x1588] sm:$0xff]
      %v4282 = vld [vmem:[%s3 + $0x1590] sm:$0xff]
      %v4283 = vld [vmem:[%s3 + $0x1598] sm:$0xff]
      %v4284 = vld [vmem:[%s3 + $0x15a0] sm:$0xff]
      %v4285 = vld [vmem:[%s3 + $0x15a8] sm:$0xff]
      %v4286 = vld [vmem:[%s3 + $0x15b0] sm:$0xff]
      %v4287 = vld [vmem:[%s3 + $0x15b8] sm:$0xff]
      %v4288 = vld [vmem:[%s3 + $0x15c0] sm:$0xff]
      %v4289 = vld [vmem:[%s3 + $0x15c8] sm:$0xff]
      %v4290 = vld [vmem:[%s3 + $0x15d0] sm:$0xff]
      %v4291 = vld [vmem:[%s3 + $0x15d8] sm:$0xff]
      %v4292 = vld [vmem:[%s3 + $0x15e0] sm:$0xff]
      %v4293 = vld [vmem:[%s3 + $0x15e8] sm:$0xff]
      %v4294 = vld [vmem:[%s3 + $0x15f0] sm:$0xff]
      %v4295 = vld [vmem:[%s3 + $0x15f8] sm:$0xff]
      %v4296 = vld [vmem:[%s3 + $0x1600] sm:$0xff]
      %v4297 = vld [vmem:[%s3 + $0x1608] sm:$0xff]
      %v4298 = vld [vmem:[%s3 + $0x1610] sm:$0xff]
      %v4299 = vld [vmem:[%s3 + $0x1618] sm:$0xff]
      %v4300 = vld [vmem:[%s3 + $0x1620] sm:$0xff]
      %v4301 = vld [vmem:[%s3 + $0x1628] sm:$0xff]
      %v4302 = vld [vmem:[%s3 + $0x1630] sm:$0xff]
      %v4303 = vld [vmem:[%s3 + $0x1638] sm:$0xff]
      %v4304 = vld [vmem:[%s3 + $0x1640] sm:$0xff]
      %v4305 = vld [vmem:[%s3 + $0x1648] sm:$0xff]
      %v4306 = vld [vmem:[%s3 + $0x1650] sm:$0xff]
      %v4307 = vld [vmem:[%s3 + $0x1658] sm:$0xff]
      %v4308 = vld [vmem:[%s3 + $0x1660] sm:$0xff]
      %v4309 = vld [vmem:[%s3 + $0x1668] sm:$0xff]
      %v4310 = vld [vmem:[%s3 + $0x1670] sm:$0xff]
      %v4311 = vld [vmem:[%s3 + $0x1678] sm:$0xff]
      %v4312 = vld [vmem:[%s3 + $0x1680] sm:$0xff]
      %v4313 = vld [vmem:[%s3 + $0x1688] sm:$0xff]
      %v4314 = vld [vmem:[%s3 + $0x1690] sm:$0xff]
      %v4315 = vld [vmem:[%s3 + $0x1698] sm:$0xff]
      %v4316 = vld [vmem:[%s3 + $0x16a0] sm:$0xff]
      %v4317 = vld [vmem:[%s3 + $0x16a8] sm:$0xff]
      %v4318 = vld [vmem:[%s3 + $0x16b0] sm:$0xff]
      %v4319 = vld [vmem:[%s3 + $0x16b8] sm:$0xff]
      %v4320 = vld [vmem:[%s3 + $0x16c0] sm:$0xff]
      %v4321 = vld [vmem:[%s3 + $0x16c8] sm:$0xff]
      %v4322 = vld [vmem:[%s3 + $0x16d0] sm:$0xff]
      %v4323 = vld [vmem:[%s3 + $0x16d8] sm:$0xff]
      %v4324 = vld [vmem:[%s3 + $0x16e0] sm:$0xff]
      %v4325 = vld [vmem:[%s3 + $0x16e8] sm:$0xff]
      %v4326 = vld [vmem:[%s3 + $0x16f0] sm:$0xff]
      %v4327 = vld [vmem:[%s3 + $0x16f8] sm:$0xff]
      %v4328 = vld [vmem:[%s3 + $0x1700] sm:$0xff]
      %v4329 = vld [vmem:[%s3 + $0x1708] sm:$0xff]
      %v4330 = vld [vmem:[%s3 + $0x1710] sm:$0xff]
      %v4331 = vld [vmem:[%s3 + $0x1718] sm:$0xff]
      %v4332 = vld [vmem:[%s3 + $0x1720] sm:$0xff]
      %v4333 = vld [vmem:[%s3 + $0x1728] sm:$0xff]
      %v4334 = vld [vmem:[%s3 + $0x1730] sm:$0xff]
      %v4335 = vld [vmem:[%s3 + $0x1738] sm:$0xff]
      %v4336 = vld [vmem:[%s3 + $0x1740] sm:$0xff]
      %v4337 = vld [vmem:[%s3 + $0x1748] sm:$0xff]
      %v4338 = vld [vmem:[%s3 + $0x1750] sm:$0xff]
      %v4339 = vld [vmem:[%s3 + $0x1758] sm:$0xff]
      %v4340 = vld [vmem:[%s3 + $0x1760] sm:$0xff]
      %v4341 = vld [vmem:[%s3 + $0x1768] sm:$0xff]
      %v4342 = vld [vmem:[%s3 + $0x1770] sm:$0xff]
      %v4343 = vld [vmem:[%s3 + $0x1778] sm:$0xff]
      %v4344 = vld [vmem:[%s3 + $0x1780] sm:$0xff]
      %v4345 = vld [vmem:[%s3 + $0x1788] sm:$0xff]
      %v4346 = vld [vmem:[%s3 + $0x1790] sm:$0xff]
      %v4347 = vld [vmem:[%s3 + $0x1798] sm:$0xff]
      %v4348 = vld [vmem:[%s3 + $0x17a0] sm:$0xff]
      %v4349 = vld [vmem:[%s3 + $0x17a8] sm:$0xff]
      %v4350 = vld [vmem:[%s3 + $0x17b0] sm:$0xff]
      %v4351 = vld [vmem:[%s3 + $0x17b8] sm:$0xff]
      %v4352 = vld [vmem:[%s3 + $0x17c0] sm:$0xff]
      %v4353 = vld [vmem:[%s3 + $0x17c8] sm:$0xff]
      %v4354 = vld [vmem:[%s3 + $0x17d0] sm:$0xff]
      %v4355 = vld [vmem:[%s3 + $0x17d8] sm:$0xff]
      %v4356 = vld [vmem:[%s3 + $0x17e0] sm:$0xff]
      %v4357 = vld [vmem:[%s3 + $0x17e8] sm:$0xff]
      %v4358 = vld [vmem:[%s3 + $0x17f0] sm:$0xff]
      %v4359 = vld [vmem:[%s3 + $0x17f8] sm:$0xff]
      %v4360 = vld [vmem:[%s3 + $0x1800] sm:$0xff]
      %v4361 = vld [vmem:[%s3 + $0x1808] sm:$0xff]
      %v4362 = vld [vmem:[%s3 + $0x1810] sm:$0xff]
      %v4363 = vld [vmem:[%s3 + $0x1818] sm:$0xff]
      %v4364 = vld [vmem:[%s3 + $0x1820] sm:$0xff]
      %v4365 = vld [vmem:[%s3 + $0x1828] sm:$0xff]
      %v4366 = vld [vmem:[%s3 + $0x1830] sm:$0xff]
      %v4367 = vld [vmem:[%s3 + $0x1838] sm:$0xff]
      %v4368 = vld [vmem:[%s3 + $0x1840] sm:$0xff]
      %v4369 = vld [vmem:[%s3 + $0x1848] sm:$0xff]
      %v4370 = vld [vmem:[%s3 + $0x1850] sm:$0xff]
      %v4371 = vld [vmem:[%s3 + $0x1858] sm:$0xff]
      %v4372 = vld [vmem:[%s3 + $0x1860] sm:$0xff]
      %v4373 = vld [vmem:[%s3 + $0x1868] sm:$0xff]
      %v4374 = vld [vmem:[%s3 + $0x1870] sm:$0xff]
      %v4375 = vld [vmem:[%s3 + $0x1878] sm:$0xff]
      %v4376 = vld [vmem:[%s3 + $0x1880] sm:$0xff]
      %v4377 = vld [vmem:[%s3 + $0x1888] sm:$0xff]
      %v4378 = vld [vmem:[%s3 + $0x1890] sm:$0xff]
      %v4379 = vld [vmem:[%s3 + $0x1898] sm:$0xff]
      %v4380 = vld [vmem:[%s3 + $0x18a0] sm:$0xff]
      %v4381 = vld [vmem:[%s3 + $0x18a8] sm:$0xff]
      %v4382 = vld [vmem:[%s3 + $0x18b0] sm:$0xff]
      %v4383 = vld [vmem:[%s3 + $0x18b8] sm:$0xff]
      %v4384 = vld [vmem:[%s3 + $0x18c0] sm:$0xff]
      %v4385 = vld [vmem:[%s3 + $0x18c8] sm:$0xff]
      %v4386 = vld [vmem:[%s3 + $0x18d0] sm:$0xff]
      %v4387 = vld [vmem:[%s3 + $0x18d8] sm:$0xff]
      %v4388 = vld [vmem:[%s3 + $0x18e0] sm:$0xff]
      %v4389 = vld [vmem:[%s3 + $0x18e8] sm:$0xff]
      %v4390 = vld [vmem:[%s3 + $0x18f0] sm:$0xff]
      %v4391 = vld [vmem:[%s3 + $0x18f8] sm:$0xff]
      %v4392 = vld [vmem:[%s3 + $0x1900] sm:$0xff]
      %v4393 = vld [vmem:[%s3 + $0x1908] sm:$0xff]
      %v4394 = vld [vmem:[%s3 + $0x1910] sm:$0xff]
      %v4395 = vld [vmem:[%s3 + $0x1918] sm:$0xff]
      %v4396 = vld [vmem:[%s3 + $0x1920] sm:$0xff]
      %v4397 = vld [vmem:[%s3 + $0x1928] sm:$0xff]
      %v4398 = vld [vmem:[%s3 + $0x1930] sm:$0xff]
      %v4399 = vld [vmem:[%s3 + $0x1938] sm:$0xff]
      %v4400 = vld [vmem:[%s3 + $0x1940] sm:$0xff]
      %v4401 = vld [vmem:[%s3 + $0x1948] sm:$0xff]
      %v4402 = vld [vmem:[%s3 + $0x1950] sm:$0xff]
      %v4403 = vld [vmem:[%s3 + $0x1958] sm:$0xff]
      %v4404 = vld [vmem:[%s3 + $0x1960] sm:$0xff]
      %v4405 = vld [vmem:[%s3 + $0x1968] sm:$0xff]
      %v4406 = vld [vmem:[%s3 + $0x1970] sm:$0xff]
      %v4407 = vld [vmem:[%s3 + $0x1978] sm:$0xff]
      %v4408 = vld [vmem:[%s3 + $0x1980] sm:$0xff]
      %v4409 = vld [vmem:[%s3 + $0x1988] sm:$0xff]
      %v4410 = vld [vmem:[%s3 + $0x1990] sm:$0xff]
      %v4411 = vld [vmem:[%s3 + $0x1998] sm:$0xff]
      %v4412 = vld [vmem:[%s3 + $0x19a0] sm:$0xff]
      %v4413 = vld [vmem:[%s3 + $0x19a8] sm:$0xff]
      %v4414 = vld [vmem:[%s3 + $0x19b0] sm:$0xff]
      %v4415 = vld [vmem:[%s3 + $0x19b8] sm:$0xff]
      %v4416 = vld [vmem:[%s3 + $0x19c0] sm:$0xff]
      %v4417 = vld [vmem:[%s3 + $0x19c8] sm:$0xff]
      %v4418 = vld [vmem:[%s3 + $0x19d0] sm:$0xff]
      %v4419 = vld [vmem:[%s3 + $0x19d8] sm:$0xff]
      %v4420 = vld [vmem:[%s3 + $0x19e0] sm:$0xff]
      %v4421 = vld [vmem:[%s3 + $0x19e8] sm:$0xff]
      %v4422 = vld [vmem:[%s3 + $0x19f0] sm:$0xff]
      %v4423 = vld [vmem:[%s3 + $0x19f8] sm:$0xff]
      %v4424 = vld [vmem:[%s3 + $0x1a00] sm:$0xff]
      %v4425 = vld [vmem:[%s3 + $0x1a08] sm:$0xff]
      %v4426 = vld [vmem:[%s3 + $0x1a10] sm:$0xff]
      %v4427 = vld [vmem:[%s3 + $0x1a18] sm:$0xff]
      %v4428 = vld [vmem:[%s3 + $0x1a20] sm:$0xff]
      %v4429 = vld [vmem:[%s3 + $0x1a28] sm:$0xff]
      %v4430 = vld [vmem:[%s3 + $0x1a30] sm:$0xff]
      %v4431 = vld [vmem:[%s3 + $0x1a38] sm:$0xff]
      %v4432 = vld [vmem:[%s3 + $0x1a40] sm:$0xff]
      %v4433 = vld [vmem:[%s3 + $0x1a48] sm:$0xff]
      %v4434 = vld [vmem:[%s3 + $0x1a50] sm:$0xff]
      %v4435 = vld [vmem:[%s3 + $0x1a58] sm:$0xff]
      %v4436 = vld [vmem:[%s3 + $0x1a60] sm:$0x33]
      %v4437 = vld [vmem:[%s3 + $0x1a68] sm:$0x33]
      %v5284 = vunpack.c.l.b16 %v3592
      %v5285 = vunpack.c.h.b16 %v3592
      %v5286 = vunpack.c.l.b16 %v3593
      %v5287 = vunpack.c.h.b16 %v3593
      %v5288 = vunpack.c.l.b16 %v3594
      %v5289 = vunpack.c.h.b16 %v3594
      %v5290 = vunpack.c.l.b16 %v3595
      %v5291 = vunpack.c.h.b16 %v3595
      %v5292 = vunpack.c.l.b16 %v3596
      %v5293 = vunpack.c.h.b16 %v3596
      %v5294 = vunpack.c.l.b16 %v3597
      %v5295 = vunpack.c.h.b16 %v3597
      %v5296 = vunpack.c.l.b16 %v3598
      %v5297 = vunpack.c.h.b16 %v3598
      %v5298 = vunpack.c.l.b16 %v3599
      %v5299 = vunpack.c.h.b16 %v3599
      %v5300 = vunpack.c.l.b16 %v3600
      %v5301 = vunpack.c.h.b16 %v3600
      %v5302 = vunpack.c.l.b16 %v3601
      %v5303 = vunpack.c.h.b16 %v3601
      %v5304 = vunpack.c.l.b16 %v3602
      %v5305 = vunpack.c.h.b16 %v3602
      %v5306 = vunpack.c.l.b16 %v3603
      %v5307 = vunpack.c.h.b16 %v3603
      %v5308 = vunpack.c.l.b16 %v3604
      %v5309 = vunpack.c.h.b16 %v3604
      %v5310 = vunpack.c.l.b16 %v3605
      %v5311 = vunpack.c.h.b16 %v3605
      %v5312 = vunpack.c.l.b16 %v3606
      %v5313 = vunpack.c.h.b16 %v3606
      %v5314 = vunpack.c.l.b16 %v3607
      %v5315 = vunpack.c.h.b16 %v3607
      %v5316 = vunpack.c.l.b16 %v3608
      %v5317 = vunpack.c.h.b16 %v3608
      %v5318 = vunpack.c.l.b16 %v3609
      %v5319 = vunpack.c.h.b16 %v3609
      %v5320 = vunpack.c.l.b16 %v3610
      %v5321 = vunpack.c.h.b16 %v3610
      %v5322 = vunpack.c.l.b16 %v3611
      %v5323 = vunpack.c.h.b16 %v3611
      %v5324 = vunpack.c.l.b16 %v3612
      %v5325 = vunpack.c.h.b16 %v3612
      %v5326 = vunpack.c.l.b16 %v3613
      %v5327 = vunpack.c.h.b16 %v3613
      %v5328 = vunpack.c.l.b16 %v3614
      %v5329 = vunpack.c.h.b16 %v3614
      %v5330 = vunpack.c.l.b16 %v3615
      %v5331 = vunpack.c.h.b16 %v3615
      %v5332 = vunpack.c.l.b16 %v3616
      %v5333 = vunpack.c.h.b16 %v3616
      %v5334 = vunpack.c.l.b16 %v3617
      %v5335 = vunpack.c.h.b16 %v3617
      %v5336 = vunpack.c.l.b16 %v3618
      %v5337 = vunpack.c.h.b16 %v3618
      %v5338 = vunpack.c.l.b16 %v3619
      %v5339 = vunpack.c.h.b16 %v3619
      %v5340 = vunpack.c.l.b16 %v3620
      %v5341 = vunpack.c.h.b16 %v3620
      %v5342 = vunpack.c.l.b16 %v3621
      %v5343 = vunpack.c.h.b16 %v3621
      %v5344 = vunpack.c.l.b16 %v3622
      %v5345 = vunpack.c.h.b16 %v3622
      %v5346 = vunpack.c.l.b16 %v3623
      %v5347 = vunpack.c.h.b16 %v3623
      %v5348 = vunpack.c.l.b16 %v3624
      %v5349 = vunpack.c.h.b16 %v3624
      %v5350 = vunpack.c.l.b16 %v3625
      %v5351 = vunpack.c.h.b16 %v3625
      %v5352 = vunpack.c.l.b16 %v3626
      %v5353 = vunpack.c.h.b16 %v3626
      %v5354 = vunpack.c.l.b16 %v3627
      %v5355 = vunpack.c.h.b16 %v3627
      %v5356 = vunpack.c.l.b16 %v3628
      %v5357 = vunpack.c.h.b16 %v3628
      %v5358 = vunpack.c.l.b16 %v3629
      %v5359 = vunpack.c.h.b16 %v3629
      %v5360 = vunpack.c.l.b16 %v3630
      %v5361 = vunpack.c.h.b16 %v3630
      %v5362 = vunpack.c.l.b16 %v3631
      %v5363 = vunpack.c.h.b16 %v3631
      %v5364 = vunpack.c.l.b16 %v3632
      %v5365 = vunpack.c.h.b16 %v3632
      %v5366 = vunpack.c.l.b16 %v3633
      %v5367 = vunpack.c.h.b16 %v3633
      %v5368 = vunpack.c.l.b16 %v3634
      %v5369 = vunpack.c.h.b16 %v3634
      %v5370 = vunpack.c.l.b16 %v3635
      %v5371 = vunpack.c.h.b16 %v3635
      %v5372 = vunpack.c.l.b16 %v3636
      %v5373 = vunpack.c.h.b16 %v3636
      %v5374 = vunpack.c.l.b16 %v3637
      %v5375 = vunpack.c.h.b16 %v3637
      %v5376 = vunpack.c.l.b16 %v3638
      %v5377 = vunpack.c.h.b16 %v3638
      %v5378 = vunpack.c.l.b16 %v3639
      %v5379 = vunpack.c.h.b16 %v3639
      %v5380 = vunpack.c.l.b16 %v3640
      %v5381 = vunpack.c.h.b16 %v3640
      %v5382 = vunpack.c.l.b16 %v3641
      %v5383 = vunpack.c.h.b16 %v3641
      %v5384 = vunpack.c.l.b16 %v3642
      %v5385 = vunpack.c.h.b16 %v3642
      %v5386 = vunpack.c.l.b16 %v3643
      %v5387 = vunpack.c.h.b16 %v3643
      %v5388 = vunpack.c.l.b16 %v3644
      %v5389 = vunpack.c.h.b16 %v3644
      %v5390 = vunpack.c.l.b16 %v3645
      %v5391 = vunpack.c.h.b16 %v3645
      %v5392 = vunpack.c.l.b16 %v3646
      %v5393 = vunpack.c.h.b16 %v3646
      %v5394 = vunpack.c.l.b16 %v3647
      %v5395 = vunpack.c.h.b16 %v3647
      %v5396 = vunpack.c.l.b16 %v3648
      %v5397 = vunpack.c.h.b16 %v3648
      %v5398 = vunpack.c.l.b16 %v3649
      %v5399 = vunpack.c.h.b16 %v3649
      %v5400 = vunpack.c.l.b16 %v3650
      %v5401 = vunpack.c.h.b16 %v3650
      %v5402 = vunpack.c.l.b16 %v3651
      %v5403 = vunpack.c.h.b16 %v3651
      %v5404 = vunpack.c.l.b16 %v3652
      %v5405 = vunpack.c.h.b16 %v3652
      %v5406 = vunpack.c.l.b16 %v3653
      %v5407 = vunpack.c.h.b16 %v3653
      %v5408 = vunpack.c.l.b16 %v3654
      %v5409 = vunpack.c.h.b16 %v3654
      %v5410 = vunpack.c.l.b16 %v3655
      %v5411 = vunpack.c.h.b16 %v3655
      %v5412 = vunpack.c.l.b16 %v3656
      %v5413 = vunpack.c.h.b16 %v3656
      %v5414 = vunpack.c.l.b16 %v3657
      %v5415 = vunpack.c.h.b16 %v3657
      %v5416 = vunpack.c.l.b16 %v3658
      %v5417 = vunpack.c.h.b16 %v3658
      %v5418 = vunpack.c.l.b16 %v3659
      %v5419 = vunpack.c.h.b16 %v3659
      %v5420 = vunpack.c.l.b16 %v3660
      %v5421 = vunpack.c.h.b16 %v3660
      %v5422 = vunpack.c.l.b16 %v3661
      %v5423 = vunpack.c.h.b16 %v3661
      %v5424 = vunpack.c.l.b16 %v3662
      %v5425 = vunpack.c.h.b16 %v3662
      %v5426 = vunpack.c.l.b16 %v3663
      %v5427 = vunpack.c.h.b16 %v3663
      %v5428 = vunpack.c.l.b16 %v3664
      %v5429 = vunpack.c.h.b16 %v3664
      %v5430 = vunpack.c.l.b16 %v3665
      %v5431 = vunpack.c.h.b16 %v3665
      %v5432 = vunpack.c.l.b16 %v3666
      %v5433 = vunpack.c.h.b16 %v3666
      %v5434 = vunpack.c.l.b16 %v3667
      %v5435 = vunpack.c.h.b16 %v3667
      %v5436 = vunpack.c.l.b16 %v3668
      %v5437 = vunpack.c.h.b16 %v3668
      %v5438 = vunpack.c.l.b16 %v3669
      %v5439 = vunpack.c.h.b16 %v3669
      %v5440 = vunpack.c.l.b16 %v3670
      %v5441 = vunpack.c.h.b16 %v3670
      %v5442 = vunpack.c.l.b16 %v3671
      %v5443 = vunpack.c.h.b16 %v3671
      %v5444 = vunpack.c.l.b16 %v3672
      %v5445 = vunpack.c.h.b16 %v3672
      %v5446 = vunpack.c.l.b16 %v3673
      %v5447 = vunpack.c.h.b16 %v3673
      %v5448 = vunpack.c.l.b16 %v3674
      %v5449 = vunpack.c.h.b16 %v3674
      %v5450 = vunpack.c.l.b16 %v3675
      %v5451 = vunpack.c.h.b16 %v3675
      %v5452 = vunpack.c.l.b16 %v3676
      %v5453 = vunpack.c.h.b16 %v3676
      %v5454 = vunpack.c.l.b16 %v3677
      %v5455 = vunpack.c.h.b16 %v3677
      %v5456 = vunpack.c.l.b16 %v3678
      %v5457 = vunpack.c.h.b16 %v3678
      %v5458 = vunpack.c.l.b16 %v3679
      %v5459 = vunpack.c.h.b16 %v3679
      %v5460 = vunpack.c.l.b16 %v3680
      %v5461 = vunpack.c.h.b16 %v3680
      %v5462 = vunpack.c.l.b16 %v3681
      %v5463 = vunpack.c.h.b16 %v3681
      %v5464 = vunpack.c.l.b16 %v3682
      %v5465 = vunpack.c.h.b16 %v3682
      %v5466 = vunpack.c.l.b16 %v3683
      %v5467 = vunpack.c.h.b16 %v3683
      %v5468 = vunpack.c.l.b16 %v3684
      %v5469 = vunpack.c.h.b16 %v3684
      %v5470 = vunpack.c.l.b16 %v3685
      %v5471 = vunpack.c.h.b16 %v3685
      %v5472 = vunpack.c.l.b16 %v3686
      %v5473 = vunpack.c.h.b16 %v3686
      %v5474 = vunpack.c.l.b16 %v3687
      %v5475 = vunpack.c.h.b16 %v3687
      %v5476 = vunpack.c.l.b16 %v3688
      %v5477 = vunpack.c.h.b16 %v3688
      %v5478 = vunpack.c.l.b16 %v3689
      %v5479 = vunpack.c.h.b16 %v3689
      %v5480 = vunpack.c.l.b16 %v3690
      %v5481 = vunpack.c.h.b16 %v3690
      %v5482 = vunpack.c.l.b16 %v3691
      %v5483 = vunpack.c.h.b16 %v3691
      %v5484 = vunpack.c.l.b16 %v3692
      %v5485 = vunpack.c.h.b16 %v3692
      %v5486 = vunpack.c.l.b16 %v3693
      %v5487 = vunpack.c.h.b16 %v3693
      %v5488 = vunpack.c.l.b16 %v3694
      %v5489 = vunpack.c.h.b16 %v3694
      %v5490 = vunpack.c.l.b16 %v3695
      %v5491 = vunpack.c.h.b16 %v3695
      %v5492 = vunpack.c.l.b16 %v3696
      %v5493 = vunpack.c.h.b16 %v3696
      %v5494 = vunpack.c.l.b16 %v3697
      %v5495 = vunpack.c.h.b16 %v3697
      %v5496 = vunpack.c.l.b16 %v3698
      %v5497 = vunpack.c.h.b16 %v3698
      %v5498 = vunpack.c.l.b16 %v3699
      %v5499 = vunpack.c.h.b16 %v3699
      %v5500 = vunpack.c.l.b16 %v3700
      %v5501 = vunpack.c.h.b16 %v3700
      %v5502 = vunpack.c.l.b16 %v3701
      %v5503 = vunpack.c.h.b16 %v3701
      %v5504 = vunpack.c.l.b16 %v3702
      %v5505 = vunpack.c.h.b16 %v3702
      %v5506 = vunpack.c.l.b16 %v3703
      %v5507 = vunpack.c.h.b16 %v3703
      %v5508 = vunpack.c.l.b16 %v3704
      %v5509 = vunpack.c.h.b16 %v3704
      %v5510 = vunpack.c.l.b16 %v3705
      %v5511 = vunpack.c.h.b16 %v3705
      %v5512 = vunpack.c.l.b16 %v3706
      %v5513 = vunpack.c.h.b16 %v3706
      %v5514 = vunpack.c.l.b16 %v3707
      %v5515 = vunpack.c.h.b16 %v3707
      %v5516 = vunpack.c.l.b16 %v3708
      %v5517 = vunpack.c.h.b16 %v3708
      %v5518 = vunpack.c.l.b16 %v3709
      %v5519 = vunpack.c.h.b16 %v3709
      %v5520 = vunpack.c.l.b16 %v3710
      %v5521 = vunpack.c.h.b16 %v3710
      %v5522 = vunpack.c.l.b16 %v3711
      %v5523 = vunpack.c.h.b16 %v3711
      %v5524 = vunpack.c.l.b16 %v3712
      %v5525 = vunpack.c.h.b16 %v3712
      %v5526 = vunpack.c.l.b16 %v3713
      %v5527 = vunpack.c.h.b16 %v3713
      %v5528 = vunpack.c.l.b16 %v3714
      %v5529 = vunpack.c.h.b16 %v3714
      %v5530 = vunpack.c.l.b16 %v3715
      %v5531 = vunpack.c.h.b16 %v3715
      %v5532 = vunpack.c.l.b16 %v3716
      %v5533 = vunpack.c.h.b16 %v3716
      %v5534 = vunpack.c.l.b16 %v3717
      %v5535 = vunpack.c.h.b16 %v3717
      %v5536 = vunpack.c.l.b16 %v3718
      %v5537 = vunpack.c.h.b16 %v3718
      %v5538 = vunpack.c.l.b16 %v3719
      %v5539 = vunpack.c.h.b16 %v3719
      %v5540 = vunpack.c.l.b16 %v3720
      %v5541 = vunpack.c.h.b16 %v3720
      %v5542 = vunpack.c.l.b16 %v3721
      %v5543 = vunpack.c.h.b16 %v3721
      %v5544 = vunpack.c.l.b16 %v3722
      %v5545 = vunpack.c.h.b16 %v3722
      %v5546 = vunpack.c.l.b16 %v3723
      %v5547 = vunpack.c.h.b16 %v3723
      %v5548 = vunpack.c.l.b16 %v3724
      %v5549 = vunpack.c.h.b16 %v3724
      %v5550 = vunpack.c.l.b16 %v3725
      %v5551 = vunpack.c.h.b16 %v3725
      %v5552 = vunpack.c.l.b16 %v3726
      %v5553 = vunpack.c.h.b16 %v3726
      %v5554 = vunpack.c.l.b16 %v3727
      %v5555 = vunpack.c.h.b16 %v3727
      %v5556 = vunpack.c.l.b16 %v3728
      %v5557 = vunpack.c.h.b16 %v3728
      %v5558 = vunpack.c.l.b16 %v3729
      %v5559 = vunpack.c.h.b16 %v3729
      %v5560 = vunpack.c.l.b16 %v3730
      %v5561 = vunpack.c.h.b16 %v3730
      %v5562 = vunpack.c.l.b16 %v3731
      %v5563 = vunpack.c.h.b16 %v3731
      %v5564 = vunpack.c.l.b16 %v3732
      %v5565 = vunpack.c.h.b16 %v3732
      %v5566 = vunpack.c.l.b16 %v3733
      %v5567 = vunpack.c.h.b16 %v3733
      %v5568 = vunpack.c.l.b16 %v3734
      %v5569 = vunpack.c.h.b16 %v3734
      %v5570 = vunpack.c.l.b16 %v3735
      %v5571 = vunpack.c.h.b16 %v3735
      %v5572 = vunpack.c.l.b16 %v3736
      %v5573 = vunpack.c.h.b16 %v3736
      %v5574 = vunpack.c.l.b16 %v3737
      %v5575 = vunpack.c.h.b16 %v3737
      %v5576 = vunpack.c.l.b16 %v3738
      %v5577 = vunpack.c.h.b16 %v3738
      %v5578 = vunpack.c.l.b16 %v3739
      %v5579 = vunpack.c.h.b16 %v3739
      %v5580 = vunpack.c.l.b16 %v3740
      %v5581 = vunpack.c.h.b16 %v3740
      %v5582 = vunpack.c.l.b16 %v3741
      %v5583 = vunpack.c.h.b16 %v3741
      %v5584 = vunpack.c.l.b16 %v3742
      %v5585 = vunpack.c.h.b16 %v3742
      %v5586 = vunpack.c.l.b16 %v3743
      %v5587 = vunpack.c.h.b16 %v3743
      %v5588 = vunpack.c.l.b16 %v3744
      %v5589 = vunpack.c.h.b16 %v3744
      %v5590 = vunpack.c.l.b16 %v3745
      %v5591 = vunpack.c.h.b16 %v3745
      %v5592 = vunpack.c.l.b16 %v3746
      %v5593 = vunpack.c.h.b16 %v3746
      %v5594 = vunpack.c.l.b16 %v3747
      %v5595 = vunpack.c.h.b16 %v3747
      %v5596 = vunpack.c.l.b16 %v3748
      %v5597 = vunpack.c.h.b16 %v3748
      %v5598 = vunpack.c.l.b16 %v3749
      %v5599 = vunpack.c.h.b16 %v3749
      %v5600 = vunpack.c.l.b16 %v3750
      %v5601 = vunpack.c.h.b16 %v3750
      %v5602 = vunpack.c.l.b16 %v3751
      %v5603 = vunpack.c.h.b16 %v3751
      %v5604 = vunpack.c.l.b16 %v3752
      %v5605 = vunpack.c.h.b16 %v3752
      %v5606 = vunpack.c.l.b16 %v3753
      %v5607 = vunpack.c.h.b16 %v3753
      %v5608 = vunpack.c.l.b16 %v3754
      %v5609 = vunpack.c.h.b16 %v3754
      %v5610 = vunpack.c.l.b16 %v3755
      %v5611 = vunpack.c.h.b16 %v3755
      %v5612 = vunpack.c.l.b16 %v3756
      %v5613 = vunpack.c.h.b16 %v3756
      %v5614 = vunpack.c.l.b16 %v3757
      %v5615 = vunpack.c.h.b16 %v3757
      %v5616 = vunpack.c.l.b16 %v3758
      %v5617 = vunpack.c.h.b16 %v3758
      %v5618 = vunpack.c.l.b16 %v3759
      %v5619 = vunpack.c.h.b16 %v3759
      %v5620 = vunpack.c.l.b16 %v3760
      %v5621 = vunpack.c.h.b16 %v3760
      %v5622 = vunpack.c.l.b16 %v3761
      %v5623 = vunpack.c.h.b16 %v3761
      %v5624 = vunpack.c.l.b16 %v3762
      %v5625 = vunpack.c.h.b16 %v3762
      %v5626 = vunpack.c.l.b16 %v3763
      %v5627 = vunpack.c.h.b16 %v3763
      %v5628 = vunpack.c.l.b16 %v3764
      %v5629 = vunpack.c.h.b16 %v3764
      %v5630 = vunpack.c.l.b16 %v3765
      %v5631 = vunpack.c.h.b16 %v3765
      %v5632 = vunpack.c.l.b16 %v3766
      %v5633 = vunpack.c.h.b16 %v3766
      %v5634 = vunpack.c.l.b16 %v3767
      %v5635 = vunpack.c.h.b16 %v3767
      %v5636 = vunpack.c.l.b16 %v3768
      %v5637 = vunpack.c.h.b16 %v3768
      %v5638 = vunpack.c.l.b16 %v3769
      %v5639 = vunpack.c.h.b16 %v3769
      %v5640 = vunpack.c.l.b16 %v3770
      %v5641 = vunpack.c.h.b16 %v3770
      %v5642 = vunpack.c.l.b16 %v3771
      %v5643 = vunpack.c.h.b16 %v3771
      %v5644 = vunpack.c.l.b16 %v3772
      %v5645 = vunpack.c.h.b16 %v3772
      %v5646 = vunpack.c.l.b16 %v3773
      %v5647 = vunpack.c.h.b16 %v3773
      %v5648 = vunpack.c.l.b16 %v3774
      %v5649 = vunpack.c.h.b16 %v3774
      %v5650 = vunpack.c.l.b16 %v3775
      %v5651 = vunpack.c.h.b16 %v3775
      %v5652 = vunpack.c.l.b16 %v3776
      %v5653 = vunpack.c.h.b16 %v3776
      %v5654 = vunpack.c.l.b16 %v3777
      %v5655 = vunpack.c.h.b16 %v3777
      %v5656 = vunpack.c.l.b16 %v3778
      %v5657 = vunpack.c.h.b16 %v3778
      %v5658 = vunpack.c.l.b16 %v3779
      %v5659 = vunpack.c.h.b16 %v3779
      %v5660 = vunpack.c.l.b16 %v3780
      %v5661 = vunpack.c.h.b16 %v3780
      %v5662 = vunpack.c.l.b16 %v3781
      %v5663 = vunpack.c.h.b16 %v3781
      %v5664 = vunpack.c.l.b16 %v3782
      %v5665 = vunpack.c.h.b16 %v3782
      %v5666 = vunpack.c.l.b16 %v3783
      %v5667 = vunpack.c.h.b16 %v3783
      %v5668 = vunpack.c.l.b16 %v3784
      %v5669 = vunpack.c.h.b16 %v3784
      %v5670 = vunpack.c.l.b16 %v3785
      %v5671 = vunpack.c.h.b16 %v3785
      %v5672 = vunpack.c.l.b16 %v3786
      %v5673 = vunpack.c.h.b16 %v3786
      %v5674 = vunpack.c.l.b16 %v3787
      %v5675 = vunpack.c.h.b16 %v3787
      %v5676 = vunpack.c.l.b16 %v3788
      %v5677 = vunpack.c.h.b16 %v3788
      %v5678 = vunpack.c.l.b16 %v3789
      %v5679 = vunpack.c.h.b16 %v3789
      %v5680 = vunpack.c.l.b16 %v3790
      %v5681 = vunpack.c.h.b16 %v3790
      %v5682 = vunpack.c.l.b16 %v3791
      %v5683 = vunpack.c.h.b16 %v3791
      %v5684 = vunpack.c.l.b16 %v3792
      %v5685 = vunpack.c.h.b16 %v3792
      %v5686 = vunpack.c.l.b16 %v3793
      %v5687 = vunpack.c.h.b16 %v3793
      %v5688 = vunpack.c.l.b16 %v3794
      %v5689 = vunpack.c.h.b16 %v3794
      %v5690 = vunpack.c.l.b16 %v3795
      %v5691 = vunpack.c.h.b16 %v3795
      %v5692 = vunpack.c.l.b16 %v3796
      %v5693 = vunpack.c.h.b16 %v3796
      %v5694 = vunpack.c.l.b16 %v3797
      %v5695 = vunpack.c.h.b16 %v3797
      %v5696 = vunpack.c.l.b16 %v3798
      %v5697 = vunpack.c.h.b16 %v3798
      %v5698 = vunpack.c.l.b16 %v3799
      %v5699 = vunpack.c.h.b16 %v3799
      %v5700 = vunpack.c.l.b16 %v3800
      %v5701 = vunpack.c.h.b16 %v3800
      %v5702 = vunpack.c.l.b16 %v3801
      %v5703 = vunpack.c.h.b16 %v3801
      %v5704 = vunpack.c.l.b16 %v3802
      %v5705 = vunpack.c.h.b16 %v3802
      %v5706 = vunpack.c.l.b16 %v3803
      %v5707 = vunpack.c.h.b16 %v3803
      %v5708 = vunpack.c.l.b16 %v3804
      %v5709 = vunpack.c.h.b16 %v3804
      %v5710 = vunpack.c.l.b16 %v3805
      %v5711 = vunpack.c.h.b16 %v3805
      %v5712 = vunpack.c.l.b16 %v3806
      %v5713 = vunpack.c.h.b16 %v3806
      %v5714 = vunpack.c.l.b16 %v3807
      %v5715 = vunpack.c.h.b16 %v3807
      %v5716 = vunpack.c.l.b16 %v3808
      %v5717 = vunpack.c.h.b16 %v3808
      %v5718 = vunpack.c.l.b16 %v3809
      %v5719 = vunpack.c.h.b16 %v3809
      %v5720 = vunpack.c.l.b16 %v3810
      %v5721 = vunpack.c.h.b16 %v3810
      %v5722 = vunpack.c.l.b16 %v3811
      %v5723 = vunpack.c.h.b16 %v3811
      %v5724 = vunpack.c.l.b16 %v3812
      %v5725 = vunpack.c.h.b16 %v3812
      %v5726 = vunpack.c.l.b16 %v3813
      %v5727 = vunpack.c.h.b16 %v3813
      %v5728 = vunpack.c.l.b16 %v3814
      %v5729 = vunpack.c.h.b16 %v3814
      %v5730 = vunpack.c.l.b16 %v3815
      %v5731 = vunpack.c.h.b16 %v3815
      %v5732 = vunpack.c.l.b16 %v3816
      %v5733 = vunpack.c.h.b16 %v3816
      %v5734 = vunpack.c.l.b16 %v3817
      %v5735 = vunpack.c.h.b16 %v3817
      %v5736 = vunpack.c.l.b16 %v3818
      %v5737 = vunpack.c.h.b16 %v3818
      %v5738 = vunpack.c.l.b16 %v3819
      %v5739 = vunpack.c.h.b16 %v3819
      %v5740 = vunpack.c.l.b16 %v3820
      %v5741 = vunpack.c.h.b16 %v3820
      %v5742 = vunpack.c.l.b16 %v3821
      %v5743 = vunpack.c.h.b16 %v3821
      %v5744 = vunpack.c.l.b16 %v3822
      %v5745 = vunpack.c.h.b16 %v3822
      %v5746 = vunpack.c.l.b16 %v3823
      %v5747 = vunpack.c.h.b16 %v3823
      %v5748 = vunpack.c.l.b16 %v3824
      %v5749 = vunpack.c.h.b16 %v3824
      %v5750 = vunpack.c.l.b16 %v3825
      %v5751 = vunpack.c.h.b16 %v3825
      %v5752 = vunpack.c.l.b16 %v3826
      %v5753 = vunpack.c.h.b16 %v3826
      %v5754 = vunpack.c.l.b16 %v3827
      %v5755 = vunpack.c.h.b16 %v3827
      %v5756 = vunpack.c.l.b16 %v3828
      %v5757 = vunpack.c.h.b16 %v3828
      %v5758 = vunpack.c.l.b16 %v3829
      %v5759 = vunpack.c.h.b16 %v3829
      %v5760 = vunpack.c.l.b16 %v3830
      %v5761 = vunpack.c.h.b16 %v3830
      %v5762 = vunpack.c.l.b16 %v3831
      %v5763 = vunpack.c.h.b16 %v3831
      %v5764 = vunpack.c.l.b16 %v3832
      %v5765 = vunpack.c.h.b16 %v3832
      %v5766 = vunpack.c.l.b16 %v3833
      %v5767 = vunpack.c.h.b16 %v3833
      %v5768 = vunpack.c.l.b16 %v3834
      %v5769 = vunpack.c.h.b16 %v3834
      %v5770 = vunpack.c.l.b16 %v3835
      %v5771 = vunpack.c.h.b16 %v3835
      %v5772 = vunpack.c.l.b16 %v3836
      %v5773 = vunpack.c.h.b16 %v3836
      %v5774 = vunpack.c.l.b16 %v3837
      %v5775 = vunpack.c.h.b16 %v3837
      %v5776 = vunpack.c.l.b16 %v3838
      %v5777 = vunpack.c.h.b16 %v3838
      %v5778 = vunpack.c.l.b16 %v3839
      %v5779 = vunpack.c.h.b16 %v3839
      %v5780 = vunpack.c.l.b16 %v3840
      %v5781 = vunpack.c.h.b16 %v3840
      %v5782 = vunpack.c.l.b16 %v3841
      %v5783 = vunpack.c.h.b16 %v3841
      %v5784 = vunpack.c.l.b16 %v3842
      %v5785 = vunpack.c.h.b16 %v3842
      %v5786 = vunpack.c.l.b16 %v3843
      %v5787 = vunpack.c.h.b16 %v3843
      %v5788 = vunpack.c.l.b16 %v3844
      %v5789 = vunpack.c.h.b16 %v3844
      %v5790 = vunpack.c.l.b16 %v3845
      %v5791 = vunpack.c.h.b16 %v3845
      %v5792 = vunpack.c.l.b16 %v3846
      %v5793 = vunpack.c.h.b16 %v3846
      %v5794 = vunpack.c.l.b16 %v3847
      %v5795 = vunpack.c.h.b16 %v3847
      %v5796 = vunpack.c.l.b16 %v3848
      %v5797 = vunpack.c.h.b16 %v3848
      %v5798 = vunpack.c.l.b16 %v3849
      %v5799 = vunpack.c.h.b16 %v3849
      %v5800 = vunpack.c.l.b16 %v3850
      %v5801 = vunpack.c.h.b16 %v3850
      %v5802 = vunpack.c.l.b16 %v3851
      %v5803 = vunpack.c.h.b16 %v3851
      %v5804 = vunpack.c.l.b16 %v3852
      %v5805 = vunpack.c.h.b16 %v3852
      %v5806 = vunpack.c.l.b16 %v3853
      %v5807 = vunpack.c.h.b16 %v3853
      %v5808 = vunpack.c.l.b16 %v3854
      %v5809 = vunpack.c.h.b16 %v3854
      %v5810 = vunpack.c.l.b16 %v3855
      %v5811 = vunpack.c.h.b16 %v3855
      %v5812 = vunpack.c.l.b16 %v3856
      %v5813 = vunpack.c.h.b16 %v3856
      %v5814 = vunpack.c.l.b16 %v3857
      %v5815 = vunpack.c.h.b16 %v3857
      %v5816 = vunpack.c.l.b16 %v3858
      %v5817 = vunpack.c.h.b16 %v3858
      %v5818 = vunpack.c.l.b16 %v3859
      %v5819 = vunpack.c.h.b16 %v3859
      %v5820 = vunpack.c.l.b16 %v3860
      %v5821 = vunpack.c.h.b16 %v3860
      %v5822 = vunpack.c.l.b16 %v3861
      %v5823 = vunpack.c.h.b16 %v3861
      %v5824 = vunpack.c.l.b16 %v3862
      %v5825 = vunpack.c.h.b16 %v3862
      %v5826 = vunpack.c.l.b16 %v3863
      %v5827 = vunpack.c.h.b16 %v3863
      %v5828 = vunpack.c.l.b16 %v3864
      %v5829 = vunpack.c.h.b16 %v3864
      %v5830 = vunpack.c.l.b16 %v3865
      %v5831 = vunpack.c.h.b16 %v3865
      %v5832 = vunpack.c.l.b16 %v3866
      %v5833 = vunpack.c.h.b16 %v3866
      %v5834 = vunpack.c.l.b16 %v3867
      %v5835 = vunpack.c.h.b16 %v3867
      %v5836 = vunpack.c.l.b16 %v3868
      %v5837 = vunpack.c.h.b16 %v3868
      %v5838 = vunpack.c.l.b16 %v3869
      %v5839 = vunpack.c.h.b16 %v3869
      %v5840 = vunpack.c.l.b16 %v3870
      %v5841 = vunpack.c.h.b16 %v3870
      %v5842 = vunpack.c.l.b16 %v3871
      %v5843 = vunpack.c.h.b16 %v3871
      %v5844 = vunpack.c.l.b16 %v3872
      %v5845 = vunpack.c.h.b16 %v3872
      %v5846 = vunpack.c.l.b16 %v3873
      %v5847 = vunpack.c.h.b16 %v3873
      %v5848 = vunpack.c.l.b16 %v3874
      %v5849 = vunpack.c.h.b16 %v3874
      %v5850 = vunpack.c.l.b16 %v3875
      %v5851 = vunpack.c.h.b16 %v3875
      %v5852 = vunpack.c.l.b16 %v3876
      %v5853 = vunpack.c.h.b16 %v3876
      %v5854 = vunpack.c.l.b16 %v3877
      %v5855 = vunpack.c.h.b16 %v3877
      %v5856 = vunpack.c.l.b16 %v3878
      %v5857 = vunpack.c.h.b16 %v3878
      %v5858 = vunpack.c.l.b16 %v3879
      %v5859 = vunpack.c.h.b16 %v3879
      %v5860 = vunpack.c.l.b16 %v3880
      %v5861 = vunpack.c.h.b16 %v3880
      %v5862 = vunpack.c.l.b16 %v3881
      %v5863 = vunpack.c.h.b16 %v3881
      %v5864 = vunpack.c.l.b16 %v3882
      %v5865 = vunpack.c.h.b16 %v3882
      %v5866 = vunpack.c.l.b16 %v3883
      %v5867 = vunpack.c.h.b16 %v3883
      %v5868 = vunpack.c.l.b16 %v3884
      %v5869 = vunpack.c.h.b16 %v3884
      %v5870 = vunpack.c.l.b16 %v3885
      %v5871 = vunpack.c.h.b16 %v3885
      %v5872 = vunpack.c.l.b16 %v3886
      %v5873 = vunpack.c.h.b16 %v3886
      %v5874 = vunpack.c.l.b16 %v3887
      %v5875 = vunpack.c.h.b16 %v3887
      %v5876 = vunpack.c.l.b16 %v3888
      %v5877 = vunpack.c.h.b16 %v3888
      %v5878 = vunpack.c.l.b16 %v3889
      %v5879 = vunpack.c.h.b16 %v3889
      %v5880 = vunpack.c.l.b16 %v3890
      %v5881 = vunpack.c.h.b16 %v3890
      %v5882 = vunpack.c.l.b16 %v3891
      %v5883 = vunpack.c.h.b16 %v3891
      %v5884 = vunpack.c.l.b16 %v3892
      %v5885 = vunpack.c.h.b16 %v3892
      %v5886 = vunpack.c.l.b16 %v3893
      %v5887 = vunpack.c.h.b16 %v3893
      %v5888 = vunpack.c.l.b16 %v3894
      %v5889 = vunpack.c.h.b16 %v3894
      %v5890 = vunpack.c.l.b16 %v3895
      %v5891 = vunpack.c.h.b16 %v3895
      %v5892 = vunpack.c.l.b16 %v3896
      %v5893 = vunpack.c.h.b16 %v3896
      %v5894 = vunpack.c.l.b16 %v3897
      %v5895 = vunpack.c.h.b16 %v3897
      %v5896 = vunpack.c.l.b16 %v3898
      %v5897 = vunpack.c.h.b16 %v3898
      %v5898 = vunpack.c.l.b16 %v3899
      %v5899 = vunpack.c.h.b16 %v3899
      %v5900 = vunpack.c.l.b16 %v3900
      %v5901 = vunpack.c.h.b16 %v3900
      %v5902 = vunpack.c.l.b16 %v3901
      %v5903 = vunpack.c.h.b16 %v3901
      %v5904 = vunpack.c.l.b16 %v3902
      %v5905 = vunpack.c.h.b16 %v3902
      %v5906 = vunpack.c.l.b16 %v3903
      %v5907 = vunpack.c.h.b16 %v3903
      %v5908 = vunpack.c.l.b16 %v3904
      %v5909 = vunpack.c.h.b16 %v3904
      %v5910 = vunpack.c.l.b16 %v3905
      %v5911 = vunpack.c.h.b16 %v3905
      %v5912 = vunpack.c.l.b16 %v3906
      %v5913 = vunpack.c.h.b16 %v3906
      %v5914 = vunpack.c.l.b16 %v3907
      %v5915 = vunpack.c.h.b16 %v3907
      %v5916 = vunpack.c.l.b16 %v3908
      %v5917 = vunpack.c.h.b16 %v3908
      %v5918 = vunpack.c.l.b16 %v3909
      %v5919 = vunpack.c.h.b16 %v3909
      %v5920 = vunpack.c.l.b16 %v3910
      %v5921 = vunpack.c.h.b16 %v3910
      %v5922 = vunpack.c.l.b16 %v3911
      %v5923 = vunpack.c.h.b16 %v3911
      %v5924 = vunpack.c.l.b16 %v3912
      %v5925 = vunpack.c.h.b16 %v3912
      %v5926 = vunpack.c.l.b16 %v3913
      %v5927 = vunpack.c.h.b16 %v3913
      %v5928 = vunpack.c.l.b16 %v3914
      %v5929 = vunpack.c.h.b16 %v3914
      %v5930 = vunpack.c.l.b16 %v3915
      %v5931 = vunpack.c.h.b16 %v3915
      %v5932 = vunpack.c.l.b16 %v3916
      %v5933 = vunpack.c.h.b16 %v3916
      %v5934 = vunpack.c.l.b16 %v3917
      %v5935 = vunpack.c.h.b16 %v3917
      %v5936 = vunpack.c.l.b16 %v3918
      %v5937 = vunpack.c.h.b16 %v3918
      %v5938 = vunpack.c.l.b16 %v3919
      %v5939 = vunpack.c.h.b16 %v3919
      %v5940 = vunpack.c.l.b16 %v3920
      %v5941 = vunpack.c.h.b16 %v3920
      %v5942 = vunpack.c.l.b16 %v3921
      %v5943 = vunpack.c.h.b16 %v3921
      %v5944 = vunpack.c.l.b16 %v3922
      %v5945 = vunpack.c.h.b16 %v3922
      %v5946 = vunpack.c.l.b16 %v3923
      %v5947 = vunpack.c.h.b16 %v3923
      %v5948 = vunpack.c.l.b16 %v3924
      %v5949 = vunpack.c.h.b16 %v3924
      %v5950 = vunpack.c.l.b16 %v3925
      %v5951 = vunpack.c.h.b16 %v3925
      %v5952 = vunpack.c.l.b16 %v3926
      %v5953 = vunpack.c.h.b16 %v3926
      %v5954 = vunpack.c.l.b16 %v3927
      %v5955 = vunpack.c.h.b16 %v3927
      %v5956 = vunpack.c.l.b16 %v3928
      %v5957 = vunpack.c.h.b16 %v3928
      %v5958 = vunpack.c.l.b16 %v3929
      %v5959 = vunpack.c.h.b16 %v3929
      %v5960 = vunpack.c.l.b16 %v3930
      %v5961 = vunpack.c.h.b16 %v3930
      %v5962 = vunpack.c.l.b16 %v3931
      %v5963 = vunpack.c.h.b16 %v3931
      %v5964 = vunpack.c.l.b16 %v3932
      %v5965 = vunpack.c.h.b16 %v3932
      %v5966 = vunpack.c.l.b16 %v3933
      %v5967 = vunpack.c.h.b16 %v3933
      %v5968 = vunpack.c.l.b16 %v3934
      %v5969 = vunpack.c.h.b16 %v3934
      %v5970 = vunpack.c.l.b16 %v3935
      %v5971 = vunpack.c.h.b16 %v3935
      %v5972 = vunpack.c.l.b16 %v3936
      %v5973 = vunpack.c.h.b16 %v3936
      %v5974 = vunpack.c.l.b16 %v3937
      %v5975 = vunpack.c.h.b16 %v3937
      %v5976 = vunpack.c.l.b16 %v3938
      %v5977 = vunpack.c.h.b16 %v3938
      %v5978 = vunpack.c.l.b16 %v3939
      %v5979 = vunpack.c.h.b16 %v3939
      %v5980 = vunpack.c.l.b16 %v3940
      %v5981 = vunpack.c.h.b16 %v3940
      %v5982 = vunpack.c.l.b16 %v3941
      %v5983 = vunpack.c.h.b16 %v3941
      %v5984 = vunpack.c.l.b16 %v3942
      %v5985 = vunpack.c.h.b16 %v3942
      %v5986 = vunpack.c.l.b16 %v3943
      %v5987 = vunpack.c.h.b16 %v3943
      %v5988 = vunpack.c.l.b16 %v3944
      %v5989 = vunpack.c.h.b16 %v3944
      %v5990 = vunpack.c.l.b16 %v3945
      %v5991 = vunpack.c.h.b16 %v3945
      %v5992 = vunpack.c.l.b16 %v3946
      %v5993 = vunpack.c.h.b16 %v3946
      %v5994 = vunpack.c.l.b16 %v3947
      %v5995 = vunpack.c.h.b16 %v3947
      %v5996 = vunpack.c.l.b16 %v3948
      %v5997 = vunpack.c.h.b16 %v3948
      %v5998 = vunpack.c.l.b16 %v3949
      %v5999 = vunpack.c.h.b16 %v3949
      %v6000 = vunpack.c.l.b16 %v3950
      %v6001 = vunpack.c.h.b16 %v3950
      %v6002 = vunpack.c.l.b16 %v3951
      %v6003 = vunpack.c.h.b16 %v3951
      %v6004 = vunpack.c.l.b16 %v3952
      %v6005 = vunpack.c.h.b16 %v3952
      %v6006 = vunpack.c.l.b16 %v3953
      %v6007 = vunpack.c.h.b16 %v3953
      %v6008 = vunpack.c.l.b16 %v3954
      %v6009 = vunpack.c.h.b16 %v3954
      %v6010 = vunpack.c.l.b16 %v3955
      %v6011 = vunpack.c.h.b16 %v3955
      %v6012 = vunpack.c.l.b16 %v3956
      %v6013 = vunpack.c.h.b16 %v3956
      %v6014 = vunpack.c.l.b16 %v3957
      %v6015 = vunpack.c.h.b16 %v3957
      %v6016 = vunpack.c.l.b16 %v3958
      %v6017 = vunpack.c.h.b16 %v3958
      %v6018 = vunpack.c.l.b16 %v3959
      %v6019 = vunpack.c.h.b16 %v3959
      %v6020 = vunpack.c.l.b16 %v3960
      %v6021 = vunpack.c.h.b16 %v3960
      %v6022 = vunpack.c.l.b16 %v3961
      %v6023 = vunpack.c.h.b16 %v3961
      %v6024 = vunpack.c.l.b16 %v3962
      %v6025 = vunpack.c.h.b16 %v3962
      %v6026 = vunpack.c.l.b16 %v3963
      %v6027 = vunpack.c.h.b16 %v3963
      %v6028 = vunpack.c.l.b16 %v3964
      %v6029 = vunpack.c.h.b16 %v3964
      %v6030 = vunpack.c.l.b16 %v3965
      %v6031 = vunpack.c.h.b16 %v3965
      %v6032 = vunpack.c.l.b16 %v3966
      %v6033 = vunpack.c.h.b16 %v3966
      %v6034 = vunpack.c.l.b16 %v3967
      %v6035 = vunpack.c.h.b16 %v3967
      %v6036 = vunpack.c.l.b16 %v3968
      %v6037 = vunpack.c.h.b16 %v3968
      %v6038 = vunpack.c.l.b16 %v3969
      %v6039 = vunpack.c.h.b16 %v3969
      %v6040 = vunpack.c.l.b16 %v3970
      %v6041 = vunpack.c.h.b16 %v3970
      %v6042 = vunpack.c.l.b16 %v3971
      %v6043 = vunpack.c.h.b16 %v3971
      %v6044 = vunpack.c.l.b16 %v3972
      %v6045 = vunpack.c.h.b16 %v3972
      %v6046 = vunpack.c.l.b16 %v3973
      %v6047 = vunpack.c.h.b16 %v3973
      %v6048 = vunpack.c.l.b16 %v3974
      %v6049 = vunpack.c.h.b16 %v3974
      %v6050 = vunpack.c.l.b16 %v3975
      %v6051 = vunpack.c.h.b16 %v3975
      %v6052 = vunpack.c.l.b16 %v3976
      %v6053 = vunpack.c.h.b16 %v3976
      %v6054 = vunpack.c.l.b16 %v3977
      %v6055 = vunpack.c.h.b16 %v3977
      %v6056 = vunpack.c.l.b16 %v3978
      %v6057 = vunpack.c.h.b16 %v3978
      %v6058 = vunpack.c.l.b16 %v3979
      %v6059 = vunpack.c.h.b16 %v3979
      %v6060 = vunpack.c.l.b16 %v3980
      %v6061 = vunpack.c.h.b16 %v3980
      %v6062 = vunpack.c.l.b16 %v3981
      %v6063 = vunpack.c.h.b16 %v3981
      %v6064 = vunpack.c.l.b16 %v3982
      %v6065 = vunpack.c.h.b16 %v3982
      %v6066 = vunpack.c.l.b16 %v3983
      %v6067 = vunpack.c.h.b16 %v3983
      %v6068 = vunpack.c.l.b16 %v3984
      %v6069 = vunpack.c.h.b16 %v3984
      %v6070 = vunpack.c.l.b16 %v3985
      %v6071 = vunpack.c.h.b16 %v3985
      %v6072 = vunpack.c.l.b16 %v3986
      %v6073 = vunpack.c.h.b16 %v3986
      %v6074 = vunpack.c.l.b16 %v3987
      %v6075 = vunpack.c.h.b16 %v3987
      %v6076 = vunpack.c.l.b16 %v3988
      %v6077 = vunpack.c.h.b16 %v3988
      %v6078 = vunpack.c.l.b16 %v3989
      %v6079 = vunpack.c.h.b16 %v3989
      %v6080 = vunpack.c.l.b16 %v3990
      %v6081 = vunpack.c.h.b16 %v3990
      %v6082 = vunpack.c.l.b16 %v3991
      %v6083 = vunpack.c.h.b16 %v3991
      %v6084 = vunpack.c.l.b16 %v3992
      %v6085 = vunpack.c.h.b16 %v3992
      %v6086 = vunpack.c.l.b16 %v3993
      %v6087 = vunpack.c.h.b16 %v3993
      %v6088 = vunpack.c.l.b16 %v3994
      %v6089 = vunpack.c.h.b16 %v3994
      %v6090 = vunpack.c.l.b16 %v3995
      %v6091 = vunpack.c.h.b16 %v3995
      %v6092 = vunpack.c.l.b16 %v3996
      %v6093 = vunpack.c.h.b16 %v3996
      %v6094 = vunpack.c.l.b16 %v3997
      %v6095 = vunpack.c.h.b16 %v3997
      %v6096 = vunpack.c.l.b16 %v3998
      %v6097 = vunpack.c.h.b16 %v3998
      %v6098 = vunpack.c.l.b16 %v3999
      %v6099 = vunpack.c.h.b16 %v3999
      %v6100 = vunpack.c.l.b16 %v4000
      %v6101 = vunpack.c.h.b16 %v4000
      %v6102 = vunpack.c.l.b16 %v4001
      %v6103 = vunpack.c.h.b16 %v4001
      %v6104 = vunpack.c.l.b16 %v4002
      %v6105 = vunpack.c.h.b16 %v4002
      %v6106 = vunpack.c.l.b16 %v4003
      %v6107 = vunpack.c.h.b16 %v4003
      %v6108 = vunpack.c.l.b16 %v4004
      %v6109 = vunpack.c.h.b16 %v4004
      %v6110 = vunpack.c.l.b16 %v4005
      %v6111 = vunpack.c.h.b16 %v4005
      %v6112 = vunpack.c.l.b16 %v4006
      %v6113 = vunpack.c.h.b16 %v4006
      %v6114 = vunpack.c.l.b16 %v4007
      %v6115 = vunpack.c.h.b16 %v4007
      %v6116 = vunpack.c.l.b16 %v4008
      %v6117 = vunpack.c.h.b16 %v4008
      %v6118 = vunpack.c.l.b16 %v4009
      %v6119 = vunpack.c.h.b16 %v4009
      %v6120 = vunpack.c.l.b16 %v4010
      %v6121 = vunpack.c.h.b16 %v4010
      %v6122 = vunpack.c.l.b16 %v4011
      %v6123 = vunpack.c.h.b16 %v4011
      %v6124 = vunpack.c.l.b16 %v4012
      %v6125 = vunpack.c.h.b16 %v4012
      %v6126 = vunpack.c.l.b16 %v4013
      %v6127 = vunpack.c.h.b16 %v4013
      %v6128 = vunpack.c.l.b16 %v4014
      %v6129 = vunpack.c.h.b16 %v4014
      %v6130 = vunpack.c.l.b16 %v4015
      %v6131 = vunpack.c.h.b16 %v4015
      %v6132 = vunpack.c.l.b16 %v4016
      %v6133 = vunpack.c.h.b16 %v4016
      %v6134 = vunpack.c.l.b16 %v4017
      %v6135 = vunpack.c.h.b16 %v4017
      %v6136 = vunpack.c.l.b16 %v4018
      %v6137 = vunpack.c.h.b16 %v4018
      %v6138 = vunpack.c.l.b16 %v4019
      %v6139 = vunpack.c.h.b16 %v4019
      %v6140 = vunpack.c.l.b16 %v4020
      %v6141 = vunpack.c.h.b16 %v4020
      %v6142 = vunpack.c.l.b16 %v4021
      %v6143 = vunpack.c.h.b16 %v4021
      %v6144 = vunpack.c.l.b16 %v4022
      %v6145 = vunpack.c.h.b16 %v4022
      %v6146 = vunpack.c.l.b16 %v4023
      %v6147 = vunpack.c.h.b16 %v4023
      %v6148 = vunpack.c.l.b16 %v4024
      %v6149 = vunpack.c.h.b16 %v4024
      %v6150 = vunpack.c.l.b16 %v4025
      %v6151 = vunpack.c.h.b16 %v4025
      %v6152 = vunpack.c.l.b16 %v4026
      %v6153 = vunpack.c.h.b16 %v4026
      %v6154 = vunpack.c.l.b16 %v4027
      %v6155 = vunpack.c.h.b16 %v4027
      %v6156 = vunpack.c.l.b16 %v4028
      %v6157 = vunpack.c.h.b16 %v4028
      %v6158 = vunpack.c.l.b16 %v4029
      %v6159 = vunpack.c.h.b16 %v4029
      %v6160 = vunpack.c.l.b16 %v4030
      %v6161 = vunpack.c.h.b16 %v4030
      %v6162 = vunpack.c.l.b16 %v4031
      %v6163 = vunpack.c.h.b16 %v4031
      %v6164 = vunpack.c.l.b16 %v4032
      %v6165 = vunpack.c.h.b16 %v4032
      %v6166 = vunpack.c.l.b16 %v4033
      %v6167 = vunpack.c.h.b16 %v4033
      %v6168 = vunpack.c.l.b16 %v4034
      %v6169 = vunpack.c.h.b16 %v4034
      %v6170 = vunpack.c.l.b16 %v4035
      %v6171 = vunpack.c.h.b16 %v4035
      %v6172 = vunpack.c.l.b16 %v4036
      %v6173 = vunpack.c.h.b16 %v4036
      %v6174 = vunpack.c.l.b16 %v4037
      %v6175 = vunpack.c.h.b16 %v4037
      %v6176 = vunpack.c.l.b16 %v4038
      %v6177 = vunpack.c.h.b16 %v4038
      %v6178 = vunpack.c.l.b16 %v4039
      %v6179 = vunpack.c.h.b16 %v4039
      %v6180 = vunpack.c.l.b16 %v4040
      %v6181 = vunpack.c.h.b16 %v4040
      %v6182 = vunpack.c.l.b16 %v4041
      %v6183 = vunpack.c.h.b16 %v4041
      %v6184 = vunpack.c.l.b16 %v4042
      %v6185 = vunpack.c.h.b16 %v4042
      %v6186 = vunpack.c.l.b16 %v4043
      %v6187 = vunpack.c.h.b16 %v4043
      %v6188 = vunpack.c.l.b16 %v4044
      %v6189 = vunpack.c.h.b16 %v4044
      %v6190 = vunpack.c.l.b16 %v4045
      %v6191 = vunpack.c.h.b16 %v4045
      %v6192 = vunpack.c.l.b16 %v4046
      %v6193 = vunpack.c.h.b16 %v4046
      %v6194 = vunpack.c.l.b16 %v4047
      %v6195 = vunpack.c.h.b16 %v4047
      %v6196 = vunpack.c.l.b16 %v4048
      %v6197 = vunpack.c.h.b16 %v4048
      %v6198 = vunpack.c.l.b16 %v4049
      %v6199 = vunpack.c.h.b16 %v4049
      %v6200 = vunpack.c.l.b16 %v4050
      %v6201 = vunpack.c.h.b16 %v4050
      %v6202 = vunpack.c.l.b16 %v4051
      %v6203 = vunpack.c.h.b16 %v4051
      %v6204 = vunpack.c.l.b16 %v4052
      %v6205 = vunpack.c.h.b16 %v4052
      %v6206 = vunpack.c.l.b16 %v4053
      %v6207 = vunpack.c.h.b16 %v4053
      %v6208 = vunpack.c.l.b16 %v4054
      %v6209 = vunpack.c.h.b16 %v4054
      %v6210 = vunpack.c.l.b16 %v4055
      %v6211 = vunpack.c.h.b16 %v4055
      %v6212 = vunpack.c.l.b16 %v4056
      %v6213 = vunpack.c.h.b16 %v4056
      %v6214 = vunpack.c.l.b16 %v4057
      %v6215 = vunpack.c.h.b16 %v4057
      %v6216 = vunpack.c.l.b16 %v4058
      %v6217 = vunpack.c.h.b16 %v4058
      %v6218 = vunpack.c.l.b16 %v4059
      %v6219 = vunpack.c.h.b16 %v4059
      %v6220 = vunpack.c.l.b16 %v4060
      %v6221 = vunpack.c.h.b16 %v4060
      %v6222 = vunpack.c.l.b16 %v4061
      %v6223 = vunpack.c.h.b16 %v4061
      %v6224 = vunpack.c.l.b16 %v4062
      %v6225 = vunpack.c.h.b16 %v4062
      %v6226 = vunpack.c.l.b16 %v4063
      %v6227 = vunpack.c.h.b16 %v4063
      %v6228 = vunpack.c.l.b16 %v4064
      %v6229 = vunpack.c.h.b16 %v4064
      %v6230 = vunpack.c.l.b16 %v4065
      %v6231 = vunpack.c.h.b16 %v4065
      %v6232 = vunpack.c.l.b16 %v4066
      %v6233 = vunpack.c.h.b16 %v4066
      %v6234 = vunpack.c.l.b16 %v4067
      %v6235 = vunpack.c.h.b16 %v4067
      %v6236 = vunpack.c.l.b16 %v4068
      %v6237 = vunpack.c.h.b16 %v4068
      %v6238 = vunpack.c.l.b16 %v4069
      %v6239 = vunpack.c.h.b16 %v4069
      %v6240 = vunpack.c.l.b16 %v4070
      %v6241 = vunpack.c.h.b16 %v4070
      %v6242 = vunpack.c.l.b16 %v4071
      %v6243 = vunpack.c.h.b16 %v4071
      %v6244 = vunpack.c.l.b16 %v4072
      %v6245 = vunpack.c.h.b16 %v4072
      %v6246 = vunpack.c.l.b16 %v4073
      %v6247 = vunpack.c.h.b16 %v4073
      %v6248 = vunpack.c.l.b16 %v4074
      %v6249 = vunpack.c.h.b16 %v4074
      %v6250 = vunpack.c.l.b16 %v4075
      %v6251 = vunpack.c.h.b16 %v4075
      %v6252 = vunpack.c.l.b16 %v4076
      %v6253 = vunpack.c.h.b16 %v4076
      %v6254 = vunpack.c.l.b16 %v4077
      %v6255 = vunpack.c.h.b16 %v4077
      %v6256 = vunpack.c.l.b16 %v4078
      %v6257 = vunpack.c.h.b16 %v4078
      %v6258 = vunpack.c.l.b16 %v4079
      %v6259 = vunpack.c.h.b16 %v4079
      %v6260 = vunpack.c.l.b16 %v4080
      %v6261 = vunpack.c.h.b16 %v4080
      %v6262 = vunpack.c.l.b16 %v4081
      %v6263 = vunpack.c.h.b16 %v4081
      %v6264 = vunpack.c.l.b16 %v4082
      %v6265 = vunpack.c.h.b16 %v4082
      %v6266 = vunpack.c.l.b16 %v4083
      %v6267 = vunpack.c.h.b16 %v4083
      %v6268 = vunpack.c.l.b16 %v4084
      %v6269 = vunpack.c.h.b16 %v4084
      %v6270 = vunpack.c.l.b16 %v4085
      %v6271 = vunpack.c.h.b16 %v4085
      %v6272 = vunpack.c.l.b16 %v4086
      %v6273 = vunpack.c.h.b16 %v4086
      %v6274 = vunpack.c.l.b16 %v4087
      %v6275 = vunpack.c.h.b16 %v4087
      %v6276 = vunpack.c.l.b16 %v4088
      %v6277 = vunpack.c.h.b16 %v4088
      %v6278 = vunpack.c.l.b16 %v4089
      %v6279 = vunpack.c.h.b16 %v4089
      %v6280 = vunpack.c.l.b16 %v4090
      %v6281 = vunpack.c.h.b16 %v4090
      %v6282 = vunpack.c.l.b16 %v4091
      %v6283 = vunpack.c.h.b16 %v4091
      %v6284 = vunpack.c.l.b16 %v4092
      %v6285 = vunpack.c.h.b16 %v4092
      %v6286 = vunpack.c.l.b16 %v4093
      %v6287 = vunpack.c.h.b16 %v4093
      %v6288 = vunpack.c.l.b16 %v4094
      %v6289 = vunpack.c.h.b16 %v4094
      %v6290 = vunpack.c.l.b16 %v4095
      %v6291 = vunpack.c.h.b16 %v4095
      %v6292 = vunpack.c.l.b16 %v4096
      %v6293 = vunpack.c.h.b16 %v4096
      %v6294 = vunpack.c.l.b16 %v4097
      %v6295 = vunpack.c.h.b16 %v4097
      %v6296 = vunpack.c.l.b16 %v4098
      %v6297 = vunpack.c.h.b16 %v4098
      %v6298 = vunpack.c.l.b16 %v4099
      %v6299 = vunpack.c.h.b16 %v4099
      %v6300 = vunpack.c.l.b16 %v4100
      %v6301 = vunpack.c.h.b16 %v4100
      %v6302 = vunpack.c.l.b16 %v4101
      %v6303 = vunpack.c.h.b16 %v4101
      %v6304 = vunpack.c.l.b16 %v4102
      %v6305 = vunpack.c.h.b16 %v4102
      %v6306 = vunpack.c.l.b16 %v4103
      %v6307 = vunpack.c.h.b16 %v4103
      %v6308 = vunpack.c.l.b16 %v4104
      %v6309 = vunpack.c.h.b16 %v4104
      %v6310 = vunpack.c.l.b16 %v4105
      %v6311 = vunpack.c.h.b16 %v4105
      %v6312 = vunpack.c.l.b16 %v4106
      %v6313 = vunpack.c.h.b16 %v4106
      %v6314 = vunpack.c.l.b16 %v4107
      %v6315 = vunpack.c.h.b16 %v4107
      %v6316 = vunpack.c.l.b16 %v4108
      %v6317 = vunpack.c.h.b16 %v4108
      %v6318 = vunpack.c.l.b16 %v4109
      %v6319 = vunpack.c.h.b16 %v4109
      %v6320 = vunpack.c.l.b16 %v4110
      %v6321 = vunpack.c.h.b16 %v4110
      %v6322 = vunpack.c.l.b16 %v4111
      %v6323 = vunpack.c.h.b16 %v4111
      %v6324 = vunpack.c.l.b16 %v4112
      %v6325 = vunpack.c.h.b16 %v4112
      %v6326 = vunpack.c.l.b16 %v4113
      %v6327 = vunpack.c.h.b16 %v4113
      %v6328 = vunpack.c.l.b16 %v4114
      %v6329 = vunpack.c.h.b16 %v4114
      %v6330 = vunpack.c.l.b16 %v4115
      %v6331 = vunpack.c.h.b16 %v4115
      %v6332 = vunpack.c.l.b16 %v4116
      %v6333 = vunpack.c.h.b16 %v4116
      %v6334 = vunpack.c.l.b16 %v4117
      %v6335 = vunpack.c.h.b16 %v4117
      %v6336 = vunpack.c.l.b16 %v4118
      %v6337 = vunpack.c.h.b16 %v4118
      %v6338 = vunpack.c.l.b16 %v4119
      %v6339 = vunpack.c.h.b16 %v4119
      %v6340 = vunpack.c.l.b16 %v4120
      %v6341 = vunpack.c.h.b16 %v4120
      %v6342 = vunpack.c.l.b16 %v4121
      %v6343 = vunpack.c.h.b16 %v4121
      %v6344 = vunpack.c.l.b16 %v4122
      %v6345 = vunpack.c.h.b16 %v4122
      %v6346 = vunpack.c.l.b16 %v4123
      %v6347 = vunpack.c.h.b16 %v4123
      %v6348 = vunpack.c.l.b16 %v4124
      %v6349 = vunpack.c.h.b16 %v4124
      %v6350 = vunpack.c.l.b16 %v4125
      %v6351 = vunpack.c.h.b16 %v4125
      %v6352 = vunpack.c.l.b16 %v4126
      %v6353 = vunpack.c.h.b16 %v4126
      %v6354 = vunpack.c.l.b16 %v4127
      %v6355 = vunpack.c.h.b16 %v4127
      %v6356 = vunpack.c.l.b16 %v4128
      %v6357 = vunpack.c.h.b16 %v4128
      %v6358 = vunpack.c.l.b16 %v4129
      %v6359 = vunpack.c.h.b16 %v4129
      %v6360 = vunpack.c.l.b16 %v4130
      %v6361 = vunpack.c.h.b16 %v4130
      %v6362 = vunpack.c.l.b16 %v4131
      %v6363 = vunpack.c.h.b16 %v4131
      %v6364 = vunpack.c.l.b16 %v4132
      %v6365 = vunpack.c.h.b16 %v4132
      %v6366 = vunpack.c.l.b16 %v4133
      %v6367 = vunpack.c.h.b16 %v4133
      %v6368 = vunpack.c.l.b16 %v4134
      %v6369 = vunpack.c.h.b16 %v4134
      %v6370 = vunpack.c.l.b16 %v4135
      %v6371 = vunpack.c.h.b16 %v4135
      %v6372 = vunpack.c.l.b16 %v4136
      %v6373 = vunpack.c.h.b16 %v4136
      %v6374 = vunpack.c.l.b16 %v4137
      %v6375 = vunpack.c.h.b16 %v4137
      %v6376 = vunpack.c.l.b16 %v4138
      %v6377 = vunpack.c.h.b16 %v4138
      %v6378 = vunpack.c.l.b16 %v4139
      %v6379 = vunpack.c.h.b16 %v4139
      %v6380 = vunpack.c.l.b16 %v4140
      %v6381 = vunpack.c.h.b16 %v4140
      %v6382 = vunpack.c.l.b16 %v4141
      %v6383 = vunpack.c.h.b16 %v4141
      %v6384 = vunpack.c.l.b16 %v4142
      %v6385 = vunpack.c.h.b16 %v4142
      %v6386 = vunpack.c.l.b16 %v4143
      %v6387 = vunpack.c.h.b16 %v4143
      %v6388 = vunpack.c.l.b16 %v4144
      %v6389 = vunpack.c.h.b16 %v4144
      %v6390 = vunpack.c.l.b16 %v4145
      %v6391 = vunpack.c.h.b16 %v4145
      %v6392 = vunpack.c.l.b16 %v4146
      %v6393 = vunpack.c.h.b16 %v4146
      %v6394 = vunpack.c.l.b16 %v4147
      %v6395 = vunpack.c.h.b16 %v4147
      %v6396 = vunpack.c.l.b16 %v4148
      %v6397 = vunpack.c.h.b16 %v4148
      %v6398 = vunpack.c.l.b16 %v4149
      %v6399 = vunpack.c.h.b16 %v4149
      %v6400 = vunpack.c.l.b16 %v4150
      %v6401 = vunpack.c.h.b16 %v4150
      %v6402 = vunpack.c.l.b16 %v4151
      %v6403 = vunpack.c.h.b16 %v4151
      %v6404 = vunpack.c.l.b16 %v4152
      %v6405 = vunpack.c.h.b16 %v4152
      %v6406 = vunpack.c.l.b16 %v4153
      %v6407 = vunpack.c.h.b16 %v4153
      %v6408 = vunpack.c.l.b16 %v4154
      %v6409 = vunpack.c.h.b16 %v4154
      %v6410 = vunpack.c.l.b16 %v4155
      %v6411 = vunpack.c.h.b16 %v4155
      %v6412 = vunpack.c.l.b16 %v4156
      %v6413 = vunpack.c.h.b16 %v4156
      %v6414 = vunpack.c.l.b16 %v4157
      %v6415 = vunpack.c.h.b16 %v4157
      %v6416 = vunpack.c.l.b16 %v4158
      %v6417 = vunpack.c.h.b16 %v4158
      %v6418 = vunpack.c.l.b16 %v4159
      %v6419 = vunpack.c.h.b16 %v4159
      %v6420 = vunpack.c.l.b16 %v4160
      %v6421 = vunpack.c.h.b16 %v4160
      %v6422 = vunpack.c.l.b16 %v4161
      %v6423 = vunpack.c.h.b16 %v4161
      %v6424 = vunpack.c.l.b16 %v4162
      %v6425 = vunpack.c.h.b16 %v4162
      %v6426 = vunpack.c.l.b16 %v4163
      %v6427 = vunpack.c.h.b16 %v4163
      %v6428 = vunpack.c.l.b16 %v4164
      %v6429 = vunpack.c.h.b16 %v4164
      %v6430 = vunpack.c.l.b16 %v4165
      %v6431 = vunpack.c.h.b16 %v4165
      %v6432 = vunpack.c.l.b16 %v4166
      %v6433 = vunpack.c.h.b16 %v4166
      %v6434 = vunpack.c.l.b16 %v4167
      %v6435 = vunpack.c.h.b16 %v4167
      %v6436 = vunpack.c.l.b16 %v4168
      %v6437 = vunpack.c.h.b16 %v4168
      %v6438 = vunpack.c.l.b16 %v4169
      %v6439 = vunpack.c.h.b16 %v4169
      %v6440 = vunpack.c.l.b16 %v4170
      %v6441 = vunpack.c.h.b16 %v4170
      %v6442 = vunpack.c.l.b16 %v4171
      %v6443 = vunpack.c.h.b16 %v4171
      %v6444 = vunpack.c.l.b16 %v4172
      %v6445 = vunpack.c.h.b16 %v4172
      %v6446 = vunpack.c.l.b16 %v4173
      %v6447 = vunpack.c.h.b16 %v4173
      %v6448 = vunpack.c.l.b16 %v4174
      %v6449 = vunpack.c.h.b16 %v4174
      %v6450 = vunpack.c.l.b16 %v4175
      %v6451 = vunpack.c.h.b16 %v4175
      %v6452 = vunpack.c.l.b16 %v4176
      %v6453 = vunpack.c.h.b16 %v4176
      %v6454 = vunpack.c.l.b16 %v4177
      %v6455 = vunpack.c.h.b16 %v4177
      %v6456 = vunpack.c.l.b16 %v4178
      %v6457 = vunpack.c.h.b16 %v4178
      %v6458 = vunpack.c.l.b16 %v4179
      %v6459 = vunpack.c.h.b16 %v4179
      %v6460 = vunpack.c.l.b16 %v4180
      %v6461 = vunpack.c.h.b16 %v4180
      %v6462 = vunpack.c.l.b16 %v4181
      %v6463 = vunpack.c.h.b16 %v4181
      %v6464 = vunpack.c.l.b16 %v4182
      %v6465 = vunpack.c.h.b16 %v4182
      %v6466 = vunpack.c.l.b16 %v4183
      %v6467 = vunpack.c.h.b16 %v4183
      %v6468 = vunpack.c.l.b16 %v4184
      %v6469 = vunpack.c.h.b16 %v4184
      %v6470 = vunpack.c.l.b16 %v4185
      %v6471 = vunpack.c.h.b16 %v4185
      %v6472 = vunpack.c.l.b16 %v4186
      %v6473 = vunpack.c.h.b16 %v4186
      %v6474 = vunpack.c.l.b16 %v4187
      %v6475 = vunpack.c.h.b16 %v4187
      %v6476 = vunpack.c.l.b16 %v4188
      %v6477 = vunpack.c.h.b16 %v4188
      %v6478 = vunpack.c.l.b16 %v4189
      %v6479 = vunpack.c.h.b16 %v4189
      %v6480 = vunpack.c.l.b16 %v4190
      %v6481 = vunpack.c.h.b16 %v4190
      %v6482 = vunpack.c.l.b16 %v4191
      %v6483 = vunpack.c.h.b16 %v4191
      %v6484 = vunpack.c.l.b16 %v4192
      %v6485 = vunpack.c.h.b16 %v4192
      %v6486 = vunpack.c.l.b16 %v4193
      %v6487 = vunpack.c.h.b16 %v4193
      %v6488 = vunpack.c.l.b16 %v4194
      %v6489 = vunpack.c.h.b16 %v4194
      %v6490 = vunpack.c.l.b16 %v4195
      %v6491 = vunpack.c.h.b16 %v4195
      %v6492 = vunpack.c.l.b16 %v4196
      %v6493 = vunpack.c.h.b16 %v4196
      %v6494 = vunpack.c.l.b16 %v4197
      %v6495 = vunpack.c.h.b16 %v4197
      %v6496 = vunpack.c.l.b16 %v4198
      %v6497 = vunpack.c.h.b16 %v4198
      %v6498 = vunpack.c.l.b16 %v4199
      %v6499 = vunpack.c.h.b16 %v4199
      %v6500 = vunpack.c.l.b16 %v4200
      %v6501 = vunpack.c.h.b16 %v4200
      %v6502 = vunpack.c.l.b16 %v4201
      %v6503 = vunpack.c.h.b16 %v4201
      %v6504 = vunpack.c.l.b16 %v4202
      %v6505 = vunpack.c.h.b16 %v4202
      %v6506 = vunpack.c.l.b16 %v4203
      %v6507 = vunpack.c.h.b16 %v4203
      %v6508 = vunpack.c.l.b16 %v4204
      %v6509 = vunpack.c.h.b16 %v4204
      %v6510 = vunpack.c.l.b16 %v4205
      %v6511 = vunpack.c.h.b16 %v4205
      %v6512 = vunpack.c.l.b16 %v4206
      %v6513 = vunpack.c.h.b16 %v4206
      %v6514 = vunpack.c.l.b16 %v4207
      %v6515 = vunpack.c.h.b16 %v4207
      %v6516 = vunpack.c.l.b16 %v4208
      %v6517 = vunpack.c.h.b16 %v4208
      %v6518 = vunpack.c.l.b16 %v4209
      %v6519 = vunpack.c.h.b16 %v4209
      %v6520 = vunpack.c.l.b16 %v4210
      %v6521 = vunpack.c.h.b16 %v4210
      %v6522 = vunpack.c.l.b16 %v4211
      %v6523 = vunpack.c.h.b16 %v4211
      %v6524 = vunpack.c.l.b16 %v4212
      %v6525 = vunpack.c.h.b16 %v4212
      %v6526 = vunpack.c.l.b16 %v4213
      %v6527 = vunpack.c.h.b16 %v4213
      %v6528 = vunpack.c.l.b16 %v4214
      %v6529 = vunpack.c.h.b16 %v4214
      %v6530 = vunpack.c.l.b16 %v4215
      %v6531 = vunpack.c.h.b16 %v4215
      %v6532 = vunpack.c.l.b16 %v4216
      %v6533 = vunpack.c.h.b16 %v4216
      %v6534 = vunpack.c.l.b16 %v4217
      %v6535 = vunpack.c.h.b16 %v4217
      %v6536 = vunpack.c.l.b16 %v4218
      %v6537 = vunpack.c.h.b16 %v4218
      %v6538 = vunpack.c.l.b16 %v4219
      %v6539 = vunpack.c.h.b16 %v4219
      %v6540 = vunpack.c.l.b16 %v4220
      %v6541 = vunpack.c.h.b16 %v4220
      %v6542 = vunpack.c.l.b16 %v4221
      %v6543 = vunpack.c.h.b16 %v4221
      %v6544 = vunpack.c.l.b16 %v4222
      %v6545 = vunpack.c.h.b16 %v4222
      %v6546 = vunpack.c.l.b16 %v4223
      %v6547 = vunpack.c.h.b16 %v4223
      %v6548 = vunpack.c.l.b16 %v4224
      %v6549 = vunpack.c.h.b16 %v4224
      %v6550 = vunpack.c.l.b16 %v4225
      %v6551 = vunpack.c.h.b16 %v4225
      %v6552 = vunpack.c.l.b16 %v4226
      %v6553 = vunpack.c.h.b16 %v4226
      %v6554 = vunpack.c.l.b16 %v4227
      %v6555 = vunpack.c.h.b16 %v4227
      %v6556 = vunpack.c.l.b16 %v4228
      %v6557 = vunpack.c.h.b16 %v4228
      %v6558 = vunpack.c.l.b16 %v4229
      %v6559 = vunpack.c.h.b16 %v4229
      %v6560 = vunpack.c.l.b16 %v4230
      %v6561 = vunpack.c.h.b16 %v4230
      %v6562 = vunpack.c.l.b16 %v4231
      %v6563 = vunpack.c.h.b16 %v4231
      %v6564 = vunpack.c.l.b16 %v4232
      %v6565 = vunpack.c.h.b16 %v4232
      %v6566 = vunpack.c.l.b16 %v4233
      %v6567 = vunpack.c.h.b16 %v4233
      %v6568 = vunpack.c.l.b16 %v4234
      %v6569 = vunpack.c.h.b16 %v4234
      %v6570 = vunpack.c.l.b16 %v4235
      %v6571 = vunpack.c.h.b16 %v4235
      %v6572 = vunpack.c.l.b16 %v4236
      %v6573 = vunpack.c.h.b16 %v4236
      %v6574 = vunpack.c.l.b16 %v4237
      %v6575 = vunpack.c.h.b16 %v4237
      %v6576 = vunpack.c.l.b16 %v4238
      %v6577 = vunpack.c.h.b16 %v4238
      %v6578 = vunpack.c.l.b16 %v4239
      %v6579 = vunpack.c.h.b16 %v4239
      %v6580 = vunpack.c.l.b16 %v4240
      %v6581 = vunpack.c.h.b16 %v4240
      %v6582 = vunpack.c.l.b16 %v4241
      %v6583 = vunpack.c.h.b16 %v4241
      %v6584 = vunpack.c.l.b16 %v4242
      %v6585 = vunpack.c.h.b16 %v4242
      %v6586 = vunpack.c.l.b16 %v4243
      %v6587 = vunpack.c.h.b16 %v4243
      %v6588 = vunpack.c.l.b16 %v4244
      %v6589 = vunpack.c.h.b16 %v4244
      %v6590 = vunpack.c.l.b16 %v4245
      %v6591 = vunpack.c.h.b16 %v4245
      %v6592 = vunpack.c.l.b16 %v4246
      %v6593 = vunpack.c.h.b16 %v4246
      %v6594 = vunpack.c.l.b16 %v4247
      %v6595 = vunpack.c.h.b16 %v4247
      %v6596 = vunpack.c.l.b16 %v4248
      %v6597 = vunpack.c.h.b16 %v4248
      %v6598 = vunpack.c.l.b16 %v4249
      %v6599 = vunpack.c.h.b16 %v4249
      %v6600 = vunpack.c.l.b16 %v4250
      %v6601 = vunpack.c.h.b16 %v4250
      %v6602 = vunpack.c.l.b16 %v4251
      %v6603 = vunpack.c.h.b16 %v4251
      %v6604 = vunpack.c.l.b16 %v4252
      %v6605 = vunpack.c.h.b16 %v4252
      %v6606 = vunpack.c.l.b16 %v4253
      %v6607 = vunpack.c.h.b16 %v4253
      %v6608 = vunpack.c.l.b16 %v4254
      %v6609 = vunpack.c.h.b16 %v4254
      %v6610 = vunpack.c.l.b16 %v4255
      %v6611 = vunpack.c.h.b16 %v4255
      %v6612 = vunpack.c.l.b16 %v4256
      %v6613 = vunpack.c.h.b16 %v4256
      %v6614 = vunpack.c.l.b16 %v4257
      %v6615 = vunpack.c.h.b16 %v4257
      %v6616 = vunpack.c.l.b16 %v4258
      %v6617 = vunpack.c.h.b16 %v4258
      %v6618 = vunpack.c.l.b16 %v4259
      %v6619 = vunpack.c.h.b16 %v4259
      %v6620 = vunpack.c.l.b16 %v4260
      %v6621 = vunpack.c.h.b16 %v4260
      %v6622 = vunpack.c.l.b16 %v4261
      %v6623 = vunpack.c.h.b16 %v4261
      %v6624 = vunpack.c.l.b16 %v4262
      %v6625 = vunpack.c.h.b16 %v4262
      %v6626 = vunpack.c.l.b16 %v4263
      %v6627 = vunpack.c.h.b16 %v4263
      %v6628 = vunpack.c.l.b16 %v4264
      %v6629 = vunpack.c.h.b16 %v4264
      %v6630 = vunpack.c.l.b16 %v4265
      %v6631 = vunpack.c.h.b16 %v4265
      %v6632 = vunpack.c.l.b16 %v4266
      %v6633 = vunpack.c.h.b16 %v4266
      %v6634 = vunpack.c.l.b16 %v4267
      %v6635 = vunpack.c.h.b16 %v4267
      %v6636 = vunpack.c.l.b16 %v4268
      %v6637 = vunpack.c.h.b16 %v4268
      %v6638 = vunpack.c.l.b16 %v4269
      %v6639 = vunpack.c.h.b16 %v4269
      %v6640 = vunpack.c.l.b16 %v4270
      %v6641 = vunpack.c.h.b16 %v4270
      %v6642 = vunpack.c.l.b16 %v4271
      %v6643 = vunpack.c.h.b16 %v4271
      %v6644 = vunpack.c.l.b16 %v4272
      %v6645 = vunpack.c.h.b16 %v4272
      %v6646 = vunpack.c.l.b16 %v4273
      %v6647 = vunpack.c.h.b16 %v4273
      %v6648 = vunpack.c.l.b16 %v4274
      %v6649 = vunpack.c.h.b16 %v4274
      %v6650 = vunpack.c.l.b16 %v4275
      %v6651 = vunpack.c.h.b16 %v4275
      %v6652 = vunpack.c.l.b16 %v4276
      %v6653 = vunpack.c.h.b16 %v4276
      %v6654 = vunpack.c.l.b16 %v4277
      %v6655 = vunpack.c.h.b16 %v4277
      %v6656 = vunpack.c.l.b16 %v4278
      %v6657 = vunpack.c.h.b16 %v4278
      %v6658 = vunpack.c.l.b16 %v4279
      %v6659 = vunpack.c.h.b16 %v4279
      %v6660 = vunpack.c.l.b16 %v4280
      %v6661 = vunpack.c.h.b16 %v4280
      %v6662 = vunpack.c.l.b16 %v4281
      %v6663 = vunpack.c.h.b16 %v4281
      %v6664 = vunpack.c.l.b16 %v4282
      %v6665 = vunpack.c.h.b16 %v4282
      %v6666 = vunpack.c.l.b16 %v4283
      %v6667 = vunpack.c.h.b16 %v4283
      %v6668 = vunpack.c.l.b16 %v4284
      %v6669 = vunpack.c.h.b16 %v4284
      %v6670 = vunpack.c.l.b16 %v4285
      %v6671 = vunpack.c.h.b16 %v4285
      %v6672 = vunpack.c.l.b16 %v4286
      %v6673 = vunpack.c.h.b16 %v4286
      %v6674 = vunpack.c.l.b16 %v4287
      %v6675 = vunpack.c.h.b16 %v4287
      %v6676 = vunpack.c.l.b16 %v4288
      %v6677 = vunpack.c.h.b16 %v4288
      %v6678 = vunpack.c.l.b16 %v4289
      %v6679 = vunpack.c.h.b16 %v4289
      %v6680 = vunpack.c.l.b16 %v4290
      %v6681 = vunpack.c.h.b16 %v4290
      %v6682 = vunpack.c.l.b16 %v4291
      %v6683 = vunpack.c.h.b16 %v4291
      %v6684 = vunpack.c.l.b16 %v4292
      %v6685 = vunpack.c.h.b16 %v4292
      %v6686 = vunpack.c.l.b16 %v4293
      %v6687 = vunpack.c.h.b16 %v4293
      %v6688 = vunpack.c.l.b16 %v4294
      %v6689 = vunpack.c.h.b16 %v4294
      %v6690 = vunpack.c.l.b16 %v4295
      %v6691 = vunpack.c.h.b16 %v4295
      %v6692 = vunpack.c.l.b16 %v4296
      %v6693 = vunpack.c.h.b16 %v4296
      %v6694 = vunpack.c.l.b16 %v4297
      %v6695 = vunpack.c.h.b16 %v4297
      %v6696 = vunpack.c.l.b16 %v4298
      %v6697 = vunpack.c.h.b16 %v4298
      %v6698 = vunpack.c.l.b16 %v4299
      %v6699 = vunpack.c.h.b16 %v4299
      %v6700 = vunpack.c.l.b16 %v4300
      %v6701 = vunpack.c.h.b16 %v4300
      %v6702 = vunpack.c.l.b16 %v4301
      %v6703 = vunpack.c.h.b16 %v4301
      %v6704 = vunpack.c.l.b16 %v4302
      %v6705 = vunpack.c.h.b16 %v4302
      %v6706 = vunpack.c.l.b16 %v4303
      %v6707 = vunpack.c.h.b16 %v4303
      %v6708 = vunpack.c.l.b16 %v4304
      %v6709 = vunpack.c.h.b16 %v4304
      %v6710 = vunpack.c.l.b16 %v4305
      %v6711 = vunpack.c.h.b16 %v4305
      %v6712 = vunpack.c.l.b16 %v4306
      %v6713 = vunpack.c.h.b16 %v4306
      %v6714 = vunpack.c.l.b16 %v4307
      %v6715 = vunpack.c.h.b16 %v4307
      %v6716 = vunpack.c.l.b16 %v4308
      %v6717 = vunpack.c.h.b16 %v4308
      %v6718 = vunpack.c.l.b16 %v4309
      %v6719 = vunpack.c.h.b16 %v4309
      %v6720 = vunpack.c.l.b16 %v4310
      %v6721 = vunpack.c.h.b16 %v4310
      %v6722 = vunpack.c.l.b16 %v4311
      %v6723 = vunpack.c.h.b16 %v4311
      %v6724 = vunpack.c.l.b16 %v4312
      %v6725 = vunpack.c.h.b16 %v4312
      %v6726 = vunpack.c.l.b16 %v4313
      %v6727 = vunpack.c.h.b16 %v4313
      %v6728 = vunpack.c.l.b16 %v4314
      %v6729 = vunpack.c.h.b16 %v4314
      %v6730 = vunpack.c.l.b16 %v4315
      %v6731 = vunpack.c.h.b16 %v4315
      %v6732 = vunpack.c.l.b16 %v4316
      %v6733 = vunpack.c.h.b16 %v4316
      %v6734 = vunpack.c.l.b16 %v4317
      %v6735 = vunpack.c.h.b16 %v4317
      %v6736 = vunpack.c.l.b16 %v4318
      %v6737 = vunpack.c.h.b16 %v4318
      %v6738 = vunpack.c.l.b16 %v4319
      %v6739 = vunpack.c.h.b16 %v4319
      %v6740 = vunpack.c.l.b16 %v4320
      %v6741 = vunpack.c.h.b16 %v4320
      %v6742 = vunpack.c.l.b16 %v4321
      %v6743 = vunpack.c.h.b16 %v4321
      %v6744 = vunpack.c.l.b16 %v4322
      %v6745 = vunpack.c.h.b16 %v4322
      %v6746 = vunpack.c.l.b16 %v4323
      %v6747 = vunpack.c.h.b16 %v4323
      %v6748 = vunpack.c.l.b16 %v4324
      %v6749 = vunpack.c.h.b16 %v4324
      %v6750 = vunpack.c.l.b16 %v4325
      %v6751 = vunpack.c.h.b16 %v4325
      %v6752 = vunpack.c.l.b16 %v4326
      %v6753 = vunpack.c.h.b16 %v4326
      %v6754 = vunpack.c.l.b16 %v4327
      %v6755 = vunpack.c.h.b16 %v4327
      %v6756 = vunpack.c.l.b16 %v4328
      %v6757 = vunpack.c.h.b16 %v4328
      %v6758 = vunpack.c.l.b16 %v4329
      %v6759 = vunpack.c.h.b16 %v4329
      %v6760 = vunpack.c.l.b16 %v4330
      %v6761 = vunpack.c.h.b16 %v4330
      %v6762 = vunpack.c.l.b16 %v4331
      %v6763 = vunpack.c.h.b16 %v4331
      %v6764 = vunpack.c.l.b16 %v4332
      %v6765 = vunpack.c.h.b16 %v4332
      %v6766 = vunpack.c.l.b16 %v4333
      %v6767 = vunpack.c.h.b16 %v4333
      %v6768 = vunpack.c.l.b16 %v4334
      %v6769 = vunpack.c.h.b16 %v4334
      %v6770 = vunpack.c.l.b16 %v4335
      %v6771 = vunpack.c.h.b16 %v4335
      %v6772 = vunpack.c.l.b16 %v4336
      %v6773 = vunpack.c.h.b16 %v4336
      %v6774 = vunpack.c.l.b16 %v4337
      %v6775 = vunpack.c.h.b16 %v4337
      %v6776 = vunpack.c.l.b16 %v4338
      %v6777 = vunpack.c.h.b16 %v4338
      %v6778 = vunpack.c.l.b16 %v4339
      %v6779 = vunpack.c.h.b16 %v4339
      %v6780 = vunpack.c.l.b16 %v4340
      %v6781 = vunpack.c.h.b16 %v4340
      %v6782 = vunpack.c.l.b16 %v4341
      %v6783 = vunpack.c.h.b16 %v4341
      %v6784 = vunpack.c.l.b16 %v4342
      %v6785 = vunpack.c.h.b16 %v4342
      %v6786 = vunpack.c.l.b16 %v4343
      %v6787 = vunpack.c.h.b16 %v4343
      %v6788 = vunpack.c.l.b16 %v4344
      %v6789 = vunpack.c.h.b16 %v4344
      %v6790 = vunpack.c.l.b16 %v4345
      %v6791 = vunpack.c.h.b16 %v4345
      %v6792 = vunpack.c.l.b16 %v4346
      %v6793 = vunpack.c.h.b16 %v4346
      %v6794 = vunpack.c.l.b16 %v4347
      %v6795 = vunpack.c.h.b16 %v4347
      %v6796 = vunpack.c.l.b16 %v4348
      %v6797 = vunpack.c.h.b16 %v4348
      %v6798 = vunpack.c.l.b16 %v4349
      %v6799 = vunpack.c.h.b16 %v4349
      %v6800 = vunpack.c.l.b16 %v4350
      %v6801 = vunpack.c.h.b16 %v4350
      %v6802 = vunpack.c.l.b16 %v4351
      %v6803 = vunpack.c.h.b16 %v4351
      %v6804 = vunpack.c.l.b16 %v4352
      %v6805 = vunpack.c.h.b16 %v4352
      %v6806 = vunpack.c.l.b16 %v4353
      %v6807 = vunpack.c.h.b16 %v4353
      %v6808 = vunpack.c.l.b16 %v4354
      %v6809 = vunpack.c.h.b16 %v4354
      %v6810 = vunpack.c.l.b16 %v4355
      %v6811 = vunpack.c.h.b16 %v4355
      %v6812 = vunpack.c.l.b16 %v4356
      %v6813 = vunpack.c.h.b16 %v4356
      %v6814 = vunpack.c.l.b16 %v4357
      %v6815 = vunpack.c.h.b16 %v4357
      %v6816 = vunpack.c.l.b16 %v4358
      %v6817 = vunpack.c.h.b16 %v4358
      %v6818 = vunpack.c.l.b16 %v4359
      %v6819 = vunpack.c.h.b16 %v4359
      %v6820 = vunpack.c.l.b16 %v4360
      %v6821 = vunpack.c.h.b16 %v4360
      %v6822 = vunpack.c.l.b16 %v4361
      %v6823 = vunpack.c.h.b16 %v4361
      %v6824 = vunpack.c.l.b16 %v4362
      %v6825 = vunpack.c.h.b16 %v4362
      %v6826 = vunpack.c.l.b16 %v4363
      %v6827 = vunpack.c.h.b16 %v4363
      %v6828 = vunpack.c.l.b16 %v4364
      %v6829 = vunpack.c.h.b16 %v4364
      %v6830 = vunpack.c.l.b16 %v4365
      %v6831 = vunpack.c.h.b16 %v4365
      %v6832 = vunpack.c.l.b16 %v4366
      %v6833 = vunpack.c.h.b16 %v4366
      %v6834 = vunpack.c.l.b16 %v4367
      %v6835 = vunpack.c.h.b16 %v4367
      %v6836 = vunpack.c.l.b16 %v4368
      %v6837 = vunpack.c.h.b16 %v4368
      %v6838 = vunpack.c.l.b16 %v4369
      %v6839 = vunpack.c.h.b16 %v4369
      %v6840 = vunpack.c.l.b16 %v4370
      %v6841 = vunpack.c.h.b16 %v4370
      %v6842 = vunpack.c.l.b16 %v4371
      %v6843 = vunpack.c.h.b16 %v4371
      %v6844 = vunpack.c.l.b16 %v4372
      %v6845 = vunpack.c.h.b16 %v4372
      %v6846 = vunpack.c.l.b16 %v4373
      %v6847 = vunpack.c.h.b16 %v4373
      %v6848 = vunpack.c.l.b16 %v4374
      %v6849 = vunpack.c.h.b16 %v4374
      %v6850 = vunpack.c.l.b16 %v4375
      %v6851 = vunpack.c.h.b16 %v4375
      %v6852 = vunpack.c.l.b16 %v4376
      %v6853 = vunpack.c.h.b16 %v4376
      %v6854 = vunpack.c.l.b16 %v4377
      %v6855 = vunpack.c.h.b16 %v4377
      %v6856 = vunpack.c.l.b16 %v4378
      %v6857 = vunpack.c.h.b16 %v4378
      %v6858 = vunpack.c.l.b16 %v4379
      %v6859 = vunpack.c.h.b16 %v4379
      %v6860 = vunpack.c.l.b16 %v4380
      %v6861 = vunpack.c.h.b16 %v4380
      %v6862 = vunpack.c.l.b16 %v4381
      %v6863 = vunpack.c.h.b16 %v4381
      %v6864 = vunpack.c.l.b16 %v4382
      %v6865 = vunpack.c.h.b16 %v4382
      %v6866 = vunpack.c.l.b16 %v4383
      %v6867 = vunpack.c.h.b16 %v4383
      %v6868 = vunpack.c.l.b16 %v4384
      %v6869 = vunpack.c.h.b16 %v4384
      %v6870 = vunpack.c.l.b16 %v4385
      %v6871 = vunpack.c.h.b16 %v4385
      %v6872 = vunpack.c.l.b16 %v4386
      %v6873 = vunpack.c.h.b16 %v4386
      %v6874 = vunpack.c.l.b16 %v4387
      %v6875 = vunpack.c.h.b16 %v4387
      %v6876 = vunpack.c.l.b16 %v4388
      %v6877 = vunpack.c.h.b16 %v4388
      %v6878 = vunpack.c.l.b16 %v4389
      %v6879 = vunpack.c.h.b16 %v4389
      %v6880 = vunpack.c.l.b16 %v4390
      %v6881 = vunpack.c.h.b16 %v4390
      %v6882 = vunpack.c.l.b16 %v4391
      %v6883 = vunpack.c.h.b16 %v4391
      %v6884 = vunpack.c.l.b16 %v4392
      %v6885 = vunpack.c.h.b16 %v4392
      %v6886 = vunpack.c.l.b16 %v4393
      %v6887 = vunpack.c.h.b16 %v4393
      %v6888 = vunpack.c.l.b16 %v4394
      %v6889 = vunpack.c.h.b16 %v4394
      %v6890 = vunpack.c.l.b16 %v4395
      %v6891 = vunpack.c.h.b16 %v4395
      %v6892 = vunpack.c.l.b16 %v4396
      %v6893 = vunpack.c.h.b16 %v4396
      %v6894 = vunpack.c.l.b16 %v4397
      %v6895 = vunpack.c.h.b16 %v4397
      %v6896 = vunpack.c.l.b16 %v4398
      %v6897 = vunpack.c.h.b16 %v4398
      %v6898 = vunpack.c.l.b16 %v4399
      %v6899 = vunpack.c.h.b16 %v4399
      %v6900 = vunpack.c.l.b16 %v4400
      %v6901 = vunpack.c.h.b16 %v4400
      %v6902 = vunpack.c.l.b16 %v4401
      %v6903 = vunpack.c.h.b16 %v4401
      %v6904 = vunpack.c.l.b16 %v4402
      %v6905 = vunpack.c.h.b16 %v4402
      %v6906 = vunpack.c.l.b16 %v4403
      %v6907 = vunpack.c.h.b16 %v4403
      %v6908 = vunpack.c.l.b16 %v4404
      %v6909 = vunpack.c.h.b16 %v4404
      %v6910 = vunpack.c.l.b16 %v4405
      %v6911 = vunpack.c.h.b16 %v4405
      %v6912 = vunpack.c.l.b16 %v4406
      %v6913 = vunpack.c.h.b16 %v4406
      %v6914 = vunpack.c.l.b16 %v4407
      %v6915 = vunpack.c.h.b16 %v4407
      %v6916 = vunpack.c.l.b16 %v4408
      %v6917 = vunpack.c.h.b16 %v4408
      %v6918 = vunpack.c.l.b16 %v4409
      %v6919 = vunpack.c.h.b16 %v4409
      %v6920 = vunpack.c.l.b16 %v4410
      %v6921 = vunpack.c.h.b16 %v4410
      %v6922 = vunpack.c.l.b16 %v4411
      %v6923 = vunpack.c.h.b16 %v4411
      %v6924 = vunpack.c.l.b16 %v4412
      %v6925 = vunpack.c.h.b16 %v4412
      %v6926 = vunpack.c.l.b16 %v4413
      %v6927 = vunpack.c.h.b16 %v4413
      %v6928 = vunpack.c.l.b16 %v4414
      %v6929 = vunpack.c.h.b16 %v4414
      %v6930 = vunpack.c.l.b16 %v4415
      %v6931 = vunpack.c.h.b16 %v4415
      %v6932 = vunpack.c.l.b16 %v4416
      %v6933 = vunpack.c.h.b16 %v4416
      %v6934 = vunpack.c.l.b16 %v4417
      %v6935 = vunpack.c.h.b16 %v4417
      %v6936 = vunpack.c.l.b16 %v4418
      %v6937 = vunpack.c.h.b16 %v4418
      %v6938 = vunpack.c.l.b16 %v4419
      %v6939 = vunpack.c.h.b16 %v4419
      %v6940 = vunpack.c.l.b16 %v4420
      %v6941 = vunpack.c.h.b16 %v4420
      %v6942 = vunpack.c.l.b16 %v4421
      %v6943 = vunpack.c.h.b16 %v4421
      %v6944 = vunpack.c.l.b16 %v4422
      %v6945 = vunpack.c.h.b16 %v4422
      %v6946 = vunpack.c.l.b16 %v4423
      %v6947 = vunpack.c.h.b16 %v4423
      %v6948 = vunpack.c.l.b16 %v4424
      %v6949 = vunpack.c.h.b16 %v4424
      %v6950 = vunpack.c.l.b16 %v4425
      %v6951 = vunpack.c.h.b16 %v4425
      %v6952 = vunpack.c.l.b16 %v4426
      %v6953 = vunpack.c.h.b16 %v4426
      %v6954 = vunpack.c.l.b16 %v4427
      %v6955 = vunpack.c.h.b16 %v4427
      %v6956 = vunpack.c.l.b16 %v4428
      %v6957 = vunpack.c.h.b16 %v4428
      %v6958 = vunpack.c.l.b16 %v4429
      %v6959 = vunpack.c.h.b16 %v4429
      %v6960 = vunpack.c.l.b16 %v4430
      %v6961 = vunpack.c.h.b16 %v4430
      %v6962 = vunpack.c.l.b16 %v4431
      %v6963 = vunpack.c.h.b16 %v4431
      %v6964 = vunpack.c.l.b16 %v4432
      %v6965 = vunpack.c.h.b16 %v4432
      %v6966 = vunpack.c.l.b16 %v4433
      %v6967 = vunpack.c.h.b16 %v4433
      %v6968 = vunpack.c.l.b16 %v4434
      %v6969 = vunpack.c.h.b16 %v4434
      %v6970 = vunpack.c.l.b16 %v4435
      %v6971 = vunpack.c.h.b16 %v4435
      %v6972 = vunpack.c.l.b16 %v4436
      %v6973 = vunpack.c.h.b16 %v4436
      %v6974 = vunpack.c.l.b16 %v4437
      %v6975 = vunpack.c.h.b16 %v4437
      %v6976 = vpack.c.b16 %v5288, %v5284
      %v6977 = vpack.c.b16 %v5289, %v5285
      %v6978 = vpack.c.b16 %v5290, %v5286
      %v6979 = vpack.c.b16 %v5291, %v5287
      %v6980 = vpack.c.b16 %v5296, %v5292
      %v6981 = vpack.c.b16 %v5297, %v5293
      %v6982 = vpack.c.b16 %v5298, %v5294
      %v6983 = vpack.c.b16 %v5299, %v5295
      %v6984 = vpack.c.b16 %v5304, %v5300
      %v6985 = vpack.c.b16 %v5305, %v5301
      %v6986 = vpack.c.b16 %v5306, %v5302
      %v6987 = vpack.c.b16 %v5307, %v5303
      %v6988 = vpack.c.b16 %v5312, %v5308
      %v6989 = vpack.c.b16 %v5313, %v5309
      %v6990 = vpack.c.b16 %v5314, %v5310
      %v6991 = vpack.c.b16 %v5315, %v5311
      %v6992 = vpack.c.b16 %v5320, %v5316
      %v6993 = vpack.c.b16 %v5321, %v5317
      %v6994 = vpack.c.b16 %v5322, %v5318
      %v6995 = vpack.c.b16 %v5323, %v5319
      %v6996 = vpack.c.b16 %v5328, %v5324
      %v6997 = vpack.c.b16 %v5329, %v5325
      %v6998 = vpack.c.b16 %v5330, %v5326
      %v6999 = vpack.c.b16 %v5331, %v5327
      %v7000 = vpack.c.b16 %v5336, %v5332
      %v7001 = vpack.c.b16 %v5337, %v5333
      %v7002 = vpack.c.b16 %v5338, %v5334
      %v7003 = vpack.c.b16 %v5339, %v5335
      %v7004 = vpack.c.b16 %v5344, %v5340
      %v7005 = vpack.c.b16 %v5345, %v5341
      %v7006 = vpack.c.b16 %v5346, %v5342
      %v7007 = vpack.c.b16 %v5347, %v5343
      %v7008 = vpack.c.b16 %v5352, %v5348
      %v7009 = vpack.c.b16 %v5353, %v5349
      %v7010 = vpack.c.b16 %v5354, %v5350
      %v7011 = vpack.c.b16 %v5355, %v5351
      %v7012 = vpack.c.b16 %v5360, %v5356
      %v7013 = vpack.c.b16 %v5361, %v5357
      %v7014 = vpack.c.b16 %v5362, %v5358
      %v7015 = vpack.c.b16 %v5363, %v5359
      %v7016 = vpack.c.b16 %v5368, %v5364
      %v7017 = vpack.c.b16 %v5369, %v5365
      %v7018 = vpack.c.b16 %v5370, %v5366
      %v7019 = vpack.c.b16 %v5371, %v5367
      %v7020 = vpack.c.b16 %v5376, %v5372
      %v7021 = vpack.c.b16 %v5377, %v5373
      %v7022 = vpack.c.b16 %v5378, %v5374
      %v7023 = vpack.c.b16 %v5379, %v5375
      %v7024 = vpack.c.b16 %v5384, %v5380
      %v7025 = vpack.c.b16 %v5385, %v5381
      %v7026 = vpack.c.b16 %v5386, %v5382
      %v7027 = vpack.c.b16 %v5387, %v5383
      %v7028 = vpack.c.b16 %v5392, %v5388
      %v7029 = vpack.c.b16 %v5393, %v5389
      %v7030 = vpack.c.b16 %v5394, %v5390
      %v7031 = vpack.c.b16 %v5395, %v5391
      %v7032 = vpack.c.b16 %v5400, %v5396
      %v7033 = vpack.c.b16 %v5401, %v5397
      %v7034 = vpack.c.b16 %v5402, %v5398
      %v7035 = vpack.c.b16 %v5403, %v5399
      %v7036 = vpack.c.b16 %v5408, %v5404
      %v7037 = vpack.c.b16 %v5409, %v5405
      %v7038 = vpack.c.b16 %v5410, %v5406
      %v7039 = vpack.c.b16 %v5411, %v5407
      %v7040 = vpack.c.b16 %v5416, %v5412
      %v7041 = vpack.c.b16 %v5417, %v5413
      %v7042 = vpack.c.b16 %v5418, %v5414
      %v7043 = vpack.c.b16 %v5419, %v5415
      %v7044 = vpack.c.b16 %v5424, %v5420
      %v7045 = vpack.c.b16 %v5425, %v5421
      %v7046 = vpack.c.b16 %v5426, %v5422
      %v7047 = vpack.c.b16 %v5427, %v5423
      %v7048 = vpack.c.b16 %v5432, %v5428
      %v7049 = vpack.c.b16 %v5433, %v5429
      %v7050 = vpack.c.b16 %v5434, %v5430
      %v7051 = vpack.c.b16 %v5435, %v5431
      %v7052 = vpack.c.b16 %v5440, %v5436
      %v7053 = vpack.c.b16 %v5441, %v5437
      %v7054 = vpack.c.b16 %v5442, %v5438
      %v7055 = vpack.c.b16 %v5443, %v5439
      %v7056 = vpack.c.b16 %v5448, %v5444
      %v7057 = vpack.c.b16 %v5449, %v5445
      %v7058 = vpack.c.b16 %v5450, %v5446
      %v7059 = vpack.c.b16 %v5451, %v5447
      %v7060 = vpack.c.b16 %v5456, %v5452
      %v7061 = vpack.c.b16 %v5457, %v5453
      %v7062 = vpack.c.b16 %v5458, %v5454
      %v7063 = vpack.c.b16 %v5459, %v5455
      %v7064 = vpack.c.b16 %v5464, %v5460
      %v7065 = vpack.c.b16 %v5465, %v5461
      %v7066 = vpack.c.b16 %v5466, %v5462
      %v7067 = vpack.c.b16 %v5467, %v5463
      %v7068 = vpack.c.b16 %v5472, %v5468
      %v7069 = vpack.c.b16 %v5473, %v5469
      %v7070 = vpack.c.b16 %v5474, %v5470
      %v7071 = vpack.c.b16 %v5475, %v5471
      %v7072 = vpack.c.b16 %v5480, %v5476
      %v7073 = vpack.c.b16 %v5481, %v5477
      %v7074 = vpack.c.b16 %v5482, %v5478
      %v7075 = vpack.c.b16 %v5483, %v5479
      %v7076 = vpack.c.b16 %v5488, %v5484
      %v7077 = vpack.c.b16 %v5489, %v5485
      %v7078 = vpack.c.b16 %v5490, %v5486
      %v7079 = vpack.c.b16 %v5491, %v5487
      %v7080 = vpack.c.b16 %v5496, %v5492
      %v7081 = vpack.c.b16 %v5497, %v5493
      %v7082 = vpack.c.b16 %v5498, %v5494
      %v7083 = vpack.c.b16 %v5499, %v5495
      %v7084 = vpack.c.b16 %v5504, %v5500
      %v7085 = vpack.c.b16 %v5505, %v5501
      %v7086 = vpack.c.b16 %v5506, %v5502
      %v7087 = vpack.c.b16 %v5507, %v5503
      %v7088 = vpack.c.b16 %v5512, %v5508
      %v7089 = vpack.c.b16 %v5513, %v5509
      %v7090 = vpack.c.b16 %v5514, %v5510
      %v7091 = vpack.c.b16 %v5515, %v5511
      %v7092 = vpack.c.b16 %v5520, %v5516
      %v7093 = vpack.c.b16 %v5521, %v5517
      %v7094 = vpack.c.b16 %v5522, %v5518
      %v7095 = vpack.c.b16 %v5523, %v5519
      %v7096 = vpack.c.b16 %v5528, %v5524
      %v7097 = vpack.c.b16 %v5529, %v5525
      %v7098 = vpack.c.b16 %v5530, %v5526
      %v7099 = vpack.c.b16 %v5531, %v5527
      %v7100 = vpack.c.b16 %v5536, %v5532
      %v7101 = vpack.c.b16 %v5537, %v5533
      %v7102 = vpack.c.b16 %v5538, %v5534
      %v7103 = vpack.c.b16 %v5539, %v5535
      %v7104 = vpack.c.b16 %v5544, %v5540
      %v7105 = vpack.c.b16 %v5545, %v5541
      %v7106 = vpack.c.b16 %v5546, %v5542
      %v7107 = vpack.c.b16 %v5547, %v5543
      %v7108 = vpack.c.b16 %v5552, %v5548
      %v7109 = vpack.c.b16 %v5553, %v5549
      %v7110 = vpack.c.b16 %v5554, %v5550
      %v7111 = vpack.c.b16 %v5555, %v5551
      %v7112 = vpack.c.b16 %v5560, %v5556
      %v7113 = vpack.c.b16 %v5561, %v5557
      %v7114 = vpack.c.b16 %v5562, %v5558
      %v7115 = vpack.c.b16 %v5563, %v5559
      %v7116 = vpack.c.b16 %v5568, %v5564
      %v7117 = vpack.c.b16 %v5569, %v5565
      %v7118 = vpack.c.b16 %v5570, %v5566
      %v7119 = vpack.c.b16 %v5571, %v5567
      %v7120 = vpack.c.b16 %v5576, %v5572
      %v7121 = vpack.c.b16 %v5577, %v5573
      %v7122 = vpack.c.b16 %v5578, %v5574
      %v7123 = vpack.c.b16 %v5579, %v5575
      %v7124 = vpack.c.b16 %v5584, %v5580
      %v7125 = vpack.c.b16 %v5585, %v5581
      %v7126 = vpack.c.b16 %v5586, %v5582
      %v7127 = vpack.c.b16 %v5587, %v5583
      %v7128 = vpack.c.b16 %v5592, %v5588
      %v7129 = vpack.c.b16 %v5593, %v5589
      %v7130 = vpack.c.b16 %v5594, %v5590
      %v7131 = vpack.c.b16 %v5595, %v5591
      %v7132 = vpack.c.b16 %v5600, %v5596
      %v7133 = vpack.c.b16 %v5601, %v5597
      %v7134 = vpack.c.b16 %v5602, %v5598
      %v7135 = vpack.c.b16 %v5603, %v5599
      %v7136 = vpack.c.b16 %v5608, %v5604
      %v7137 = vpack.c.b16 %v5609, %v5605
      %v7138 = vpack.c.b16 %v5610, %v5606
      %v7139 = vpack.c.b16 %v5611, %v5607
      %v7140 = vpack.c.b16 %v5616, %v5612
      %v7141 = vpack.c.b16 %v5617, %v5613
      %v7142 = vpack.c.b16 %v5618, %v5614
      %v7143 = vpack.c.b16 %v5619, %v5615
      %v7144 = vpack.c.b16 %v5624, %v5620
      %v7145 = vpack.c.b16 %v5625, %v5621
      %v7146 = vpack.c.b16 %v5626, %v5622
      %v7147 = vpack.c.b16 %v5627, %v5623
      %v7148 = vpack.c.b16 %v5632, %v5628
      %v7149 = vpack.c.b16 %v5633, %v5629
      %v7150 = vpack.c.b16 %v5634, %v5630
      %v7151 = vpack.c.b16 %v5635, %v5631
      %v7152 = vpack.c.b16 %v5640, %v5636
      %v7153 = vpack.c.b16 %v5641, %v5637
      %v7154 = vpack.c.b16 %v5642, %v5638
      %v7155 = vpack.c.b16 %v5643, %v5639
      %v7156 = vpack.c.b16 %v5648, %v5644
      %v7157 = vpack.c.b16 %v5649, %v5645
      %v7158 = vpack.c.b16 %v5650, %v5646
      %v7159 = vpack.c.b16 %v5651, %v5647
      %v7160 = vpack.c.b16 %v5656, %v5652
      %v7161 = vpack.c.b16 %v5657, %v5653
      %v7162 = vpack.c.b16 %v5658, %v5654
      %v7163 = vpack.c.b16 %v5659, %v5655
      %v7164 = vpack.c.b16 %v5664, %v5660
      %v7165 = vpack.c.b16 %v5665, %v5661
      %v7166 = vpack.c.b16 %v5666, %v5662
      %v7167 = vpack.c.b16 %v5667, %v5663
      %v7168 = vpack.c.b16 %v5672, %v5668
      %v7169 = vpack.c.b16 %v5673, %v5669
      %v7170 = vpack.c.b16 %v5674, %v5670
      %v7171 = vpack.c.b16 %v5675, %v5671
      %v7172 = vpack.c.b16 %v5680, %v5676
      %v7173 = vpack.c.b16 %v5681, %v5677
      %v7174 = vpack.c.b16 %v5682, %v5678
      %v7175 = vpack.c.b16 %v5683, %v5679
      %v7176 = vpack.c.b16 %v5688, %v5684
      %v7177 = vpack.c.b16 %v5689, %v5685
      %v7178 = vpack.c.b16 %v5690, %v5686
      %v7179 = vpack.c.b16 %v5691, %v5687
      %v7180 = vpack.c.b16 %v5696, %v5692
      %v7181 = vpack.c.b16 %v5697, %v5693
      %v7182 = vpack.c.b16 %v5698, %v5694
      %v7183 = vpack.c.b16 %v5699, %v5695
      %v7184 = vpack.c.b16 %v5704, %v5700
      %v7185 = vpack.c.b16 %v5705, %v5701
      %v7186 = vpack.c.b16 %v5706, %v5702
      %v7187 = vpack.c.b16 %v5707, %v5703
      %v7188 = vpack.c.b16 %v5712, %v5708
      %v7189 = vpack.c.b16 %v5713, %v5709
      %v7190 = vpack.c.b16 %v5714, %v5710
      %v7191 = vpack.c.b16 %v5715, %v5711
      %v7192 = vpack.c.b16 %v5720, %v5716
      %v7193 = vpack.c.b16 %v5721, %v5717
      %v7194 = vpack.c.b16 %v5722, %v5718
      %v7195 = vpack.c.b16 %v5723, %v5719
      %v7196 = vpack.c.b16 %v5728, %v5724
      %v7197 = vpack.c.b16 %v5729, %v5725
      %v7198 = vpack.c.b16 %v5730, %v5726
      %v7199 = vpack.c.b16 %v5731, %v5727
      %v7200 = vpack.c.b16 %v5736, %v5732
      %v7201 = vpack.c.b16 %v5737, %v5733
      %v7202 = vpack.c.b16 %v5738, %v5734
      %v7203 = vpack.c.b16 %v5739, %v5735
      %v7204 = vpack.c.b16 %v5744, %v5740
      %v7205 = vpack.c.b16 %v5745, %v5741
      %v7206 = vpack.c.b16 %v5746, %v5742
      %v7207 = vpack.c.b16 %v5747, %v5743
      %v7208 = vpack.c.b16 %v5752, %v5748
      %v7209 = vpack.c.b16 %v5753, %v5749
      %v7210 = vpack.c.b16 %v5754, %v5750
      %v7211 = vpack.c.b16 %v5755, %v5751
      %v7212 = vpack.c.b16 %v5760, %v5756
      %v7213 = vpack.c.b16 %v5761, %v5757
      %v7214 = vpack.c.b16 %v5762, %v5758
      %v7215 = vpack.c.b16 %v5763, %v5759
      %v7216 = vpack.c.b16 %v5768, %v5764
      %v7217 = vpack.c.b16 %v5769, %v5765
      %v7218 = vpack.c.b16 %v5770, %v5766
      %v7219 = vpack.c.b16 %v5771, %v5767
      %v7220 = vpack.c.b16 %v5776, %v5772
      %v7221 = vpack.c.b16 %v5777, %v5773
      %v7222 = vpack.c.b16 %v5778, %v5774
      %v7223 = vpack.c.b16 %v5779, %v5775
      %v7224 = vpack.c.b16 %v5784, %v5780
      %v7225 = vpack.c.b16 %v5785, %v5781
      %v7226 = vpack.c.b16 %v5786, %v5782
      %v7227 = vpack.c.b16 %v5787, %v5783
      %v7228 = vpack.c.b16 %v5792, %v5788
      %v7229 = vpack.c.b16 %v5793, %v5789
      %v7230 = vpack.c.b16 %v5794, %v5790
      %v7231 = vpack.c.b16 %v5795, %v5791
      %v7232 = vpack.c.b16 %v5800, %v5796
      %v7233 = vpack.c.b16 %v5801, %v5797
      %v7234 = vpack.c.b16 %v5802, %v5798
      %v7235 = vpack.c.b16 %v5803, %v5799
      %v7236 = vpack.c.b16 %v5808, %v5804
      %v7237 = vpack.c.b16 %v5809, %v5805
      %v7238 = vpack.c.b16 %v5810, %v5806
      %v7239 = vpack.c.b16 %v5811, %v5807
      %v7240 = vpack.c.b16 %v5816, %v5812
      %v7241 = vpack.c.b16 %v5817, %v5813
      %v7242 = vpack.c.b16 %v5818, %v5814
      %v7243 = vpack.c.b16 %v5819, %v5815
      %v7244 = vpack.c.b16 %v5824, %v5820
      %v7245 = vpack.c.b16 %v5825, %v5821
      %v7246 = vpack.c.b16 %v5826, %v5822
      %v7247 = vpack.c.b16 %v5827, %v5823
      %v7248 = vpack.c.b16 %v5832, %v5828
      %v7249 = vpack.c.b16 %v5833, %v5829
      %v7250 = vpack.c.b16 %v5834, %v5830
      %v7251 = vpack.c.b16 %v5835, %v5831
      %v7252 = vpack.c.b16 %v5840, %v5836
      %v7253 = vpack.c.b16 %v5841, %v5837
      %v7254 = vpack.c.b16 %v5842, %v5838
      %v7255 = vpack.c.b16 %v5843, %v5839
      %v7256 = vpack.c.b16 %v5848, %v5844
      %v7257 = vpack.c.b16 %v5849, %v5845
      %v7258 = vpack.c.b16 %v5850, %v5846
      %v7259 = vpack.c.b16 %v5851, %v5847
      %v7260 = vpack.c.b16 %v5856, %v5852
      %v7261 = vpack.c.b16 %v5857, %v5853
      %v7262 = vpack.c.b16 %v5858, %v5854
      %v7263 = vpack.c.b16 %v5859, %v5855
      %v7264 = vpack.c.b16 %v5864, %v5860
      %v7265 = vpack.c.b16 %v5865, %v5861
      %v7266 = vpack.c.b16 %v5866, %v5862
      %v7267 = vpack.c.b16 %v5867, %v5863
      %v7268 = vpack.c.b16 %v5872, %v5868
      %v7269 = vpack.c.b16 %v5873, %v5869
      %v7270 = vpack.c.b16 %v5874, %v5870
      %v7271 = vpack.c.b16 %v5875, %v5871
      %v7272 = vpack.c.b16 %v5880, %v5876
      %v7273 = vpack.c.b16 %v5881, %v5877
      %v7274 = vpack.c.b16 %v5882, %v5878
      %v7275 = vpack.c.b16 %v5883, %v5879
      %v7276 = vpack.c.b16 %v5888, %v5884
      %v7277 = vpack.c.b16 %v5889, %v5885
      %v7278 = vpack.c.b16 %v5890, %v5886
      %v7279 = vpack.c.b16 %v5891, %v5887
      %v7280 = vpack.c.b16 %v5896, %v5892
      %v7281 = vpack.c.b16 %v5897, %v5893
      %v7282 = vpack.c.b16 %v5898, %v5894
      %v7283 = vpack.c.b16 %v5899, %v5895
      %v7284 = vpack.c.b16 %v5904, %v5900
      %v7285 = vpack.c.b16 %v5905, %v5901
      %v7286 = vpack.c.b16 %v5906, %v5902
      %v7287 = vpack.c.b16 %v5907, %v5903
      %v7288 = vpack.c.b16 %v5912, %v5908
      %v7289 = vpack.c.b16 %v5913, %v5909
      %v7290 = vpack.c.b16 %v5914, %v5910
      %v7291 = vpack.c.b16 %v5915, %v5911
      %v7292 = vpack.c.b16 %v5920, %v5916
      %v7293 = vpack.c.b16 %v5921, %v5917
      %v7294 = vpack.c.b16 %v5922, %v5918
      %v7295 = vpack.c.b16 %v5923, %v5919
      %v7296 = vpack.c.b16 %v5928, %v5924
      %v7297 = vpack.c.b16 %v5929, %v5925
      %v7298 = vpack.c.b16 %v5930, %v5926
      %v7299 = vpack.c.b16 %v5931, %v5927
      %v7300 = vpack.c.b16 %v5936, %v5932
      %v7301 = vpack.c.b16 %v5937, %v5933
      %v7302 = vpack.c.b16 %v5938, %v5934
      %v7303 = vpack.c.b16 %v5939, %v5935
      %v7304 = vpack.c.b16 %v5944, %v5940
      %v7305 = vpack.c.b16 %v5945, %v5941
      %v7306 = vpack.c.b16 %v5946, %v5942
      %v7307 = vpack.c.b16 %v5947, %v5943
      %v7308 = vpack.c.b16 %v5952, %v5948
      %v7309 = vpack.c.b16 %v5953, %v5949
      %v7310 = vpack.c.b16 %v5954, %v5950
      %v7311 = vpack.c.b16 %v5955, %v5951
      %v7312 = vpack.c.b16 %v5960, %v5956
      %v7313 = vpack.c.b16 %v5961, %v5957
      %v7314 = vpack.c.b16 %v5962, %v5958
      %v7315 = vpack.c.b16 %v5963, %v5959
      %v7316 = vpack.c.b16 %v5968, %v5964
      %v7317 = vpack.c.b16 %v5969, %v5965
      %v7318 = vpack.c.b16 %v5970, %v5966
      %v7319 = vpack.c.b16 %v5971, %v5967
      %v7320 = vpack.c.b16 %v5976, %v5972
      %v7321 = vpack.c.b16 %v5977, %v5973
      %v7322 = vpack.c.b16 %v5978, %v5974
      %v7323 = vpack.c.b16 %v5979, %v5975
      %v7324 = vpack.c.b16 %v5984, %v5980
      %v7325 = vpack.c.b16 %v5985, %v5981
      %v7326 = vpack.c.b16 %v5986, %v5982
      %v7327 = vpack.c.b16 %v5987, %v5983
      %v7328 = vpack.c.b16 %v5992, %v5988
      %v7329 = vpack.c.b16 %v5993, %v5989
      %v7330 = vpack.c.b16 %v5994, %v5990
      %v7331 = vpack.c.b16 %v5995, %v5991
      %v7332 = vpack.c.b16 %v6000, %v5996
      %v7333 = vpack.c.b16 %v6001, %v5997
      %v7334 = vpack.c.b16 %v6002, %v5998
      %v7335 = vpack.c.b16 %v6003, %v5999
      %v7336 = vpack.c.b16 %v6008, %v6004
      %v7337 = vpack.c.b16 %v6009, %v6005
      %v7338 = vpack.c.b16 %v6010, %v6006
      %v7339 = vpack.c.b16 %v6011, %v6007
      %v7340 = vpack.c.b16 %v6016, %v6012
      %v7341 = vpack.c.b16 %v6017, %v6013
      %v7342 = vpack.c.b16 %v6018, %v6014
      %v7343 = vpack.c.b16 %v6019, %v6015
      %v7344 = vpack.c.b16 %v6024, %v6020
      %v7345 = vpack.c.b16 %v6025, %v6021
      %v7346 = vpack.c.b16 %v6026, %v6022
      %v7347 = vpack.c.b16 %v6027, %v6023
      %v7348 = vpack.c.b16 %v6032, %v6028
      %v7349 = vpack.c.b16 %v6033, %v6029
      %v7350 = vpack.c.b16 %v6034, %v6030
      %v7351 = vpack.c.b16 %v6035, %v6031
      %v7352 = vpack.c.b16 %v6040, %v6036
      %v7353 = vpack.c.b16 %v6041, %v6037
      %v7354 = vpack.c.b16 %v6042, %v6038
      %v7355 = vpack.c.b16 %v6043, %v6039
      %v7356 = vpack.c.b16 %v6048, %v6044
      %v7357 = vpack.c.b16 %v6049, %v6045
      %v7358 = vpack.c.b16 %v6050, %v6046
      %v7359 = vpack.c.b16 %v6051, %v6047
      %v7360 = vpack.c.b16 %v6056, %v6052
      %v7361 = vpack.c.b16 %v6057, %v6053
      %v7362 = vpack.c.b16 %v6058, %v6054
      %v7363 = vpack.c.b16 %v6059, %v6055
      %v7364 = vpack.c.b16 %v6064, %v6060
      %v7365 = vpack.c.b16 %v6065, %v6061
      %v7366 = vpack.c.b16 %v6066, %v6062
      %v7367 = vpack.c.b16 %v6067, %v6063
      %v7368 = vpack.c.b16 %v6072, %v6068
      %v7369 = vpack.c.b16 %v6073, %v6069
      %v7370 = vpack.c.b16 %v6074, %v6070
      %v7371 = vpack.c.b16 %v6075, %v6071
      %v7372 = vpack.c.b16 %v6080, %v6076
      %v7373 = vpack.c.b16 %v6081, %v6077
      %v7374 = vpack.c.b16 %v6082, %v6078
      %v7375 = vpack.c.b16 %v6083, %v6079
      %v7376 = vpack.c.b16 %v6088, %v6084
      %v7377 = vpack.c.b16 %v6089, %v6085
      %v7378 = vpack.c.b16 %v6090, %v6086
      %v7379 = vpack.c.b16 %v6091, %v6087
      %v7380 = vpack.c.b16 %v6096, %v6092
      %v7381 = vpack.c.b16 %v6097, %v6093
      %v7382 = vpack.c.b16 %v6098, %v6094
      %v7383 = vpack.c.b16 %v6099, %v6095
      %v7384 = vpack.c.b16 %v6104, %v6100
      %v7385 = vpack.c.b16 %v6105, %v6101
      %v7386 = vpack.c.b16 %v6106, %v6102
      %v7387 = vpack.c.b16 %v6107, %v6103
      %v7388 = vpack.c.b16 %v6112, %v6108
      %v7389 = vpack.c.b16 %v6113, %v6109
      %v7390 = vpack.c.b16 %v6114, %v6110
      %v7391 = vpack.c.b16 %v6115, %v6111
      %v7392 = vpack.c.b16 %v6120, %v6116
      %v7393 = vpack.c.b16 %v6121, %v6117
      %v7394 = vpack.c.b16 %v6122, %v6118
      %v7395 = vpack.c.b16 %v6123, %v6119
      %v7396 = vpack.c.b16 %v6128, %v6124
      %v7397 = vpack.c.b16 %v6129, %v6125
      %v7398 = vpack.c.b16 %v6130, %v6126
      %v7399 = vpack.c.b16 %v6131, %v6127
      %v7400 = vpack.c.b16 %v6136, %v6132
      %v7401 = vpack.c.b16 %v6137, %v6133
      %v7402 = vpack.c.b16 %v6138, %v6134
      %v7403 = vpack.c.b16 %v6139, %v6135
      %v7404 = vpack.c.b16 %v6144, %v6140
      %v7405 = vpack.c.b16 %v6145, %v6141
      %v7406 = vpack.c.b16 %v6146, %v6142
      %v7407 = vpack.c.b16 %v6147, %v6143
      %v7408 = vpack.c.b16 %v6152, %v6148
      %v7409 = vpack.c.b16 %v6153, %v6149
      %v7410 = vpack.c.b16 %v6154, %v6150
      %v7411 = vpack.c.b16 %v6155, %v6151
      %v7412 = vpack.c.b16 %v6160, %v6156
      %v7413 = vpack.c.b16 %v6161, %v6157
      %v7414 = vpack.c.b16 %v6162, %v6158
      %v7415 = vpack.c.b16 %v6163, %v6159
      %v7416 = vpack.c.b16 %v6168, %v6164
      %v7417 = vpack.c.b16 %v6169, %v6165
      %v7418 = vpack.c.b16 %v6170, %v6166
      %v7419 = vpack.c.b16 %v6171, %v6167
      %v7420 = vpack.c.b16 %v6176, %v6172
      %v7421 = vpack.c.b16 %v6177, %v6173
      %v7422 = vpack.c.b16 %v6178, %v6174
      %v7423 = vpack.c.b16 %v6179, %v6175
      %v7424 = vpack.c.b16 %v6184, %v6180
      %v7425 = vpack.c.b16 %v6185, %v6181
      %v7426 = vpack.c.b16 %v6186, %v6182
      %v7427 = vpack.c.b16 %v6187, %v6183
      %v7428 = vpack.c.b16 %v6192, %v6188
      %v7429 = vpack.c.b16 %v6193, %v6189
      %v7430 = vpack.c.b16 %v6194, %v6190
      %v7431 = vpack.c.b16 %v6195, %v6191
      %v7432 = vpack.c.b16 %v6200, %v6196
      %v7433 = vpack.c.b16 %v6201, %v6197
      %v7434 = vpack.c.b16 %v6202, %v6198
      %v7435 = vpack.c.b16 %v6203, %v6199
      %v7436 = vpack.c.b16 %v6208, %v6204
      %v7437 = vpack.c.b16 %v6209, %v6205
      %v7438 = vpack.c.b16 %v6210, %v6206
      %v7439 = vpack.c.b16 %v6211, %v6207
      %v7440 = vpack.c.b16 %v6216, %v6212
      %v7441 = vpack.c.b16 %v6217, %v6213
      %v7442 = vpack.c.b16 %v6218, %v6214
      %v7443 = vpack.c.b16 %v6219, %v6215
      %v7444 = vpack.c.b16 %v6224, %v6220
      %v7445 = vpack.c.b16 %v6225, %v6221
      %v7446 = vpack.c.b16 %v6226, %v6222
      %v7447 = vpack.c.b16 %v6227, %v6223
      %v7448 = vpack.c.b16 %v6232, %v6228
      %v7449 = vpack.c.b16 %v6233, %v6229
      %v7450 = vpack.c.b16 %v6234, %v6230
      %v7451 = vpack.c.b16 %v6235, %v6231
      %v7452 = vpack.c.b16 %v6240, %v6236
      %v7453 = vpack.c.b16 %v6241, %v6237
      %v7454 = vpack.c.b16 %v6242, %v6238
      %v7455 = vpack.c.b16 %v6243, %v6239
      %v7456 = vpack.c.b16 %v6248, %v6244
      %v7457 = vpack.c.b16 %v6249, %v6245
      %v7458 = vpack.c.b16 %v6250, %v6246
      %v7459 = vpack.c.b16 %v6251, %v6247
      %v7460 = vpack.c.b16 %v6256, %v6252
      %v7461 = vpack.c.b16 %v6257, %v6253
      %v7462 = vpack.c.b16 %v6258, %v6254
      %v7463 = vpack.c.b16 %v6259, %v6255
      %v7464 = vpack.c.b16 %v6264, %v6260
      %v7465 = vpack.c.b16 %v6265, %v6261
      %v7466 = vpack.c.b16 %v6266, %v6262
      %v7467 = vpack.c.b16 %v6267, %v6263
      %v7468 = vpack.c.b16 %v6272, %v6268
      %v7469 = vpack.c.b16 %v6273, %v6269
      %v7470 = vpack.c.b16 %v6274, %v6270
      %v7471 = vpack.c.b16 %v6275, %v6271
      %v7472 = vpack.c.b16 %v6280, %v6276
      %v7473 = vpack.c.b16 %v6281, %v6277
      %v7474 = vpack.c.b16 %v6282, %v6278
      %v7475 = vpack.c.b16 %v6283, %v6279
      %v7476 = vpack.c.b16 %v6288, %v6284
      %v7477 = vpack.c.b16 %v6289, %v6285
      %v7478 = vpack.c.b16 %v6290, %v6286
      %v7479 = vpack.c.b16 %v6291, %v6287
      %v7480 = vpack.c.b16 %v6296, %v6292
      %v7481 = vpack.c.b16 %v6297, %v6293
      %v7482 = vpack.c.b16 %v6298, %v6294
      %v7483 = vpack.c.b16 %v6299, %v6295
      %v7484 = vpack.c.b16 %v6304, %v6300
      %v7485 = vpack.c.b16 %v6305, %v6301
      %v7486 = vpack.c.b16 %v6306, %v6302
      %v7487 = vpack.c.b16 %v6307, %v6303
      %v7488 = vpack.c.b16 %v6312, %v6308
      %v7489 = vpack.c.b16 %v6313, %v6309
      %v7490 = vpack.c.b16 %v6314, %v6310
      %v7491 = vpack.c.b16 %v6315, %v6311
      %v7492 = vpack.c.b16 %v6320, %v6316
      %v7493 = vpack.c.b16 %v6321, %v6317
      %v7494 = vpack.c.b16 %v6322, %v6318
      %v7495 = vpack.c.b16 %v6323, %v6319
      %v7496 = vpack.c.b16 %v6328, %v6324
      %v7497 = vpack.c.b16 %v6329, %v6325
      %v7498 = vpack.c.b16 %v6330, %v6326
      %v7499 = vpack.c.b16 %v6331, %v6327
      %v7500 = vpack.c.b16 %v6336, %v6332
      %v7501 = vpack.c.b16 %v6337, %v6333
      %v7502 = vpack.c.b16 %v6338, %v6334
      %v7503 = vpack.c.b16 %v6339, %v6335
      %v7504 = vpack.c.b16 %v6344, %v6340
      %v7505 = vpack.c.b16 %v6345, %v6341
      %v7506 = vpack.c.b16 %v6346, %v6342
      %v7507 = vpack.c.b16 %v6347, %v6343
      %v7508 = vpack.c.b16 %v6352, %v6348
      %v7509 = vpack.c.b16 %v6353, %v6349
      %v7510 = vpack.c.b16 %v6354, %v6350
      %v7511 = vpack.c.b16 %v6355, %v6351
      %v7512 = vpack.c.b16 %v6360, %v6356
      %v7513 = vpack.c.b16 %v6361, %v6357
      %v7514 = vpack.c.b16 %v6362, %v6358
      %v7515 = vpack.c.b16 %v6363, %v6359
      %v7516 = vpack.c.b16 %v6368, %v6364
      %v7517 = vpack.c.b16 %v6369, %v6365
      %v7518 = vpack.c.b16 %v6370, %v6366
      %v7519 = vpack.c.b16 %v6371, %v6367
      %v7520 = vpack.c.b16 %v6376, %v6372
      %v7521 = vpack.c.b16 %v6377, %v6373
      %v7522 = vpack.c.b16 %v6378, %v6374
      %v7523 = vpack.c.b16 %v6379, %v6375
      %v7524 = vpack.c.b16 %v6384, %v6380
      %v7525 = vpack.c.b16 %v6385, %v6381
      %v7526 = vpack.c.b16 %v6386, %v6382
      %v7527 = vpack.c.b16 %v6387, %v6383
      %v7528 = vpack.c.b16 %v6392, %v6388
      %v7529 = vpack.c.b16 %v6393, %v6389
      %v7530 = vpack.c.b16 %v6394, %v6390
      %v7531 = vpack.c.b16 %v6395, %v6391
      %v7532 = vpack.c.b16 %v6400, %v6396
      %v7533 = vpack.c.b16 %v6401, %v6397
      %v7534 = vpack.c.b16 %v6402, %v6398
      %v7535 = vpack.c.b16 %v6403, %v6399
      %v7536 = vpack.c.b16 %v6408, %v6404
      %v7537 = vpack.c.b16 %v6409, %v6405
      %v7538 = vpack.c.b16 %v6410, %v6406
      %v7539 = vpack.c.b16 %v6411, %v6407
      %v7540 = vpack.c.b16 %v6416, %v6412
      %v7541 = vpack.c.b16 %v6417, %v6413
      %v7542 = vpack.c.b16 %v6418, %v6414
      %v7543 = vpack.c.b16 %v6419, %v6415
      %v7544 = vpack.c.b16 %v6424, %v6420
      %v7545 = vpack.c.b16 %v6425, %v6421
      %v7546 = vpack.c.b16 %v6426, %v6422
      %v7547 = vpack.c.b16 %v6427, %v6423
      %v7548 = vpack.c.b16 %v6432, %v6428
      %v7549 = vpack.c.b16 %v6433, %v6429
      %v7550 = vpack.c.b16 %v6434, %v6430
      %v7551 = vpack.c.b16 %v6435, %v6431
      %v7552 = vpack.c.b16 %v6440, %v6436
      %v7553 = vpack.c.b16 %v6441, %v6437
      %v7554 = vpack.c.b16 %v6442, %v6438
      %v7555 = vpack.c.b16 %v6443, %v6439
      %v7556 = vpack.c.b16 %v6448, %v6444
      %v7557 = vpack.c.b16 %v6449, %v6445
      %v7558 = vpack.c.b16 %v6450, %v6446
      %v7559 = vpack.c.b16 %v6451, %v6447
      %v7560 = vpack.c.b16 %v6456, %v6452
      %v7561 = vpack.c.b16 %v6457, %v6453
      %v7562 = vpack.c.b16 %v6458, %v6454
      %v7563 = vpack.c.b16 %v6459, %v6455
      %v7564 = vpack.c.b16 %v6464, %v6460
      %v7565 = vpack.c.b16 %v6465, %v6461
      %v7566 = vpack.c.b16 %v6466, %v6462
      %v7567 = vpack.c.b16 %v6467, %v6463
      %v7568 = vpack.c.b16 %v6472, %v6468
      %v7569 = vpack.c.b16 %v6473, %v6469
      %v7570 = vpack.c.b16 %v6474, %v6470
      %v7571 = vpack.c.b16 %v6475, %v6471
      %v7572 = vpack.c.b16 %v6480, %v6476
      %v7573 = vpack.c.b16 %v6481, %v6477
      %v7574 = vpack.c.b16 %v6482, %v6478
      %v7575 = vpack.c.b16 %v6483, %v6479
      %v7576 = vpack.c.b16 %v6488, %v6484
      %v7577 = vpack.c.b16 %v6489, %v6485
      %v7578 = vpack.c.b16 %v6490, %v6486
      %v7579 = vpack.c.b16 %v6491, %v6487
      %v7580 = vpack.c.b16 %v6496, %v6492
      %v7581 = vpack.c.b16 %v6497, %v6493
      %v7582 = vpack.c.b16 %v6498, %v6494
      %v7583 = vpack.c.b16 %v6499, %v6495
      %v7584 = vpack.c.b16 %v6504, %v6500
      %v7585 = vpack.c.b16 %v6505, %v6501
      %v7586 = vpack.c.b16 %v6506, %v6502
      %v7587 = vpack.c.b16 %v6507, %v6503
      %v7588 = vpack.c.b16 %v6512, %v6508
      %v7589 = vpack.c.b16 %v6513, %v6509
      %v7590 = vpack.c.b16 %v6514, %v6510
      %v7591 = vpack.c.b16 %v6515, %v6511
      %v7592 = vpack.c.b16 %v6520, %v6516
      %v7593 = vpack.c.b16 %v6521, %v6517
      %v7594 = vpack.c.b16 %v6522, %v6518
      %v7595 = vpack.c.b16 %v6523, %v6519
      %v7596 = vpack.c.b16 %v6528, %v6524
      %v7597 = vpack.c.b16 %v6529, %v6525
      %v7598 = vpack.c.b16 %v6530, %v6526
      %v7599 = vpack.c.b16 %v6531, %v6527
      %v7600 = vpack.c.b16 %v6536, %v6532
      %v7601 = vpack.c.b16 %v6537, %v6533
      %v7602 = vpack.c.b16 %v6538, %v6534
      %v7603 = vpack.c.b16 %v6539, %v6535
      %v7604 = vpack.c.b16 %v6544, %v6540
      %v7605 = vpack.c.b16 %v6545, %v6541
      %v7606 = vpack.c.b16 %v6546, %v6542
      %v7607 = vpack.c.b16 %v6547, %v6543
      %v7608 = vpack.c.b16 %v6552, %v6548
      %v7609 = vpack.c.b16 %v6553, %v6549
      %v7610 = vpack.c.b16 %v6554, %v6550
      %v7611 = vpack.c.b16 %v6555, %v6551
      %v7612 = vpack.c.b16 %v6560, %v6556
      %v7613 = vpack.c.b16 %v6561, %v6557
      %v7614 = vpack.c.b16 %v6562, %v6558
      %v7615 = vpack.c.b16 %v6563, %v6559
      %v7616 = vpack.c.b16 %v6568, %v6564
      %v7617 = vpack.c.b16 %v6569, %v6565
      %v7618 = vpack.c.b16 %v6570, %v6566
      %v7619 = vpack.c.b16 %v6571, %v6567
      %v7620 = vpack.c.b16 %v6576, %v6572
      %v7621 = vpack.c.b16 %v6577, %v6573
      %v7622 = vpack.c.b16 %v6578, %v6574
      %v7623 = vpack.c.b16 %v6579, %v6575
      %v7624 = vpack.c.b16 %v6584, %v6580
      %v7625 = vpack.c.b16 %v6585, %v6581
      %v7626 = vpack.c.b16 %v6586, %v6582
      %v7627 = vpack.c.b16 %v6587, %v6583
      %v7628 = vpack.c.b16 %v6592, %v6588
      %v7629 = vpack.c.b16 %v6593, %v6589
      %v7630 = vpack.c.b16 %v6594, %v6590
      %v7631 = vpack.c.b16 %v6595, %v6591
      %v7632 = vpack.c.b16 %v6600, %v6596
      %v7633 = vpack.c.b16 %v6601, %v6597
      %v7634 = vpack.c.b16 %v6602, %v6598
      %v7635 = vpack.c.b16 %v6603, %v6599
      %v7636 = vpack.c.b16 %v6608, %v6604
      %v7637 = vpack.c.b16 %v6609, %v6605
      %v7638 = vpack.c.b16 %v6610, %v6606
      %v7639 = vpack.c.b16 %v6611, %v6607
      %v7640 = vpack.c.b16 %v6616, %v6612
      %v7641 = vpack.c.b16 %v6617, %v6613
      %v7642 = vpack.c.b16 %v6618, %v6614
      %v7643 = vpack.c.b16 %v6619, %v6615
      %v7644 = vpack.c.b16 %v6624, %v6620
      %v7645 = vpack.c.b16 %v6625, %v6621
      %v7646 = vpack.c.b16 %v6626, %v6622
      %v7647 = vpack.c.b16 %v6627, %v6623
      %v7648 = vpack.c.b16 %v6632, %v6628
      %v7649 = vpack.c.b16 %v6633, %v6629
      %v7650 = vpack.c.b16 %v6634, %v6630
      %v7651 = vpack.c.b16 %v6635, %v6631
      %v7652 = vpack.c.b16 %v6640, %v6636
      %v7653 = vpack.c.b16 %v6641, %v6637
      %v7654 = vpack.c.b16 %v6642, %v6638
      %v7655 = vpack.c.b16 %v6643, %v6639
      %v7656 = vpack.c.b16 %v6648, %v6644
      %v7657 = vpack.c.b16 %v6649, %v6645
      %v7658 = vpack.c.b16 %v6650, %v6646
      %v7659 = vpack.c.b16 %v6651, %v6647
      %v7660 = vpack.c.b16 %v6656, %v6652
      %v7661 = vpack.c.b16 %v6657, %v6653
      %v7662 = vpack.c.b16 %v6658, %v6654
      %v7663 = vpack.c.b16 %v6659, %v6655
      %v7664 = vpack.c.b16 %v6664, %v6660
      %v7665 = vpack.c.b16 %v6665, %v6661
      %v7666 = vpack.c.b16 %v6666, %v6662
      %v7667 = vpack.c.b16 %v6667, %v6663
      %v7668 = vpack.c.b16 %v6672, %v6668
      %v7669 = vpack.c.b16 %v6673, %v6669
      %v7670 = vpack.c.b16 %v6674, %v6670
      %v7671 = vpack.c.b16 %v6675, %v6671
      %v7672 = vpack.c.b16 %v6680, %v6676
      %v7673 = vpack.c.b16 %v6681, %v6677
      %v7674 = vpack.c.b16 %v6682, %v6678
      %v7675 = vpack.c.b16 %v6683, %v6679
      %v7676 = vpack.c.b16 %v6688, %v6684
      %v7677 = vpack.c.b16 %v6689, %v6685
      %v7678 = vpack.c.b16 %v6690, %v6686
      %v7679 = vpack.c.b16 %v6691, %v6687
      %v7680 = vpack.c.b16 %v6696, %v6692
      %v7681 = vpack.c.b16 %v6697, %v6693
      %v7682 = vpack.c.b16 %v6698, %v6694
      %v7683 = vpack.c.b16 %v6699, %v6695
      %v7684 = vpack.c.b16 %v6704, %v6700
      %v7685 = vpack.c.b16 %v6705, %v6701
      %v7686 = vpack.c.b16 %v6706, %v6702
      %v7687 = vpack.c.b16 %v6707, %v6703
      %v7688 = vpack.c.b16 %v6712, %v6708
      %v7689 = vpack.c.b16 %v6713, %v6709
      %v7690 = vpack.c.b16 %v6714, %v6710
      %v7691 = vpack.c.b16 %v6715, %v6711
      %v7692 = vpack.c.b16 %v6720, %v6716
      %v7693 = vpack.c.b16 %v6721, %v6717
      %v7694 = vpack.c.b16 %v6722, %v6718
      %v7695 = vpack.c.b16 %v6723, %v6719
      %v7696 = vpack.c.b16 %v6728, %v6724
      %v7697 = vpack.c.b16 %v6729, %v6725
      %v7698 = vpack.c.b16 %v6730, %v6726
      %v7699 = vpack.c.b16 %v6731, %v6727
      %v7700 = vpack.c.b16 %v6736, %v6732
      %v7701 = vpack.c.b16 %v6737, %v6733
      %v7702 = vpack.c.b16 %v6738, %v6734
      %v7703 = vpack.c.b16 %v6739, %v6735
      %v7704 = vpack.c.b16 %v6744, %v6740
      %v7705 = vpack.c.b16 %v6745, %v6741
      %v7706 = vpack.c.b16 %v6746, %v6742
      %v7707 = vpack.c.b16 %v6747, %v6743
      %v7708 = vpack.c.b16 %v6752, %v6748
      %v7709 = vpack.c.b16 %v6753, %v6749
      %v7710 = vpack.c.b16 %v6754, %v6750
      %v7711 = vpack.c.b16 %v6755, %v6751
      %v7712 = vpack.c.b16 %v6760, %v6756
      %v7713 = vpack.c.b16 %v6761, %v6757
      %v7714 = vpack.c.b16 %v6762, %v6758
      %v7715 = vpack.c.b16 %v6763, %v6759
      %v7716 = vpack.c.b16 %v6768, %v6764
      %v7717 = vpack.c.b16 %v6769, %v6765
      %v7718 = vpack.c.b16 %v6770, %v6766
      %v7719 = vpack.c.b16 %v6771, %v6767
      %v7720 = vpack.c.b16 %v6776, %v6772
      %v7721 = vpack.c.b16 %v6777, %v6773
      %v7722 = vpack.c.b16 %v6778, %v6774
      %v7723 = vpack.c.b16 %v6779, %v6775
      %v7724 = vpack.c.b16 %v6784, %v6780
      %v7725 = vpack.c.b16 %v6785, %v6781
      %v7726 = vpack.c.b16 %v6786, %v6782
      %v7727 = vpack.c.b16 %v6787, %v6783
      %v7728 = vpack.c.b16 %v6792, %v6788
      %v7729 = vpack.c.b16 %v6793, %v6789
      %v7730 = vpack.c.b16 %v6794, %v6790
      %v7731 = vpack.c.b16 %v6795, %v6791
      %v7732 = vpack.c.b16 %v6800, %v6796
      %v7733 = vpack.c.b16 %v6801, %v6797
      %v7734 = vpack.c.b16 %v6802, %v6798
      %v7735 = vpack.c.b16 %v6803, %v6799
      %v7736 = vpack.c.b16 %v6808, %v6804
      %v7737 = vpack.c.b16 %v6809, %v6805
      %v7738 = vpack.c.b16 %v6810, %v6806
      %v7739 = vpack.c.b16 %v6811, %v6807
      %v7740 = vpack.c.b16 %v6816, %v6812
      %v7741 = vpack.c.b16 %v6817, %v6813
      %v7742 = vpack.c.b16 %v6818, %v6814
      %v7743 = vpack.c.b16 %v6819, %v6815
      %v7744 = vpack.c.b16 %v6824, %v6820
      %v7745 = vpack.c.b16 %v6825, %v6821
      %v7746 = vpack.c.b16 %v6826, %v6822
      %v7747 = vpack.c.b16 %v6827, %v6823
      %v7748 = vpack.c.b16 %v6832, %v6828
      %v7749 = vpack.c.b16 %v6833, %v6829
      %v7750 = vpack.c.b16 %v6834, %v6830
      %v7751 = vpack.c.b16 %v6835, %v6831
      %v7752 = vpack.c.b16 %v6840, %v6836
      %v7753 = vpack.c.b16 %v6841, %v6837
      %v7754 = vpack.c.b16 %v6842, %v6838
      %v7755 = vpack.c.b16 %v6843, %v6839
      %v7756 = vpack.c.b16 %v6848, %v6844
      %v7757 = vpack.c.b16 %v6849, %v6845
      %v7758 = vpack.c.b16 %v6850, %v6846
      %v7759 = vpack.c.b16 %v6851, %v6847
      %v7760 = vpack.c.b16 %v6856, %v6852
      %v7761 = vpack.c.b16 %v6857, %v6853
      %v7762 = vpack.c.b16 %v6858, %v6854
      %v7763 = vpack.c.b16 %v6859, %v6855
      %v7764 = vpack.c.b16 %v6864, %v6860
      %v7765 = vpack.c.b16 %v6865, %v6861
      %v7766 = vpack.c.b16 %v6866, %v6862
      %v7767 = vpack.c.b16 %v6867, %v6863
      %v7768 = vpack.c.b16 %v6872, %v6868
      %v7769 = vpack.c.b16 %v6873, %v6869
      %v7770 = vpack.c.b16 %v6874, %v6870
      %v7771 = vpack.c.b16 %v6875, %v6871
      %v7772 = vpack.c.b16 %v6880, %v6876
      %v7773 = vpack.c.b16 %v6881, %v6877
      %v7774 = vpack.c.b16 %v6882, %v6878
      %v7775 = vpack.c.b16 %v6883, %v6879
      %v7776 = vpack.c.b16 %v6888, %v6884
      %v7777 = vpack.c.b16 %v6889, %v6885
      %v7778 = vpack.c.b16 %v6890, %v6886
      %v7779 = vpack.c.b16 %v6891, %v6887
      %v7780 = vpack.c.b16 %v6896, %v6892
      %v7781 = vpack.c.b16 %v6897, %v6893
      %v7782 = vpack.c.b16 %v6898, %v6894
      %v7783 = vpack.c.b16 %v6899, %v6895
      %v7784 = vpack.c.b16 %v6904, %v6900
      %v7785 = vpack.c.b16 %v6905, %v6901
      %v7786 = vpack.c.b16 %v6906, %v6902
      %v7787 = vpack.c.b16 %v6907, %v6903
      %v7788 = vpack.c.b16 %v6912, %v6908
      %v7789 = vpack.c.b16 %v6913, %v6909
      %v7790 = vpack.c.b16 %v6914, %v6910
      %v7791 = vpack.c.b16 %v6915, %v6911
      %v7792 = vpack.c.b16 %v6920, %v6916
      %v7793 = vpack.c.b16 %v6921, %v6917
      %v7794 = vpack.c.b16 %v6922, %v6918
      %v7795 = vpack.c.b16 %v6923, %v6919
      %v7796 = vpack.c.b16 %v6928, %v6924
      %v7797 = vpack.c.b16 %v6929, %v6925
      %v7798 = vpack.c.b16 %v6930, %v6926
      %v7799 = vpack.c.b16 %v6931, %v6927
      %v7800 = vpack.c.b16 %v6936, %v6932
      %v7801 = vpack.c.b16 %v6937, %v6933
      %v7802 = vpack.c.b16 %v6938, %v6934
      %v7803 = vpack.c.b16 %v6939, %v6935
      %v7804 = vpack.c.b16 %v6944, %v6940
      %v7805 = vpack.c.b16 %v6945, %v6941
      %v7806 = vpack.c.b16 %v6946, %v6942
      %v7807 = vpack.c.b16 %v6947, %v6943
      %v7808 = vpack.c.b16 %v6952, %v6948
      %v7809 = vpack.c.b16 %v6953, %v6949
      %v7810 = vpack.c.b16 %v6954, %v6950
      %v7811 = vpack.c.b16 %v6955, %v6951
      %v7812 = vpack.c.b16 %v6960, %v6956
      %v7813 = vpack.c.b16 %v6961, %v6957
      %v7814 = vpack.c.b16 %v6962, %v6958
      %v7815 = vpack.c.b16 %v6963, %v6959
      %v7816 = vpack.c.b16 %v6968, %v6964
      %v7817 = vpack.c.b16 %v6969, %v6965
      %v7818 = vpack.c.b16 %v6970, %v6966
      %v7819 = vpack.c.b16 %v6971, %v6967
      %v7820 = vpack.c.b16 %v6972, %v6972
      %v7821 = vpack.c.b16 %v6973, %v6973
      %v7822 = vpack.c.b16 %v6974, %v6974
      %v7823 = vpack.c.b16 %v6975, %v6975
      %vm8668 = vcmask 424960
      %v8670 = vsel %vm8668, %v3591, 0
      %vm8672 = vcmask 1041408
      %v8674 = vsel %vm8672, %v7820, 0
      %v8677 = vsel %vm8672, %v7821, 0
      %v8680 = vsel %vm8672, %v7822, 0
      %v8683 = vsel %vm8672, %v7823, 0
      %8685 = vmatpush.bf16.msra.mxu0 %v7004
      %8686 = vmatpush.bf16.msra.mxu0 %v7000
      %8687 = vmatpush.bf16.msra.mxu0 %v6996
      %8688 = vmatpush.bf16.msra.mxu0 %v6992
      %8689 = vmatpush.bf16.msra.mxu0 %v6988
      %8690 = vmatpush.bf16.msra.mxu0 %v6984
      %8691 = vmatpush.bf16.msra.mxu0 %v6980
      %8692 = vmatpush.bf16.msra.mxu0 %v6976
      %8693 = vmatmul.bf16.gmra.mxu0 %v3565
      %v8694 = vpop.f32.mrf.mxu0
      %v8695 = vadd.f32 0.0, %v8694
      %v8696 = vpop.f32.mrf.mxu0
      %8697 = vdwg.mxu0
      %8698 = vmatpush.bf16.msra.mxu0 %v7036
      %8699 = vmatpush.bf16.msra.mxu0 %v7032
      %8700 = vmatpush.bf16.msra.mxu0 %v7028
      %8701 = vmatpush.bf16.msra.mxu0 %v7024
      %8702 = vmatpush.bf16.msra.mxu0 %v7020
      %8703 = vmatpush.bf16.msra.mxu0 %v7016
      %8704 = vmatpush.bf16.msra.mxu0 %v7012
      %8705 = vmatpush.bf16.msra.mxu0 %v7008
      %8706 = vmatmul.bf16.gmra.mxu0 %v3566
      %v8707 = vpop.f32.mrf.mxu0
      %v8708 = vadd.f32 %v8695, %v8707
      %v8709 = vpop.f32.mrf.mxu0
      %8710 = vdwg.mxu0
      %8711 = vmatpush.bf16.msra.mxu0 %v7068
      %8712 = vmatpush.bf16.msra.mxu0 %v7064
      %8713 = vmatpush.bf16.msra.mxu0 %v7060
      %8714 = vmatpush.bf16.msra.mxu0 %v7056
      %8715 = vmatpush.bf16.msra.mxu0 %v7052
      %8716 = vmatpush.bf16.msra.mxu0 %v7048
      %8717 = vmatpush.bf16.msra.mxu0 %v7044
      %8718 = vmatpush.bf16.msra.mxu0 %v7040
      %8719 = vmatmul.bf16.gmra.mxu0 %v3567
      %v8720 = vpop.f32.mrf.mxu0
      %v8721 = vadd.f32 %v8708, %v8720
      %v8722 = vpop.f32.mrf.mxu0
      %8723 = vdwg.mxu0
      %8724 = vmatpush.bf16.msra.mxu0 %v7100
      %8725 = vmatpush.bf16.msra.mxu0 %v7096
      %8726 = vmatpush.bf16.msra.mxu0 %v7092
      %8727 = vmatpush.bf16.msra.mxu0 %v7088
      %8728 = vmatpush.bf16.msra.mxu0 %v7084
      %8729 = vmatpush.bf16.msra.mxu0 %v7080
      %8730 = vmatpush.bf16.msra.mxu0 %v7076
      %8731 = vmatpush.bf16.msra.mxu0 %v7072
      %8732 = vmatmul.bf16.gmra.mxu0 %v3568
      %v8733 = vpop.f32.mrf.mxu0
      %v8734 = vadd.f32 %v8721, %v8733
      %v8735 = vpop.f32.mrf.mxu0
      %8736 = vdwg.mxu0
      %8737 = vmatpush.bf16.msra.mxu0 %v7132
      %8738 = vmatpush.bf16.msra.mxu0 %v7128
      %8739 = vmatpush.bf16.msra.mxu0 %v7124
      %8740 = vmatpush.bf16.msra.mxu0 %v7120
      %8741 = vmatpush.bf16.msra.mxu0 %v7116
      %8742 = vmatpush.bf16.msra.mxu0 %v7112
      %8743 = vmatpush.bf16.msra.mxu0 %v7108
      %8744 = vmatpush.bf16.msra.mxu0 %v7104
      %8745 = vmatmul.bf16.gmra.mxu0 %v3569
      %v8746 = vpop.f32.mrf.mxu0
      %v8747 = vadd.f32 %v8734, %v8746
      %v8748 = vpop.f32.mrf.mxu0
      %8749 = vdwg.mxu0
      %8750 = vmatpush.bf16.msra.mxu0 %v7164
      %8751 = vmatpush.bf16.msra.mxu0 %v7160
      %8752 = vmatpush.bf16.msra.mxu0 %v7156
      %8753 = vmatpush.bf16.msra.mxu0 %v7152
      %8754 = vmatpush.bf16.msra.mxu0 %v7148
      %8755 = vmatpush.bf16.msra.mxu0 %v7144
      %8756 = vmatpush.bf16.msra.mxu0 %v7140
      %8757 = vmatpush.bf16.msra.mxu0 %v7136
      %8758 = vmatmul.bf16.gmra.mxu0 %v3570
      %v8759 = vpop.f32.mrf.mxu0
      %v8760 = vadd.f32 %v8747, %v8759
      %v8761 = vpop.f32.mrf.mxu0
      %8762 = vdwg.mxu0
      %8763 = vmatpush.bf16.msra.mxu0 %v7196
      %8764 = vmatpush.bf16.msra.mxu0 %v7192
      %8765 = vmatpush.bf16.msra.mxu0 %v7188
      %8766 = vmatpush.bf16.msra.mxu0 %v7184
      %8767 = vmatpush.bf16.msra.mxu0 %v7180
      %8768 = vmatpush.bf16.msra.mxu0 %v7176
      %8769 = vmatpush.bf16.msra.mxu0 %v7172
      %8770 = vmatpush.bf16.msra.mxu0 %v7168
      %8771 = vmatmul.bf16.gmra.mxu0 %v3571
      %v8772 = vpop.f32.mrf.mxu0
      %v8773 = vadd.f32 %v8760, %v8772
      %v8774 = vpop.f32.mrf.mxu0
      %8775 = vdwg.mxu0
      %8776 = vmatpush.bf16.msra.mxu0 %v7228
      %8777 = vmatpush.bf16.msra.mxu0 %v7224
      %8778 = vmatpush.bf16.msra.mxu0 %v7220
      %8779 = vmatpush.bf16.msra.mxu0 %v7216
      %8780 = vmatpush.bf16.msra.mxu0 %v7212
      %8781 = vmatpush.bf16.msra.mxu0 %v7208
      %8782 = vmatpush.bf16.msra.mxu0 %v7204
      %8783 = vmatpush.bf16.msra.mxu0 %v7200
      %8784 = vmatmul.bf16.gmra.mxu0 %v3572
      %v8785 = vpop.f32.mrf.mxu0
      %v8786 = vadd.f32 %v8773, %v8785
      %v8787 = vpop.f32.mrf.mxu0
      %8788 = vdwg.mxu0
      %8789 = vmatpush.bf16.msra.mxu0 %v7260
      %8790 = vmatpush.bf16.msra.mxu0 %v7256
      %8791 = vmatpush.bf16.msra.mxu0 %v7252
      %8792 = vmatpush.bf16.msra.mxu0 %v7248
      %8793 = vmatpush.bf16.msra.mxu0 %v7244
      %8794 = vmatpush.bf16.msra.mxu0 %v7240
      %8795 = vmatpush.bf16.msra.mxu0 %v7236
      %8796 = vmatpush.bf16.msra.mxu0 %v7232
      %8797 = vmatmul.bf16.gmra.mxu0 %v3573
      %v8798 = vpop.f32.mrf.mxu0
      %v8799 = vadd.f32 %v8786, %v8798
      %v8800 = vpop.f32.mrf.mxu0
      %8801 = vdwg.mxu0
      %8802 = vmatpush.bf16.msra.mxu0 %v7292
      %8803 = vmatpush.bf16.msra.mxu0 %v7288
      %8804 = vmatpush.bf16.msra.mxu0 %v7284
      %8805 = vmatpush.bf16.msra.mxu0 %v7280
      %8806 = vmatpush.bf16.msra.mxu0 %v7276
      %8807 = vmatpush.bf16.msra.mxu0 %v7272
      %8808 = vmatpush.bf16.msra.mxu0 %v7268
      %8809 = vmatpush.bf16.msra.mxu0 %v7264
      %8810 = vmatmul.bf16.gmra.mxu0 %v3574
      %v8811 = vpop.f32.mrf.mxu0
      %v8812 = vadd.f32 %v8799, %v8811
      %v8813 = vpop.f32.mrf.mxu0
      %8814 = vdwg.mxu0
      %8815 = vmatpush.bf16.msra.mxu0 %v7324
      %8816 = vmatpush.bf16.msra.mxu0 %v7320
      %8817 = vmatpush.bf16.msra.mxu0 %v7316
      %8818 = vmatpush.bf16.msra.mxu0 %v7312
      %8819 = vmatpush.bf16.msra.mxu0 %v7308
      %8820 = vmatpush.bf16.msra.mxu0 %v7304
      %8821 = vmatpush.bf16.msra.mxu0 %v7300
      %8822 = vmatpush.bf16.msra.mxu0 %v7296
      %8823 = vmatmul.bf16.gmra.mxu0 %v3575
      %v8824 = vpop.f32.mrf.mxu0
      %v8825 = vadd.f32 %v8812, %v8824
      %v8826 = vpop.f32.mrf.mxu0
      %8827 = vdwg.mxu0
      %8828 = vmatpush.bf16.msra.mxu0 %v7356
      %8829 = vmatpush.bf16.msra.mxu0 %v7352
      %8830 = vmatpush.bf16.msra.mxu0 %v7348
      %8831 = vmatpush.bf16.msra.mxu0 %v7344
      %8832 = vmatpush.bf16.msra.mxu0 %v7340
      %8833 = vmatpush.bf16.msra.mxu0 %v7336
      %8834 = vmatpush.bf16.msra.mxu0 %v7332
      %8835 = vmatpush.bf16.msra.mxu0 %v7328
      %8836 = vmatmul.bf16.gmra.mxu0 %v3576
      %v8837 = vpop.f32.mrf.mxu0
      %v8838 = vadd.f32 %v8825, %v8837
      %v8839 = vpop.f32.mrf.mxu0
      %8840 = vdwg.mxu0
      %8841 = vmatpush.bf16.msra.mxu0 %v7388
      %8842 = vmatpush.bf16.msra.mxu0 %v7384
      %8843 = vmatpush.bf16.msra.mxu0 %v7380
      %8844 = vmatpush.bf16.msra.mxu0 %v7376
      %8845 = vmatpush.bf16.msra.mxu0 %v7372
      %8846 = vmatpush.bf16.msra.mxu0 %v7368
      %8847 = vmatpush.bf16.msra.mxu0 %v7364
      %8848 = vmatpush.bf16.msra.mxu0 %v7360
      %8849 = vmatmul.bf16.gmra.mxu0 %v3577
      %v8850 = vpop.f32.mrf.mxu0
      %v8851 = vadd.f32 %v8838, %v8850
      %v8852 = vpop.f32.mrf.mxu0
      %8853 = vdwg.mxu0
      %8854 = vmatpush.bf16.msra.mxu0 %v7420
      %8855 = vmatpush.bf16.msra.mxu0 %v7416
      %8856 = vmatpush.bf16.msra.mxu0 %v7412
      %8857 = vmatpush.bf16.msra.mxu0 %v7408
      %8858 = vmatpush.bf16.msra.mxu0 %v7404
      %8859 = vmatpush.bf16.msra.mxu0 %v7400
      %8860 = vmatpush.bf16.msra.mxu0 %v7396
      %8861 = vmatpush.bf16.msra.mxu0 %v7392
      %8862 = vmatmul.bf16.gmra.mxu0 %v3578
      %v8863 = vpop.f32.mrf.mxu0
      %v8864 = vadd.f32 %v8851, %v8863
      %v8865 = vpop.f32.mrf.mxu0
      %8866 = vdwg.mxu0
      %8867 = vmatpush.bf16.msra.mxu0 %v7452
      %8868 = vmatpush.bf16.msra.mxu0 %v7448
      %8869 = vmatpush.bf16.msra.mxu0 %v7444
      %8870 = vmatpush.bf16.msra.mxu0 %v7440
      %8871 = vmatpush.bf16.msra.mxu0 %v7436
      %8872 = vmatpush.bf16.msra.mxu0 %v7432
      %8873 = vmatpush.bf16.msra.mxu0 %v7428
      %8874 = vmatpush.bf16.msra.mxu0 %v7424
      %8875 = vmatmul.bf16.gmra.mxu0 %v3579
      %v8876 = vpop.f32.mrf.mxu0
      %v8877 = vadd.f32 %v8864, %v8876
      %v8878 = vpop.f32.mrf.mxu0
      %8879 = vdwg.mxu0
      %8880 = vmatpush.bf16.msra.mxu0 %v7484
      %8881 = vmatpush.bf16.msra.mxu0 %v7480
      %8882 = vmatpush.bf16.msra.mxu0 %v7476
      %8883 = vmatpush.bf16.msra.mxu0 %v7472
      %8884 = vmatpush.bf16.msra.mxu0 %v7468
      %8885 = vmatpush.bf16.msra.mxu0 %v7464
      %8886 = vmatpush.bf16.msra.mxu0 %v7460
      %8887 = vmatpush.bf16.msra.mxu0 %v7456
      %8888 = vmatmul.bf16.gmra.mxu0 %v3580
      %v8889 = vpop.f32.mrf.mxu0
      %v8890 = vadd.f32 %v8877, %v8889
      %v8891 = vpop.f32.mrf.mxu0
      %8892 = vdwg.mxu0
      %8893 = vmatpush.bf16.msra.mxu0 %v7516
      %8894 = vmatpush.bf16.msra.mxu0 %v7512
      %8895 = vmatpush.bf16.msra.mxu0 %v7508
      %8896 = vmatpush.bf16.msra.mxu0 %v7504
      %8897 = vmatpush.bf16.msra.mxu0 %v7500
      %8898 = vmatpush.bf16.msra.mxu0 %v7496
      %8899 = vmatpush.bf16.msra.mxu0 %v7492
      %8900 = vmatpush.bf16.msra.mxu0 %v7488
      %8901 = vmatmul.bf16.gmra.mxu0 %v3581
      %v8902 = vpop.f32.mrf.mxu0
      %v8903 = vadd.f32 %v8890, %v8902
      %v8904 = vpop.f32.mrf.mxu0
      %8905 = vdwg.mxu0
      %8906 = vmatpush.bf16.msra.mxu0 %v7548
      %8907 = vmatpush.bf16.msra.mxu0 %v7544
      %8908 = vmatpush.bf16.msra.mxu0 %v7540
      %8909 = vmatpush.bf16.msra.mxu0 %v7536
      %8910 = vmatpush.bf16.msra.mxu0 %v7532
      %8911 = vmatpush.bf16.msra.mxu0 %v7528
      %8912 = vmatpush.bf16.msra.mxu0 %v7524
      %8913 = vmatpush.bf16.msra.mxu0 %v7520
      %8914 = vmatmul.bf16.gmra.mxu0 %v3582
      %v8915 = vpop.f32.mrf.mxu0
      %v8916 = vadd.f32 %v8903, %v8915
      %v8917 = vpop.f32.mrf.mxu0
      %8918 = vdwg.mxu0
      %8919 = vmatpush.bf16.msra.mxu0 %v7580
      %8920 = vmatpush.bf16.msra.mxu0 %v7576
      %8921 = vmatpush.bf16.msra.mxu0 %v7572
      %8922 = vmatpush.bf16.msra.mxu0 %v7568
      %8923 = vmatpush.bf16.msra.mxu0 %v7564
      %8924 = vmatpush.bf16.msra.mxu0 %v7560
      %8925 = vmatpush.bf16.msra.mxu0 %v7556
      %8926 = vmatpush.bf16.msra.mxu0 %v7552
      %8927 = vmatmul.bf16.gmra.mxu0 %v3583
      %v8928 = vpop.f32.mrf.mxu0
      %v8929 = vadd.f32 %v8916, %v8928
      %v8930 = vpop.f32.mrf.mxu0
      %8931 = vdwg.mxu0
      %8932 = vmatpush.bf16.msra.mxu0 %v7612
      %8933 = vmatpush.bf16.msra.mxu0 %v7608
      %8934 = vmatpush.bf16.msra.mxu0 %v7604
      %8935 = vmatpush.bf16.msra.mxu0 %v7600
      %8936 = vmatpush.bf16.msra.mxu0 %v7596
      %8937 = vmatpush.bf16.msra.mxu0 %v7592
      %8938 = vmatpush.bf16.msra.mxu0 %v7588
      %8939 = vmatpush.bf16.msra.mxu0 %v7584
      %8940 = vmatmul.bf16.gmra.mxu0 %v3584
      %v8941 = vpop.f32.mrf.mxu0
      %v8942 = vadd.f32 %v8929, %v8941
      %v8943 = vpop.f32.mrf.mxu0
      %8944 = vdwg.mxu0
      %8945 = vmatpush.bf16.msra.mxu0 %v7644
      %8946 = vmatpush.bf16.msra.mxu0 %v7640
      %8947 = vmatpush.bf16.msra.mxu0 %v7636
      %8948 = vmatpush.bf16.msra.mxu0 %v7632
      %8949 = vmatpush.bf16.msra.mxu0 %v7628
      %8950 = vmatpush.bf16.msra.mxu0 %v7624
      %8951 = vmatpush.bf16.msra.mxu0 %v7620
      %8952 = vmatpush.bf16.msra.mxu0 %v7616
      %8953 = vmatmul.bf16.gmra.mxu0 %v3585
      %v8954 = vpop.f32.mrf.mxu0
      %v8955 = vadd.f32 %v8942, %v8954
      %v8956 = vpop.f32.mrf.mxu0
      %8957 = vdwg.mxu0
      %8958 = vmatpush.bf16.msra.mxu0 %v7676
      %8959 = vmatpush.bf16.msra.mxu0 %v7672
      %8960 = vmatpush.bf16.msra.mxu0 %v7668
      %8961 = vmatpush.bf16.msra.mxu0 %v7664
      %8962 = vmatpush.bf16.msra.mxu0 %v7660
      %8963 = vmatpush.bf16.msra.mxu0 %v7656
      %8964 = vmatpush.bf16.msra.mxu0 %v7652
      %8965 = vmatpush.bf16.msra.mxu0 %v7648
      %8966 = vmatmul.bf16.gmra.mxu0 %v3586
      %v8967 = vpop.f32.mrf.mxu0
      %v8968 = vadd.f32 %v8955, %v8967
      %v8969 = vpop.f32.mrf.mxu0
      %8970 = vdwg.mxu0
      %8971 = vmatpush.bf16.msra.mxu0 %v7708
      %8972 = vmatpush.bf16.msra.mxu0 %v7704
      %8973 = vmatpush.bf16.msra.mxu0 %v7700
      %8974 = vmatpush.bf16.msra.mxu0 %v7696
      %8975 = vmatpush.bf16.msra.mxu0 %v7692
      %8976 = vmatpush.bf16.msra.mxu0 %v7688
      %8977 = vmatpush.bf16.msra.mxu0 %v7684
      %8978 = vmatpush.bf16.msra.mxu0 %v7680
      %8979 = vmatmul.bf16.gmra.mxu0 %v3587
      %v8980 = vpop.f32.mrf.mxu0
      %v8981 = vadd.f32 %v8968, %v8980
      %v8982 = vpop.f32.mrf.mxu0
      %8983 = vdwg.mxu0
      %8984 = vmatpush.bf16.msra.mxu0 %v7740
      %8985 = vmatpush.bf16.msra.mxu0 %v7736
      %8986 = vmatpush.bf16.msra.mxu0 %v7732
      %8987 = vmatpush.bf16.msra.mxu0 %v7728
      %8988 = vmatpush.bf16.msra.mxu0 %v7724
      %8989 = vmatpush.bf16.msra.mxu0 %v7720
      %8990 = vmatpush.bf16.msra.mxu0 %v7716
      %8991 = vmatpush.bf16.msra.mxu0 %v7712
      %8992 = vmatmul.bf16.gmra.mxu0 %v3588
      %v8993 = vpop.f32.mrf.mxu0
      %v8994 = vadd.f32 %v8981, %v8993
      %v8995 = vpop.f32.mrf.mxu0
      %8996 = vdwg.mxu0
      %8997 = vmatpush.bf16.msra.mxu0 %v7772
      %8998 = vmatpush.bf16.msra.mxu0 %v7768
      %8999 = vmatpush.bf16.msra.mxu0 %v7764
      %9000 = vmatpush.bf16.msra.mxu0 %v7760
      %9001 = vmatpush.bf16.msra.mxu0 %v7756
      %9002 = vmatpush.bf16.msra.mxu0 %v7752
      %9003 = vmatpush.bf16.msra.mxu0 %v7748
      %9004 = vmatpush.bf16.msra.mxu0 %v7744
      %9005 = vmatmul.bf16.gmra.mxu0 %v3589
      %v9006 = vpop.f32.mrf.mxu0
      %v9007 = vadd.f32 %v8994, %v9006
      %v9008 = vpop.f32.mrf.mxu0
      %9009 = vdwg.mxu0
      %9010 = vmatpush.bf16.msra.mxu0 %v7804
      %9011 = vmatpush.bf16.msra.mxu0 %v7800
      %9012 = vmatpush.bf16.msra.mxu0 %v7796
      %9013 = vmatpush.bf16.msra.mxu0 %v7792
      %9014 = vmatpush.bf16.msra.mxu0 %v7788
      %9015 = vmatpush.bf16.msra.mxu0 %v7784
      %9016 = vmatpush.bf16.msra.mxu0 %v7780
      %9017 = vmatpush.bf16.msra.mxu0 %v7776
      %9018 = vmatmul.bf16.gmra.mxu0 %v3590
      %v9019 = vpop.f32.mrf.mxu0
      %v9020 = vadd.f32 %v9007, %v9019
      %v9021 = vpop.f32.mrf.mxu0
      %9022 = vdwg.mxu0
      %9023 = vmatpush.bf16.msra.mxu0 0
      %9024 = vmatpush.bf16.msra.mxu0 0
      %9025 = vmatpush.bf16.msra.mxu0 0
      %9026 = vmatpush.bf16.msra.mxu0 0
      %9027 = vmatpush.bf16.msra.mxu0 %v8674
      %9028 = vmatpush.bf16.msra.mxu0 %v7816
      %9029 = vmatpush.bf16.msra.mxu0 %v7812
      %9030 = vmatpush.bf16.msra.mxu0 %v7808
      %9031 = vmatmul.bf16.gmra.mxu0 %v8670
      %v9032 = vpop.f32.mrf.mxu0
      %v9033 = vadd.f32 %v9020, %v9032
      %v9034 = vpop.f32.mrf.mxu0
      %9035 = vdwg.mxu0
      %9036 = vmatpush.bf16.msra.mxu0 %v7005
      %9037 = vmatpush.bf16.msra.mxu0 %v7001
      %9038 = vmatpush.bf16.msra.mxu0 %v6997
      %9039 = vmatpush.bf16.msra.mxu0 %v6993
      %9040 = vmatpush.bf16.msra.mxu0 %v6989
      %9041 = vmatpush.bf16.msra.mxu0 %v6985
      %9042 = vmatpush.bf16.msra.mxu0 %v6981
      %9043 = vmatpush.bf16.msra.mxu0 %v6977
      %9044 = vmatmul.bf16.gmra.mxu0 %v3565
      %v9045 = vpop.f32.mrf.mxu0
      %v9046 = vadd.f32 0.0, %v9045
      %v9047 = vpop.f32.mrf.mxu0
      %9048 = vdwg.mxu0
      %9049 = vmatpush.bf16.msra.mxu0 %v7037
      %9050 = vmatpush.bf16.msra.mxu0 %v7033
      %9051 = vmatpush.bf16.msra.mxu0 %v7029
      %9052 = vmatpush.bf16.msra.mxu0 %v7025
      %9053 = vmatpush.bf16.msra.mxu0 %v7021
      %9054 = vmatpush.bf16.msra.mxu0 %v7017
      %9055 = vmatpush.bf16.msra.mxu0 %v7013
      %9056 = vmatpush.bf16.msra.mxu0 %v7009
      %9057 = vmatmul.bf16.gmra.mxu0 %v3566
      %v9058 = vpop.f32.mrf.mxu0
      %v9059 = vadd.f32 %v9046, %v9058
      %v9060 = vpop.f32.mrf.mxu0
      %9061 = vdwg.mxu0
      %9062 = vmatpush.bf16.msra.mxu0 %v7069
      %9063 = vmatpush.bf16.msra.mxu0 %v7065
      %9064 = vmatpush.bf16.msra.mxu0 %v7061
      %9065 = vmatpush.bf16.msra.mxu0 %v7057
      %9066 = vmatpush.bf16.msra.mxu0 %v7053
      %9067 = vmatpush.bf16.msra.mxu0 %v7049
      %9068 = vmatpush.bf16.msra.mxu0 %v7045
      %9069 = vmatpush.bf16.msra.mxu0 %v7041
      %9070 = vmatmul.bf16.gmra.mxu0 %v3567
      %v9071 = vpop.f32.mrf.mxu0
      %v9072 = vadd.f32 %v9059, %v9071
      %v9073 = vpop.f32.mrf.mxu0
      %9074 = vdwg.mxu0
      %9075 = vmatpush.bf16.msra.mxu0 %v7101
      %9076 = vmatpush.bf16.msra.mxu0 %v7097
      %9077 = vmatpush.bf16.msra.mxu0 %v7093
      %9078 = vmatpush.bf16.msra.mxu0 %v7089
      %9079 = vmatpush.bf16.msra.mxu0 %v7085
      %9080 = vmatpush.bf16.msra.mxu0 %v7081
      %9081 = vmatpush.bf16.msra.mxu0 %v7077
      %9082 = vmatpush.bf16.msra.mxu0 %v7073
      %9083 = vmatmul.bf16.gmra.mxu0 %v3568
      %v9084 = vpop.f32.mrf.mxu0
      %v9085 = vadd.f32 %v9072, %v9084
      %v9086 = vpop.f32.mrf.mxu0
      %9087 = vdwg.mxu0
      %9088 = vmatpush.bf16.msra.mxu0 %v7133
      %9089 = vmatpush.bf16.msra.mxu0 %v7129
      %9090 = vmatpush.bf16.msra.mxu0 %v7125
      %9091 = vmatpush.bf16.msra.mxu0 %v7121
      %9092 = vmatpush.bf16.msra.mxu0 %v7117
      %9093 = vmatpush.bf16.msra.mxu0 %v7113
      %9094 = vmatpush.bf16.msra.mxu0 %v7109
      %9095 = vmatpush.bf16.msra.mxu0 %v7105
      %9096 = vmatmul.bf16.gmra.mxu0 %v3569
      %v9097 = vpop.f32.mrf.mxu0
      %v9098 = vadd.f32 %v9085, %v9097
      %v9099 = vpop.f32.mrf.mxu0
      %9100 = vdwg.mxu0
      %9101 = vmatpush.bf16.msra.mxu0 %v7165
      %9102 = vmatpush.bf16.msra.mxu0 %v7161
      %9103 = vmatpush.bf16.msra.mxu0 %v7157
      %9104 = vmatpush.bf16.msra.mxu0 %v7153
      %9105 = vmatpush.bf16.msra.mxu0 %v7149
      %9106 = vmatpush.bf16.msra.mxu0 %v7145
      %9107 = vmatpush.bf16.msra.mxu0 %v7141
      %9108 = vmatpush.bf16.msra.mxu0 %v7137
      %9109 = vmatmul.bf16.gmra.mxu0 %v3570
      %v9110 = vpop.f32.mrf.mxu0
      %v9111 = vadd.f32 %v9098, %v9110
      %v9112 = vpop.f32.mrf.mxu0
      %9113 = vdwg.mxu0
      %9114 = vmatpush.bf16.msra.mxu0 %v7197
      %9115 = vmatpush.bf16.msra.mxu0 %v7193
      %9116 = vmatpush.bf16.msra.mxu0 %v7189
      %9117 = vmatpush.bf16.msra.mxu0 %v7185
      %9118 = vmatpush.bf16.msra.mxu0 %v7181
      %9119 = vmatpush.bf16.msra.mxu0 %v7177
      %9120 = vmatpush.bf16.msra.mxu0 %v7173
      %9121 = vmatpush.bf16.msra.mxu0 %v7169
      %9122 = vmatmul.bf16.gmra.mxu0 %v3571
      %v9123 = vpop.f32.mrf.mxu0
      %v9124 = vadd.f32 %v9111, %v9123
      %v9125 = vpop.f32.mrf.mxu0
      %9126 = vdwg.mxu0
      %9127 = vmatpush.bf16.msra.mxu0 %v7229
      %9128 = vmatpush.bf16.msra.mxu0 %v7225
      %9129 = vmatpush.bf16.msra.mxu0 %v7221
      %9130 = vmatpush.bf16.msra.mxu0 %v7217
      %9131 = vmatpush.bf16.msra.mxu0 %v7213
      %9132 = vmatpush.bf16.msra.mxu0 %v7209
      %9133 = vmatpush.bf16.msra.mxu0 %v7205
      %9134 = vmatpush.bf16.msra.mxu0 %v7201
      %9135 = vmatmul.bf16.gmra.mxu0 %v3572
      %v9136 = vpop.f32.mrf.mxu0
      %v9137 = vadd.f32 %v9124, %v9136
      %v9138 = vpop.f32.mrf.mxu0
      %9139 = vdwg.mxu0
      %9140 = vmatpush.bf16.msra.mxu0 %v7261
      %9141 = vmatpush.bf16.msra.mxu0 %v7257
      %9142 = vmatpush.bf16.msra.mxu0 %v7253
      %9143 = vmatpush.bf16.msra.mxu0 %v7249
      %9144 = vmatpush.bf16.msra.mxu0 %v7245
      %9145 = vmatpush.bf16.msra.mxu0 %v7241
      %9146 = vmatpush.bf16.msra.mxu0 %v7237
      %9147 = vmatpush.bf16.msra.mxu0 %v7233
      %9148 = vmatmul.bf16.gmra.mxu0 %v3573
      %v9149 = vpop.f32.mrf.mxu0
      %v9150 = vadd.f32 %v9137, %v9149
      %v9151 = vpop.f32.mrf.mxu0
      %9152 = vdwg.mxu0
      %9153 = vmatpush.bf16.msra.mxu0 %v7293
      %9154 = vmatpush.bf16.msra.mxu0 %v7289
      %9155 = vmatpush.bf16.msra.mxu0 %v7285
      %9156 = vmatpush.bf16.msra.mxu0 %v7281
      %9157 = vmatpush.bf16.msra.mxu0 %v7277
      %9158 = vmatpush.bf16.msra.mxu0 %v7273
      %9159 = vmatpush.bf16.msra.mxu0 %v7269
      %9160 = vmatpush.bf16.msra.mxu0 %v7265
      %9161 = vmatmul.bf16.gmra.mxu0 %v3574
      %v9162 = vpop.f32.mrf.mxu0
      %v9163 = vadd.f32 %v9150, %v9162
      %v9164 = vpop.f32.mrf.mxu0
      %9165 = vdwg.mxu0
      %9166 = vmatpush.bf16.msra.mxu0 %v7325
      %9167 = vmatpush.bf16.msra.mxu0 %v7321
      %9168 = vmatpush.bf16.msra.mxu0 %v7317
      %9169 = vmatpush.bf16.msra.mxu0 %v7313
      %9170 = vmatpush.bf16.msra.mxu0 %v7309
      %9171 = vmatpush.bf16.msra.mxu0 %v7305
      %9172 = vmatpush.bf16.msra.mxu0 %v7301
      %9173 = vmatpush.bf16.msra.mxu0 %v7297
      %9174 = vmatmul.bf16.gmra.mxu0 %v3575
      %v9175 = vpop.f32.mrf.mxu0
      %v9176 = vadd.f32 %v9163, %v9175
      %v9177 = vpop.f32.mrf.mxu0
      %9178 = vdwg.mxu0
      %9179 = vmatpush.bf16.msra.mxu0 %v7357
      %9180 = vmatpush.bf16.msra.mxu0 %v7353
      %9181 = vmatpush.bf16.msra.mxu0 %v7349
      %9182 = vmatpush.bf16.msra.mxu0 %v7345
      %9183 = vmatpush.bf16.msra.mxu0 %v7341
      %9184 = vmatpush.bf16.msra.mxu0 %v7337
      %9185 = vmatpush.bf16.msra.mxu0 %v7333
      %9186 = vmatpush.bf16.msra.mxu0 %v7329
      %9187 = vmatmul.bf16.gmra.mxu0 %v3576
      %v9188 = vpop.f32.mrf.mxu0
      %v9189 = vadd.f32 %v9176, %v9188
      %v9190 = vpop.f32.mrf.mxu0
      %9191 = vdwg.mxu0
      %9192 = vmatpush.bf16.msra.mxu0 %v7389
      %9193 = vmatpush.bf16.msra.mxu0 %v7385
      %9194 = vmatpush.bf16.msra.mxu0 %v7381
      %9195 = vmatpush.bf16.msra.mxu0 %v7377
      %9196 = vmatpush.bf16.msra.mxu0 %v7373
      %9197 = vmatpush.bf16.msra.mxu0 %v7369
      %9198 = vmatpush.bf16.msra.mxu0 %v7365
      %9199 = vmatpush.bf16.msra.mxu0 %v7361
      %9200 = vmatmul.bf16.gmra.mxu0 %v3577
      %v9201 = vpop.f32.mrf.mxu0
      %v9202 = vadd.f32 %v9189, %v9201
      %v9203 = vpop.f32.mrf.mxu0
      %9204 = vdwg.mxu0
      %9205 = vmatpush.bf16.msra.mxu0 %v7421
      %9206 = vmatpush.bf16.msra.mxu0 %v7417
      %9207 = vmatpush.bf16.msra.mxu0 %v7413
      %9208 = vmatpush.bf16.msra.mxu0 %v7409
      %9209 = vmatpush.bf16.msra.mxu0 %v7405
      %9210 = vmatpush.bf16.msra.mxu0 %v7401
      %9211 = vmatpush.bf16.msra.mxu0 %v7397
      %9212 = vmatpush.bf16.msra.mxu0 %v7393
      %9213 = vmatmul.bf16.gmra.mxu0 %v3578
      %v9214 = vpop.f32.mrf.mxu0
      %v9215 = vadd.f32 %v9202, %v9214
      %v9216 = vpop.f32.mrf.mxu0
      %9217 = vdwg.mxu0
      %9218 = vmatpush.bf16.msra.mxu0 %v7453
      %9219 = vmatpush.bf16.msra.mxu0 %v7449
      %9220 = vmatpush.bf16.msra.mxu0 %v7445
      %9221 = vmatpush.bf16.msra.mxu0 %v7441
      %9222 = vmatpush.bf16.msra.mxu0 %v7437
      %9223 = vmatpush.bf16.msra.mxu0 %v7433
      %9224 = vmatpush.bf16.msra.mxu0 %v7429
      %9225 = vmatpush.bf16.msra.mxu0 %v7425
      %9226 = vmatmul.bf16.gmra.mxu0 %v3579
      %v9227 = vpop.f32.mrf.mxu0
      %v9228 = vadd.f32 %v9215, %v9227
      %v9229 = vpop.f32.mrf.mxu0
      %9230 = vdwg.mxu0
      %9231 = vmatpush.bf16.msra.mxu0 %v7485
      %9232 = vmatpush.bf16.msra.mxu0 %v7481
      %9233 = vmatpush.bf16.msra.mxu0 %v7477
      %9234 = vmatpush.bf16.msra.mxu0 %v7473
      %9235 = vmatpush.bf16.msra.mxu0 %v7469
      %9236 = vmatpush.bf16.msra.mxu0 %v7465
      %9237 = vmatpush.bf16.msra.mxu0 %v7461
      %9238 = vmatpush.bf16.msra.mxu0 %v7457
      %9239 = vmatmul.bf16.gmra.mxu0 %v3580
      %v9240 = vpop.f32.mrf.mxu0
      %v9241 = vadd.f32 %v9228, %v9240
      %v9242 = vpop.f32.mrf.mxu0
      %9243 = vdwg.mxu0
      %9244 = vmatpush.bf16.msra.mxu0 %v7517
      %9245 = vmatpush.bf16.msra.mxu0 %v7513
      %9246 = vmatpush.bf16.msra.mxu0 %v7509
      %9247 = vmatpush.bf16.msra.mxu0 %v7505
      %9248 = vmatpush.bf16.msra.mxu0 %v7501
      %9249 = vmatpush.bf16.msra.mxu0 %v7497
      %9250 = vmatpush.bf16.msra.mxu0 %v7493
      %9251 = vmatpush.bf16.msra.mxu0 %v7489
      %9252 = vmatmul.bf16.gmra.mxu0 %v3581
      %v9253 = vpop.f32.mrf.mxu0
      %v9254 = vadd.f32 %v9241, %v9253
      %v9255 = vpop.f32.mrf.mxu0
      %9256 = vdwg.mxu0
      %9257 = vmatpush.bf16.msra.mxu0 %v7549
      %9258 = vmatpush.bf16.msra.mxu0 %v7545
      %9259 = vmatpush.bf16.msra.mxu0 %v7541
      %9260 = vmatpush.bf16.msra.mxu0 %v7537
      %9261 = vmatpush.bf16.msra.mxu0 %v7533
      %9262 = vmatpush.bf16.msra.mxu0 %v7529
      %9263 = vmatpush.bf16.msra.mxu0 %v7525
      %9264 = vmatpush.bf16.msra.mxu0 %v7521
      %9265 = vmatmul.bf16.gmra.mxu0 %v3582
      %v9266 = vpop.f32.mrf.mxu0
      %v9267 = vadd.f32 %v9254, %v9266
      %v9268 = vpop.f32.mrf.mxu0
      %9269 = vdwg.mxu0
      %9270 = vmatpush.bf16.msra.mxu0 %v7581
      %9271 = vmatpush.bf16.msra.mxu0 %v7577
      %9272 = vmatpush.bf16.msra.mxu0 %v7573
      %9273 = vmatpush.bf16.msra.mxu0 %v7569
      %9274 = vmatpush.bf16.msra.mxu0 %v7565
      %9275 = vmatpush.bf16.msra.mxu0 %v7561
      %9276 = vmatpush.bf16.msra.mxu0 %v7557
      %9277 = vmatpush.bf16.msra.mxu0 %v7553
      %9278 = vmatmul.bf16.gmra.mxu0 %v3583
      %v9279 = vpop.f32.mrf.mxu0
      %v9280 = vadd.f32 %v9267, %v9279
      %v9281 = vpop.f32.mrf.mxu0
      %9282 = vdwg.mxu0
      %9283 = vmatpush.bf16.msra.mxu0 %v7613
      %9284 = vmatpush.bf16.msra.mxu0 %v7609
      %9285 = vmatpush.bf16.msra.mxu0 %v7605
      %9286 = vmatpush.bf16.msra.mxu0 %v7601
      %9287 = vmatpush.bf16.msra.mxu0 %v7597
      %9288 = vmatpush.bf16.msra.mxu0 %v7593
      %9289 = vmatpush.bf16.msra.mxu0 %v7589
      %9290 = vmatpush.bf16.msra.mxu0 %v7585
      %9291 = vmatmul.bf16.gmra.mxu0 %v3584
      %v9292 = vpop.f32.mrf.mxu0
      %v9293 = vadd.f32 %v9280, %v9292
      %v9294 = vpop.f32.mrf.mxu0
      %9295 = vdwg.mxu0
      %9296 = vmatpush.bf16.msra.mxu0 %v7645
      %9297 = vmatpush.bf16.msra.mxu0 %v7641
      %9298 = vmatpush.bf16.msra.mxu0 %v7637
      %9299 = vmatpush.bf16.msra.mxu0 %v7633
      %9300 = vmatpush.bf16.msra.mxu0 %v7629
      %9301 = vmatpush.bf16.msra.mxu0 %v7625
      %9302 = vmatpush.bf16.msra.mxu0 %v7621
      %9303 = vmatpush.bf16.msra.mxu0 %v7617
      %9304 = vmatmul.bf16.gmra.mxu0 %v3585
      %v9305 = vpop.f32.mrf.mxu0
      %v9306 = vadd.f32 %v9293, %v9305
      %v9307 = vpop.f32.mrf.mxu0
      %9308 = vdwg.mxu0
      %9309 = vmatpush.bf16.msra.mxu0 %v7677
      %9310 = vmatpush.bf16.msra.mxu0 %v7673
      %9311 = vmatpush.bf16.msra.mxu0 %v7669
      %9312 = vmatpush.bf16.msra.mxu0 %v7665
      %9313 = vmatpush.bf16.msra.mxu0 %v7661
      %9314 = vmatpush.bf16.msra.mxu0 %v7657
      %9315 = vmatpush.bf16.msra.mxu0 %v7653
      %9316 = vmatpush.bf16.msra.mxu0 %v7649
      %9317 = vmatmul.bf16.gmra.mxu0 %v3586
      %v9318 = vpop.f32.mrf.mxu0
      %v9319 = vadd.f32 %v9306, %v9318
      %v9320 = vpop.f32.mrf.mxu0
      %9321 = vdwg.mxu0
      %9322 = vmatpush.bf16.msra.mxu0 %v7709
      %9323 = vmatpush.bf16.msra.mxu0 %v7705
      %9324 = vmatpush.bf16.msra.mxu0 %v7701
      %9325 = vmatpush.bf16.msra.mxu0 %v7697
      %9326 = vmatpush.bf16.msra.mxu0 %v7693
      %9327 = vmatpush.bf16.msra.mxu0 %v7689
      %9328 = vmatpush.bf16.msra.mxu0 %v7685
      %9329 = vmatpush.bf16.msra.mxu0 %v7681
      %9330 = vmatmul.bf16.gmra.mxu0 %v3587
      %v9331 = vpop.f32.mrf.mxu0
      %v9332 = vadd.f32 %v9319, %v9331
      %v9333 = vpop.f32.mrf.mxu0
      %9334 = vdwg.mxu0
      %9335 = vmatpush.bf16.msra.mxu0 %v7741
      %9336 = vmatpush.bf16.msra.mxu0 %v7737
      %9337 = vmatpush.bf16.msra.mxu0 %v7733
      %9338 = vmatpush.bf16.msra.mxu0 %v7729
      %9339 = vmatpush.bf16.msra.mxu0 %v7725
      %9340 = vmatpush.bf16.msra.mxu0 %v7721
      %9341 = vmatpush.bf16.msra.mxu0 %v7717
      %9342 = vmatpush.bf16.msra.mxu0 %v7713
      %9343 = vmatmul.bf16.gmra.mxu0 %v3588
      %v9344 = vpop.f32.mrf.mxu0
      %v9345 = vadd.f32 %v9332, %v9344
      %v9346 = vpop.f32.mrf.mxu0
      %9347 = vdwg.mxu0
      %9348 = vmatpush.bf16.msra.mxu0 %v7773
      %9349 = vmatpush.bf16.msra.mxu0 %v7769
      %9350 = vmatpush.bf16.msra.mxu0 %v7765
      %9351 = vmatpush.bf16.msra.mxu0 %v7761
      %9352 = vmatpush.bf16.msra.mxu0 %v7757
      %9353 = vmatpush.bf16.msra.mxu0 %v7753
      %9354 = vmatpush.bf16.msra.mxu0 %v7749
      %9355 = vmatpush.bf16.msra.mxu0 %v7745
      %9356 = vmatmul.bf16.gmra.mxu0 %v3589
      %v9357 = vpop.f32.mrf.mxu0
      %v9358 = vadd.f32 %v9345, %v9357
      %v9359 = vpop.f32.mrf.mxu0
      %9360 = vdwg.mxu0
      %9361 = vmatpush.bf16.msra.mxu0 %v7805
      %9362 = vmatpush.bf16.msra.mxu0 %v7801
      %9363 = vmatpush.bf16.msra.mxu0 %v7797
      %9364 = vmatpush.bf16.msra.mxu0 %v7793
      %9365 = vmatpush.bf16.msra.mxu0 %v7789
      %9366 = vmatpush.bf16.msra.mxu0 %v7785
      %9367 = vmatpush.bf16.msra.mxu0 %v7781
      %9368 = vmatpush.bf16.msra.mxu0 %v7777
      %9369 = vmatmul.bf16.gmra.mxu0 %v3590
      %v9370 = vpop.f32.mrf.mxu0
      %v9371 = vadd.f32 %v9358, %v9370
      %v9372 = vpop.f32.mrf.mxu0
      %9373 = vdwg.mxu0
      %9374 = vmatpush.bf16.msra.mxu0 0
      %9375 = vmatpush.bf16.msra.mxu0 0
      %9376 = vmatpush.bf16.msra.mxu0 0
      %9377 = vmatpush.bf16.msra.mxu0 0
      %9378 = vmatpush.bf16.msra.mxu0 %v8677
      %9379 = vmatpush.bf16.msra.mxu0 %v7817
      %9380 = vmatpush.bf16.msra.mxu0 %v7813
      %9381 = vmatpush.bf16.msra.mxu0 %v7809
      %9382 = vmatmul.bf16.gmra.mxu0 %v8670
      %v9383 = vpop.f32.mrf.mxu0
      %v9384 = vadd.f32 %v9371, %v9383
      %v9385 = vpop.f32.mrf.mxu0
      %9386 = vdwg.mxu0
      %9387 = vmatpush.bf16.msra.mxu0 %v7006
      %9388 = vmatpush.bf16.msra.mxu0 %v7002
      %9389 = vmatpush.bf16.msra.mxu0 %v6998
      %9390 = vmatpush.bf16.msra.mxu0 %v6994
      %9391 = vmatpush.bf16.msra.mxu0 %v6990
      %9392 = vmatpush.bf16.msra.mxu0 %v6986
      %9393 = vmatpush.bf16.msra.mxu0 %v6982
      %9394 = vmatpush.bf16.msra.mxu0 %v6978
      %9395 = vmatmul.bf16.gmra.mxu0 %v3565
      %v9396 = vpop.f32.mrf.mxu0
      %v9397 = vadd.f32 0.0, %v9396
      %v9398 = vpop.f32.mrf.mxu0
      %9399 = vdwg.mxu0
      %9400 = vmatpush.bf16.msra.mxu0 %v7038
      %9401 = vmatpush.bf16.msra.mxu0 %v7034
      %9402 = vmatpush.bf16.msra.mxu0 %v7030
      %9403 = vmatpush.bf16.msra.mxu0 %v7026
      %9404 = vmatpush.bf16.msra.mxu0 %v7022
      %9405 = vmatpush.bf16.msra.mxu0 %v7018
      %9406 = vmatpush.bf16.msra.mxu0 %v7014
      %9407 = vmatpush.bf16.msra.mxu0 %v7010
      %9408 = vmatmul.bf16.gmra.mxu0 %v3566
      %v9409 = vpop.f32.mrf.mxu0
      %v9410 = vadd.f32 %v9397, %v9409
      %v9411 = vpop.f32.mrf.mxu0
      %9412 = vdwg.mxu0
      %9413 = vmatpush.bf16.msra.mxu0 %v7070
      %9414 = vmatpush.bf16.msra.mxu0 %v7066
      %9415 = vmatpush.bf16.msra.mxu0 %v7062
      %9416 = vmatpush.bf16.msra.mxu0 %v7058
      %9417 = vmatpush.bf16.msra.mxu0 %v7054
      %9418 = vmatpush.bf16.msra.mxu0 %v7050
      %9419 = vmatpush.bf16.msra.mxu0 %v7046
      %9420 = vmatpush.bf16.msra.mxu0 %v7042
      %9421 = vmatmul.bf16.gmra.mxu0 %v3567
      %v9422 = vpop.f32.mrf.mxu0
      %v9423 = vadd.f32 %v9410, %v9422
      %v9424 = vpop.f32.mrf.mxu0
      %9425 = vdwg.mxu0
      %9426 = vmatpush.bf16.msra.mxu0 %v7102
      %9427 = vmatpush.bf16.msra.mxu0 %v7098
      %9428 = vmatpush.bf16.msra.mxu0 %v7094
      %9429 = vmatpush.bf16.msra.mxu0 %v7090
      %9430 = vmatpush.bf16.msra.mxu0 %v7086
      %9431 = vmatpush.bf16.msra.mxu0 %v7082
      %9432 = vmatpush.bf16.msra.mxu0 %v7078
      %9433 = vmatpush.bf16.msra.mxu0 %v7074
      %9434 = vmatmul.bf16.gmra.mxu0 %v3568
      %v9435 = vpop.f32.mrf.mxu0
      %v9436 = vadd.f32 %v9423, %v9435
      %v9437 = vpop.f32.mrf.mxu0
      %9438 = vdwg.mxu0
      %9439 = vmatpush.bf16.msra.mxu0 %v7134
      %9440 = vmatpush.bf16.msra.mxu0 %v7130
      %9441 = vmatpush.bf16.msra.mxu0 %v7126
      %9442 = vmatpush.bf16.msra.mxu0 %v7122
      %9443 = vmatpush.bf16.msra.mxu0 %v7118
      %9444 = vmatpush.bf16.msra.mxu0 %v7114
      %9445 = vmatpush.bf16.msra.mxu0 %v7110
      %9446 = vmatpush.bf16.msra.mxu0 %v7106
      %9447 = vmatmul.bf16.gmra.mxu0 %v3569
      %v9448 = vpop.f32.mrf.mxu0
      %v9449 = vadd.f32 %v9436, %v9448
      %v9450 = vpop.f32.mrf.mxu0
      %9451 = vdwg.mxu0
      %9452 = vmatpush.bf16.msra.mxu0 %v7166
      %9453 = vmatpush.bf16.msra.mxu0 %v7162
      %9454 = vmatpush.bf16.msra.mxu0 %v7158
      %9455 = vmatpush.bf16.msra.mxu0 %v7154
      %9456 = vmatpush.bf16.msra.mxu0 %v7150
      %9457 = vmatpush.bf16.msra.mxu0 %v7146
      %9458 = vmatpush.bf16.msra.mxu0 %v7142
      %9459 = vmatpush.bf16.msra.mxu0 %v7138
      %9460 = vmatmul.bf16.gmra.mxu0 %v3570
      %v9461 = vpop.f32.mrf.mxu0
      %v9462 = vadd.f32 %v9449, %v9461
      %v9463 = vpop.f32.mrf.mxu0
      %9464 = vdwg.mxu0
      %9465 = vmatpush.bf16.msra.mxu0 %v7198
      %9466 = vmatpush.bf16.msra.mxu0 %v7194
      %9467 = vmatpush.bf16.msra.mxu0 %v7190
      %9468 = vmatpush.bf16.msra.mxu0 %v7186
      %9469 = vmatpush.bf16.msra.mxu0 %v7182
      %9470 = vmatpush.bf16.msra.mxu0 %v7178
      %9471 = vmatpush.bf16.msra.mxu0 %v7174
      %9472 = vmatpush.bf16.msra.mxu0 %v7170
      %9473 = vmatmul.bf16.gmra.mxu0 %v3571
      %v9474 = vpop.f32.mrf.mxu0
      %v9475 = vadd.f32 %v9462, %v9474
      %v9476 = vpop.f32.mrf.mxu0
      %9477 = vdwg.mxu0
      %9478 = vmatpush.bf16.msra.mxu0 %v7230
      %9479 = vmatpush.bf16.msra.mxu0 %v7226
      %9480 = vmatpush.bf16.msra.mxu0 %v7222
      %9481 = vmatpush.bf16.msra.mxu0 %v7218
      %9482 = vmatpush.bf16.msra.mxu0 %v7214
      %9483 = vmatpush.bf16.msra.mxu0 %v7210
      %9484 = vmatpush.bf16.msra.mxu0 %v7206
      %9485 = vmatpush.bf16.msra.mxu0 %v7202
      %9486 = vmatmul.bf16.gmra.mxu0 %v3572
      %v9487 = vpop.f32.mrf.mxu0
      %v9488 = vadd.f32 %v9475, %v9487
      %v9489 = vpop.f32.mrf.mxu0
      %9490 = vdwg.mxu0
      %9491 = vmatpush.bf16.msra.mxu0 %v7262
      %9492 = vmatpush.bf16.msra.mxu0 %v7258
      %9493 = vmatpush.bf16.msra.mxu0 %v7254
      %9494 = vmatpush.bf16.msra.mxu0 %v7250
      %9495 = vmatpush.bf16.msra.mxu0 %v7246
      %9496 = vmatpush.bf16.msra.mxu0 %v7242
      %9497 = vmatpush.bf16.msra.mxu0 %v7238
      %9498 = vmatpush.bf16.msra.mxu0 %v7234
      %9499 = vmatmul.bf16.gmra.mxu0 %v3573
      %v9500 = vpop.f32.mrf.mxu0
      %v9501 = vadd.f32 %v9488, %v9500
      %v9502 = vpop.f32.mrf.mxu0
      %9503 = vdwg.mxu0
      %9504 = vmatpush.bf16.msra.mxu0 %v7294
      %9505 = vmatpush.bf16.msra.mxu0 %v7290
      %9506 = vmatpush.bf16.msra.mxu0 %v7286
      %9507 = vmatpush.bf16.msra.mxu0 %v7282
      %9508 = vmatpush.bf16.msra.mxu0 %v7278
      %9509 = vmatpush.bf16.msra.mxu0 %v7274
      %9510 = vmatpush.bf16.msra.mxu0 %v7270
      %9511 = vmatpush.bf16.msra.mxu0 %v7266
      %9512 = vmatmul.bf16.gmra.mxu0 %v3574
      %v9513 = vpop.f32.mrf.mxu0
      %v9514 = vadd.f32 %v9501, %v9513
      %v9515 = vpop.f32.mrf.mxu0
      %9516 = vdwg.mxu0
      %9517 = vmatpush.bf16.msra.mxu0 %v7326
      %9518 = vmatpush.bf16.msra.mxu0 %v7322
      %9519 = vmatpush.bf16.msra.mxu0 %v7318
      %9520 = vmatpush.bf16.msra.mxu0 %v7314
      %9521 = vmatpush.bf16.msra.mxu0 %v7310
      %9522 = vmatpush.bf16.msra.mxu0 %v7306
      %9523 = vmatpush.bf16.msra.mxu0 %v7302
      %9524 = vmatpush.bf16.msra.mxu0 %v7298
      %9525 = vmatmul.bf16.gmra.mxu0 %v3575
      %v9526 = vpop.f32.mrf.mxu0
      %v9527 = vadd.f32 %v9514, %v9526
      %v9528 = vpop.f32.mrf.mxu0
      %9529 = vdwg.mxu0
      %9530 = vmatpush.bf16.msra.mxu0 %v7358
      %9531 = vmatpush.bf16.msra.mxu0 %v7354
      %9532 = vmatpush.bf16.msra.mxu0 %v7350
      %9533 = vmatpush.bf16.msra.mxu0 %v7346
      %9534 = vmatpush.bf16.msra.mxu0 %v7342
      %9535 = vmatpush.bf16.msra.mxu0 %v7338
      %9536 = vmatpush.bf16.msra.mxu0 %v7334
      %9537 = vmatpush.bf16.msra.mxu0 %v7330
      %9538 = vmatmul.bf16.gmra.mxu0 %v3576
      %v9539 = vpop.f32.mrf.mxu0
      %v9540 = vadd.f32 %v9527, %v9539
      %v9541 = vpop.f32.mrf.mxu0
      %9542 = vdwg.mxu0
      %9543 = vmatpush.bf16.msra.mxu0 %v7390
      %9544 = vmatpush.bf16.msra.mxu0 %v7386
      %9545 = vmatpush.bf16.msra.mxu0 %v7382
      %9546 = vmatpush.bf16.msra.mxu0 %v7378
      %9547 = vmatpush.bf16.msra.mxu0 %v7374
      %9548 = vmatpush.bf16.msra.mxu0 %v7370
      %9549 = vmatpush.bf16.msra.mxu0 %v7366
      %9550 = vmatpush.bf16.msra.mxu0 %v7362
      %9551 = vmatmul.bf16.gmra.mxu0 %v3577
      %v9552 = vpop.f32.mrf.mxu0
      %v9553 = vadd.f32 %v9540, %v9552
      %v9554 = vpop.f32.mrf.mxu0
      %9555 = vdwg.mxu0
      %9556 = vmatpush.bf16.msra.mxu0 %v7422
      %9557 = vmatpush.bf16.msra.mxu0 %v7418
      %9558 = vmatpush.bf16.msra.mxu0 %v7414
      %9559 = vmatpush.bf16.msra.mxu0 %v7410
      %9560 = vmatpush.bf16.msra.mxu0 %v7406
      %9561 = vmatpush.bf16.msra.mxu0 %v7402
      %9562 = vmatpush.bf16.msra.mxu0 %v7398
      %9563 = vmatpush.bf16.msra.mxu0 %v7394
      %9564 = vmatmul.bf16.gmra.mxu0 %v3578
      %v9565 = vpop.f32.mrf.mxu0
      %v9566 = vadd.f32 %v9553, %v9565
      %v9567 = vpop.f32.mrf.mxu0
      %9568 = vdwg.mxu0
      %9569 = vmatpush.bf16.msra.mxu0 %v7454
      %9570 = vmatpush.bf16.msra.mxu0 %v7450
      %9571 = vmatpush.bf16.msra.mxu0 %v7446
      %9572 = vmatpush.bf16.msra.mxu0 %v7442
      %9573 = vmatpush.bf16.msra.mxu0 %v7438
      %9574 = vmatpush.bf16.msra.mxu0 %v7434
      %9575 = vmatpush.bf16.msra.mxu0 %v7430
      %9576 = vmatpush.bf16.msra.mxu0 %v7426
      %9577 = vmatmul.bf16.gmra.mxu0 %v3579
      %v9578 = vpop.f32.mrf.mxu0
      %v9579 = vadd.f32 %v9566, %v9578
      %v9580 = vpop.f32.mrf.mxu0
      %9581 = vdwg.mxu0
      %9582 = vmatpush.bf16.msra.mxu0 %v7486
      %9583 = vmatpush.bf16.msra.mxu0 %v7482
      %9584 = vmatpush.bf16.msra.mxu0 %v7478
      %9585 = vmatpush.bf16.msra.mxu0 %v7474
      %9586 = vmatpush.bf16.msra.mxu0 %v7470
      %9587 = vmatpush.bf16.msra.mxu0 %v7466
      %9588 = vmatpush.bf16.msra.mxu0 %v7462
      %9589 = vmatpush.bf16.msra.mxu0 %v7458
      %9590 = vmatmul.bf16.gmra.mxu0 %v3580
      %v9591 = vpop.f32.mrf.mxu0
      %v9592 = vadd.f32 %v9579, %v9591
      %v9593 = vpop.f32.mrf.mxu0
      %9594 = vdwg.mxu0
      %9595 = vmatpush.bf16.msra.mxu0 %v7518
      %9596 = vmatpush.bf16.msra.mxu0 %v7514
      %9597 = vmatpush.bf16.msra.mxu0 %v7510
      %9598 = vmatpush.bf16.msra.mxu0 %v7506
      %9599 = vmatpush.bf16.msra.mxu0 %v7502
      %9600 = vmatpush.bf16.msra.mxu0 %v7498
      %9601 = vmatpush.bf16.msra.mxu0 %v7494
      %9602 = vmatpush.bf16.msra.mxu0 %v7490
      %9603 = vmatmul.bf16.gmra.mxu0 %v3581
      %v9604 = vpop.f32.mrf.mxu0
      %v9605 = vadd.f32 %v9592, %v9604
      %v9606 = vpop.f32.mrf.mxu0
      %9607 = vdwg.mxu0
      %9608 = vmatpush.bf16.msra.mxu0 %v7550
      %9609 = vmatpush.bf16.msra.mxu0 %v7546
      %9610 = vmatpush.bf16.msra.mxu0 %v7542
      %9611 = vmatpush.bf16.msra.mxu0 %v7538
      %9612 = vmatpush.bf16.msra.mxu0 %v7534
      %9613 = vmatpush.bf16.msra.mxu0 %v7530
      %9614 = vmatpush.bf16.msra.mxu0 %v7526
      %9615 = vmatpush.bf16.msra.mxu0 %v7522
      %9616 = vmatmul.bf16.gmra.mxu0 %v3582
      %v9617 = vpop.f32.mrf.mxu0
      %v9618 = vadd.f32 %v9605, %v9617
      %v9619 = vpop.f32.mrf.mxu0
      %9620 = vdwg.mxu0
      %9621 = vmatpush.bf16.msra.mxu0 %v7582
      %9622 = vmatpush.bf16.msra.mxu0 %v7578
      %9623 = vmatpush.bf16.msra.mxu0 %v7574
      %9624 = vmatpush.bf16.msra.mxu0 %v7570
      %9625 = vmatpush.bf16.msra.mxu0 %v7566
      %9626 = vmatpush.bf16.msra.mxu0 %v7562
      %9627 = vmatpush.bf16.msra.mxu0 %v7558
      %9628 = vmatpush.bf16.msra.mxu0 %v7554
      %9629 = vmatmul.bf16.gmra.mxu0 %v3583
      %v9630 = vpop.f32.mrf.mxu0
      %v9631 = vadd.f32 %v9618, %v9630
      %v9632 = vpop.f32.mrf.mxu0
      %9633 = vdwg.mxu0
      %9634 = vmatpush.bf16.msra.mxu0 %v7614
      %9635 = vmatpush.bf16.msra.mxu0 %v7610
      %9636 = vmatpush.bf16.msra.mxu0 %v7606
      %9637 = vmatpush.bf16.msra.mxu0 %v7602
      %9638 = vmatpush.bf16.msra.mxu0 %v7598
      %9639 = vmatpush.bf16.msra.mxu0 %v7594
      %9640 = vmatpush.bf16.msra.mxu0 %v7590
      %9641 = vmatpush.bf16.msra.mxu0 %v7586
      %9642 = vmatmul.bf16.gmra.mxu0 %v3584
      %v9643 = vpop.f32.mrf.mxu0
      %v9644 = vadd.f32 %v9631, %v9643
      %v9645 = vpop.f32.mrf.mxu0
      %9646 = vdwg.mxu0
      %9647 = vmatpush.bf16.msra.mxu0 %v7646
      %9648 = vmatpush.bf16.msra.mxu0 %v7642
      %9649 = vmatpush.bf16.msra.mxu0 %v7638
      %9650 = vmatpush.bf16.msra.mxu0 %v7634
      %9651 = vmatpush.bf16.msra.mxu0 %v7630
      %9652 = vmatpush.bf16.msra.mxu0 %v7626
      %9653 = vmatpush.bf16.msra.mxu0 %v7622
      %9654 = vmatpush.bf16.msra.mxu0 %v7618
      %9655 = vmatmul.bf16.gmra.mxu0 %v3585
      %v9656 = vpop.f32.mrf.mxu0
      %v9657 = vadd.f32 %v9644, %v9656
      %v9658 = vpop.f32.mrf.mxu0
      %9659 = vdwg.mxu0
      %9660 = vmatpush.bf16.msra.mxu0 %v7678
      %9661 = vmatpush.bf16.msra.mxu0 %v7674
      %9662 = vmatpush.bf16.msra.mxu0 %v7670
      %9663 = vmatpush.bf16.msra.mxu0 %v7666
      %9664 = vmatpush.bf16.msra.mxu0 %v7662
      %9665 = vmatpush.bf16.msra.mxu0 %v7658
      %9666 = vmatpush.bf16.msra.mxu0 %v7654
      %9667 = vmatpush.bf16.msra.mxu0 %v7650
      %9668 = vmatmul.bf16.gmra.mxu0 %v3586
      %v9669 = vpop.f32.mrf.mxu0
      %v9670 = vadd.f32 %v9657, %v9669
      %v9671 = vpop.f32.mrf.mxu0
      %9672 = vdwg.mxu0
      %9673 = vmatpush.bf16.msra.mxu0 %v7710
      %9674 = vmatpush.bf16.msra.mxu0 %v7706
      %9675 = vmatpush.bf16.msra.mxu0 %v7702
      %9676 = vmatpush.bf16.msra.mxu0 %v7698
      %9677 = vmatpush.bf16.msra.mxu0 %v7694
      %9678 = vmatpush.bf16.msra.mxu0 %v7690
      %9679 = vmatpush.bf16.msra.mxu0 %v7686
      %9680 = vmatpush.bf16.msra.mxu0 %v7682
      %9681 = vmatmul.bf16.gmra.mxu0 %v3587
      %v9682 = vpop.f32.mrf.mxu0
      %v9683 = vadd.f32 %v9670, %v9682
      %v9684 = vpop.f32.mrf.mxu0
      %9685 = vdwg.mxu0
      %9686 = vmatpush.bf16.msra.mxu0 %v7742
      %9687 = vmatpush.bf16.msra.mxu0 %v7738
      %9688 = vmatpush.bf16.msra.mxu0 %v7734
      %9689 = vmatpush.bf16.msra.mxu0 %v7730
      %9690 = vmatpush.bf16.msra.mxu0 %v7726
      %9691 = vmatpush.bf16.msra.mxu0 %v7722
      %9692 = vmatpush.bf16.msra.mxu0 %v7718
      %9693 = vmatpush.bf16.msra.mxu0 %v7714
      %9694 = vmatmul.bf16.gmra.mxu0 %v3588
      %v9695 = vpop.f32.mrf.mxu0
      %v9696 = vadd.f32 %v9683, %v9695
      %v9697 = vpop.f32.mrf.mxu0
      %9698 = vdwg.mxu0
      %9699 = vmatpush.bf16.msra.mxu0 %v7774
      %9700 = vmatpush.bf16.msra.mxu0 %v7770
      %9701 = vmatpush.bf16.msra.mxu0 %v7766
      %9702 = vmatpush.bf16.msra.mxu0 %v7762
      %9703 = vmatpush.bf16.msra.mxu0 %v7758
      %9704 = vmatpush.bf16.msra.mxu0 %v7754
      %9705 = vmatpush.bf16.msra.mxu0 %v7750
      %9706 = vmatpush.bf16.msra.mxu0 %v7746
      %9707 = vmatmul.bf16.gmra.mxu0 %v3589
      %v9708 = vpop.f32.mrf.mxu0
      %v9709 = vadd.f32 %v9696, %v9708
      %v9710 = vpop.f32.mrf.mxu0
      %9711 = vdwg.mxu0
      %9712 = vmatpush.bf16.msra.mxu0 %v7806
      %9713 = vmatpush.bf16.msra.mxu0 %v7802
      %9714 = vmatpush.bf16.msra.mxu0 %v7798
      %9715 = vmatpush.bf16.msra.mxu0 %v7794
      %9716 = vmatpush.bf16.msra.mxu0 %v7790
      %9717 = vmatpush.bf16.msra.mxu0 %v7786
      %9718 = vmatpush.bf16.msra.mxu0 %v7782
      %9719 = vmatpush.bf16.msra.mxu0 %v7778
      %9720 = vmatmul.bf16.gmra.mxu0 %v3590
      %v9721 = vpop.f32.mrf.mxu0
      %v9722 = vadd.f32 %v9709, %v9721
      %v9723 = vpop.f32.mrf.mxu0
      %9724 = vdwg.mxu0
      %9725 = vmatpush.bf16.msra.mxu0 0
      %9726 = vmatpush.bf16.msra.mxu0 0
      %9727 = vmatpush.bf16.msra.mxu0 0
      %9728 = vmatpush.bf16.msra.mxu0 0
      %9729 = vmatpush.bf16.msra.mxu0 %v8680
      %9730 = vmatpush.bf16.msra.mxu0 %v7818
      %9731 = vmatpush.bf16.msra.mxu0 %v7814
      %9732 = vmatpush.bf16.msra.mxu0 %v7810
      %9733 = vmatmul.bf16.gmra.mxu0 %v8670
      %v9734 = vpop.f32.mrf.mxu0
      %v9735 = vadd.f32 %v9722, %v9734
      %v9736 = vpop.f32.mrf.mxu0
      %9737 = vdwg.mxu0
      %9738 = vmatpush.bf16.msra.mxu0 %v7007
      %9739 = vmatpush.bf16.msra.mxu0 %v7003
      %9740 = vmatpush.bf16.msra.mxu0 %v6999
      %9741 = vmatpush.bf16.msra.mxu0 %v6995
      %9742 = vmatpush.bf16.msra.mxu0 %v6991
      %9743 = vmatpush.bf16.msra.mxu0 %v6987
      %9744 = vmatpush.bf16.msra.mxu0 %v6983
      %9745 = vmatpush.bf16.msra.mxu0 %v6979
      %9746 = vmatmul.bf16.gmra.mxu0 %v3565
      %v9747 = vpop.f32.mrf.mxu0
      %v9748 = vadd.f32 0.0, %v9747
      %v9749 = vpop.f32.mrf.mxu0
      %9750 = vdwg.mxu0
      %9751 = vmatpush.bf16.msra.mxu0 %v7039
      %9752 = vmatpush.bf16.msra.mxu0 %v7035
      %9753 = vmatpush.bf16.msra.mxu0 %v7031
      %9754 = vmatpush.bf16.msra.mxu0 %v7027
      %9755 = vmatpush.bf16.msra.mxu0 %v7023
      %9756 = vmatpush.bf16.msra.mxu0 %v7019
      %9757 = vmatpush.bf16.msra.mxu0 %v7015
      %9758 = vmatpush.bf16.msra.mxu0 %v7011
      %9759 = vmatmul.bf16.gmra.mxu0 %v3566
      %v9760 = vpop.f32.mrf.mxu0
      %v9761 = vadd.f32 %v9748, %v9760
      %v9762 = vpop.f32.mrf.mxu0
      %9763 = vdwg.mxu0
      %9764 = vmatpush.bf16.msra.mxu0 %v7071
      %9765 = vmatpush.bf16.msra.mxu0 %v7067
      %9766 = vmatpush.bf16.msra.mxu0 %v7063
      %9767 = vmatpush.bf16.msra.mxu0 %v7059
      %9768 = vmatpush.bf16.msra.mxu0 %v7055
      %9769 = vmatpush.bf16.msra.mxu0 %v7051
      %9770 = vmatpush.bf16.msra.mxu0 %v7047
      %9771 = vmatpush.bf16.msra.mxu0 %v7043
      %9772 = vmatmul.bf16.gmra.mxu0 %v3567
      %v9773 = vpop.f32.mrf.mxu0
      %v9774 = vadd.f32 %v9761, %v9773
      %v9775 = vpop.f32.mrf.mxu0
      %9776 = vdwg.mxu0
      %9777 = vmatpush.bf16.msra.mxu0 %v7103
      %9778 = vmatpush.bf16.msra.mxu0 %v7099
      %9779 = vmatpush.bf16.msra.mxu0 %v7095
      %9780 = vmatpush.bf16.msra.mxu0 %v7091
      %9781 = vmatpush.bf16.msra.mxu0 %v7087
      %9782 = vmatpush.bf16.msra.mxu0 %v7083
      %9783 = vmatpush.bf16.msra.mxu0 %v7079
      %9784 = vmatpush.bf16.msra.mxu0 %v7075
      %9785 = vmatmul.bf16.gmra.mxu0 %v3568
      %v9786 = vpop.f32.mrf.mxu0
      %v9787 = vadd.f32 %v9774, %v9786
      %v9788 = vpop.f32.mrf.mxu0
      %9789 = vdwg.mxu0
      %9790 = vmatpush.bf16.msra.mxu0 %v7135
      %9791 = vmatpush.bf16.msra.mxu0 %v7131
      %9792 = vmatpush.bf16.msra.mxu0 %v7127
      %9793 = vmatpush.bf16.msra.mxu0 %v7123
      %9794 = vmatpush.bf16.msra.mxu0 %v7119
      %9795 = vmatpush.bf16.msra.mxu0 %v7115
      %9796 = vmatpush.bf16.msra.mxu0 %v7111
      %9797 = vmatpush.bf16.msra.mxu0 %v7107
      %9798 = vmatmul.bf16.gmra.mxu0 %v3569
      %v9799 = vpop.f32.mrf.mxu0
      %v9800 = vadd.f32 %v9787, %v9799
      %v9801 = vpop.f32.mrf.mxu0
      %9802 = vdwg.mxu0
      %9803 = vmatpush.bf16.msra.mxu0 %v7167
      %9804 = vmatpush.bf16.msra.mxu0 %v7163
      %9805 = vmatpush.bf16.msra.mxu0 %v7159
      %9806 = vmatpush.bf16.msra.mxu0 %v7155
      %9807 = vmatpush.bf16.msra.mxu0 %v7151
      %9808 = vmatpush.bf16.msra.mxu0 %v7147
      %9809 = vmatpush.bf16.msra.mxu0 %v7143
      %9810 = vmatpush.bf16.msra.mxu0 %v7139
      %9811 = vmatmul.bf16.gmra.mxu0 %v3570
      %v9812 = vpop.f32.mrf.mxu0
      %v9813 = vadd.f32 %v9800, %v9812
      %v9814 = vpop.f32.mrf.mxu0
      %9815 = vdwg.mxu0
      %9816 = vmatpush.bf16.msra.mxu0 %v7199
      %9817 = vmatpush.bf16.msra.mxu0 %v7195
      %9818 = vmatpush.bf16.msra.mxu0 %v7191
      %9819 = vmatpush.bf16.msra.mxu0 %v7187
      %9820 = vmatpush.bf16.msra.mxu0 %v7183
      %9821 = vmatpush.bf16.msra.mxu0 %v7179
      %9822 = vmatpush.bf16.msra.mxu0 %v7175
      %9823 = vmatpush.bf16.msra.mxu0 %v7171
      %9824 = vmatmul.bf16.gmra.mxu0 %v3571
      %v9825 = vpop.f32.mrf.mxu0
      %v9826 = vadd.f32 %v9813, %v9825
      %v9827 = vpop.f32.mrf.mxu0
      %9828 = vdwg.mxu0
      %9829 = vmatpush.bf16.msra.mxu0 %v7231
      %9830 = vmatpush.bf16.msra.mxu0 %v7227
      %9831 = vmatpush.bf16.msra.mxu0 %v7223
      %9832 = vmatpush.bf16.msra.mxu0 %v7219
      %9833 = vmatpush.bf16.msra.mxu0 %v7215
      %9834 = vmatpush.bf16.msra.mxu0 %v7211
      %9835 = vmatpush.bf16.msra.mxu0 %v7207
      %9836 = vmatpush.bf16.msra.mxu0 %v7203
      %9837 = vmatmul.bf16.gmra.mxu0 %v3572
      %v9838 = vpop.f32.mrf.mxu0
      %v9839 = vadd.f32 %v9826, %v9838
      %v9840 = vpop.f32.mrf.mxu0
      %9841 = vdwg.mxu0
      %9842 = vmatpush.bf16.msra.mxu0 %v7263
      %9843 = vmatpush.bf16.msra.mxu0 %v7259
      %9844 = vmatpush.bf16.msra.mxu0 %v7255
      %9845 = vmatpush.bf16.msra.mxu0 %v7251
      %9846 = vmatpush.bf16.msra.mxu0 %v7247
      %9847 = vmatpush.bf16.msra.mxu0 %v7243
      %9848 = vmatpush.bf16.msra.mxu0 %v7239
      %9849 = vmatpush.bf16.msra.mxu0 %v7235
      %9850 = vmatmul.bf16.gmra.mxu0 %v3573
      %v9851 = vpop.f32.mrf.mxu0
      %v9852 = vadd.f32 %v9839, %v9851
      %v9853 = vpop.f32.mrf.mxu0
      %9854 = vdwg.mxu0
      %9855 = vmatpush.bf16.msra.mxu0 %v7295
      %9856 = vmatpush.bf16.msra.mxu0 %v7291
      %9857 = vmatpush.bf16.msra.mxu0 %v7287
      %9858 = vmatpush.bf16.msra.mxu0 %v7283
      %9859 = vmatpush.bf16.msra.mxu0 %v7279
      %9860 = vmatpush.bf16.msra.mxu0 %v7275
      %9861 = vmatpush.bf16.msra.mxu0 %v7271
      %9862 = vmatpush.bf16.msra.mxu0 %v7267
      %9863 = vmatmul.bf16.gmra.mxu0 %v3574
      %v9864 = vpop.f32.mrf.mxu0
      %v9865 = vadd.f32 %v9852, %v9864
      %v9866 = vpop.f32.mrf.mxu0
      %9867 = vdwg.mxu0
      %9868 = vmatpush.bf16.msra.mxu0 %v7327
      %9869 = vmatpush.bf16.msra.mxu0 %v7323
      %9870 = vmatpush.bf16.msra.mxu0 %v7319
      %9871 = vmatpush.bf16.msra.mxu0 %v7315
      %9872 = vmatpush.bf16.msra.mxu0 %v7311
      %9873 = vmatpush.bf16.msra.mxu0 %v7307
      %9874 = vmatpush.bf16.msra.mxu0 %v7303
      %9875 = vmatpush.bf16.msra.mxu0 %v7299
      %9876 = vmatmul.bf16.gmra.mxu0 %v3575
      %v9877 = vpop.f32.mrf.mxu0
      %v9878 = vadd.f32 %v9865, %v9877
      %v9879 = vpop.f32.mrf.mxu0
      %9880 = vdwg.mxu0
      %9881 = vmatpush.bf16.msra.mxu0 %v7359
      %9882 = vmatpush.bf16.msra.mxu0 %v7355
      %9883 = vmatpush.bf16.msra.mxu0 %v7351
      %9884 = vmatpush.bf16.msra.mxu0 %v7347
      %9885 = vmatpush.bf16.msra.mxu0 %v7343
      %9886 = vmatpush.bf16.msra.mxu0 %v7339
      %9887 = vmatpush.bf16.msra.mxu0 %v7335
      %9888 = vmatpush.bf16.msra.mxu0 %v7331
      %9889 = vmatmul.bf16.gmra.mxu0 %v3576
      %v9890 = vpop.f32.mrf.mxu0
      %v9891 = vadd.f32 %v9878, %v9890
      %v9892 = vpop.f32.mrf.mxu0
      %9893 = vdwg.mxu0
      %9894 = vmatpush.bf16.msra.mxu0 %v7391
      %9895 = vmatpush.bf16.msra.mxu0 %v7387
      %9896 = vmatpush.bf16.msra.mxu0 %v7383
      %9897 = vmatpush.bf16.msra.mxu0 %v7379
      %9898 = vmatpush.bf16.msra.mxu0 %v7375
      %9899 = vmatpush.bf16.msra.mxu0 %v7371
      %9900 = vmatpush.bf16.msra.mxu0 %v7367
      %9901 = vmatpush.bf16.msra.mxu0 %v7363
      %9902 = vmatmul.bf16.gmra.mxu0 %v3577
      %v9903 = vpop.f32.mrf.mxu0
      %v9904 = vadd.f32 %v9891, %v9903
      %v9905 = vpop.f32.mrf.mxu0
      %9906 = vdwg.mxu0
      %9907 = vmatpush.bf16.msra.mxu0 %v7423
      %9908 = vmatpush.bf16.msra.mxu0 %v7419
      %9909 = vmatpush.bf16.msra.mxu0 %v7415
      %9910 = vmatpush.bf16.msra.mxu0 %v7411
      %9911 = vmatpush.bf16.msra.mxu0 %v7407
      %9912 = vmatpush.bf16.msra.mxu0 %v7403
      %9913 = vmatpush.bf16.msra.mxu0 %v7399
      %9914 = vmatpush.bf16.msra.mxu0 %v7395
      %9915 = vmatmul.bf16.gmra.mxu0 %v3578
      %v9916 = vpop.f32.mrf.mxu0
      %v9917 = vadd.f32 %v9904, %v9916
      %v9918 = vpop.f32.mrf.mxu0
      %9919 = vdwg.mxu0
      %9920 = vmatpush.bf16.msra.mxu0 %v7455
      %9921 = vmatpush.bf16.msra.mxu0 %v7451
      %9922 = vmatpush.bf16.msra.mxu0 %v7447
      %9923 = vmatpush.bf16.msra.mxu0 %v7443
      %9924 = vmatpush.bf16.msra.mxu0 %v7439
      %9925 = vmatpush.bf16.msra.mxu0 %v7435
      %9926 = vmatpush.bf16.msra.mxu0 %v7431
      %9927 = vmatpush.bf16.msra.mxu0 %v7427
      %9928 = vmatmul.bf16.gmra.mxu0 %v3579
      %v9929 = vpop.f32.mrf.mxu0
      %v9930 = vadd.f32 %v9917, %v9929
      %v9931 = vpop.f32.mrf.mxu0
      %9932 = vdwg.mxu0
      %9933 = vmatpush.bf16.msra.mxu0 %v7487
      %9934 = vmatpush.bf16.msra.mxu0 %v7483
      %9935 = vmatpush.bf16.msra.mxu0 %v7479
      %9936 = vmatpush.bf16.msra.mxu0 %v7475
      %9937 = vmatpush.bf16.msra.mxu0 %v7471
      %9938 = vmatpush.bf16.msra.mxu0 %v7467
      %9939 = vmatpush.bf16.msra.mxu0 %v7463
      %9940 = vmatpush.bf16.msra.mxu0 %v7459
      %9941 = vmatmul.bf16.gmra.mxu0 %v3580
      %v9942 = vpop.f32.mrf.mxu0
      %v9943 = vadd.f32 %v9930, %v9942
      %v9944 = vpop.f32.mrf.mxu0
      %9945 = vdwg.mxu0
      %9946 = vmatpush.bf16.msra.mxu0 %v7519
      %9947 = vmatpush.bf16.msra.mxu0 %v7515
      %9948 = vmatpush.bf16.msra.mxu0 %v7511
      %9949 = vmatpush.bf16.msra.mxu0 %v7507
      %9950 = vmatpush.bf16.msra.mxu0 %v7503
      %9951 = vmatpush.bf16.msra.mxu0 %v7499
      %9952 = vmatpush.bf16.msra.mxu0 %v7495
      %9953 = vmatpush.bf16.msra.mxu0 %v7491
      %9954 = vmatmul.bf16.gmra.mxu0 %v3581
      %v9955 = vpop.f32.mrf.mxu0
      %v9956 = vadd.f32 %v9943, %v9955
      %v9957 = vpop.f32.mrf.mxu0
      %9958 = vdwg.mxu0
      %9959 = vmatpush.bf16.msra.mxu0 %v7551
      %9960 = vmatpush.bf16.msra.mxu0 %v7547
      %9961 = vmatpush.bf16.msra.mxu0 %v7543
      %9962 = vmatpush.bf16.msra.mxu0 %v7539
      %9963 = vmatpush.bf16.msra.mxu0 %v7535
      %9964 = vmatpush.bf16.msra.mxu0 %v7531
      %9965 = vmatpush.bf16.msra.mxu0 %v7527
      %9966 = vmatpush.bf16.msra.mxu0 %v7523
      %9967 = vmatmul.bf16.gmra.mxu0 %v3582
      %v9968 = vpop.f32.mrf.mxu0
      %v9969 = vadd.f32 %v9956, %v9968
      %v9970 = vpop.f32.mrf.mxu0
      %9971 = vdwg.mxu0
      %9972 = vmatpush.bf16.msra.mxu0 %v7583
      %9973 = vmatpush.bf16.msra.mxu0 %v7579
      %9974 = vmatpush.bf16.msra.mxu0 %v7575
      %9975 = vmatpush.bf16.msra.mxu0 %v7571
      %9976 = vmatpush.bf16.msra.mxu0 %v7567
      %9977 = vmatpush.bf16.msra.mxu0 %v7563
      %9978 = vmatpush.bf16.msra.mxu0 %v7559
      %9979 = vmatpush.bf16.msra.mxu0 %v7555
      %9980 = vmatmul.bf16.gmra.mxu0 %v3583
      %v9981 = vpop.f32.mrf.mxu0
      %v9982 = vadd.f32 %v9969, %v9981
      %v9983 = vpop.f32.mrf.mxu0
      %9984 = vdwg.mxu0
      %9985 = vmatpush.bf16.msra.mxu0 %v7615
      %9986 = vmatpush.bf16.msra.mxu0 %v7611
      %9987 = vmatpush.bf16.msra.mxu0 %v7607
      %9988 = vmatpush.bf16.msra.mxu0 %v7603
      %9989 = vmatpush.bf16.msra.mxu0 %v7599
      %9990 = vmatpush.bf16.msra.mxu0 %v7595
      %9991 = vmatpush.bf16.msra.mxu0 %v7591
      %9992 = vmatpush.bf16.msra.mxu0 %v7587
      %9993 = vmatmul.bf16.gmra.mxu0 %v3584
      %v9994 = vpop.f32.mrf.mxu0
      %v9995 = vadd.f32 %v9982, %v9994
      %v9996 = vpop.f32.mrf.mxu0
      %9997 = vdwg.mxu0
      %9998 = vmatpush.bf16.msra.mxu0 %v7647
      %9999 = vmatpush.bf16.msra.mxu0 %v7643
      %10000 = vmatpush.bf16.msra.mxu0 %v7639
      %10001 = vmatpush.bf16.msra.mxu0 %v7635
      %10002 = vmatpush.bf16.msra.mxu0 %v7631
      %10003 = vmatpush.bf16.msra.mxu0 %v7627
      %10004 = vmatpush.bf16.msra.mxu0 %v7623
      %10005 = vmatpush.bf16.msra.mxu0 %v7619
      %10006 = vmatmul.bf16.gmra.mxu0 %v3585
      %v10007 = vpop.f32.mrf.mxu0
      %v10008 = vadd.f32 %v9995, %v10007
      %v10009 = vpop.f32.mrf.mxu0
      %10010 = vdwg.mxu0
      %10011 = vmatpush.bf16.msra.mxu0 %v7679
      %10012 = vmatpush.bf16.msra.mxu0 %v7675
      %10013 = vmatpush.bf16.msra.mxu0 %v7671
      %10014 = vmatpush.bf16.msra.mxu0 %v7667
      %10015 = vmatpush.bf16.msra.mxu0 %v7663
      %10016 = vmatpush.bf16.msra.mxu0 %v7659
      %10017 = vmatpush.bf16.msra.mxu0 %v7655
      %10018 = vmatpush.bf16.msra.mxu0 %v7651
      %10019 = vmatmul.bf16.gmra.mxu0 %v3586
      %v10020 = vpop.f32.mrf.mxu0
      %v10021 = vadd.f32 %v10008, %v10020
      %v10022 = vpop.f32.mrf.mxu0
      %10023 = vdwg.mxu0
      %10024 = vmatpush.bf16.msra.mxu0 %v7711
      %10025 = vmatpush.bf16.msra.mxu0 %v7707
      %10026 = vmatpush.bf16.msra.mxu0 %v7703
      %10027 = vmatpush.bf16.msra.mxu0 %v7699
      %10028 = vmatpush.bf16.msra.mxu0 %v7695
      %10029 = vmatpush.bf16.msra.mxu0 %v7691
      %10030 = vmatpush.bf16.msra.mxu0 %v7687
      %10031 = vmatpush.bf16.msra.mxu0 %v7683
      %10032 = vmatmul.bf16.gmra.mxu0 %v3587
      %v10033 = vpop.f32.mrf.mxu0
      %v10034 = vadd.f32 %v10021, %v10033
      %v10035 = vpop.f32.mrf.mxu0
      %10036 = vdwg.mxu0
      %10037 = vmatpush.bf16.msra.mxu0 %v7743
      %10038 = vmatpush.bf16.msra.mxu0 %v7739
      %10039 = vmatpush.bf16.msra.mxu0 %v7735
      %10040 = vmatpush.bf16.msra.mxu0 %v7731
      %10041 = vmatpush.bf16.msra.mxu0 %v7727
      %10042 = vmatpush.bf16.msra.mxu0 %v7723
      %10043 = vmatpush.bf16.msra.mxu0 %v7719
      %10044 = vmatpush.bf16.msra.mxu0 %v7715
      %10045 = vmatmul.bf16.gmra.mxu0 %v3588
      %v10046 = vpop.f32.mrf.mxu0
      %v10047 = vadd.f32 %v10034, %v10046
      %v10048 = vpop.f32.mrf.mxu0
      %10049 = vdwg.mxu0
      %10050 = vmatpush.bf16.msra.mxu0 %v7775
      %10051 = vmatpush.bf16.msra.mxu0 %v7771
      %10052 = vmatpush.bf16.msra.mxu0 %v7767
      %10053 = vmatpush.bf16.msra.mxu0 %v7763
      %10054 = vmatpush.bf16.msra.mxu0 %v7759
      %10055 = vmatpush.bf16.msra.mxu0 %v7755
      %10056 = vmatpush.bf16.msra.mxu0 %v7751
      %10057 = vmatpush.bf16.msra.mxu0 %v7747
      %10058 = vmatmul.bf16.gmra.mxu0 %v3589
      %v10059 = vpop.f32.mrf.mxu0
      %v10060 = vadd.f32 %v10047, %v10059
      %v10061 = vpop.f32.mrf.mxu0
      %10062 = vdwg.mxu0
      %10063 = vmatpush.bf16.msra.mxu0 %v7807
      %10064 = vmatpush.bf16.msra.mxu0 %v7803
      %10065 = vmatpush.bf16.msra.mxu0 %v7799
      %10066 = vmatpush.bf16.msra.mxu0 %v7795
      %10067 = vmatpush.bf16.msra.mxu0 %v7791
      %10068 = vmatpush.bf16.msra.mxu0 %v7787
      %10069 = vmatpush.bf16.msra.mxu0 %v7783
      %10070 = vmatpush.bf16.msra.mxu0 %v7779
      %10071 = vmatmul.bf16.gmra.mxu0 %v3590
      %v10072 = vpop.f32.mrf.mxu0
      %v10073 = vadd.f32 %v10060, %v10072
      %v10074 = vpop.f32.mrf.mxu0
      %10075 = vdwg.mxu0
      %10076 = vmatpush.bf16.msra.mxu0 0
      %10077 = vmatpush.bf16.msra.mxu0 0
      %10078 = vmatpush.bf16.msra.mxu0 0
      %10079 = vmatpush.bf16.msra.mxu0 0
      %10080 = vmatpush.bf16.msra.mxu0 %v8683
      %10081 = vmatpush.bf16.msra.mxu0 %v7819
      %10082 = vmatpush.bf16.msra.mxu0 %v7815
      %10083 = vmatpush.bf16.msra.mxu0 %v7811
      %10084 = vmatmul.bf16.gmra.mxu0 %v8670
      %v10085 = vpop.f32.mrf.mxu0
      %v10086 = vadd.f32 %v10073, %v10085
      %v10087 = vpop.f32.mrf.mxu0
      %10088 = vdwg.mxu0
      %v10089 = vld [vmem:[%s4] sm:$0xf]
      %v10091 = vperm.slane %v10089, 0
      %v10092 = vperm.slane %v10089, 1
      %v10093 = vperm.slane %v10089, 2
      %v10094 = vperm.slane %v10089, 3
      %v10099 = vmul.f32 %v9033, %v10091
      %v10100 = vmul.f32 %v9384, %v10092
      %v10101 = vmul.f32 %v9735, %v10093
      %v10102 = vmul.f32 %v10086, %v10094
      %v10103 = vld [vmem:[%s5] sm:$0xf]
      %v10105 = vperm.slane %v10103, 0
      %v10106 = vperm.slane %v10103, 1
      %v10107 = vperm.slane %v10103, 2
      %v10108 = vperm.slane %v10103, 3
      %v10113 = vadd.f32 %v10099, %v10105
      %v10114 = vadd.f32 %v10100, %v10106
      %v10115 = vadd.f32 %v10101, %v10107
      %v10116 = vadd.f32 %v10102, %v10108
      %v10117 = vmax.f32 %v10113, 0.0
      %v10118 = vmax.f32 %v10114, 0.0
      %v10119 = vmax.f32 %v10115, 0.0
      %v10120 = vmax.f32 %v10116, 0.0
      %v10121 = vpack.c.bf16 %v10117, %v10117
      %v10122 = vpack.c.bf16 %v10118, %v10118
      %v10123 = vpack.c.bf16 %v10119, %v10119
      %v10124 = vpack.c.bf16 %v10120, %v10120
      %v10125 = vld [vmem:[%s6] sm:$0xf]
      %v10126 = vld [vmem:[%s6 + $0x4] sm:$0xf]
      %v10127 = vld [vmem:[%s6 + $0x8] sm:$0xf]
      %v10128 = vld [vmem:[%s6 + $0xc] sm:$0xf]
      %v10129 = vld [vmem:[%s6 + $0x10] sm:$0xf]
      %v10130 = vld [vmem:[%s6 + $0x14] sm:$0xf]
      %v10131 = vld [vmem:[%s6 + $0x18] sm:$0xf]
      %v10132 = vld [vmem:[%s6 + $0x1c] sm:$0xf]
      %v10133 = vld [vmem:[%s6 + $0x20] sm:$0xf]
      %v10134 = vld [vmem:[%s6 + $0x24] sm:$0xf]
      %v10135 = vld [vmem:[%s6 + $0x28] sm:$0xf]
      %v10136 = vld [vmem:[%s6 + $0x2c] sm:$0xf]
      %v10137 = vld [vmem:[%s6 + $0x30] sm:$0xf]
      %v10138 = vld [vmem:[%s6 + $0x34] sm:$0xf]
      %v10139 = vld [vmem:[%s6 + $0x38] sm:$0xf]
      %v10140 = vld [vmem:[%s6 + $0x3c] sm:$0xf]
      %v10141 = vld [vmem:[%s6 + $0x40] sm:$0xf]
      %v10142 = vld [vmem:[%s6 + $0x44] sm:$0xf]
      %v10143 = vld [vmem:[%s6 + $0x48] sm:$0xf]
      %v10144 = vld [vmem:[%s6 + $0x4c] sm:$0xf]
      %v10145 = vld [vmem:[%s6 + $0x50] sm:$0xf]
      %v10146 = vld [vmem:[%s6 + $0x54] sm:$0xf]
      %v10147 = vld [vmem:[%s6 + $0x58] sm:$0xf]
      %v10148 = vld [vmem:[%s6 + $0x5c] sm:$0xf]
      %v10149 = vld [vmem:[%s6 + $0x60] sm:$0xf]
      %v10150 = vld [vmem:[%s6 + $0x64] sm:$0xf]
      %v10151 = vld [vmem:[%s6 + $0x68] sm:$0xf]
      %v10152 = vld [vmem:[%s6 + $0x6c] sm:$0xf]
      %v10153 = vld [vmem:[%s6 + $0x70] sm:$0xf]
      %v10154 = vld [vmem:[%s6 + $0x74] sm:$0xf]
      %v10155 = vld [vmem:[%s6 + $0x78] sm:$0xf]
      %v10156 = vld [vmem:[%s6 + $0x7c] sm:$0xf]
      %v10157 = vld [vmem:[%s6 + $0x80] sm:$0xf]
      %v10158 = vld [vmem:[%s6 + $0x84] sm:$0xf]
      %v10159 = vld [vmem:[%s6 + $0x88] sm:$0xf]
      %v10160 = vld [vmem:[%s6 + $0x8c] sm:$0xf]
      %v10161 = vld [vmem:[%s6 + $0x90] sm:$0xf]
      %v10162 = vld [vmem:[%s6 + $0x94] sm:$0xf]
      %v10163 = vld [vmem:[%s6 + $0x98] sm:$0xf]
      %v10164 = vld [vmem:[%s6 + $0x9c] sm:$0xf]
      %v10165 = vld [vmem:[%s6 + $0xa0] sm:$0xf]
      %v10166 = vld [vmem:[%s6 + $0xa4] sm:$0xf]
      %v10167 = vld [vmem:[%s6 + $0xa8] sm:$0xf]
      %v10168 = vld [vmem:[%s6 + $0xac] sm:$0xf]
      %v10169 = vld [vmem:[%s6 + $0xb0] sm:$0xf]
      %v10170 = vld [vmem:[%s6 + $0xb4] sm:$0xf]
      %v10171 = vld [vmem:[%s6 + $0xb8] sm:$0xf]
      %v10172 = vld [vmem:[%s6 + $0xbc] sm:$0xf]
      %v10173 = vld [vmem:[%s6 + $0xc0] sm:$0xf]
      %v10174 = vld [vmem:[%s6 + $0xc4] sm:$0xf]
      %v10175 = vld [vmem:[%s6 + $0xc8] sm:$0xf]
      %v10176 = vld [vmem:[%s6 + $0xcc] sm:$0xf]
      %v10177 = vld [vmem:[%s6 + $0xd0] sm:$0xf]
      %v10178 = vld [vmem:[%s6 + $0xd4] sm:$0xf]
      %v10179 = vld [vmem:[%s6 + $0xd8] sm:$0xf]
      %v10180 = vld [vmem:[%s6 + $0xdc] sm:$0xf]
      %v10181 = vld [vmem:[%s6 + $0xe0] sm:$0xf]
      %v10182 = vld [vmem:[%s6 + $0xe4] sm:$0xf]
      %v10183 = vld [vmem:[%s6 + $0xe8] sm:$0xf]
      %v10184 = vld [vmem:[%s6 + $0xec] sm:$0xf]
      %v10185 = vld [vmem:[%s6 + $0xf0] sm:$0xf]
      %v10186 = vld [vmem:[%s6 + $0xf4] sm:$0xf]
      %v10187 = vld [vmem:[%s6 + $0xf8] sm:$0xf]
      %v10188 = vld [vmem:[%s6 + $0xfc] sm:$0xf]
      %v10189 = vld [vmem:[%s7] sm:$0x1]
      %v10191 = vperm.slane %v10189, 0
      %v10257 = vunpack.c.l.b16 %v10125
      %v10258 = vunpack.c.l.b16 %v10126
      %v10259 = vunpack.c.l.b16 %v10127
      %v10260 = vunpack.c.l.b16 %v10128
      %v10261 = vunpack.c.l.b16 %v10129
      %v10262 = vunpack.c.l.b16 %v10130
      %v10263 = vunpack.c.l.b16 %v10131
      %v10264 = vunpack.c.l.b16 %v10132
      %v10265 = vunpack.c.l.b16 %v10133
      %v10266 = vunpack.c.l.b16 %v10134
      %v10267 = vunpack.c.l.b16 %v10135
      %v10268 = vunpack.c.l.b16 %v10136
      %v10269 = vunpack.c.l.b16 %v10137
      %v10270 = vunpack.c.l.b16 %v10138
      %v10271 = vunpack.c.l.b16 %v10139
      %v10272 = vunpack.c.l.b16 %v10140
      %v10273 = vunpack.c.l.b16 %v10141
      %v10274 = vunpack.c.l.b16 %v10142
      %v10275 = vunpack.c.l.b16 %v10143
      %v10276 = vunpack.c.l.b16 %v10144
      %v10277 = vunpack.c.l.b16 %v10145
      %v10278 = vunpack.c.l.b16 %v10146
      %v10279 = vunpack.c.l.b16 %v10147
      %v10280 = vunpack.c.l.b16 %v10148
      %v10281 = vunpack.c.l.b16 %v10149
      %v10282 = vunpack.c.l.b16 %v10150
      %v10283 = vunpack.c.l.b16 %v10151
      %v10284 = vunpack.c.l.b16 %v10152
      %v10285 = vunpack.c.l.b16 %v10153
      %v10286 = vunpack.c.l.b16 %v10154
      %v10287 = vunpack.c.l.b16 %v10155
      %v10288 = vunpack.c.l.b16 %v10156
      %v10289 = vunpack.c.l.b16 %v10157
      %v10290 = vunpack.c.l.b16 %v10158
      %v10291 = vunpack.c.l.b16 %v10159
      %v10292 = vunpack.c.l.b16 %v10160
      %v10293 = vunpack.c.l.b16 %v10161
      %v10294 = vunpack.c.l.b16 %v10162
      %v10295 = vunpack.c.l.b16 %v10163
      %v10296 = vunpack.c.l.b16 %v10164
      %v10297 = vunpack.c.l.b16 %v10165
      %v10298 = vunpack.c.l.b16 %v10166
      %v10299 = vunpack.c.l.b16 %v10167
      %v10300 = vunpack.c.l.b16 %v10168
      %v10301 = vunpack.c.l.b16 %v10169
      %v10302 = vunpack.c.l.b16 %v10170
      %v10303 = vunpack.c.l.b16 %v10171
      %v10304 = vunpack.c.l.b16 %v10172
      %v10305 = vunpack.c.l.b16 %v10173
      %v10306 = vunpack.c.l.b16 %v10174
      %v10307 = vunpack.c.l.b16 %v10175
      %v10308 = vunpack.c.l.b16 %v10176
      %v10309 = vunpack.c.l.b16 %v10177
      %v10310 = vunpack.c.l.b16 %v10178
      %v10311 = vunpack.c.l.b16 %v10179
      %v10312 = vunpack.c.l.b16 %v10180
      %v10313 = vunpack.c.l.b16 %v10181
      %v10314 = vunpack.c.l.b16 %v10182
      %v10315 = vunpack.c.l.b16 %v10183
      %v10316 = vunpack.c.l.b16 %v10184
      %v10317 = vunpack.c.l.b16 %v10185
      %v10318 = vunpack.c.l.b16 %v10186
      %v10319 = vunpack.c.l.b16 %v10187
      %v10320 = vunpack.c.l.b16 %v10188
      %v10321 = vpack.c.b16 %v10258, %v10257
      %v10322 = vpack.c.b16 %v10260, %v10259
      %v10323 = vpack.c.b16 %v10262, %v10261
      %v10324 = vpack.c.b16 %v10264, %v10263
      %v10325 = vpack.c.b16 %v10266, %v10265
      %v10326 = vpack.c.b16 %v10268, %v10267
      %v10327 = vpack.c.b16 %v10270, %v10269
      %v10328 = vpack.c.b16 %v10272, %v10271
      %v10329 = vpack.c.b16 %v10274, %v10273
      %v10330 = vpack.c.b16 %v10276, %v10275
      %v10331 = vpack.c.b16 %v10278, %v10277
      %v10332 = vpack.c.b16 %v10280, %v10279
      %v10333 = vpack.c.b16 %v10282, %v10281
      %v10334 = vpack.c.b16 %v10284, %v10283
      %v10335 = vpack.c.b16 %v10286, %v10285
      %v10336 = vpack.c.b16 %v10288, %v10287
      %v10337 = vpack.c.b16 %v10290, %v10289
      %v10338 = vpack.c.b16 %v10292, %v10291
      %v10339 = vpack.c.b16 %v10294, %v10293
      %v10340 = vpack.c.b16 %v10296, %v10295
      %v10341 = vpack.c.b16 %v10298, %v10297
      %v10342 = vpack.c.b16 %v10300, %v10299
      %v10343 = vpack.c.b16 %v10302, %v10301
      %v10344 = vpack.c.b16 %v10304, %v10303
      %v10345 = vpack.c.b16 %v10306, %v10305
      %v10346 = vpack.c.b16 %v10308, %v10307
      %v10347 = vpack.c.b16 %v10310, %v10309
      %v10348 = vpack.c.b16 %v10312, %v10311
      %v10349 = vpack.c.b16 %v10314, %v10313
      %v10350 = vpack.c.b16 %v10316, %v10315
      %v10351 = vpack.c.b16 %v10318, %v10317
      %v10352 = vpack.c.b16 %v10320, %v10319
      %10385 = vmatpush.bf16.msra.mxu0 %v10328
      %10386 = vmatpush.bf16.msra.mxu0 %v10327
      %10387 = vmatpush.bf16.msra.mxu0 %v10326
      %10388 = vmatpush.bf16.msra.mxu0 %v10325
      %10389 = vmatpush.bf16.msra.mxu0 %v10324
      %10390 = vmatpush.bf16.msra.mxu0 %v10323
      %10391 = vmatpush.bf16.msra.mxu0 %v10322
      %10392 = vmatpush.bf16.msra.mxu0 %v10321
      %10393 = vmatmul.bf16.gmra.mxu0 %v10121
      %v10394 = vpop.f32.mrf.mxu0
      %v10395 = vadd.f32 %v10191, %v10394
      %v10396 = vpop.f32.mrf.mxu0
      %10397 = vdwg.mxu0
      %10398 = vmatpush.bf16.msra.mxu0 %v10336
      %10399 = vmatpush.bf16.msra.mxu0 %v10335
      %10400 = vmatpush.bf16.msra.mxu0 %v10334
      %10401 = vmatpush.bf16.msra.mxu0 %v10333
      %10402 = vmatpush.bf16.msra.mxu0 %v10332
      %10403 = vmatpush.bf16.msra.mxu0 %v10331
      %10404 = vmatpush.bf16.msra.mxu0 %v10330
      %10405 = vmatpush.bf16.msra.mxu0 %v10329
      %10406 = vmatmul.bf16.gmra.mxu0 %v10122
      %v10407 = vpop.f32.mrf.mxu0
      %v10408 = vadd.f32 %v10395, %v10407
      %v10409 = vpop.f32.mrf.mxu0
      %10410 = vdwg.mxu0
      %10411 = vmatpush.bf16.msra.mxu0 %v10344
      %10412 = vmatpush.bf16.msra.mxu0 %v10343
      %10413 = vmatpush.bf16.msra.mxu0 %v10342
      %10414 = vmatpush.bf16.msra.mxu0 %v10341
      %10415 = vmatpush.bf16.msra.mxu0 %v10340
      %10416 = vmatpush.bf16.msra.mxu0 %v10339
      %10417 = vmatpush.bf16.msra.mxu0 %v10338
      %10418 = vmatpush.bf16.msra.mxu0 %v10337
      %10419 = vmatmul.bf16.gmra.mxu0 %v10123
      %v10420 = vpop.f32.mrf.mxu0
      %v10421 = vadd.f32 %v10408, %v10420
      %v10422 = vpop.f32.mrf.mxu0
      %10423 = vdwg.mxu0
      %10424 = vmatpush.bf16.msra.mxu0 %v10352
      %10425 = vmatpush.bf16.msra.mxu0 %v10351
      %10426 = vmatpush.bf16.msra.mxu0 %v10350
      %10427 = vmatpush.bf16.msra.mxu0 %v10349
      %10428 = vmatpush.bf16.msra.mxu0 %v10348
      %10429 = vmatpush.bf16.msra.mxu0 %v10347
      %10430 = vmatpush.bf16.msra.mxu0 %v10346
      %10431 = vmatpush.bf16.msra.mxu0 %v10345
      %10432 = vmatmul.bf16.gmra.mxu0 %v10124
      %v10433 = vpop.f32.mrf.mxu0
      %v10434 = vadd.f32 %v10421, %v10433
      %v10435 = vpop.f32.mrf.mxu0
      %10436 = vdwg.mxu0
      %10437 = vst [vmem:[%s303] sm:$0xff] %v10434
      %p10438 = scmp.lt.s32.totalorder %s19, 1
      %s10439 = scalar_select %p10438, %s19, 1
      %s10440 = smul.addr %s10439, 8
      %s10441 = scalar_lea.vmem %s8, %s10440
      // Predicated region
      $region53: #{net_forward.1} parent=51 // pred_check
        %p10442 = pneg %p210
      $region54: #{net_forward.1} parent=51 // pred_check_branch
        %10444 = sbr.rel (%p10442) target = $region56
      $region55: #{net_forward.1} parent=51 // pred_region
        _
      $region56: #{net_forward.1} parent=51 // pred_fallthru
        _
    $region52: #{net_forward.1} parent=5 // pred_fallthru
      _
    %p10445 = scmp.le.s32.totalorder 2, %s14
    // Predicated region
    $region57: #{net_forward.1} parent=5 // pred_check
      %p10446 = pneg %p10445
    $region58: #{net_forward.1} parent=5 // pred_check_branch
      %10448 = sbr.rel (%p10446) target = $region60
    $region59: #{net_forward.1} parent=5 // pred_region
      %s10449 = ssub.s32 %s14, 2
      // Predicated region
      $region61: #{net_forward.1} parent=59 // pred_check
        %p10450 = pneg %p216
      $region62: #{net_forward.1} parent=59 // pred_check_branch
        %10452 = sbr.rel (%p10450) target = $region64
      $region63: #{net_forward.1} parent=59 // pred_region
        %p10453 = scmp.lt.s32.totalorder %s20, 1
        %s10454 = scalar_select %p10453, %s20, 1
        %s10455 = smul.addr %s10454, 8
        %s10456 = scalar_lea.vmem %s8, %s10455
      $region64: #{net_forward.1} parent=59 // pred_fallthru
        _
    $region60: #{net_forward.1} parent=5 // pred_fallthru
      _
  $region6: #{net_forward.1} parent=0 // loop_footer
    %s18 = sadd.s32 1, %s14
  $region7: #{net_forward.1} parent=0 // loop_footer_branch
    %13 = sbr.rel target = $region3
  $region8: #{net_forward.1} parent=0 // loop_exit
    _

</llo_original>
